<compile_context>
chip_gen: v5e
topology: v5e:2x2
jax: 0.10.0
libtpu: 0.0.40
codegen_flags: <defaults>
</compile_context>

<pallas_src>
import functools

import jax
import jax.numpy as jnp
from jax.experimental import pallas as pl
from jax.experimental.pallas import tpu as pltpu

LANE = 128
_EPS = 1e-5
_VMEM_LIMIT = 48 * 1024 * 1024      # safe on v5e/v6e (128 MiB) and v7x (64 MiB)
_COMPUTE_DTYPE = jnp.bfloat16       # matmul / activation HBM dtype (f32 accum)


def _round_up(x, m):
    return (x + m - 1) // m * m


def _pick_tile(s, cap=1024):
    for t in (2048, 1024, 512, 256, 128, 64, 32, 16, 8):
        if t <= cap and t <= s and s % t == 0:
            return t
    return s


# ----------------------------------------------------------------------------
# Pallas kernels
# ----------------------------------------------------------------------------
def _conv3x3x3_kernel(x0_ref, x1_ref, x2_ref, w_ref, b_ref,
                      y_ref, ps_ref, pq_ref, *, out_h, out_w):
    """One (sample, depth-slice): 27 shifted-tap matmuls accumulated in f32,
    fused bias and GroupNorm partial statistics."""
    cin = x0_ref.shape[-1]
    cout = y_ref.shape[-1]
    acc = jnp.zeros((out_h * out_w, cout), jnp.float32)
    for kd, slab_ref in enumerate((x0_ref, x1_ref, x2_ref)):
        for kh in range(3):
            for kw in range(3):
                win = slab_ref[0, 0, kh:kh + out_h, kw:kw + out_w, :]
                xin = win.reshape(out_h * out_w, cin)
                tap = (kd * 3 + kh) * 3 + kw
                acc = acc + jnp.dot(xin, w_ref[tap],
                                    preferred_element_type=jnp.float32)
    acc = acc + b_ref[...]                       # (1, cout) broadcast
    y_ref[0, 0] = acc.astype(y_ref.dtype)
    # GroupNorm(1, C) partials; padded output channels are exactly zero.
    ps_ref[...] = jnp.zeros(ps_ref.shape, jnp.float32) + jnp.sum(acc)
    pq_ref[...] = jnp.zeros(pq_ref.shape, jnp.float32) + jnp.sum(acc * acc)


def conv3x3x3(x, w27, bias, out_dtype=_COMPUTE_DTYPE):
    """3x3x3 conv (stride 1, pad 1) with fused bias + GN partial sums.
    x: (N, D, H, W, Cin_pad) bf16; w27: (27, Cin_pad, Cout_pad) bf16;
    bias: (1, Cout_pad) f32.
    Returns y (N, D, H*W, Cout_pad), psum / psq (N, D, 8, 128) f32."""
    n, d, h, w, cin = x.shape
    cout = w27.shape[-1]
    xp = jnp.pad(x, ((0, 0), (1, 1), (1, 1), (1, 1), (0, 0)))
    hp, wp = h + 2, w + 2

    def slab_spec(off):
        def imap(nn, dd):
            return (nn, dd + off, 0, 0, 0)
        return pl.BlockSpec((1, 1, hp, wp, cin), imap)

    kernel = functools.partial(_conv3x3x3_kernel, out_h=h, out_w=w)
    return pl.pallas_call(
        kernel,
        out_shape=(jax.ShapeDtypeStruct((n, d, h * w, cout), out_dtype),
                   jax.ShapeDtypeStruct((n, d, 8, LANE), jnp.float32),
                   jax.ShapeDtypeStruct((n, d, 8, LANE), jnp.float32)),
        grid=(n, d),
        in_specs=[slab_spec(0), slab_spec(1), slab_spec(2),
                  pl.BlockSpec((27, cin, cout), lambda nn, dd: (0, 0, 0)),
                  pl.BlockSpec((1, cout), lambda nn, dd: (0, 0))],
        out_specs=[pl.BlockSpec((1, 1, h * w, cout),
                                lambda nn, dd: (nn, dd, 0, 0)),
                   pl.BlockSpec((1, 1, 8, LANE), lambda nn, dd: (nn, dd, 0, 0)),
                   pl.BlockSpec((1, 1, 8, LANE), lambda nn, dd: (nn, dd, 0, 0))],
        compiler_params=pltpu.CompilerParams(
            dimension_semantics=("parallel", "parallel"),
            vmem_limit_bytes=_VMEM_LIMIT),
    )(xp, xp, xp, w27, bias)


def _upconv_kernel(x_ref, w_ref, b_ref, y_ref, ps_ref, pq_ref):
    acc = jnp.dot(x_ref[0], w_ref[...], preferred_element_type=jnp.float32)
    acc = acc + b_ref[...]
    y_ref[0] = acc.astype(y_ref.dtype)
    ps_ref[...] = jnp.zeros(ps_ref.shape, jnp.float32) + jnp.sum(acc)
    pq_ref[...] = jnp.zeros(pq_ref.shape, jnp.float32) + jnp.sum(acc * acc)


def upconv2x2x2(x, wmat, bias, out_dtype=_COMPUTE_DTYPE):
    """ConvTranspose3d(k=2, s=2) as a per-voxel matmul producing (kd,kh,kw,o)
    columns, with fused bias + GroupNorm partial sums.
    x: (N, S, Cin_pad) bf16; wmat: (Cin_pad, COLpad) bf16; bias: (1, COLpad)."""
    n, s, cin = x.shape
    colp = wmat.shape[-1]
    ts = _pick_tile(s, 1024)
    nt = s // ts
    return pl.pallas_call(
        _upconv_kernel,
        out_shape=(jax.ShapeDtypeStruct((n, s, colp), out_dtype),
                   jax.ShapeDtypeStruct((n, nt, 8, LANE), jnp.float32),
                   jax.ShapeDtypeStruct((n, nt, 8, LANE), jnp.float32)),
        grid=(n, nt),
        in_specs=[pl.BlockSpec((1, ts, cin), lambda nn, tt: (nn, tt, 0)),
                  pl.BlockSpec((cin, colp), lambda nn, tt: (0, 0)),
                  pl.BlockSpec((1, colp), lambda nn, tt: (0, 0))],
        out_specs=[pl.BlockSpec((1, ts, colp), lambda nn, tt: (nn, tt, 0)),
                   pl.BlockSpec((1, 1, 8, LANE), lambda nn, tt: (nn, tt, 0, 0)),
                   pl.BlockSpec((1, 1, 8, LANE), lambda nn, tt: (nn, tt, 0, 0))],
        compiler_params=pltpu.CompilerParams(
            dimension_semantics=("parallel", "parallel"),
            vmem_limit_bytes=_VMEM_LIMIT),
    )(x, wmat, bias)


def _affine_kernel(x_ref, sc_ref, sh_ref, o_ref, *, relu):
    y = x_ref[...].astype(jnp.float32) * sc_ref[...] + sh_ref[...]
    if relu:
        y = jnp.maximum(y, 0.0)
    o_ref[...] = y.astype(o_ref.dtype)


def _affine_res_kernel(x_ref, sc_ref, sh_ref, r_ref, o_ref, *, relu):
    y = (x_ref[...].astype(jnp.float32) * sc_ref[...] + sh_ref[...]
         + r_ref[...].astype(jnp.float32))
    if relu:
        y = jnp.maximum(y, 0.0)
    o_ref[...] = y.astype(o_ref.dtype)


def gn_affine(x, scale, shift, residual=None, relu=True,
              out_dtype=_COMPUTE_DTYPE):
    """y = [relu]( x * scale + shift [+ residual] ), tiled over (sample, rows).
    x/residual: (N, S, Cpad); scale/shift: (N, 1, Cpad) f32."""
    n, s, c = x.shape
    ts = _pick_tile(s, 2048)
    x_spec = pl.BlockSpec((1, ts, c), lambda nn, tt: (nn, tt, 0))
    v_spec = pl.BlockSpec((1, 1, c), lambda nn, tt: (nn, 0, 0))
    if residual is None:
        kern = functools.partial(_affine_kernel, relu=relu)
        in_specs = [x_spec, v_spec, v_spec]
        args = (x, scale, shift)
    else:
        kern = functools.partial(_affine_res_kernel, relu=relu)
        in_specs = [x_spec, v_spec, v_spec, x_spec]
        args = (x, scale, shift, residual)
    return pl.pallas_call(
        kern,
        out_shape=jax.ShapeDtypeStruct((n, s, c), out_dtype),
        grid=(n, s // ts),
        in_specs=in_specs,
        out_specs=x_spec,
        compiler_params=pltpu.CompilerParams(
            dimension_semantics=("parallel", "parallel"),
            vmem_limit_bytes=_VMEM_LIMIT),
    )(*args)


# ----------------------------------------------------------------------------
# GroupNorm(1, C) statistics -> per-(sample, channel) scale / shift
# ----------------------------------------------------------------------------
def _gn_scale_shift(psum, psq, count, gamma_pad, beta_pad, eps=_EPS):
    s = jnp.sum(psum[..., 0, 0], axis=1)               # (N,)
    q = jnp.sum(psq[..., 0, 0], axis=1)
    mean = s / count
    var = jnp.maximum(q / count - mean * mean, 0.0)     # biased var (PyTorch)
    rstd = jax.lax.rsqrt(var + eps)
    scale = gamma_pad[None, :] * rstd[:, None]          # (N, Cpad)
    shift = beta_pad[None, :] - mean[:, None] * scale
    return scale[:, None, :], shift[:, None, :]         # (N, 1, Cpad)


# ----------------------------------------------------------------------------
# Layer compositions
# ----------------------------------------------------------------------------
def _conv_gn(x, p, cout_true, relu, residual=None):
    """ConvGnRelu3 (+ optionally fused residual add + ReLU).
    x: (N, D, H, W, Cin_pad) bf16 -> (N, D, H, W, Cout_pad) bf16."""
    n, d, h, w, _ = x.shape
    y, ps, pq = conv3x3x3(x, p["w"], p["b"])
    s = d * h * w
    y = y.reshape(n, s, -1)
    scale, shift = _gn_scale_shift(ps, pq, float(s * cout_true),
                                   p["gamma"], p["beta"])
    res = None if residual is None else residual.reshape(n, s, -1)
    out = gn_affine(y, scale, shift, residual=res, relu=relu)
    return out.reshape(n, d, h, w, -1)


def _residual_block(x, rparams, channels):
    out = x
    last = len(rparams) - 1
    for i, p in enumerate(rparams):
        # last conv has do_act=False; its GN fuses residual add + final ReLU
        out = _conv_gn(out, p, channels, relu=True,
                       residual=x if i == last else None)
    return out


def _bott_residual_block(x, rparams, channels, mid):
    out = x
    last = len(rparams) - 1
    for i, (p1, p2, p3) in enumerate(rparams):
        out = _conv_gn(out, p1, mid, relu=True)
        out = _conv_gn(out, p2, mid, relu=True)
        out = _conv_gn(out, p3, channels, relu=True,
                       residual=x if i == last else None)
    return out


def up_block_forward(x_ncdhw, params, *, in_channels, out_channels,
                     compression=False, ratio=4):
    """UpBlock.forward: (N, Cin, D, H, W) f32 -> (N, Cout, 2D, 2H, 2W) f32."""
    n, cin, d, h, w = x_ncdhw.shape
    assert cin == in_channels
    cin_pad = _round_up(in_channels, LANE)

    # NCDHW -> NDHWC, channel-pad to a lane multiple, bf16 compute dtype.
    x = jnp.transpose(x_ncdhw, (0, 2, 3, 4, 1))
    x = jnp.pad(x, ((0, 0), (0, 0), (0, 0), (0, 0), (0, cin_pad - cin)))
    x = x.astype(_COMPUTE_DTYPE)

    if compression:
        out = _bott_residual_block(x, params["rblock"], in_channels,
                                   max(in_channels // ratio, 1))
    else:
        out = _residual_block(x, params["rblock"], in_channels)

    # ConvTranspose3d(k=2, s=2) as per-voxel matmul; GroupNorm + ReLU applied
    # on the pre-scatter (N, S, 8*Cout) layout (stats permutation invariant).
    s = d * h * w
    y, ps, pq = upconv2x2x2(out.reshape(n, s, cin_pad),
                            params["up_w"], params["up_b"])
    scale, shift = _gn_scale_shift(ps, pq, float(s * 8 * out_channels),
                                   params["up_gamma"], params["up_beta"])
    y = gn_affine(y, scale, shift, relu=True, out_dtype=jnp.float32)

    # TODO(synk): the 2x scatter (reshape/transpose) and NDHWC->NCDHW boundary
    # layout conversion stay as XLA ops; fusing them into the matmul out_spec
    # would save one more HBM pass.
    y = y[:, :, :8 * out_channels].reshape(n, d, h, w, 2, 2, 2, out_channels)
    y = jnp.transpose(y, (0, 1, 4, 2, 5, 3, 6, 7)).reshape(
        n, 2 * d, 2 * h, 2 * w, out_channels)
    return jnp.transpose(y, (0, 4, 1, 2, 3))


# ----------------------------------------------------------------------------
# Parameter init (PyTorch layout) + one-time layout preparation
# ----------------------------------------------------------------------------
def _init_conv_gn(key, cin, cout):
    k1, k2, k3, k4 = jax.random.split(key, 4)
    w = 0.1 * jax.random.normal(k1, (cout, cin, 3, 3, 3), jnp.float32)
    b = 0.05 * jax.random.normal(k2, (cout,), jnp.float32)
    gamma = 1.0 + 0.1 * jax.random.normal(k3, (cout,), jnp.float32)
    beta = 0.05 * jax.random.normal(k4, (cout,), jnp.float32)
    return (w, b, gamma, beta)


def init_up_block_params(key, in_channels, out_channels, num_convs,
                         compression=False, ratio=4):
    keys = jax.random.split(key, num_convs * 3 + 2)
    rblock = []
    if compression:
        mid = in_channels // ratio
        for i in range(num_convs):
            rblock.append((
                _init_conv_gn(keys[3 * i + 0], in_channels, mid),
                _init_conv_gn(keys[3 * i + 1], mid, mid),
                _init_conv_gn(keys[3 * i + 2], mid, in_channels),
            ))
    else:
        for i in range(num_convs):
            rblock.append(_init_conv_gn(keys[i], in_channels, in_channels))

    ku, kg = keys[-2], keys[-1]
    k1, k2 = jax.random.split(ku)
    wt = 0.1 * jax.random.normal(k1, (in_channels, out_channels, 2, 2, 2),
                                 jnp.float32)
    bt = 0.05 * jax.random.normal(k2, (out_channels,), jnp.float32)
    k3, k4 = jax.random.split(kg)
    up_g = 1.0 + 0.1 * jax.random.normal(k3, (out_channels,), jnp.float32)
    up_b = 0.05 * jax.random.normal(k4, (out_channels,), jnp.float32)
    return {"rblock": rblock, "up_conv": (wt, bt), "up_gn": (up_g, up_b)}


def _prep_conv(p, cin_pad):
    """PyTorch (Cout, Cin, 3,3,3) conv + GN params -> padded, kernel-ready."""
    w, b, gamma, beta = p
    cout, cin = w.shape[0], w.shape[1]
    cout_pad = _round_up(cout, LANE)
    # (Cout, Cin, kd, kh, kw) -> (kd, kh, kw, Cin, Cout) -> (27, Cin, Cout)
    wt = jnp.transpose(w, (2, 3, 4, 1, 0)).reshape(27, cin, cout)
    wt = jnp.pad(wt, ((0, 0), (0, cin_pad - cin), (0, cout_pad - cout)))
    return {
        "w": wt.astype(_COMPUTE_DTYPE),
        "b": jnp.pad(b, (0, cout_pad - cout)).reshape(1, cout_pad)
               .astype(jnp.float32),
        "gamma": jnp.pad(gamma, (0, cout_pad - cout)).astype(jnp.float32),
        "beta": jnp.pad(beta, (0, cout_pad - cout)).astype(jnp.float32),
    }


def prepare_params(raw, in_channels, out_channels, compression=False, ratio=4):
    """One-time weight/bias layout transforms (hoisted out of the forward)."""
    cin_pad = _round_up(in_channels, LANE)
    mid_pad = _round_up(max(in_channels // ratio, 1), LANE)
    rblock = []
    for layer in raw["rblock"]:
        if compression:
            rblock.append((_prep_conv(layer[0], cin_pad),
                           _prep_conv(layer[1], mid_pad),
                           _prep_conv(layer[2], mid_pad)))
        else:
            rblock.append(_prep_conv(layer, cin_pad))

    wt, bt = raw["up_conv"]                       # (Cin, Cout, 2, 2, 2)
    col = 8 * out_channels
    col_pad = _round_up(col, LANE)
    # (Cin, Cout, kd, kh, kw) -> (Cin, kd, kh, kw, Cout) -> (Cin, 8*Cout)
    wm = jnp.transpose(wt, (0, 2, 3, 4, 1)).reshape(in_channels, col)
    wm = jnp.pad(wm, ((0, cin_pad - in_channels), (0, col_pad - col)))
    up_g, up_beta = raw["up_gn"]
    return {
        "rblock": rblock,
        "up_w": wm.astype(_COMPUTE_DTYPE),
        "up_b": jnp.pad(jnp.tile(bt, 8), (0, col_pad - col))
                   .reshape(1, col_pad).astype(jnp.float32),
        "up_gamma": jnp.pad(jnp.tile(up_g, 8), (0, col_pad - col))
                       .astype(jnp.float32),
        "up_beta": jnp.pad(jnp.tile(up_beta, 8), (0, col_pad - col))
                      .astype(jnp.float32),
    }


# ----------------------------------------------------------------------------
if __name__ == "__main__":
    key = jax.random.PRNGKey(0)
    kx, kp = jax.random.split(key)

    # small shapes: batch=2, in_channels=8, out_channels=4, spatial 8^3
    N, CIN, COUT, D = 2, 8, 4, 8
    NUM_CONVS = 2
    x = jax.random.normal(kx, (N, CIN, D, D, D), jnp.float32)   # NCDHW

    raw = init_up_block_params(kp, CIN, COUT, NUM_CONVS, compression=False)
    params = prepare_params(raw, CIN, COUT, compression=False)

    fwd = jax.jit(functools.partial(up_block_forward, in_channels=CIN,
                                    out_channels=COUT, compression=False))
    out = jax.block_until_ready(fwd(x, params))

    assert out.shape == (N, COUT, 2 * D, 2 * D, 2 * D), out.shape
    assert out.dtype == jnp.float32
    assert bool(jnp.all(jnp.isfinite(out)))
    assert bool(jnp.all(out >= 0.0))  # final ReLU

    print("KERNEL_OK")
</pallas_src>

<mosaic_0001>
module attributes {stable_mosaic.version = 11 : i64} {
  func.func @_conv3x3x3_kernel(%arg0: i32, %arg1: i32, %arg2: memref<1x1x10x10x128xbf16, #tpu.memory_space<vmem>>, %arg3: memref<1x1x10x10x128xbf16, #tpu.memory_space<vmem>>, %arg4: memref<1x1x10x10x128xbf16, #tpu.memory_space<vmem>>, %arg5: memref<27x128x128xbf16, #tpu.memory_space<vmem>>, %arg6: memref<1x128xf32, #tpu.memory_space<vmem>>, %arg7: memref<1x1x64x128xbf16, #tpu.memory_space<vmem>>, %arg8: memref<1x1x8x128xf32, #tpu.memory_space<vmem>>, %arg9: memref<1x1x8x128xf32, #tpu.memory_space<vmem>>) attributes {dimension_semantics = [#tpu.dimension_semantics<parallel>, #tpu.dimension_semantics<parallel>], iteration_bounds = array<i64: 2, 8>, scalar_prefetch = 0 : i64, scratch_operands = 0 : i64, tpu.core_type = #tpu.core_type<tc>, window_params = [{transform_indices = @transform_0, window_bounds = array<i64: 1, 1, 10, 10, 128>}, {transform_indices = @transform_1, window_bounds = array<i64: 1, 1, 10, 10, 128>}, {transform_indices = @transform_2, window_bounds = array<i64: 1, 1, 10, 10, 128>}, {pipeline_mode = #tpu.pipeline_mode<synchronous>, transform_indices = @transform_3, window_bounds = array<i64: 27, 128, 128>}, {pipeline_mode = #tpu.pipeline_mode<synchronous>, transform_indices = @transform_4, window_bounds = array<i64: 1, 128>}, {transform_indices = @transform_5, window_bounds = array<i64: 1, 1, 64, 128>}, {transform_indices = @transform_6, window_bounds = array<i64: 1, 1, 8, 128>}, {transform_indices = @transform_7, window_bounds = array<i64: 1, 1, 8, 128>}]} {
    %cst = arith.constant 0.000000e+00 : f32
    %0 = vector.broadcast %cst : f32 to vector<64x128xf32>
    %c0 = arith.constant 0 : index
    %c0_0 = arith.constant 0 : index
    %c0_1 = arith.constant 0 : index
    %c0_2 = arith.constant 0 : index
    %c0_3 = arith.constant 0 : index
    %1 = vector.load %arg2[%c0, %c0_0, %c0_1, %c0_2, %c0_3] : memref<1x1x10x10x128xbf16, #tpu.memory_space<vmem>>, vector<1x1x8x8x128xbf16>
    %2 = vector.shape_cast %1 : vector<1x1x8x8x128xbf16> to vector<8x8x128xbf16>
    %3 = vector.shape_cast %2 : vector<8x8x128xbf16> to vector<64x128xbf16>
    %c0_4 = arith.constant 0 : index
    %c0_5 = arith.constant 0 : index
    %c0_6 = arith.constant 0 : index
    %4 = vector.load %arg5[%c0_4, %c0_5, %c0_6] : memref<27x128x128xbf16, #tpu.memory_space<vmem>>, vector<1x128x128xbf16>
    %5 = vector.shape_cast %4 : vector<1x128x128xbf16> to vector<128x128xbf16>
    %cst_7 = arith.constant dense<0.000000e+00> : vector<64x128xf32>
    %6 = tpu.matmul %3, %5, %cst_7 {dimension_numbers = #tpu.dot_dimension_numbers<[1], [0], [0], [1], [0, 0, 1, 1], [], []>} : vector<64x128xbf16>, vector<128x128xbf16>, vector<64x128xf32> -> vector<64x128xf32>
    %7 = arith.addf %0, %6 : vector<64x128xf32>
    %c0_8 = arith.constant 0 : index
    %c0_9 = arith.constant 0 : index
    %c0_10 = arith.constant 0 : index
    %c1 = arith.constant 1 : index
    %c0_11 = arith.constant 0 : index
    %8 = vector.load %arg2[%c0_8, %c0_9, %c0_10, %c1, %c0_11] : memref<1x1x10x10x128xbf16, #tpu.memory_space<vmem>>, vector<1x1x8x8x128xbf16>
    %9 = vector.shape_cast %8 : vector<1x1x8x8x128xbf16> to vector<8x8x128xbf16>
    %10 = vector.shape_cast %9 : vector<8x8x128xbf16> to vector<64x128xbf16>
    %c1_12 = arith.constant 1 : index
    %c0_13 = arith.constant 0 : index
    %c0_14 = arith.constant 0 : index
    %11 = vector.load %arg5[%c1_12, %c0_13, %c0_14] : memref<27x128x128xbf16, #tpu.memory_space<vmem>>, vector<1x128x128xbf16>
    %12 = vector.shape_cast %11 : vector<1x128x128xbf16> to vector<128x128xbf16>
    %cst_15 = arith.constant dense<0.000000e+00> : vector<64x128xf32>
    %13 = tpu.matmul %10, %12, %cst_15 {dimension_numbers = #tpu.dot_dimension_numbers<[1], [0], [0], [1], [0, 0, 1, 1], [], []>} : vector<64x128xbf16>, vector<128x128xbf16>, vector<64x128xf32> -> vector<64x128xf32>
    %14 = arith.addf %7, %13 : vector<64x128xf32>
    %c0_16 = arith.constant 0 : index
    %c0_17 = arith.constant 0 : index
    %c0_18 = arith.constant 0 : index
    %c2 = arith.constant 2 : index
    %c0_19 = arith.constant 0 : index
    %15 = vector.load %arg2[%c0_16, %c0_17, %c0_18, %c2, %c0_19] : memref<1x1x10x10x128xbf16, #tpu.memory_space<vmem>>, vector<1x1x8x8x128xbf16>
    %16 = vector.shape_cast %15 : vector<1x1x8x8x128xbf16> to vector<8x8x128xbf16>
    %17 = vector.shape_cast %16 : vector<8x8x128xbf16> to vector<64x128xbf16>
    %c2_20 = arith.constant 2 : index
    %c0_21 = arith.constant 0 : index
    %c0_22 = arith.constant 0 : index
    %18 = vector.load %arg5[%c2_20, %c0_21, %c0_22] : memref<27x128x128xbf16, #tpu.memory_space<vmem>>, vector<1x128x128xbf16>
    %19 = vector.shape_cast %18 : vector<1x128x128xbf16> to vector<128x128xbf16>
    %cst_23 = arith.constant dense<0.000000e+00> : vector<64x128xf32>
    %20 = tpu.matmul %17, %19, %cst_23 {dimension_numbers = #tpu.dot_dimension_numbers<[1], [0], [0], [1], [0, 0, 1, 1], [], []>} : vector<64x128xbf16>, vector<128x128xbf16>, vector<64x128xf32> -> vector<64x128xf32>
    %21 = arith.addf %14, %20 : vector<64x128xf32>
    %c0_24 = arith.constant 0 : index
    %c0_25 = arith.constant 0 : index
    %c1_26 = arith.constant 1 : index
    %c0_27 = arith.constant 0 : index
    %c0_28 = arith.constant 0 : index
    %22 = vector.load %arg2[%c0_24, %c0_25, %c1_26, %c0_27, %c0_28] : memref<1x1x10x10x128xbf16, #tpu.memory_space<vmem>>, vector<1x1x8x8x128xbf16>
    %23 = vector.shape_cast %22 : vector<1x1x8x8x128xbf16> to vector<8x8x128xbf16>
    %24 = vector.shape_cast %23 : vector<8x8x128xbf16> to vector<64x128xbf16>
    %c3 = arith.constant 3 : index
    %c0_29 = arith.constant 0 : index
    %c0_30 = arith.constant 0 : index
    %25 = vector.load %arg5[%c3, %c0_29, %c0_30] : memref<27x128x128xbf16, #tpu.memory_space<vmem>>, vector<1x128x128xbf16>
    %26 = vector.shape_cast %25 : vector<1x128x128xbf16> to vector<128x128xbf16>
    %cst_31 = arith.constant dense<0.000000e+00> : vector<64x128xf32>
    %27 = tpu.matmul %24, %26, %cst_31 {dimension_numbers = #tpu.dot_dimension_numbers<[1], [0], [0], [1], [0, 0, 1, 1], [], []>} : vector<64x128xbf16>, vector<128x128xbf16>, vector<64x128xf32> -> vector<64x128xf32>
    %28 = arith.addf %21, %27 : vector<64x128xf32>
    %c0_32 = arith.constant 0 : index
    %c0_33 = arith.constant 0 : index
    %c1_34 = arith.constant 1 : index
    %c1_35 = arith.constant 1 : index
    %c0_36 = arith.constant 0 : index
    %29 = vector.load %arg2[%c0_32, %c0_33, %c1_34, %c1_35, %c0_36] : memref<1x1x10x10x128xbf16, #tpu.memory_space<vmem>>, vector<1x1x8x8x128xbf16>
    %30 = vector.shape_cast %29 : vector<1x1x8x8x128xbf16> to vector<8x8x128xbf16>
    %31 = vector.shape_cast %30 : vector<8x8x128xbf16> to vector<64x128xbf16>
    %c4 = arith.constant 4 : index
    %c0_37 = arith.constant 0 : index
    %c0_38 = arith.constant 0 : index
    %32 = vector.load %arg5[%c4, %c0_37, %c0_38] : memref<27x128x128xbf16, #tpu.memory_space<vmem>>, vector<1x128x128xbf16>
    %33 = vector.shape_cast %32 : vector<1x128x128xbf16> to vector<128x128xbf16>
    %cst_39 = arith.constant dense<0.000000e+00> : vector<64x128xf32>
    %34 = tpu.matmul %31, %33, %cst_39 {dimension_numbers = #tpu.dot_dimension_numbers<[1], [0], [0], [1], [0, 0, 1, 1], [], []>} : vector<64x128xbf16>, vector<128x128xbf16>, vector<64x128xf32> -> vector<64x128xf32>
    %35 = arith.addf %28, %34 : vector<64x128xf32>
    %c0_40 = arith.constant 0 : index
    %c0_41 = arith.constant 0 : index
    %c1_42 = arith.constant 1 : index
    %c2_43 = arith.constant 2 : index
    %c0_44 = arith.constant 0 : index
    %36 = vector.load %arg2[%c0_40, %c0_41, %c1_42, %c2_43, %c0_44] : memref<1x1x10x10x128xbf16, #tpu.memory_space<vmem>>, vector<1x1x8x8x128xbf16>
    %37 = vector.shape_cast %36 : vector<1x1x8x8x128xbf16> to vector<8x8x128xbf16>
    %38 = vector.shape_cast %37 : vector<8x8x128xbf16> to vector<64x128xbf16>
    %c5 = arith.constant 5 : index
    %c0_45 = arith.constant 0 : index
    %c0_46 = arith.constant 0 : index
    %39 = vector.load %arg5[%c5, %c0_45, %c0_46] : memref<27x128x128xbf16, #tpu.memory_space<vmem>>, vector<1x128x128xbf16>
    %40 = vector.shape_cast %39 : vector<1x128x128xbf16> to vector<128x128xbf16>
    %cst_47 = arith.constant dense<0.000000e+00> : vector<64x128xf32>
    %41 = tpu.matmul %38, %40, %cst_47 {dimension_numbers = #tpu.dot_dimension_numbers<[1], [0], [0], [1], [0, 0, 1, 1], [], []>} : vector<64x128xbf16>, vector<128x128xbf16>, vector<64x128xf32> -> vector<64x128xf32>
    %42 = arith.addf %35, %41 : vector<64x128xf32>
    %c0_48 = arith.constant 0 : index
    %c0_49 = arith.constant 0 : index
    %c2_50 = arith.constant 2 : index
    %c0_51 = arith.constant 0 : index
    %c0_52 = arith.constant 0 : index
    %43 = vector.load %arg2[%c0_48, %c0_49, %c2_50, %c0_51, %c0_52] : memref<1x1x10x10x128xbf16, #tpu.memory_space<vmem>>, vector<1x1x8x8x128xbf16>
    %44 = vector.shape_cast %43 : vector<1x1x8x8x128xbf16> to vector<8x8x128xbf16>
    %45 = vector.shape_cast %44 : vector<8x8x128xbf16> to vector<64x128xbf16>
    %c6 = arith.constant 6 : index
    %c0_53 = arith.constant 0 : index
    %c0_54 = arith.constant 0 : index
    %46 = vector.load %arg5[%c6, %c0_53, %c0_54] : memref<27x128x128xbf16, #tpu.memory_space<vmem>>, vector<1x128x128xbf16>
    %47 = vector.shape_cast %46 : vector<1x128x128xbf16> to vector<128x128xbf16>
    %cst_55 = arith.constant dense<0.000000e+00> : vector<64x128xf32>
    %48 = tpu.matmul %45, %47, %cst_55 {dimension_numbers = #tpu.dot_dimension_numbers<[1], [0], [0], [1], [0, 0, 1, 1], [], []>} : vector<64x128xbf16>, vector<128x128xbf16>, vector<64x128xf32> -> vector<64x128xf32>
    %49 = arith.addf %42, %48 : vector<64x128xf32>
    %c0_56 = arith.constant 0 : index
    %c0_57 = arith.constant 0 : index
    %c2_58 = arith.constant 2 : index
    %c1_59 = arith.constant 1 : index
    %c0_60 = arith.constant 0 : index
    %50 = vector.load %arg2[%c0_56, %c0_57, %c2_58, %c1_59, %c0_60] : memref<1x1x10x10x128xbf16, #tpu.memory_space<vmem>>, vector<1x1x8x8x128xbf16>
    %51 = vector.shape_cast %50 : vector<1x1x8x8x128xbf16> to vector<8x8x128xbf16>
    %52 = vector.shape_cast %51 : vector<8x8x128xbf16> to vector<64x128xbf16>
    %c7 = arith.constant 7 : index
    %c0_61 = arith.constant 0 : index
    %c0_62 = arith.constant 0 : index
    %53 = vector.load %arg5[%c7, %c0_61, %c0_62] : memref<27x128x128xbf16, #tpu.memory_space<vmem>>, vector<1x128x128xbf16>
    %54 = vector.shape_cast %53 : vector<1x128x128xbf16> to vector<128x128xbf16>
    %cst_63 = arith.constant dense<0.000000e+00> : vector<64x128xf32>
    %55 = tpu.matmul %52, %54, %cst_63 {dimension_numbers = #tpu.dot_dimension_numbers<[1], [0], [0], [1], [0, 0, 1, 1], [], []>} : vector<64x128xbf16>, vector<128x128xbf16>, vector<64x128xf32> -> vector<64x128xf32>
    %56 = arith.addf %49, %55 : vector<64x128xf32>
    %c0_64 = arith.constant 0 : index
    %c0_65 = arith.constant 0 : index
    %c2_66 = arith.constant 2 : index
    %c2_67 = arith.constant 2 : index
    %c0_68 = arith.constant 0 : index
    %57 = vector.load %arg2[%c0_64, %c0_65, %c2_66, %c2_67, %c0_68] : memref<1x1x10x10x128xbf16, #tpu.memory_space<vmem>>, vector<1x1x8x8x128xbf16>
    %58 = vector.shape_cast %57 : vector<1x1x8x8x128xbf16> to vector<8x8x128xbf16>
    %59 = vector.shape_cast %58 : vector<8x8x128xbf16> to vector<64x128xbf16>
    %c8 = arith.constant 8 : index
    %c0_69 = arith.constant 0 : index
    %c0_70 = arith.constant 0 : index
    %60 = vector.load %arg5[%c8, %c0_69, %c0_70] : memref<27x128x128xbf16, #tpu.memory_space<vmem>>, vector<1x128x128xbf16>
    %61 = vector.shape_cast %60 : vector<1x128x128xbf16> to vector<128x128xbf16>
    %cst_71 = arith.constant dense<0.000000e+00> : vector<64x128xf32>
    %62 = tpu.matmul %59, %61, %cst_71 {dimension_numbers = #tpu.dot_dimension_numbers<[1], [0], [0], [1], [0, 0, 1, 1], [], []>} : vector<64x128xbf16>, vector<128x128xbf16>, vector<64x128xf32> -> vector<64x128xf32>
    %63 = arith.addf %56, %62 : vector<64x128xf32>
    %c0_72 = arith.constant 0 : index
    %c0_73 = arith.constant 0 : index
    %c0_74 = arith.constant 0 : index
    %c0_75 = arith.constant 0 : index
    %c0_76 = arith.constant 0 : index
    %64 = vector.load %arg3[%c0_72, %c0_73, %c0_74, %c0_75, %c0_76] : memref<1x1x10x10x128xbf16, #tpu.memory_space<vmem>>, vector<1x1x8x8x128xbf16>
    %65 = vector.shape_cast %64 : vector<1x1x8x8x128xbf16> to vector<8x8x128xbf16>
    %66 = vector.shape_cast %65 : vector<8x8x128xbf16> to vector<64x128xbf16>
    %c9 = arith.constant 9 : index
    %c0_77 = arith.constant 0 : index
    %c0_78 = arith.constant 0 : index
    %67 = vector.load %arg5[%c9, %c0_77, %c0_78] : memref<27x128x128xbf16, #tpu.memory_space<vmem>>, vector<1x128x128xbf16>
    %68 = vector.shape_cast %67 : vector<1x128x128xbf16> to vector<128x128xbf16>
    %cst_79 = arith.constant dense<0.000000e+00> : vector<64x128xf32>
    %69 = tpu.matmul %66, %68, %cst_79 {dimension_numbers = #tpu.dot_dimension_numbers<[1], [0], [0], [1], [0, 0, 1, 1], [], []>} : vector<64x128xbf16>, vector<128x128xbf16>, vector<64x128xf32> -> vector<64x128xf32>
    %70 = arith.addf %63, %69 : vector<64x128xf32>
    %c0_80 = arith.constant 0 : index
    %c0_81 = arith.constant 0 : index
    %c0_82 = arith.constant 0 : index
    %c1_83 = arith.constant 1 : index
    %c0_84 = arith.constant 0 : index
    %71 = vector.load %arg3[%c0_80, %c0_81, %c0_82, %c1_83, %c0_84] : memref<1x1x10x10x128xbf16, #tpu.memory_space<vmem>>, vector<1x1x8x8x128xbf16>
    %72 = vector.shape_cast %71 : vector<1x1x8x8x128xbf16> to vector<8x8x128xbf16>
    %73 = vector.shape_cast %72 : vector<8x8x128xbf16> to vector<64x128xbf16>
    %c10 = arith.constant 10 : index
    %c0_85 = arith.constant 0 : index
    %c0_86 = arith.constant 0 : index
    %74 = vector.load %arg5[%c10, %c0_85, %c0_86] : memref<27x128x128xbf16, #tpu.memory_space<vmem>>, vector<1x128x128xbf16>
    %75 = vector.shape_cast %74 : vector<1x128x128xbf16> to vector<128x128xbf16>
    %cst_87 = arith.constant dense<0.000000e+00> : vector<64x128xf32>
    %76 = tpu.matmul %73, %75, %cst_87 {dimension_numbers = #tpu.dot_dimension_numbers<[1], [0], [0], [1], [0, 0, 1, 1], [], []>} : vector<64x128xbf16>, vector<128x128xbf16>, vector<64x128xf32> -> vector<64x128xf32>
    %77 = arith.addf %70, %76 : vector<64x128xf32>
    %c0_88 = arith.constant 0 : index
    %c0_89 = arith.constant 0 : index
    %c0_90 = arith.constant 0 : index
    %c2_91 = arith.constant 2 : index
    %c0_92 = arith.constant 0 : index
    %78 = vector.load %arg3[%c0_88, %c0_89, %c0_90, %c2_91, %c0_92] : memref<1x1x10x10x128xbf16, #tpu.memory_space<vmem>>, vector<1x1x8x8x128xbf16>
    %79 = vector.shape_cast %78 : vector<1x1x8x8x128xbf16> to vector<8x8x128xbf16>
    %80 = vector.shape_cast %79 : vector<8x8x128xbf16> to vector<64x128xbf16>
    %c11 = arith.constant 11 : index
    %c0_93 = arith.constant 0 : index
    %c0_94 = arith.constant 0 : index
    %81 = vector.load %arg5[%c11, %c0_93, %c0_94] : memref<27x128x128xbf16, #tpu.memory_space<vmem>>, vector<1x128x128xbf16>
    %82 = vector.shape_cast %81 : vector<1x128x128xbf16> to vector<128x128xbf16>
    %cst_95 = arith.constant dense<0.000000e+00> : vector<64x128xf32>
    %83 = tpu.matmul %80, %82, %cst_95 {dimension_numbers = #tpu.dot_dimension_numbers<[1], [0], [0], [1], [0, 0, 1, 1], [], []>} : vector<64x128xbf16>, vector<128x128xbf16>, vector<64x128xf32> -> vector<64x128xf32>
    %84 = arith.addf %77, %83 : vector<64x128xf32>
    %c0_96 = arith.constant 0 : index
    %c0_97 = arith.constant 0 : index
    %c1_98 = arith.constant 1 : index
    %c0_99 = arith.constant 0 : index
    %c0_100 = arith.constant 0 : index
    %85 = vector.load %arg3[%c0_96, %c0_97, %c1_98, %c0_99, %c0_100] : memref<1x1x10x10x128xbf16, #tpu.memory_space<vmem>>, vector<1x1x8x8x128xbf16>
    %86 = vector.shape_cast %85 : vector<1x1x8x8x128xbf16> to vector<8x8x128xbf16>
    %87 = vector.shape_cast %86 : vector<8x8x128xbf16> to vector<64x128xbf16>
    %c12 = arith.constant 12 : index
    %c0_101 = arith.constant 0 : index
    %c0_102 = arith.constant 0 : index
    %88 = vector.load %arg5[%c12, %c0_101, %c0_102] : memref<27x128x128xbf16, #tpu.memory_space<vmem>>, vector<1x128x128xbf16>
    %89 = vector.shape_cast %88 : vector<1x128x128xbf16> to vector<128x128xbf16>
    %cst_103 = arith.constant dense<0.000000e+00> : vector<64x128xf32>
    %90 = tpu.matmul %87, %89, %cst_103 {dimension_numbers = #tpu.dot_dimension_numbers<[1], [0], [0], [1], [0, 0, 1, 1], [], []>} : vector<64x128xbf16>, vector<128x128xbf16>, vector<64x128xf32> -> vector<64x128xf32>
    %91 = arith.addf %84, %90 : vector<64x128xf32>
    %c0_104 = arith.constant 0 : index
    %c0_105 = arith.constant 0 : index
    %c1_106 = arith.constant 1 : index
    %c1_107 = arith.constant 1 : index
    %c0_108 = arith.constant 0 : index
    %92 = vector.load %arg3[%c0_104, %c0_105, %c1_106, %c1_107, %c0_108] : memref<1x1x10x10x128xbf16, #tpu.memory_space<vmem>>, vector<1x1x8x8x128xbf16>
    %93 = vector.shape_cast %92 : vector<1x1x8x8x128xbf16> to vector<8x8x128xbf16>
    %94 = vector.shape_cast %93 : vector<8x8x128xbf16> to vector<64x128xbf16>
    %c13 = arith.constant 13 : index
    %c0_109 = arith.constant 0 : index
    %c0_110 = arith.constant 0 : index
    %95 = vector.load %arg5[%c13, %c0_109, %c0_110] : memref<27x128x128xbf16, #tpu.memory_space<vmem>>, vector<1x128x128xbf16>
    %96 = vector.shape_cast %95 : vector<1x128x128xbf16> to vector<128x128xbf16>
    %cst_111 = arith.constant dense<0.000000e+00> : vector<64x128xf32>
    %97 = tpu.matmul %94, %96, %cst_111 {dimension_numbers = #tpu.dot_dimension_numbers<[1], [0], [0], [1], [0, 0, 1, 1], [], []>} : vector<64x128xbf16>, vector<128x128xbf16>, vector<64x128xf32> -> vector<64x128xf32>
    %98 = arith.addf %91, %97 : vector<64x128xf32>
    %c0_112 = arith.constant 0 : index
    %c0_113 = arith.constant 0 : index
    %c1_114 = arith.constant 1 : index
    %c2_115 = arith.constant 2 : index
    %c0_116 = arith.constant 0 : index
    %99 = vector.load %arg3[%c0_112, %c0_113, %c1_114, %c2_115, %c0_116] : memref<1x1x10x10x128xbf16, #tpu.memory_space<vmem>>, vector<1x1x8x8x128xbf16>
    %100 = vector.shape_cast %99 : vector<1x1x8x8x128xbf16> to vector<8x8x128xbf16>
    %101 = vector.shape_cast %100 : vector<8x8x128xbf16> to vector<64x128xbf16>
    %c14 = arith.constant 14 : index
    %c0_117 = arith.constant 0 : index
    %c0_118 = arith.constant 0 : index
    %102 = vector.load %arg5[%c14, %c0_117, %c0_118] : memref<27x128x128xbf16, #tpu.memory_space<vmem>>, vector<1x128x128xbf16>
    %103 = vector.shape_cast %102 : vector<1x128x128xbf16> to vector<128x128xbf16>
    %cst_119 = arith.constant dense<0.000000e+00> : vector<64x128xf32>
    %104 = tpu.matmul %101, %103, %cst_119 {dimension_numbers = #tpu.dot_dimension_numbers<[1], [0], [0], [1], [0, 0, 1, 1], [], []>} : vector<64x128xbf16>, vector<128x128xbf16>, vector<64x128xf32> -> vector<64x128xf32>
    %105 = arith.addf %98, %104 : vector<64x128xf32>
    %c0_120 = arith.constant 0 : index
    %c0_121 = arith.constant 0 : index
    %c2_122 = arith.constant 2 : index
    %c0_123 = arith.constant 0 : index
    %c0_124 = arith.constant 0 : index
    %106 = vector.load %arg3[%c0_120, %c0_121, %c2_122, %c0_123, %c0_124] : memref<1x1x10x10x128xbf16, #tpu.memory_space<vmem>>, vector<1x1x8x8x128xbf16>
    %107 = vector.shape_cast %106 : vector<1x1x8x8x128xbf16> to vector<8x8x128xbf16>
    %108 = vector.shape_cast %107 : vector<8x8x128xbf16> to vector<64x128xbf16>
    %c15 = arith.constant 15 : index
    %c0_125 = arith.constant 0 : index
    %c0_126 = arith.constant 0 : index
    %109 = vector.load %arg5[%c15, %c0_125, %c0_126] : memref<27x128x128xbf16, #tpu.memory_space<vmem>>, vector<1x128x128xbf16>
    %110 = vector.shape_cast %109 : vector<1x128x128xbf16> to vector<128x128xbf16>
    %cst_127 = arith.constant dense<0.000000e+00> : vector<64x128xf32>
    %111 = tpu.matmul %108, %110, %cst_127 {dimension_numbers = #tpu.dot_dimension_numbers<[1], [0], [0], [1], [0, 0, 1, 1], [], []>} : vector<64x128xbf16>, vector<128x128xbf16>, vector<64x128xf32> -> vector<64x128xf32>
    %112 = arith.addf %105, %111 : vector<64x128xf32>
    %c0_128 = arith.constant 0 : index
    %c0_129 = arith.constant 0 : index
    %c2_130 = arith.constant 2 : index
    %c1_131 = arith.constant 1 : index
    %c0_132 = arith.constant 0 : index
    %113 = vector.load %arg3[%c0_128, %c0_129, %c2_130, %c1_131, %c0_132] : memref<1x1x10x10x128xbf16, #tpu.memory_space<vmem>>, vector<1x1x8x8x128xbf16>
    %114 = vector.shape_cast %113 : vector<1x1x8x8x128xbf16> to vector<8x8x128xbf16>
    %115 = vector.shape_cast %114 : vector<8x8x128xbf16> to vector<64x128xbf16>
    %c16 = arith.constant 16 : index
    %c0_133 = arith.constant 0 : index
    %c0_134 = arith.constant 0 : index
    %116 = vector.load %arg5[%c16, %c0_133, %c0_134] : memref<27x128x128xbf16, #tpu.memory_space<vmem>>, vector<1x128x128xbf16>
    %117 = vector.shape_cast %116 : vector<1x128x128xbf16> to vector<128x128xbf16>
    %cst_135 = arith.constant dense<0.000000e+00> : vector<64x128xf32>
    %118 = tpu.matmul %115, %117, %cst_135 {dimension_numbers = #tpu.dot_dimension_numbers<[1], [0], [0], [1], [0, 0, 1, 1], [], []>} : vector<64x128xbf16>, vector<128x128xbf16>, vector<64x128xf32> -> vector<64x128xf32>
    %119 = arith.addf %112, %118 : vector<64x128xf32>
    %c0_136 = arith.constant 0 : index
    %c0_137 = arith.constant 0 : index
    %c2_138 = arith.constant 2 : index
    %c2_139 = arith.constant 2 : index
    %c0_140 = arith.constant 0 : index
    %120 = vector.load %arg3[%c0_136, %c0_137, %c2_138, %c2_139, %c0_140] : memref<1x1x10x10x128xbf16, #tpu.memory_space<vmem>>, vector<1x1x8x8x128xbf16>
    %121 = vector.shape_cast %120 : vector<1x1x8x8x128xbf16> to vector<8x8x128xbf16>
    %122 = vector.shape_cast %121 : vector<8x8x128xbf16> to vector<64x128xbf16>
    %c17 = arith.constant 17 : index
    %c0_141 = arith.constant 0 : index
    %c0_142 = arith.constant 0 : index
    %123 = vector.load %arg5[%c17, %c0_141, %c0_142] : memref<27x128x128xbf16, #tpu.memory_space<vmem>>, vector<1x128x128xbf16>
    %124 = vector.shape_cast %123 : vector<1x128x128xbf16> to vector<128x128xbf16>
    %cst_143 = arith.constant dense<0.000000e+00> : vector<64x128xf32>
    %125 = tpu.matmul %122, %124, %cst_143 {dimension_numbers = #tpu.dot_dimension_numbers<[1], [0], [0], [1], [0, 0, 1, 1], [], []>} : vector<64x128xbf16>, vector<128x128xbf16>, vector<64x128xf32> -> vector<64x128xf32>
    %126 = arith.addf %119, %125 : vector<64x128xf32>
    %c0_144 = arith.constant 0 : index
    %c0_145 = arith.constant 0 : index
    %c0_146 = arith.constant 0 : index
    %c0_147 = arith.constant 0 : index
    %c0_148 = arith.constant 0 : index
    %127 = vector.load %arg4[%c0_144, %c0_145, %c0_146, %c0_147, %c0_148] : memref<1x1x10x10x128xbf16, #tpu.memory_space<vmem>>, vector<1x1x8x8x128xbf16>
    %128 = vector.shape_cast %127 : vector<1x1x8x8x128xbf16> to vector<8x8x128xbf16>
    %129 = vector.shape_cast %128 : vector<8x8x128xbf16> to vector<64x128xbf16>
    %c18 = arith.constant 18 : index
    %c0_149 = arith.constant 0 : index
    %c0_150 = arith.constant 0 : index
    %130 = vector.load %arg5[%c18, %c0_149, %c0_150] : memref<27x128x128xbf16, #tpu.memory_space<vmem>>, vector<1x128x128xbf16>
    %131 = vector.shape_cast %130 : vector<1x128x128xbf16> to vector<128x128xbf16>
    %cst_151 = arith.constant dense<0.000000e+00> : vector<64x128xf32>
    %132 = tpu.matmul %129, %131, %cst_151 {dimension_numbers = #tpu.dot_dimension_numbers<[1], [0], [0], [1], [0, 0, 1, 1], [], []>} : vector<64x128xbf16>, vector<128x128xbf16>, vector<64x128xf32> -> vector<64x128xf32>
    %133 = arith.addf %126, %132 : vector<64x128xf32>
    %c0_152 = arith.constant 0 : index
    %c0_153 = arith.constant 0 : index
    %c0_154 = arith.constant 0 : index
    %c1_155 = arith.constant 1 : index
    %c0_156 = arith.constant 0 : index
    %134 = vector.load %arg4[%c0_152, %c0_153, %c0_154, %c1_155, %c0_156] : memref<1x1x10x10x128xbf16, #tpu.memory_space<vmem>>, vector<1x1x8x8x128xbf16>
    %135 = vector.shape_cast %134 : vector<1x1x8x8x128xbf16> to vector<8x8x128xbf16>
    %136 = vector.shape_cast %135 : vector<8x8x128xbf16> to vector<64x128xbf16>
    %c19 = arith.constant 19 : index
    %c0_157 = arith.constant 0 : index
    %c0_158 = arith.constant 0 : index
    %137 = vector.load %arg5[%c19, %c0_157, %c0_158] : memref<27x128x128xbf16, #tpu.memory_space<vmem>>, vector<1x128x128xbf16>
    %138 = vector.shape_cast %137 : vector<1x128x128xbf16> to vector<128x128xbf16>
    %cst_159 = arith.constant dense<0.000000e+00> : vector<64x128xf32>
    %139 = tpu.matmul %136, %138, %cst_159 {dimension_numbers = #tpu.dot_dimension_numbers<[1], [0], [0], [1], [0, 0, 1, 1], [], []>} : vector<64x128xbf16>, vector<128x128xbf16>, vector<64x128xf32> -> vector<64x128xf32>
    %140 = arith.addf %133, %139 : vector<64x128xf32>
    %c0_160 = arith.constant 0 : index
    %c0_161 = arith.constant 0 : index
    %c0_162 = arith.constant 0 : index
    %c2_163 = arith.constant 2 : index
    %c0_164 = arith.constant 0 : index
    %141 = vector.load %arg4[%c0_160, %c0_161, %c0_162, %c2_163, %c0_164] : memref<1x1x10x10x128xbf16, #tpu.memory_space<vmem>>, vector<1x1x8x8x128xbf16>
    %142 = vector.shape_cast %141 : vector<1x1x8x8x128xbf16> to vector<8x8x128xbf16>
    %143 = vector.shape_cast %142 : vector<8x8x128xbf16> to vector<64x128xbf16>
    %c20 = arith.constant 20 : index
    %c0_165 = arith.constant 0 : index
    %c0_166 = arith.constant 0 : index
    %144 = vector.load %arg5[%c20, %c0_165, %c0_166] : memref<27x128x128xbf16, #tpu.memory_space<vmem>>, vector<1x128x128xbf16>
    %145 = vector.shape_cast %144 : vector<1x128x128xbf16> to vector<128x128xbf16>
    %cst_167 = arith.constant dense<0.000000e+00> : vector<64x128xf32>
    %146 = tpu.matmul %143, %145, %cst_167 {dimension_numbers = #tpu.dot_dimension_numbers<[1], [0], [0], [1], [0, 0, 1, 1], [], []>} : vector<64x128xbf16>, vector<128x128xbf16>, vector<64x128xf32> -> vector<64x128xf32>
    %147 = arith.addf %140, %146 : vector<64x128xf32>
    %c0_168 = arith.constant 0 : index
    %c0_169 = arith.constant 0 : index
    %c1_170 = arith.constant 1 : index
    %c0_171 = arith.constant 0 : index
    %c0_172 = arith.constant 0 : index
    %148 = vector.load %arg4[%c0_168, %c0_169, %c1_170, %c0_171, %c0_172] : memref<1x1x10x10x128xbf16, #tpu.memory_space<vmem>>, vector<1x1x8x8x128xbf16>
    %149 = vector.shape_cast %148 : vector<1x1x8x8x128xbf16> to vector<8x8x128xbf16>
    %150 = vector.shape_cast %149 : vector<8x8x128xbf16> to vector<64x128xbf16>
    %c21 = arith.constant 21 : index
    %c0_173 = arith.constant 0 : index
    %c0_174 = arith.constant 0 : index
    %151 = vector.load %arg5[%c21, %c0_173, %c0_174] : memref<27x128x128xbf16, #tpu.memory_space<vmem>>, vector<1x128x128xbf16>
    %152 = vector.shape_cast %151 : vector<1x128x128xbf16> to vector<128x128xbf16>
    %cst_175 = arith.constant dense<0.000000e+00> : vector<64x128xf32>
    %153 = tpu.matmul %150, %152, %cst_175 {dimension_numbers = #tpu.dot_dimension_numbers<[1], [0], [0], [1], [0, 0, 1, 1], [], []>} : vector<64x128xbf16>, vector<128x128xbf16>, vector<64x128xf32> -> vector<64x128xf32>
    %154 = arith.addf %147, %153 : vector<64x128xf32>
    %c0_176 = arith.constant 0 : index
    %c0_177 = arith.constant 0 : index
    %c1_178 = arith.constant 1 : index
    %c1_179 = arith.constant 1 : index
    %c0_180 = arith.constant 0 : index
    %155 = vector.load %arg4[%c0_176, %c0_177, %c1_178, %c1_179, %c0_180] : memref<1x1x10x10x128xbf16, #tpu.memory_space<vmem>>, vector<1x1x8x8x128xbf16>
    %156 = vector.shape_cast %155 : vector<1x1x8x8x128xbf16> to vector<8x8x128xbf16>
    %157 = vector.shape_cast %156 : vector<8x8x128xbf16> to vector<64x128xbf16>
    %c22 = arith.constant 22 : index
    %c0_181 = arith.constant 0 : index
    %c0_182 = arith.constant 0 : index
    %158 = vector.load %arg5[%c22, %c0_181, %c0_182] : memref<27x128x128xbf16, #tpu.memory_space<vmem>>, vector<1x128x128xbf16>
    %159 = vector.shape_cast %158 : vector<1x128x128xbf16> to vector<128x128xbf16>
    %cst_183 = arith.constant dense<0.000000e+00> : vector<64x128xf32>
    %160 = tpu.matmul %157, %159, %cst_183 {dimension_numbers = #tpu.dot_dimension_numbers<[1], [0], [0], [1], [0, 0, 1, 1], [], []>} : vector<64x128xbf16>, vector<128x128xbf16>, vector<64x128xf32> -> vector<64x128xf32>
    %161 = arith.addf %154, %160 : vector<64x128xf32>
    %c0_184 = arith.constant 0 : index
    %c0_185 = arith.constant 0 : index
    %c1_186 = arith.constant 1 : index
    %c2_187 = arith.constant 2 : index
    %c0_188 = arith.constant 0 : index
    %162 = vector.load %arg4[%c0_184, %c0_185, %c1_186, %c2_187, %c0_188] : memref<1x1x10x10x128xbf16, #tpu.memory_space<vmem>>, vector<1x1x8x8x128xbf16>
    %163 = vector.shape_cast %162 : vector<1x1x8x8x128xbf16> to vector<8x8x128xbf16>
    %164 = vector.shape_cast %163 : vector<8x8x128xbf16> to vector<64x128xbf16>
    %c23 = arith.constant 23 : index
    %c0_189 = arith.constant 0 : index
    %c0_190 = arith.constant 0 : index
    %165 = vector.load %arg5[%c23, %c0_189, %c0_190] : memref<27x128x128xbf16, #tpu.memory_space<vmem>>, vector<1x128x128xbf16>
    %166 = vector.shape_cast %165 : vector<1x128x128xbf16> to vector<128x128xbf16>
    %cst_191 = arith.constant dense<0.000000e+00> : vector<64x128xf32>
    %167 = tpu.matmul %164, %166, %cst_191 {dimension_numbers = #tpu.dot_dimension_numbers<[1], [0], [0], [1], [0, 0, 1, 1], [], []>} : vector<64x128xbf16>, vector<128x128xbf16>, vector<64x128xf32> -> vector<64x128xf32>
    %168 = arith.addf %161, %167 : vector<64x128xf32>
    %c0_192 = arith.constant 0 : index
    %c0_193 = arith.constant 0 : index
    %c2_194 = arith.constant 2 : index
    %c0_195 = arith.constant 0 : index
    %c0_196 = arith.constant 0 : index
    %169 = vector.load %arg4[%c0_192, %c0_193, %c2_194, %c0_195, %c0_196] : memref<1x1x10x10x128xbf16, #tpu.memory_space<vmem>>, vector<1x1x8x8x128xbf16>
    %170 = vector.shape_cast %169 : vector<1x1x8x8x128xbf16> to vector<8x8x128xbf16>
    %171 = vector.shape_cast %170 : vector<8x8x128xbf16> to vector<64x128xbf16>
    %c24 = arith.constant 24 : index
    %c0_197 = arith.constant 0 : index
    %c0_198 = arith.constant 0 : index
    %172 = vector.load %arg5[%c24, %c0_197, %c0_198] : memref<27x128x128xbf16, #tpu.memory_space<vmem>>, vector<1x128x128xbf16>
    %173 = vector.shape_cast %172 : vector<1x128x128xbf16> to vector<128x128xbf16>
    %cst_199 = arith.constant dense<0.000000e+00> : vector<64x128xf32>
    %174 = tpu.matmul %171, %173, %cst_199 {dimension_numbers = #tpu.dot_dimension_numbers<[1], [0], [0], [1], [0, 0, 1, 1], [], []>} : vector<64x128xbf16>, vector<128x128xbf16>, vector<64x128xf32> -> vector<64x128xf32>
    %175 = arith.addf %168, %174 : vector<64x128xf32>
    %c0_200 = arith.constant 0 : index
    %c0_201 = arith.constant 0 : index
    %c2_202 = arith.constant 2 : index
    %c1_203 = arith.constant 1 : index
    %c0_204 = arith.constant 0 : index
    %176 = vector.load %arg4[%c0_200, %c0_201, %c2_202, %c1_203, %c0_204] : memref<1x1x10x10x128xbf16, #tpu.memory_space<vmem>>, vector<1x1x8x8x128xbf16>
    %177 = vector.shape_cast %176 : vector<1x1x8x8x128xbf16> to vector<8x8x128xbf16>
    %178 = vector.shape_cast %177 : vector<8x8x128xbf16> to vector<64x128xbf16>
    %c25 = arith.constant 25 : index
    %c0_205 = arith.constant 0 : index
    %c0_206 = arith.constant 0 : index
    %179 = vector.load %arg5[%c25, %c0_205, %c0_206] : memref<27x128x128xbf16, #tpu.memory_space<vmem>>, vector<1x128x128xbf16>
    %180 = vector.shape_cast %179 : vector<1x128x128xbf16> to vector<128x128xbf16>
    %cst_207 = arith.constant dense<0.000000e+00> : vector<64x128xf32>
    %181 = tpu.matmul %178, %180, %cst_207 {dimension_numbers = #tpu.dot_dimension_numbers<[1], [0], [0], [1], [0, 0, 1, 1], [], []>} : vector<64x128xbf16>, vector<128x128xbf16>, vector<64x128xf32> -> vector<64x128xf32>
    %182 = arith.addf %175, %181 : vector<64x128xf32>
    %c0_208 = arith.constant 0 : index
    %c0_209 = arith.constant 0 : index
    %c2_210 = arith.constant 2 : index
    %c2_211 = arith.constant 2 : index
    %c0_212 = arith.constant 0 : index
    %183 = vector.load %arg4[%c0_208, %c0_209, %c2_210, %c2_211, %c0_212] : memref<1x1x10x10x128xbf16, #tpu.memory_space<vmem>>, vector<1x1x8x8x128xbf16>
    %184 = vector.shape_cast %183 : vector<1x1x8x8x128xbf16> to vector<8x8x128xbf16>
    %185 = vector.shape_cast %184 : vector<8x8x128xbf16> to vector<64x128xbf16>
    %c26 = arith.constant 26 : index
    %c0_213 = arith.constant 0 : index
    %c0_214 = arith.constant 0 : index
    %186 = vector.load %arg5[%c26, %c0_213, %c0_214] : memref<27x128x128xbf16, #tpu.memory_space<vmem>>, vector<1x128x128xbf16>
    %187 = vector.shape_cast %186 : vector<1x128x128xbf16> to vector<128x128xbf16>
    %cst_215 = arith.constant dense<0.000000e+00> : vector<64x128xf32>
    %188 = tpu.matmul %185, %187, %cst_215 {dimension_numbers = #tpu.dot_dimension_numbers<[1], [0], [0], [1], [0, 0, 1, 1], [], []>} : vector<64x128xbf16>, vector<128x128xbf16>, vector<64x128xf32> -> vector<64x128xf32>
    %189 = arith.addf %182, %188 : vector<64x128xf32>
    %c0_216 = arith.constant 0 : index
    %c0_217 = arith.constant 0 : index
    %190 = vector.load %arg6[%c0_216, %c0_217] : memref<1x128xf32, #tpu.memory_space<vmem>>, vector<1x128xf32>
    %191 = vector.broadcast %190 : vector<1x128xf32> to vector<64x128xf32>
    %192 = arith.addf %189, %191 : vector<64x128xf32>
    %193 = arith.truncf %192 : vector<64x128xf32> to vector<64x128xbf16>
    %c0_218 = arith.constant 0 : index
    %c0_219 = arith.constant 0 : index
    %c0_220 = arith.constant 0 : index
    %c0_221 = arith.constant 0 : index
    %194 = vector.load %arg7[%c0_218, %c0_219, %c0_220, %c0_221] : memref<1x1x64x128xbf16, #tpu.memory_space<vmem>>, vector<1x1x64x128xbf16>
    %195 = vector.shape_cast %194 : vector<1x1x64x128xbf16> to vector<64x128xbf16>
    %196 = vector.shape_cast %193 : vector<64x128xbf16> to vector<1x1x64x128xbf16>
    tpu.vector_store %arg7[%c0_218, %c0_219, %c0_220, %c0_221], %196 {strides = array<i32>} : memref<1x1x64x128xbf16, #tpu.memory_space<vmem>>, vector<1x1x64x128xbf16>,
    %cst_222 = arith.constant 0.000000e+00 : f32
    %197 = vector.broadcast %cst_222 : f32 to vector<1x1x8x128xf32>
    %198 = vector.shape_cast %192 : vector<64x128xf32> to vector<1x64x128xf32>
    %cst_223 = arith.constant dense<0.000000e+00> : vector<1xf32>
    %199 = vector.multi_reduction <add>, %198, %cst_223 [1, 2] : vector<1x64x128xf32> to vector<1xf32>
    %200 = vector.shape_cast %199 : vector<1xf32> to vector<1x1x1xf32>
    %201 = vector.extract %200[0, 0, 0] : f32 from vector<1x1x1xf32>
    %202 = vector.broadcast %201 : f32 to vector<1x1x8x128xf32>
    %203 = arith.addf %197, %202 : vector<1x1x8x128xf32>
    %c0_224 = arith.constant 0 : index
    %c0_225 = arith.constant 0 : index
    %c0_226 = arith.constant 0 : index
    %c0_227 = arith.constant 0 : index
    %204 = vector.load %arg8[%c0_224, %c0_225, %c0_226, %c0_227] : memref<1x1x8x128xf32, #tpu.memory_space<vmem>>, vector<1x1x8x128xf32>
    tpu.vector_store %arg8[%c0_224, %c0_225, %c0_226, %c0_227], %203 {strides = array<i32>} : memref<1x1x8x128xf32, #tpu.memory_space<vmem>>, vector<1x1x8x128xf32>,
    %cst_228 = arith.constant 0.000000e+00 : f32
    %205 = vector.broadcast %cst_228 : f32 to vector<1x1x8x128xf32>
    %206 = arith.mulf %192, %192 : vector<64x128xf32>
    %207 = vector.shape_cast %206 : vector<64x128xf32> to vector<1x64x128xf32>
    %cst_229 = arith.constant dense<0.000000e+00> : vector<1xf32>
    %208 = vector.multi_reduction <add>, %207, %cst_229 [1, 2] : vector<1x64x128xf32> to vector<1xf32>
    %209 = vector.shape_cast %208 : vector<1xf32> to vector<1x1x1xf32>
    %210 = vector.extract %209[0, 0, 0] : f32 from vector<1x1x1xf32>
    %211 = vector.broadcast %210 : f32 to vector<1x1x8x128xf32>
    %212 = arith.addf %205, %211 : vector<1x1x8x128xf32>
    %c0_230 = arith.constant 0 : index
    %c0_231 = arith.constant 0 : index
    %c0_232 = arith.constant 0 : index
    %c0_233 = arith.constant 0 : index
    %213 = vector.load %arg9[%c0_230, %c0_231, %c0_232, %c0_233] : memref<1x1x8x128xf32, #tpu.memory_space<vmem>>, vector<1x1x8x128xf32>
    tpu.vector_store %arg9[%c0_230, %c0_231, %c0_232, %c0_233], %212 {strides = array<i32>} : memref<1x1x8x128xf32, #tpu.memory_space<vmem>>, vector<1x1x8x128xf32>,
    return
  }
  func.func @transform_0(%arg0: i32, %arg1: i32) -> (i32, i32, i32, i32, i32) {
    %c0_i32 = arith.constant 0 : i32
    %0 = arith.addi %arg1, %c0_i32 : i32
    %c0_i32_0 = arith.constant 0 : i32
    %c0_i32_1 = arith.constant 0 : i32
    %c0_i32_2 = arith.constant 0 : i32
    %c0_i32_3 = arith.constant 0 : i32
    return %arg0, %0, %c0_i32_0, %c0_i32_1, %c0_i32_2 : i32, i32, i32, i32, i32
  }
  func.func @transform_1(%arg0: i32, %arg1: i32) -> (i32, i32, i32, i32, i32) {
    %c1_i32 = arith.constant 1 : i32
    %0 = arith.addi %arg1, %c1_i32 : i32
    %c0_i32 = arith.constant 0 : i32
    %c0_i32_0 = arith.constant 0 : i32
    %c0_i32_1 = arith.constant 0 : i32
    %c0_i32_2 = arith.constant 0 : i32
    return %arg0, %0, %c0_i32, %c0_i32_0, %c0_i32_1 : i32, i32, i32, i32, i32
  }
  func.func @transform_2(%arg0: i32, %arg1: i32) -> (i32, i32, i32, i32, i32) {
    %c2_i32 = arith.constant 2 : i32
    %0 = arith.addi %arg1, %c2_i32 : i32
    %c0_i32 = arith.constant 0 : i32
    %c0_i32_0 = arith.constant 0 : i32
    %c0_i32_1 = arith.constant 0 : i32
    %c0_i32_2 = arith.constant 0 : i32
    return %arg0, %0, %c0_i32, %c0_i32_0, %c0_i32_1 : i32, i32, i32, i32, i32
  }
  func.func @transform_3(%arg0: i32, %arg1: i32) -> (i32, i32, i32) {
    %c0_i32 = arith.constant 0 : i32
    %c0_i32_0 = arith.constant 0 : i32
    %c0_i32_1 = arith.constant 0 : i32
    %c0_i32_2 = arith.constant 0 : i32
    return %c0_i32, %c0_i32_0, %c0_i32_1 : i32, i32, i32
  }
  func.func @transform_4(%arg0: i32, %arg1: i32) -> (i32, i32) {
    %c0_i32 = arith.constant 0 : i32
    %c0_i32_0 = arith.constant 0 : i32
    %c0_i32_1 = arith.constant 0 : i32
    return %c0_i32, %c0_i32_0 : i32, i32
  }
  func.func @transform_5(%arg0: i32, %arg1: i32) -> (i32, i32, i32, i32) {
    %c0_i32 = arith.constant 0 : i32
    %c0_i32_0 = arith.constant 0 : i32
    %c0_i32_1 = arith.constant 0 : i32
    return %arg0, %arg1, %c0_i32, %c0_i32_0 : i32, i32, i32, i32
  }
  func.func @transform_6(%arg0: i32, %arg1: i32) -> (i32, i32, i32, i32) {
    %c0_i32 = arith.constant 0 : i32
    %c0_i32_0 = arith.constant 0 : i32
    %c0_i32_1 = arith.constant 0 : i32
    return %arg0, %arg1, %c0_i32, %c0_i32_0 : i32, i32, i32, i32
  }
  func.func @transform_7(%arg0: i32, %arg1: i32) -> (i32, i32, i32, i32) {
    %c0_i32 = arith.constant 0 : i32
    %c0_i32_0 = arith.constant 0 : i32
    %c0_i32_1 = arith.constant 0 : i32
    return %arg0, %arg1, %c0_i32, %c0_i32_0 : i32, i32, i32, i32
  }
}

module attributes {stable_mosaic.version = 11 : i64} {
  func.func @_affine_kernel(%arg0: i32, %arg1: i32, %arg2: memref<1x512x128xbf16, #tpu.memory_space<vmem>>, %arg3: memref<1x1x128xf32, #tpu.memory_space<vmem>>, %arg4: memref<1x1x128xf32, #tpu.memory_space<vmem>>, %arg5: memref<1x512x128xbf16, #tpu.memory_space<vmem>>) attributes {dimension_semantics = [#tpu.dimension_semantics<parallel>, #tpu.dimension_semantics<parallel>], iteration_bounds = array<i64: 2, 1>, scalar_prefetch = 0 : i64, scratch_operands = 0 : i64, tpu.core_type = #tpu.core_type<tc>, window_params = [{transform_indices = @transform_0, window_bounds = array<i64: 1, 512, 128>}, {transform_indices = @transform_1, window_bounds = array<i64: 1, 1, 128>}, {transform_indices = @transform_2, window_bounds = array<i64: 1, 1, 128>}, {transform_indices = @transform_3, window_bounds = array<i64: 1, 512, 128>}]} {
    %c0 = arith.constant 0 : index
    %c0_0 = arith.constant 0 : index
    %c0_1 = arith.constant 0 : index
    %0 = vector.load %arg2[%c0, %c0_0, %c0_1] : memref<1x512x128xbf16, #tpu.memory_space<vmem>>, vector<1x512x128xbf16>
    %1 = arith.extf %0 : vector<1x512x128xbf16> to vector<1x512x128xf32>
    %c0_2 = arith.constant 0 : index
    %c0_3 = arith.constant 0 : index
    %c0_4 = arith.constant 0 : index
    %2 = vector.load %arg3[%c0_2, %c0_3, %c0_4] : memref<1x1x128xf32, #tpu.memory_space<vmem>>, vector<1x1x128xf32>
    %3 = vector.broadcast %2 : vector<1x1x128xf32> to vector<1x512x128xf32>
    %4 = arith.mulf %1, %3 : vector<1x512x128xf32>
    %c0_5 = arith.constant 0 : index
    %c0_6 = arith.constant 0 : index
    %c0_7 = arith.constant 0 : index
    %5 = vector.load %arg4[%c0_5, %c0_6, %c0_7] : memref<1x1x128xf32, #tpu.memory_space<vmem>>, vector<1x1x128xf32>
    %6 = vector.broadcast %5 : vector<1x1x128xf32> to vector<1x512x128xf32>
    %7 = arith.addf %4, %6 : vector<1x512x128xf32>
    %cst = arith.constant 0.000000e+00 : f32
    %8 = vector.broadcast %cst : f32 to vector<1x512x128xf32>
    %9 = arith.maximumf %7, %8 : vector<1x512x128xf32>
    %10 = arith.truncf %9 : vector<1x512x128xf32> to vector<1x512x128xbf16>
    %c0_8 = arith.constant 0 : index
    %c0_9 = arith.constant 0 : index
    %c0_10 = arith.constant 0 : index
    %11 = vector.load %arg5[%c0_8, %c0_9, %c0_10] : memref<1x512x128xbf16, #tpu.memory_space<vmem>>, vector<1x512x128xbf16>
    tpu.vector_store %arg5[%c0_8, %c0_9, %c0_10], %10 {strides = array<i32>} : memref<1x512x128xbf16, #tpu.memory_space<vmem>>, vector<1x512x128xbf16>,
    return
  }
  func.func @transform_0(%arg0: i32, %arg1: i32) -> (i32, i32, i32) {
    %c0_i32 = arith.constant 0 : i32
    %c0_i32_0 = arith.constant 0 : i32
    return %arg0, %arg1, %c0_i32 : i32, i32, i32
  }
  func.func @transform_1(%arg0: i32, %arg1: i32) -> (i32, i32, i32) {
    %c0_i32 = arith.constant 0 : i32
    %c0_i32_0 = arith.constant 0 : i32
    %c0_i32_1 = arith.constant 0 : i32
    return %arg0, %c0_i32, %c0_i32_0 : i32, i32, i32
  }
  func.func @transform_2(%arg0: i32, %arg1: i32) -> (i32, i32, i32) {
    %c0_i32 = arith.constant 0 : i32
    %c0_i32_0 = arith.constant 0 : i32
    %c0_i32_1 = arith.constant 0 : i32
    return %arg0, %c0_i32, %c0_i32_0 : i32, i32, i32
  }
  func.func @transform_3(%arg0: i32, %arg1: i32) -> (i32, i32, i32) {
    %c0_i32 = arith.constant 0 : i32
    %c0_i32_0 = arith.constant 0 : i32
    return %arg0, %arg1, %c0_i32 : i32, i32, i32
  }
}

module attributes {stable_mosaic.version = 11 : i64} {
  func.func @_affine_res_kernel(%arg0: i32, %arg1: i32, %arg2: memref<1x512x128xbf16, #tpu.memory_space<vmem>>, %arg3: memref<1x1x128xf32, #tpu.memory_space<vmem>>, %arg4: memref<1x1x128xf32, #tpu.memory_space<vmem>>, %arg5: memref<1x512x128xbf16, #tpu.memory_space<vmem>>, %arg6: memref<1x512x128xbf16, #tpu.memory_space<vmem>>) attributes {dimension_semantics = [#tpu.dimension_semantics<parallel>, #tpu.dimension_semantics<parallel>], iteration_bounds = array<i64: 2, 1>, scalar_prefetch = 0 : i64, scratch_operands = 0 : i64, tpu.core_type = #tpu.core_type<tc>, window_params = [{transform_indices = @transform_0, window_bounds = array<i64: 1, 512, 128>}, {transform_indices = @transform_1, window_bounds = array<i64: 1, 1, 128>}, {transform_indices = @transform_2, window_bounds = array<i64: 1, 1, 128>}, {transform_indices = @transform_3, window_bounds = array<i64: 1, 512, 128>}, {transform_indices = @transform_4, window_bounds = array<i64: 1, 512, 128>}]} {
    %c0 = arith.constant 0 : index
    %c0_0 = arith.constant 0 : index
    %c0_1 = arith.constant 0 : index
    %0 = vector.load %arg2[%c0, %c0_0, %c0_1] : memref<1x512x128xbf16, #tpu.memory_space<vmem>>, vector<1x512x128xbf16>
    %1 = arith.extf %0 : vector<1x512x128xbf16> to vector<1x512x128xf32>
    %c0_2 = arith.constant 0 : index
    %c0_3 = arith.constant 0 : index
    %c0_4 = arith.constant 0 : index
    %2 = vector.load %arg3[%c0_2, %c0_3, %c0_4] : memref<1x1x128xf32, #tpu.memory_space<vmem>>, vector<1x1x128xf32>
    %3 = vector.broadcast %2 : vector<1x1x128xf32> to vector<1x512x128xf32>
    %4 = arith.mulf %1, %3 : vector<1x512x128xf32>
    %c0_5 = arith.constant 0 : index
    %c0_6 = arith.constant 0 : index
    %c0_7 = arith.constant 0 : index
    %5 = vector.load %arg4[%c0_5, %c0_6, %c0_7] : memref<1x1x128xf32, #tpu.memory_space<vmem>>, vector<1x1x128xf32>
    %6 = vector.broadcast %5 : vector<1x1x128xf32> to vector<1x512x128xf32>
    %7 = arith.addf %4, %6 : vector<1x512x128xf32>
    %c0_8 = arith.constant 0 : index
    %c0_9 = arith.constant 0 : index
    %c0_10 = arith.constant 0 : index
    %8 = vector.load %arg5[%c0_8, %c0_9, %c0_10] : memref<1x512x128xbf16, #tpu.memory_space<vmem>>, vector<1x512x128xbf16>
    %9 = arith.extf %8 : vector<1x512x128xbf16> to vector<1x512x128xf32>
    %10 = arith.addf %7, %9 : vector<1x512x128xf32>
    %cst = arith.constant 0.000000e+00 : f32
    %11 = vector.broadcast %cst : f32 to vector<1x512x128xf32>
    %12 = arith.maximumf %10, %11 : vector<1x512x128xf32>
    %13 = arith.truncf %12 : vector<1x512x128xf32> to vector<1x512x128xbf16>
    %c0_11 = arith.constant 0 : index
    %c0_12 = arith.constant 0 : index
    %c0_13 = arith.constant 0 : index
    %14 = vector.load %arg6[%c0_11, %c0_12, %c0_13] : memref<1x512x128xbf16, #tpu.memory_space<vmem>>, vector<1x512x128xbf16>
    tpu.vector_store %arg6[%c0_11, %c0_12, %c0_13], %13 {strides = array<i32>} : memref<1x512x128xbf16, #tpu.memory_space<vmem>>, vector<1x512x128xbf16>,
    return
  }
  func.func @transform_0(%arg0: i32, %arg1: i32) -> (i32, i32, i32) {
    %c0_i32 = arith.constant 0 : i32
    %c0_i32_0 = arith.constant 0 : i32
    return %arg0, %arg1, %c0_i32 : i32, i32, i32
  }
  func.func @transform_1(%arg0: i32, %arg1: i32) -> (i32, i32, i32) {
    %c0_i32 = arith.constant 0 : i32
    %c0_i32_0 = arith.constant 0 : i32
    %c0_i32_1 = arith.constant 0 : i32
    return %arg0, %c0_i32, %c0_i32_0 : i32, i32, i32
  }
  func.func @transform_2(%arg0: i32, %arg1: i32) -> (i32, i32, i32) {
    %c0_i32 = arith.constant 0 : i32
    %c0_i32_0 = arith.constant 0 : i32
    %c0_i32_1 = arith.constant 0 : i32
    return %arg0, %c0_i32, %c0_i32_0 : i32, i32, i32
  }
  func.func @transform_3(%arg0: i32, %arg1: i32) -> (i32, i32, i32) {
    %c0_i32 = arith.constant 0 : i32
    %c0_i32_0 = arith.constant 0 : i32
    return %arg0, %arg1, %c0_i32 : i32, i32, i32
  }
  func.func @transform_4(%arg0: i32, %arg1: i32) -> (i32, i32, i32) {
    %c0_i32 = arith.constant 0 : i32
    %c0_i32_0 = arith.constant 0 : i32
    return %arg0, %arg1, %c0_i32 : i32, i32, i32
  }
}

module attributes {stable_mosaic.version = 11 : i64} {
  func.func @_upconv_kernel(%arg0: i32, %arg1: i32, %arg2: memref<1x512x128xbf16, #tpu.memory_space<vmem>>, %arg3: memref<128x128xbf16, #tpu.memory_space<vmem>>, %arg4: memref<1x128xf32, #tpu.memory_space<vmem>>, %arg5: memref<1x512x128xbf16, #tpu.memory_space<vmem>>, %arg6: memref<1x1x8x128xf32, #tpu.memory_space<vmem>>, %arg7: memref<1x1x8x128xf32, #tpu.memory_space<vmem>>) attributes {dimension_semantics = [#tpu.dimension_semantics<parallel>, #tpu.dimension_semantics<parallel>], iteration_bounds = array<i64: 2, 1>, scalar_prefetch = 0 : i64, scratch_operands = 0 : i64, tpu.core_type = #tpu.core_type<tc>, window_params = [{transform_indices = @transform_0, window_bounds = array<i64: 1, 512, 128>}, {pipeline_mode = #tpu.pipeline_mode<synchronous>, transform_indices = @transform_1, window_bounds = array<i64: 128, 128>}, {pipeline_mode = #tpu.pipeline_mode<synchronous>, transform_indices = @transform_2, window_bounds = array<i64: 1, 128>}, {transform_indices = @transform_3, window_bounds = array<i64: 1, 512, 128>}, {transform_indices = @transform_4, window_bounds = array<i64: 1, 1, 8, 128>}, {transform_indices = @transform_5, window_bounds = array<i64: 1, 1, 8, 128>}]} {
    %c0 = arith.constant 0 : index
    %c0_0 = arith.constant 0 : index
    %c0_1 = arith.constant 0 : index
    %0 = vector.load %arg2[%c0, %c0_0, %c0_1] : memref<1x512x128xbf16, #tpu.memory_space<vmem>>, vector<1x512x128xbf16>
    %1 = vector.shape_cast %0 : vector<1x512x128xbf16> to vector<512x128xbf16>
    %c0_2 = arith.constant 0 : index
    %c0_3 = arith.constant 0 : index
    %2 = vector.load %arg3[%c0_2, %c0_3] : memref<128x128xbf16, #tpu.memory_space<vmem>>, vector<128x128xbf16>
    %cst = arith.constant dense<0.000000e+00> : vector<512x128xf32>
    %3 = tpu.matmul %1, %2, %cst {dimension_numbers = #tpu.dot_dimension_numbers<[1], [0], [0], [1], [0, 0, 1, 1], [], []>} : vector<512x128xbf16>, vector<128x128xbf16>, vector<512x128xf32> -> vector<512x128xf32>
    %c0_4 = arith.constant 0 : index
    %c0_5 = arith.constant 0 : index
    %4 = vector.load %arg4[%c0_4, %c0_5] : memref<1x128xf32, #tpu.memory_space<vmem>>, vector<1x128xf32>
    %5 = vector.broadcast %4 : vector<1x128xf32> to vector<512x128xf32>
    %6 = arith.addf %3, %5 : vector<512x128xf32>
    %7 = arith.truncf %6 : vector<512x128xf32> to vector<512x128xbf16>
    %c0_6 = arith.constant 0 : index
    %c0_7 = arith.constant 0 : index
    %c0_8 = arith.constant 0 : index
    %8 = vector.load %arg5[%c0_6, %c0_7, %c0_8] : memref<1x512x128xbf16, #tpu.memory_space<vmem>>, vector<1x512x128xbf16>
    %9 = vector.shape_cast %8 : vector<1x512x128xbf16> to vector<512x128xbf16>
    %10 = vector.shape_cast %7 : vector<512x128xbf16> to vector<1x512x128xbf16>
    tpu.vector_store %arg5[%c0_6, %c0_7, %c0_8], %10 {strides = array<i32>} : memref<1x512x128xbf16, #tpu.memory_space<vmem>>, vector<1x512x128xbf16>,
    %cst_9 = arith.constant 0.000000e+00 : f32
    %11 = vector.broadcast %cst_9 : f32 to vector<1x1x8x128xf32>
    %12 = vector.shape_cast %6 : vector<512x128xf32> to vector<1x512x128xf32>
    %cst_10 = arith.constant dense<0.000000e+00> : vector<1xf32>
    %13 = vector.multi_reduction <add>, %12, %cst_10 [1, 2] : vector<1x512x128xf32> to vector<1xf32>
    %14 = vector.shape_cast %13 : vector<1xf32> to vector<1x1x1xf32>
    %15 = vector.extract %14[0, 0, 0] : f32 from vector<1x1x1xf32>
    %16 = vector.broadcast %15 : f32 to vector<1x1x8x128xf32>
    %17 = arith.addf %11, %16 : vector<1x1x8x128xf32>
    %c0_11 = arith.constant 0 : index
    %c0_12 = arith.constant 0 : index
    %c0_13 = arith.constant 0 : index
    %c0_14 = arith.constant 0 : index
    %18 = vector.load %arg6[%c0_11, %c0_12, %c0_13, %c0_14] : memref<1x1x8x128xf32, #tpu.memory_space<vmem>>, vector<1x1x8x128xf32>
    tpu.vector_store %arg6[%c0_11, %c0_12, %c0_13, %c0_14], %17 {strides = array<i32>} : memref<1x1x8x128xf32, #tpu.memory_space<vmem>>, vector<1x1x8x128xf32>,
    %cst_15 = arith.constant 0.000000e+00 : f32
    %19 = vector.broadcast %cst_15 : f32 to vector<1x1x8x128xf32>
    %20 = arith.mulf %6, %6 : vector<512x128xf32>
    %21 = vector.shape_cast %20 : vector<512x128xf32> to vector<1x512x128xf32>
    %cst_16 = arith.constant dense<0.000000e+00> : vector<1xf32>
    %22 = vector.multi_reduction <add>, %21, %cst_16 [1, 2] : vector<1x512x128xf32> to vector<1xf32>
    %23 = vector.shape_cast %22 : vector<1xf32> to vector<1x1x1xf32>
    %24 = vector.extract %23[0, 0, 0] : f32 from vector<1x1x1xf32>
    %25 = vector.broadcast %24 : f32 to vector<1x1x8x128xf32>
    %26 = arith.addf %19, %25 : vector<1x1x8x128xf32>
    %c0_17 = arith.constant 0 : index
    %c0_18 = arith.constant 0 : index
    %c0_19 = arith.constant 0 : index
    %c0_20 = arith.constant 0 : index
    %27 = vector.load %arg7[%c0_17, %c0_18, %c0_19, %c0_20] : memref<1x1x8x128xf32, #tpu.memory_space<vmem>>, vector<1x1x8x128xf32>
    tpu.vector_store %arg7[%c0_17, %c0_18, %c0_19, %c0_20], %26 {strides = array<i32>} : memref<1x1x8x128xf32, #tpu.memory_space<vmem>>, vector<1x1x8x128xf32>,
    return
  }
  func.func @transform_0(%arg0: i32, %arg1: i32) -> (i32, i32, i32) {
    %c0_i32 = arith.constant 0 : i32
    %c0_i32_0 = arith.constant 0 : i32
    return %arg0, %arg1, %c0_i32 : i32, i32, i32
  }
  func.func @transform_1(%arg0: i32, %arg1: i32) -> (i32, i32) {
    %c0_i32 = arith.constant 0 : i32
    %c0_i32_0 = arith.constant 0 : i32
    %c0_i32_1 = arith.constant 0 : i32
    return %c0_i32, %c0_i32_0 : i32, i32
  }
  func.func @transform_2(%arg0: i32, %arg1: i32) -> (i32, i32) {
    %c0_i32 = arith.constant 0 : i32
    %c0_i32_0 = arith.constant 0 : i32
    %c0_i32_1 = arith.constant 0 : i32
    return %c0_i32, %c0_i32_0 : i32, i32
  }
  func.func @transform_3(%arg0: i32, %arg1: i32) -> (i32, i32, i32) {
    %c0_i32 = arith.constant 0 : i32
    %c0_i32_0 = arith.constant 0 : i32
    return %arg0, %arg1, %c0_i32 : i32, i32, i32
  }
  func.func @transform_4(%arg0: i32, %arg1: i32) -> (i32, i32, i32, i32) {
    %c0_i32 = arith.constant 0 : i32
    %c0_i32_0 = arith.constant 0 : i32
    %c0_i32_1 = arith.constant 0 : i32
    return %arg0, %arg1, %c0_i32, %c0_i32_0 : i32, i32, i32, i32
  }
  func.func @transform_5(%arg0: i32, %arg1: i32) -> (i32, i32, i32, i32) {
    %c0_i32 = arith.constant 0 : i32
    %c0_i32_0 = arith.constant 0 : i32
    %c0_i32_1 = arith.constant 0 : i32
    return %arg0, %arg1, %c0_i32, %c0_i32_0 : i32, i32, i32, i32
  }
}

module attributes {stable_mosaic.version = 11 : i64} {
  func.func @_affine_kernel(%arg0: i32, %arg1: i32, %arg2: memref<1x512x128xbf16, #tpu.memory_space<vmem>>, %arg3: memref<1x1x128xf32, #tpu.memory_space<vmem>>, %arg4: memref<1x1x128xf32, #tpu.memory_space<vmem>>, %arg5: memref<1x512x128xf32, #tpu.memory_space<vmem>>) attributes {dimension_semantics = [#tpu.dimension_semantics<parallel>, #tpu.dimension_semantics<parallel>], iteration_bounds = array<i64: 2, 1>, scalar_prefetch = 0 : i64, scratch_operands = 0 : i64, tpu.core_type = #tpu.core_type<tc>, window_params = [{transform_indices = @transform_0, window_bounds = array<i64: 1, 512, 128>}, {transform_indices = @transform_1, window_bounds = array<i64: 1, 1, 128>}, {transform_indices = @transform_2, window_bounds = array<i64: 1, 1, 128>}, {transform_indices = @transform_3, window_bounds = array<i64: 1, 512, 128>}]} {
    %c0 = arith.constant 0 : index
    %c0_0 = arith.constant 0 : index
    %c0_1 = arith.constant 0 : index
    %0 = vector.load %arg2[%c0, %c0_0, %c0_1] : memref<1x512x128xbf16, #tpu.memory_space<vmem>>, vector<1x512x128xbf16>
    %1 = arith.extf %0 : vector<1x512x128xbf16> to vector<1x512x128xf32>
    %c0_2 = arith.constant 0 : index
    %c0_3 = arith.constant 0 : index
    %c0_4 = arith.constant 0 : index
    %2 = vector.load %arg3[%c0_2, %c0_3, %c0_4] : memref<1x1x128xf32, #tpu.memory_space<vmem>>, vector<1x1x128xf32>
    %3 = vector.broadcast %2 : vector<1x1x128xf32> to vector<1x512x128xf32>
    %4 = arith.mulf %1, %3 : vector<1x512x128xf32>
    %c0_5 = arith.constant 0 : index
    %c0_6 = arith.constant 0 : index
    %c0_7 = arith.constant 0 : index
    %5 = vector.load %arg4[%c0_5, %c0_6, %c0_7] : memref<1x1x128xf32, #tpu.memory_space<vmem>>, vector<1x1x128xf32>
    %6 = vector.broadcast %5 : vector<1x1x128xf32> to vector<1x512x128xf32>
    %7 = arith.addf %4, %6 : vector<1x512x128xf32>
    %cst = arith.constant 0.000000e+00 : f32
    %8 = vector.broadcast %cst : f32 to vector<1x512x128xf32>
    %9 = arith.maximumf %7, %8 : vector<1x512x128xf32>
    %c0_8 = arith.constant 0 : index
    %c0_9 = arith.constant 0 : index
    %c0_10 = arith.constant 0 : index
    %10 = vector.load %arg5[%c0_8, %c0_9, %c0_10] : memref<1x512x128xf32, #tpu.memory_space<vmem>>, vector<1x512x128xf32>
    tpu.vector_store %arg5[%c0_8, %c0_9, %c0_10], %9 {strides = array<i32>} : memref<1x512x128xf32, #tpu.memory_space<vmem>>, vector<1x512x128xf32>,
    return
  }
  func.func @transform_0(%arg0: i32, %arg1: i32) -> (i32, i32, i32) {
    %c0_i32 = arith.constant 0 : i32
    %c0_i32_0 = arith.constant 0 : i32
    return %arg0, %arg1, %c0_i32 : i32, i32, i32
  }
  func.func @transform_1(%arg0: i32, %arg1: i32) -> (i32, i32, i32) {
    %c0_i32 = arith.constant 0 : i32
    %c0_i32_0 = arith.constant 0 : i32
    %c0_i32_1 = arith.constant 0 : i32
    return %arg0, %c0_i32, %c0_i32_0 : i32, i32, i32
  }
  func.func @transform_2(%arg0: i32, %arg1: i32) -> (i32, i32, i32) {
    %c0_i32 = arith.constant 0 : i32
    %c0_i32_0 = arith.constant 0 : i32
    %c0_i32_1 = arith.constant 0 : i32
    return %arg0, %c0_i32, %c0_i32_0 : i32, i32, i32
  }
  func.func @transform_3(%arg0: i32, %arg1: i32) -> (i32, i32, i32) {
    %c0_i32 = arith.constant 0 : i32
    %c0_i32_0 = arith.constant 0 : i32
    return %arg0, %arg1, %c0_i32 : i32, i32, i32
  }
}

</mosaic_0001>

<llo_original>
// kernel: up_block_forward.7
$region0: #{up_block_forward.7}
  #allocation0 [shape = 'u32[]', space=smem, size = 0x4, offset = 0x4, fixed_abs, tag = 'smem constant byte address 0x4 - core index']
  #allocation1 [shape = 'u32[72,128]{1,0:T(1,128)}', space=vmem, size = 0x9000, scoped, tag = 'internal scratch']
  %s0 = inlined_call_operand.vmem [shape: bf16[2,512,128], index: 0, kind: input, shape index: {}]
  %s1 = inlined_call_operand.vmem [shape: f32[2,1,128], index: 1, kind: input, shape index: {}]
  %s2 = inlined_call_operand.vmem [shape: f32[2,1,128], index: 2, kind: input, shape index: {}]
  %s3 = inlined_call_operand.vmem [shape: bf16[2,512,128], index: 3, kind: output, shape index: {}]
  %s4 = sld [smem:[#allocation0]]
  $region45: #{up_block_forward.7} parent=0
    _
  %s6 = ssub.s32 1, %s4
  %s7 = scalar_select 0, %s6, %s4
  loop: start=0, step=1, limit=4
  $region2: #{up_block_forward.7} parent=0 // loop_pre_header
    _
  $region3: #{up_block_forward.7} parent=0 // loop_header
    %s9 = sphi 0, %s13
    %p10 = scmp.ge.s32.totalorder %s9, 4
    %s16 = sphi 0, %s28
    %s17 = sphi 0, %s24
    %s18 = sphi 0, %s16
    %s19 = sphi 0, %s17
    %s20 = sphi 0, %s18
    %s21 = sphi 0, %s19
    %s33 = sphi 0, %s35
    %s36 = sphi 0, %s33
    %s37 = sphi 0, %s36
    %s53 = sphi 0, %s37
    %s59 = sphi 0, %s61
    %s62 = sphi 0, %s59
    %s63 = sphi 0, %s62
    %s79 = sphi 0, %s63
    %s85 = sphi 0, %s87
    %s88 = sphi 0, %s85
    %s89 = sphi 0, %s88
    %s105 = sphi 0, %s89
    %s113 = sphi 0, %s115
    %s116 = sphi 0, %s113
    %s117 = sphi 0, %s116
    %s133 = sphi 0, %s117
  $region4: #{up_block_forward.7} parent=0 // loop_header_branch
    %12 = sbr.rel (%p10) target = $region8
  $region5: #{up_block_forward.7} parent=0 // loop_body
    %s14 = ssub.s32 %s9, 1
    %s15 = ssub.s32 %s9, 2
    %s22 = sadd.s32 1, %s17
    %p23 = scmp.ge.s32.totalorder %s22, 1
    %s24 = scalar_select %p23, 0, %s22
    %s25 = sadd.s32 1, %s16
    %s26 = scalar_select %p23, %s25, %s16
    %p27 = scmp.ge.s32.totalorder %s26, 2
    %s28 = scalar_select %p27, 0, %s26
    %s29 = ssub.s32 %s16, %s28
    %s30 = ssub.s32 %s17, %s24
    %s31 = sor.u32 %s29, %s30
    %p32 = scmp.eq.s32.totalorder %s31, 0
    %s34 = sadd.s32 %s33, 1
    %s35 = scalar_select %p32, %s33, %s34
    %p38 = pneg %p32
    %p39 = scmp.eq.s32.totalorder %s9, 1
    %p40 = por %p38, %p39
    %p41 = scmp.ne.s32.totalorder %s33, %s36
    %p42 = scmp.eq.s32.totalorder %s9, 0
    %p43 = por %p41, %p42
    %p44 = scmp.ne.s32.totalorder %s33, %s36
    %p45 = scmp.eq.s32.totalorder %s14, 1
    %p46 = por %p44, %p45
    %p47 = scmp.ne.s32.totalorder %s36, %s37
    %p48 = scmp.eq.s32.totalorder %s14, 0
    %p49 = por %p47, %p48
    %p50 = scmp.ne.s32.totalorder %s36, %s37
    %p51 = scmp.eq.s32.totalorder %s15, 1
    %p52 = por %p50, %p51
    %p54 = scmp.ne.s32.totalorder %s37, %s53
    %p55 = scmp.eq.s32.totalorder %s15, 0
    %p56 = por %p54, %p55
    %s57 = ssub.s32 %s16, %s28
    %p58 = scmp.eq.s32.totalorder %s57, 0
    %s60 = sadd.s32 %s59, 1
    %s61 = scalar_select %p58, %s59, %s60
    %p64 = pneg %p58
    %p65 = scmp.eq.s32.totalorder %s9, 1
    %p66 = por %p64, %p65
    %p67 = scmp.ne.s32.totalorder %s59, %s62
    %p68 = scmp.eq.s32.totalorder %s9, 0
    %p69 = por %p67, %p68
    %p70 = scmp.ne.s32.totalorder %s59, %s62
    %p71 = scmp.eq.s32.totalorder %s14, 1
    %p72 = por %p70, %p71
    %p73 = scmp.ne.s32.totalorder %s62, %s63
    %p74 = scmp.eq.s32.totalorder %s14, 0
    %p75 = por %p73, %p74
    %p76 = scmp.ne.s32.totalorder %s62, %s63
    %p77 = scmp.eq.s32.totalorder %s15, 1
    %p78 = por %p76, %p77
    %p80 = scmp.ne.s32.totalorder %s63, %s79
    %p81 = scmp.eq.s32.totalorder %s15, 0
    %p82 = por %p80, %p81
    %s83 = ssub.s32 %s16, %s28
    %p84 = scmp.eq.s32.totalorder %s83, 0
    %s86 = sadd.s32 %s85, 1
    %s87 = scalar_select %p84, %s85, %s86
    %p90 = pneg %p84
    %p91 = scmp.eq.s32.totalorder %s9, 1
    %p92 = por %p90, %p91
    %p93 = scmp.ne.s32.totalorder %s85, %s88
    %p94 = scmp.eq.s32.totalorder %s9, 0
    %p95 = por %p93, %p94
    %p96 = scmp.ne.s32.totalorder %s85, %s88
    %p97 = scmp.eq.s32.totalorder %s14, 1
    %p98 = por %p96, %p97
    %p99 = scmp.ne.s32.totalorder %s88, %s89
    %p100 = scmp.eq.s32.totalorder %s14, 0
    %p101 = por %p99, %p100
    %p102 = scmp.ne.s32.totalorder %s88, %s89
    %p103 = scmp.eq.s32.totalorder %s15, 1
    %p104 = por %p102, %p103
    %p106 = scmp.ne.s32.totalorder %s89, %s105
    %p107 = scmp.eq.s32.totalorder %s15, 0
    %p108 = por %p106, %p107
    %s109 = ssub.s32 %s16, %s28
    %s110 = ssub.s32 %s17, %s24
    %s111 = sor.u32 %s109, %s110
    %p112 = scmp.eq.s32.totalorder %s111, 0
    %s114 = sadd.s32 %s113, 1
    %s115 = scalar_select %p112, %s113, %s114
    %p118 = pneg %p112
    %p119 = scmp.eq.s32.totalorder %s9, 1
    %p120 = por %p118, %p119
    %p121 = scmp.ne.s32.totalorder %s113, %s116
    %p122 = scmp.eq.s32.totalorder %s9, 0
    %p123 = por %p121, %p122
    %p124 = scmp.ne.s32.totalorder %s113, %s116
    %p125 = scmp.eq.s32.totalorder %s14, 1
    %p126 = por %p124, %p125
    %p127 = scmp.ne.s32.totalorder %s116, %s117
    %p128 = scmp.eq.s32.totalorder %s14, 0
    %p129 = por %p127, %p128
    %p130 = scmp.ne.s32.totalorder %s116, %s117
    %p131 = scmp.eq.s32.totalorder %s15, 1
    %p132 = por %p130, %p131
    %p134 = scmp.ne.s32.totalorder %s117, %s133
    %p135 = scmp.eq.s32.totalorder %s15, 0
    %p136 = por %p134, %p135
    %p137 = scmp.le.s32.totalorder 1, %s9
    %p138 = scmp.lt.s32.totalorder %s9, 3
    %p139 = pnand %p137, %p138
    %p140 = pneg %p139
    // Predicated region
    $region9: #{up_block_forward.7} parent=5 // pred_check
      _
    $region10: #{up_block_forward.7} parent=5 // pred_check_branch
      %142 = sbr.rel (%p139) target = $region12
    $region11: #{up_block_forward.7} parent=5 // pred_region
      %s143 = ssub.s32 %s9, 1
    $region12: #{up_block_forward.7} parent=5 // pred_fallthru
      _
    %p144 = scmp.lt.s32.totalorder %s9, 2
    // Predicated region
    $region13: #{up_block_forward.7} parent=5 // pred_check
      %p145 = pneg %p144
    $region14: #{up_block_forward.7} parent=5 // pred_check_branch
      %147 = sbr.rel (%p145) target = $region16
    $region15: #{up_block_forward.7} parent=5 // pred_region
      // Predicated region
      $region17: #{up_block_forward.7} parent=15 // pred_check
        %p148 = pneg %p43
      $region18: #{up_block_forward.7} parent=15 // pred_check_branch
        %150 = sbr.rel (%p148) target = $region20
      $region19: #{up_block_forward.7} parent=15 // pred_region
        %s151 = smul.u32 64, %s17
        %p152 = scmp.lt.s32.totalorder %s16, 1
        %s153 = scalar_select %p152, %s16, 1
        %p154 = scmp.lt.s32.totalorder %s151, 63
        %s155 = scalar_select %p154, %s151, 63
        %s156 = smul.addr %s153, 64
        %s157 = sadd.s32 %s155, %s156
        %s158 = smul.addr %s157, 4
        %s159 = scalar_lea.vmem %s0, %s158
        %s160 = smul.u32 64, %s17
      $region20: #{up_block_forward.7} parent=15 // pred_fallthru
        _
      // Predicated region
      $region21: #{up_block_forward.7} parent=15 // pred_check
        %p161 = pneg %p69
      $region22: #{up_block_forward.7} parent=15 // pred_check_branch
        %163 = sbr.rel (%p161) target = $region24
      $region23: #{up_block_forward.7} parent=15 // pred_region
        %p164 = scmp.lt.s32.totalorder %s16, 1
        %s165 = scalar_select %p164, %s16, 1
        %s166 = scalar_lea.vmem %s1, %s165
      $region24: #{up_block_forward.7} parent=15 // pred_fallthru
        _
      // Predicated region
      $region25: #{up_block_forward.7} parent=15 // pred_check
        %p167 = pneg %p95
      $region26: #{up_block_forward.7} parent=15 // pred_check_branch
        %169 = sbr.rel (%p167) target = $region28
      $region27: #{up_block_forward.7} parent=15 // pred_region
        %p170 = scmp.lt.s32.totalorder %s16, 1
        %s171 = scalar_select %p170, %s16, 1
        %s172 = scalar_lea.vmem %s2, %s171
      $region28: #{up_block_forward.7} parent=15 // pred_fallthru
        _
    $region16: #{up_block_forward.7} parent=5 // pred_fallthru
      _
    %p173 = scmp.le.s32.totalorder 1, %s9
    %p174 = scmp.lt.s32.totalorder %s9, 3
    %p175 = pnand %p173, %p174
    %p176 = pneg %p175
    // Predicated region
    $region29: #{up_block_forward.7} parent=5 // pred_check
      _
    $region30: #{up_block_forward.7} parent=5 // pred_check_branch
      %178 = sbr.rel (%p175) target = $region32
    $region31: #{up_block_forward.7} parent=5 // pred_region
      %s179 = ssub.s32 %s9, 1
      %s180 = smul.u32 64, %s19
      %p181 = scmp.lt.s32.totalorder %s18, 1
      %s182 = scalar_select %p181, %s18, 1
      %p183 = scmp.lt.s32.totalorder %s180, 63
      %s184 = scalar_select %p183, %s180, 63
      %s185 = smul.addr %s182, 64
      %s186 = sadd.s32 %s184, %s185
      %s187 = smul.addr %s186, 4
      %s188 = scalar_lea.vmem %s0, %s187
      %p189 = pneg %p49
      %p190 = pneg %p46
      %p191 = scmp.lt.s32.totalorder %s18, 1
      %s192 = scalar_select %p191, %s18, 1
      %s193 = scalar_lea.vmem %s1, %s192
      %p194 = pneg %p75
      %p195 = pneg %p72
      %p196 = scmp.lt.s32.totalorder %s18, 1
      %s197 = scalar_select %p196, %s18, 1
      %s198 = scalar_lea.vmem %s2, %s197
      %p199 = pneg %p101
      %p200 = pneg %p98
      %p201 = pneg %p129
      %p202 = pneg %p126
      %s203 = smul.u32 64, %s19
      %p204 = scmp.lt.s32.totalorder %s18, 1
      %s205 = scalar_select %p204, %s18, 1
      %p206 = scmp.lt.s32.totalorder %s203, 63
      %s207 = scalar_select %p206, %s203, 63
      %s208 = smul.addr %s205, 64
      %s209 = sadd.s32 %s207, %s208
      %s210 = smul.addr %s209, 4
      %s211 = scalar_lea.vmem %s3, %s210
      %s212 = smul.u32 64, %s19
      %p213 = scmp.lt.s32.totalorder %s18, 1
      %s214 = scalar_select %p213, %s18, 1
      %p215 = scmp.lt.s32.totalorder %s212, 63
      %s216 = scalar_select %p215, %s212, 63
      %s217 = smul.addr %s214, 64
      %s218 = sadd.s32 %s216, %s217
      %s219 = smul.addr %s218, 4
      %s220 = scalar_lea.vmem %s0, %s219
      %s221 = smul.u32 64, %s19
      %p222 = scmp.lt.s32.totalorder %s18, 1
      %s223 = scalar_select %p222, %s18, 1
      %s224 = scalar_lea.vmem %s1, %s223
      %p225 = scmp.lt.s32.totalorder %s18, 1
      %s226 = scalar_select %p225, %s18, 1
      %s227 = scalar_lea.vmem %s2, %s226
      %s228 = smul.u32 64, %s19
      %p229 = scmp.lt.s32.totalorder %s18, 1
      %s230 = scalar_select %p229, %s18, 1
      %p231 = scmp.lt.s32.totalorder %s228, 63
      %s232 = scalar_select %p231, %s228, 63
      %s233 = smul.addr %s230, 64
      %s234 = sadd.s32 %s232, %s233
      %s235 = smul.addr %s234, 4
      %s236 = scalar_lea.vmem %s3, %s235
      %s237 = smul.u32 64, %s19
      %v238 = vld [vmem:[%s220] sm:$0xf]
      %v239 = vld [vmem:[%s220 + $0x4] sm:$0xf]
      %v240 = vld [vmem:[%s220 + $0x8] sm:$0xf]
      %v241 = vld [vmem:[%s220 + $0xc] sm:$0xf]
      %v242 = vld [vmem:[%s220 + $0x10] sm:$0xf]
      %v243 = vld [vmem:[%s220 + $0x14] sm:$0xf]
      %v244 = vld [vmem:[%s220 + $0x18] sm:$0xf]
      %v245 = vld [vmem:[%s220 + $0x1c] sm:$0xf]
      %v246 = vld [vmem:[%s220 + $0x20] sm:$0xf]
      %v247 = vld [vmem:[%s220 + $0x24] sm:$0xf]
      %v248 = vld [vmem:[%s220 + $0x28] sm:$0xf]
      %v249 = vld [vmem:[%s220 + $0x2c] sm:$0xf]
      %v250 = vld [vmem:[%s220 + $0x30] sm:$0xf]
      %v251 = vld [vmem:[%s220 + $0x34] sm:$0xf]
      %v252 = vld [vmem:[%s220 + $0x38] sm:$0xf]
      %v253 = vld [vmem:[%s220 + $0x3c] sm:$0xf]
      %v254 = vld [vmem:[%s220 + $0x40] sm:$0xf]
      %v255 = vld [vmem:[%s220 + $0x44] sm:$0xf]
      %v256 = vld [vmem:[%s220 + $0x48] sm:$0xf]
      %v257 = vld [vmem:[%s220 + $0x4c] sm:$0xf]
      %v258 = vld [vmem:[%s220 + $0x50] sm:$0xf]
      %v259 = vld [vmem:[%s220 + $0x54] sm:$0xf]
      %v260 = vld [vmem:[%s220 + $0x58] sm:$0xf]
      %v261 = vld [vmem:[%s220 + $0x5c] sm:$0xf]
      %v262 = vld [vmem:[%s220 + $0x60] sm:$0xf]
      %v263 = vld [vmem:[%s220 + $0x64] sm:$0xf]
      %v264 = vld [vmem:[%s220 + $0x68] sm:$0xf]
      %v265 = vld [vmem:[%s220 + $0x6c] sm:$0xf]
      %v266 = vld [vmem:[%s220 + $0x70] sm:$0xf]
      %v267 = vld [vmem:[%s220 + $0x74] sm:$0xf]
      %v268 = vld [vmem:[%s220 + $0x78] sm:$0xf]
      %v269 = vld [vmem:[%s220 + $0x7c] sm:$0xf]
      %v270 = vld [vmem:[%s220 + $0x80] sm:$0xf]
      %v271 = vld [vmem:[%s220 + $0x84] sm:$0xf]
      %v272 = vld [vmem:[%s220 + $0x88] sm:$0xf]
      %v273 = vld [vmem:[%s220 + $0x8c] sm:$0xf]
      %v274 = vld [vmem:[%s220 + $0x90] sm:$0xf]
      %v275 = vld [vmem:[%s220 + $0x94] sm:$0xf]
      %v276 = vld [vmem:[%s220 + $0x98] sm:$0xf]
      %v277 = vld [vmem:[%s220 + $0x9c] sm:$0xf]
      %v278 = vld [vmem:[%s220 + $0xa0] sm:$0xf]
      %v279 = vld [vmem:[%s220 + $0xa4] sm:$0xf]
      %v280 = vld [vmem:[%s220 + $0xa8] sm:$0xf]
      %v281 = vld [vmem:[%s220 + $0xac] sm:$0xf]
      %v282 = vld [vmem:[%s220 + $0xb0] sm:$0xf]
      %v283 = vld [vmem:[%s220 + $0xb4] sm:$0xf]
      %v284 = vld [vmem:[%s220 + $0xb8] sm:$0xf]
      %v285 = vld [vmem:[%s220 + $0xbc] sm:$0xf]
      %v286 = vld [vmem:[%s220 + $0xc0] sm:$0xf]
      %v287 = vld [vmem:[%s220 + $0xc4] sm:$0xf]
      %v288 = vld [vmem:[%s220 + $0xc8] sm:$0xf]
      %v289 = vld [vmem:[%s220 + $0xcc] sm:$0xf]
      %v290 = vld [vmem:[%s220 + $0xd0] sm:$0xf]
      %v291 = vld [vmem:[%s220 + $0xd4] sm:$0xf]
      %v292 = vld [vmem:[%s220 + $0xd8] sm:$0xf]
      %v293 = vld [vmem:[%s220 + $0xdc] sm:$0xf]
      %v294 = vld [vmem:[%s220 + $0xe0] sm:$0xf]
      %v295 = vld [vmem:[%s220 + $0xe4] sm:$0xf]
      %v296 = vld [vmem:[%s220 + $0xe8] sm:$0xf]
      %v297 = vld [vmem:[%s220 + $0xec] sm:$0xf]
      %v298 = vld [vmem:[%s220 + $0xf0] sm:$0xf]
      %v299 = vld [vmem:[%s220 + $0xf4] sm:$0xf]
      %v300 = vld [vmem:[%s220 + $0xf8] sm:$0xf]
      %v301 = vld [vmem:[%s220 + $0xfc] sm:$0xf]
      %v302 = vunpack.c.l.bf16 %v238
      %v303 = vunpack.c.l.bf16 %v239
      %v304 = vunpack.c.l.bf16 %v240
      %v305 = vunpack.c.l.bf16 %v241
      %v306 = vunpack.c.l.bf16 %v242
      %v307 = vunpack.c.l.bf16 %v243
      %v308 = vunpack.c.l.bf16 %v244
      %v309 = vunpack.c.l.bf16 %v245
      %v310 = vunpack.c.l.bf16 %v246
      %v311 = vunpack.c.l.bf16 %v247
      %v312 = vunpack.c.l.bf16 %v248
      %v313 = vunpack.c.l.bf16 %v249
      %v314 = vunpack.c.l.bf16 %v250
      %v315 = vunpack.c.l.bf16 %v251
      %v316 = vunpack.c.l.bf16 %v252
      %v317 = vunpack.c.l.bf16 %v253
      %v318 = vunpack.c.l.bf16 %v254
      %v319 = vunpack.c.l.bf16 %v255
      %v320 = vunpack.c.l.bf16 %v256
      %v321 = vunpack.c.l.bf16 %v257
      %v322 = vunpack.c.l.bf16 %v258
      %v323 = vunpack.c.l.bf16 %v259
      %v324 = vunpack.c.l.bf16 %v260
      %v325 = vunpack.c.l.bf16 %v261
      %v326 = vunpack.c.l.bf16 %v262
      %v327 = vunpack.c.l.bf16 %v263
      %v328 = vunpack.c.l.bf16 %v264
      %v329 = vunpack.c.l.bf16 %v265
      %v330 = vunpack.c.l.bf16 %v266
      %v331 = vunpack.c.l.bf16 %v267
      %v332 = vunpack.c.l.bf16 %v268
      %v333 = vunpack.c.l.bf16 %v269
      %v334 = vunpack.c.l.bf16 %v270
      %v335 = vunpack.c.l.bf16 %v271
      %v336 = vunpack.c.l.bf16 %v272
      %v337 = vunpack.c.l.bf16 %v273
      %v338 = vunpack.c.l.bf16 %v274
      %v339 = vunpack.c.l.bf16 %v275
      %v340 = vunpack.c.l.bf16 %v276
      %v341 = vunpack.c.l.bf16 %v277
      %v342 = vunpack.c.l.bf16 %v278
      %v343 = vunpack.c.l.bf16 %v279
      %v344 = vunpack.c.l.bf16 %v280
      %v345 = vunpack.c.l.bf16 %v281
      %v346 = vunpack.c.l.bf16 %v282
      %v347 = vunpack.c.l.bf16 %v283
      %v348 = vunpack.c.l.bf16 %v284
      %v349 = vunpack.c.l.bf16 %v285
      %v350 = vunpack.c.l.bf16 %v286
      %v351 = vunpack.c.l.bf16 %v287
      %v352 = vunpack.c.l.bf16 %v288
      %v353 = vunpack.c.l.bf16 %v289
      %v354 = vunpack.c.l.bf16 %v290
      %v355 = vunpack.c.l.bf16 %v291
      %v356 = vunpack.c.l.bf16 %v292
      %v357 = vunpack.c.l.bf16 %v293
      %v358 = vunpack.c.l.bf16 %v294
      %v359 = vunpack.c.l.bf16 %v295
      %v360 = vunpack.c.l.bf16 %v296
      %v361 = vunpack.c.l.bf16 %v297
      %v362 = vunpack.c.l.bf16 %v298
      %v363 = vunpack.c.l.bf16 %v299
      %v364 = vunpack.c.l.bf16 %v300
      %v365 = vunpack.c.l.bf16 %v301
      %v366 = vld [vmem:[%s224] sm:$0x1]
      %v368 = vperm.slane %v366, 0
      %v370 = vmul.f32 %v302, %v368
      %v371 = vmul.f32 %v303, %v368
      %v372 = vmul.f32 %v304, %v368
      %v373 = vmul.f32 %v305, %v368
      %v374 = vmul.f32 %v306, %v368
      %v375 = vmul.f32 %v307, %v368
      %v376 = vmul.f32 %v308, %v368
      %v377 = vmul.f32 %v309, %v368
      %v378 = vmul.f32 %v310, %v368
      %v379 = vmul.f32 %v311, %v368
      %v380 = vmul.f32 %v312, %v368
      %v381 = vmul.f32 %v313, %v368
      %v382 = vmul.f32 %v314, %v368
      %v383 = vmul.f32 %v315, %v368
      %v384 = vmul.f32 %v316, %v368
      %v385 = vmul.f32 %v317, %v368
      %v386 = vmul.f32 %v318, %v368
      %v387 = vmul.f32 %v319, %v368
      %v388 = vmul.f32 %v320, %v368
      %v389 = vmul.f32 %v321, %v368
      %v390 = vmul.f32 %v322, %v368
      %v391 = vmul.f32 %v323, %v368
      %v392 = vmul.f32 %v324, %v368
      %v393 = vmul.f32 %v325, %v368
      %v394 = vmul.f32 %v326, %v368
      %v395 = vmul.f32 %v327, %v368
      %v396 = vmul.f32 %v328, %v368
      %v397 = vmul.f32 %v329, %v368
      %v398 = vmul.f32 %v330, %v368
      %v399 = vmul.f32 %v331, %v368
      %v400 = vmul.f32 %v332, %v368
      %v401 = vmul.f32 %v333, %v368
      %v402 = vmul.f32 %v334, %v368
      %v403 = vmul.f32 %v335, %v368
      %v404 = vmul.f32 %v336, %v368
      %v405 = vmul.f32 %v337, %v368
      %v406 = vmul.f32 %v338, %v368
      %v407 = vmul.f32 %v339, %v368
      %v408 = vmul.f32 %v340, %v368
      %v409 = vmul.f32 %v341, %v368
      %v410 = vmul.f32 %v342, %v368
      %v411 = vmul.f32 %v343, %v368
      %v412 = vmul.f32 %v344, %v368
      %v413 = vmul.f32 %v345, %v368
      %v414 = vmul.f32 %v346, %v368
      %v415 = vmul.f32 %v347, %v368
      %v416 = vmul.f32 %v348, %v368
      %v417 = vmul.f32 %v349, %v368
      %v418 = vmul.f32 %v350, %v368
      %v419 = vmul.f32 %v351, %v368
      %v420 = vmul.f32 %v352, %v368
      %v421 = vmul.f32 %v353, %v368
      %v422 = vmul.f32 %v354, %v368
      %v423 = vmul.f32 %v355, %v368
      %v424 = vmul.f32 %v356, %v368
      %v425 = vmul.f32 %v357, %v368
      %v426 = vmul.f32 %v358, %v368
      %v427 = vmul.f32 %v359, %v368
      %v428 = vmul.f32 %v360, %v368
      %v429 = vmul.f32 %v361, %v368
      %v430 = vmul.f32 %v362, %v368
      %v431 = vmul.f32 %v363, %v368
      %v432 = vmul.f32 %v364, %v368
      %v433 = vmul.f32 %v365, %v368
      %v434 = vld [vmem:[%s227] sm:$0x1]
      %v436 = vperm.slane %v434, 0
      %v438 = vadd.f32 %v370, %v436
      %v439 = vadd.f32 %v371, %v436
      %v440 = vadd.f32 %v372, %v436
      %v441 = vadd.f32 %v373, %v436
      %v442 = vadd.f32 %v374, %v436
      %v443 = vadd.f32 %v375, %v436
      %v444 = vadd.f32 %v376, %v436
      %v445 = vadd.f32 %v377, %v436
      %v446 = vadd.f32 %v378, %v436
      %v447 = vadd.f32 %v379, %v436
      %v448 = vadd.f32 %v380, %v436
      %v449 = vadd.f32 %v381, %v436
      %v450 = vadd.f32 %v382, %v436
      %v451 = vadd.f32 %v383, %v436
      %v452 = vadd.f32 %v384, %v436
      %v453 = vadd.f32 %v385, %v436
      %v454 = vadd.f32 %v386, %v436
      %v455 = vadd.f32 %v387, %v436
      %v456 = vadd.f32 %v388, %v436
      %v457 = vadd.f32 %v389, %v436
      %v458 = vadd.f32 %v390, %v436
      %v459 = vadd.f32 %v391, %v436
      %v460 = vadd.f32 %v392, %v436
      %v461 = vadd.f32 %v393, %v436
      %v462 = vadd.f32 %v394, %v436
      %v463 = vadd.f32 %v395, %v436
      %v464 = vadd.f32 %v396, %v436
      %v465 = vadd.f32 %v397, %v436
      %v466 = vadd.f32 %v398, %v436
      %v467 = vadd.f32 %v399, %v436
      %v468 = vadd.f32 %v400, %v436
      %v469 = vadd.f32 %v401, %v436
      %v470 = vadd.f32 %v402, %v436
      %v471 = vadd.f32 %v403, %v436
      %v472 = vadd.f32 %v404, %v436
      %v473 = vadd.f32 %v405, %v436
      %v474 = vadd.f32 %v406, %v436
      %v475 = vadd.f32 %v407, %v436
      %v476 = vadd.f32 %v408, %v436
      %v477 = vadd.f32 %v409, %v436
      %v478 = vadd.f32 %v410, %v436
      %v479 = vadd.f32 %v411, %v436
      %v480 = vadd.f32 %v412, %v436
      %v481 = vadd.f32 %v413, %v436
      %v482 = vadd.f32 %v414, %v436
      %v483 = vadd.f32 %v415, %v436
      %v484 = vadd.f32 %v416, %v436
      %v485 = vadd.f32 %v417, %v436
      %v486 = vadd.f32 %v418, %v436
      %v487 = vadd.f32 %v419, %v436
      %v488 = vadd.f32 %v420, %v436
      %v489 = vadd.f32 %v421, %v436
      %v490 = vadd.f32 %v422, %v436
      %v491 = vadd.f32 %v423, %v436
      %v492 = vadd.f32 %v424, %v436
      %v493 = vadd.f32 %v425, %v436
      %v494 = vadd.f32 %v426, %v436
      %v495 = vadd.f32 %v427, %v436
      %v496 = vadd.f32 %v428, %v436
      %v497 = vadd.f32 %v429, %v436
      %v498 = vadd.f32 %v430, %v436
      %v499 = vadd.f32 %v431, %v436
      %v500 = vadd.f32 %v432, %v436
      %v501 = vadd.f32 %v433, %v436
      %v502 = vmax.f32 %v438, 0.0
      %v503 = vmax.f32 %v439, 0.0
      %v504 = vmax.f32 %v440, 0.0
      %v505 = vmax.f32 %v441, 0.0
      %v506 = vmax.f32 %v442, 0.0
      %v507 = vmax.f32 %v443, 0.0
      %v508 = vmax.f32 %v444, 0.0
      %v509 = vmax.f32 %v445, 0.0
      %v510 = vmax.f32 %v446, 0.0
      %v511 = vmax.f32 %v447, 0.0
      %v512 = vmax.f32 %v448, 0.0
      %v513 = vmax.f32 %v449, 0.0
      %v514 = vmax.f32 %v450, 0.0
      %v515 = vmax.f32 %v451, 0.0
      %v516 = vmax.f32 %v452, 0.0
      %v517 = vmax.f32 %v453, 0.0
      %v518 = vmax.f32 %v454, 0.0
      %v519 = vmax.f32 %v455, 0.0
      %v520 = vmax.f32 %v456, 0.0
      %v521 = vmax.f32 %v457, 0.0
      %v522 = vmax.f32 %v458, 0.0
      %v523 = vmax.f32 %v459, 0.0
      %v524 = vmax.f32 %v460, 0.0
      %v525 = vmax.f32 %v461, 0.0
      %v526 = vmax.f32 %v462, 0.0
      %v527 = vmax.f32 %v463, 0.0
      %v528 = vmax.f32 %v464, 0.0
      %v529 = vmax.f32 %v465, 0.0
      %v530 = vmax.f32 %v466, 0.0
      %v531 = vmax.f32 %v467, 0.0
      %v532 = vmax.f32 %v468, 0.0
      %v533 = vmax.f32 %v469, 0.0
      %v534 = vmax.f32 %v470, 0.0
      %v535 = vmax.f32 %v471, 0.0
      %v536 = vmax.f32 %v472, 0.0
      %v537 = vmax.f32 %v473, 0.0
      %v538 = vmax.f32 %v474, 0.0
      %v539 = vmax.f32 %v475, 0.0
      %v540 = vmax.f32 %v476, 0.0
      %v541 = vmax.f32 %v477, 0.0
      %v542 = vmax.f32 %v478, 0.0
      %v543 = vmax.f32 %v479, 0.0
      %v544 = vmax.f32 %v480, 0.0
      %v545 = vmax.f32 %v481, 0.0
      %v546 = vmax.f32 %v482, 0.0
      %v547 = vmax.f32 %v483, 0.0
      %v548 = vmax.f32 %v484, 0.0
      %v549 = vmax.f32 %v485, 0.0
      %v550 = vmax.f32 %v486, 0.0
      %v551 = vmax.f32 %v487, 0.0
      %v552 = vmax.f32 %v488, 0.0
      %v553 = vmax.f32 %v489, 0.0
      %v554 = vmax.f32 %v490, 0.0
      %v555 = vmax.f32 %v491, 0.0
      %v556 = vmax.f32 %v492, 0.0
      %v557 = vmax.f32 %v493, 0.0
      %v558 = vmax.f32 %v494, 0.0
      %v559 = vmax.f32 %v495, 0.0
      %v560 = vmax.f32 %v496, 0.0
      %v561 = vmax.f32 %v497, 0.0
      %v562 = vmax.f32 %v498, 0.0
      %v563 = vmax.f32 %v499, 0.0
      %v564 = vmax.f32 %v500, 0.0
      %v565 = vmax.f32 %v501, 0.0
      %v566 = vpack.c.bf16 %v502, %v502
      %v567 = vpack.c.bf16 %v503, %v503
      %v568 = vpack.c.bf16 %v504, %v504
      %v569 = vpack.c.bf16 %v505, %v505
      %v570 = vpack.c.bf16 %v506, %v506
      %v571 = vpack.c.bf16 %v507, %v507
      %v572 = vpack.c.bf16 %v508, %v508
      %v573 = vpack.c.bf16 %v509, %v509
      %v574 = vpack.c.bf16 %v510, %v510
      %v575 = vpack.c.bf16 %v511, %v511
      %v576 = vpack.c.bf16 %v512, %v512
      %v577 = vpack.c.bf16 %v513, %v513
      %v578 = vpack.c.bf16 %v514, %v514
      %v579 = vpack.c.bf16 %v515, %v515
      %v580 = vpack.c.bf16 %v516, %v516
      %v581 = vpack.c.bf16 %v517, %v517
      %v582 = vpack.c.bf16 %v518, %v518
      %v583 = vpack.c.bf16 %v519, %v519
      %v584 = vpack.c.bf16 %v520, %v520
      %v585 = vpack.c.bf16 %v521, %v521
      %v586 = vpack.c.bf16 %v522, %v522
      %v587 = vpack.c.bf16 %v523, %v523
      %v588 = vpack.c.bf16 %v524, %v524
      %v589 = vpack.c.bf16 %v525, %v525
      %v590 = vpack.c.bf16 %v526, %v526
      %v591 = vpack.c.bf16 %v527, %v527
      %v592 = vpack.c.bf16 %v528, %v528
      %v593 = vpack.c.bf16 %v529, %v529
      %v594 = vpack.c.bf16 %v530, %v530
      %v595 = vpack.c.bf16 %v531, %v531
      %v596 = vpack.c.bf16 %v532, %v532
      %v597 = vpack.c.bf16 %v533, %v533
      %v598 = vpack.c.bf16 %v534, %v534
      %v599 = vpack.c.bf16 %v535, %v535
      %v600 = vpack.c.bf16 %v536, %v536
      %v601 = vpack.c.bf16 %v537, %v537
      %v602 = vpack.c.bf16 %v538, %v538
      %v603 = vpack.c.bf16 %v539, %v539
      %v604 = vpack.c.bf16 %v540, %v540
      %v605 = vpack.c.bf16 %v541, %v541
      %v606 = vpack.c.bf16 %v542, %v542
      %v607 = vpack.c.bf16 %v543, %v543
      %v608 = vpack.c.bf16 %v544, %v544
      %v609 = vpack.c.bf16 %v545, %v545
      %v610 = vpack.c.bf16 %v546, %v546
      %v611 = vpack.c.bf16 %v547, %v547
      %v612 = vpack.c.bf16 %v548, %v548
      %v613 = vpack.c.bf16 %v549, %v549
      %v614 = vpack.c.bf16 %v550, %v550
      %v615 = vpack.c.bf16 %v551, %v551
      %v616 = vpack.c.bf16 %v552, %v552
      %v617 = vpack.c.bf16 %v553, %v553
      %v618 = vpack.c.bf16 %v554, %v554
      %v619 = vpack.c.bf16 %v555, %v555
      %v620 = vpack.c.bf16 %v556, %v556
      %v621 = vpack.c.bf16 %v557, %v557
      %v622 = vpack.c.bf16 %v558, %v558
      %v623 = vpack.c.bf16 %v559, %v559
      %v624 = vpack.c.bf16 %v560, %v560
      %v625 = vpack.c.bf16 %v561, %v561
      %v626 = vpack.c.bf16 %v562, %v562
      %v627 = vpack.c.bf16 %v563, %v563
      %v628 = vpack.c.bf16 %v564, %v564
      %v629 = vpack.c.bf16 %v565, %v565
      %630 = vst [vmem:[%s236] sm:$0xf] %v566
      %631 = vst [vmem:[%s236 + $0x4] sm:$0xf] %v567
      %632 = vst [vmem:[%s236 + $0x8] sm:$0xf] %v568
      %633 = vst [vmem:[%s236 + $0xc] sm:$0xf] %v569
      %634 = vst [vmem:[%s236 + $0x10] sm:$0xf] %v570
      %635 = vst [vmem:[%s236 + $0x14] sm:$0xf] %v571
      %636 = vst [vmem:[%s236 + $0x18] sm:$0xf] %v572
      %637 = vst [vmem:[%s236 + $0x1c] sm:$0xf] %v573
      %638 = vst [vmem:[%s236 + $0x20] sm:$0xf] %v574
      %639 = vst [vmem:[%s236 + $0x24] sm:$0xf] %v575
      %640 = vst [vmem:[%s236 + $0x28] sm:$0xf] %v576
      %641 = vst [vmem:[%s236 + $0x2c] sm:$0xf] %v577
      %642 = vst [vmem:[%s236 + $0x30] sm:$0xf] %v578
      %643 = vst [vmem:[%s236 + $0x34] sm:$0xf] %v579
      %644 = vst [vmem:[%s236 + $0x38] sm:$0xf] %v580
      %645 = vst [vmem:[%s236 + $0x3c] sm:$0xf] %v581
      %646 = vst [vmem:[%s236 + $0x40] sm:$0xf] %v582
      %647 = vst [vmem:[%s236 + $0x44] sm:$0xf] %v583
      %648 = vst [vmem:[%s236 + $0x48] sm:$0xf] %v584
      %649 = vst [vmem:[%s236 + $0x4c] sm:$0xf] %v585
      %650 = vst [vmem:[%s236 + $0x50] sm:$0xf] %v586
      %651 = vst [vmem:[%s236 + $0x54] sm:$0xf] %v587
      %652 = vst [vmem:[%s236 + $0x58] sm:$0xf] %v588
      %653 = vst [vmem:[%s236 + $0x5c] sm:$0xf] %v589
      %654 = vst [vmem:[%s236 + $0x60] sm:$0xf] %v590
      %655 = vst [vmem:[%s236 + $0x64] sm:$0xf] %v591
      %656 = vst [vmem:[%s236 + $0x68] sm:$0xf] %v592
      %657 = vst [vmem:[%s236 + $0x6c] sm:$0xf] %v593
      %658 = vst [vmem:[%s236 + $0x70] sm:$0xf] %v594
      %659 = vst [vmem:[%s236 + $0x74] sm:$0xf] %v595
      %660 = vst [vmem:[%s236 + $0x78] sm:$0xf] %v596
      %661 = vst [vmem:[%s236 + $0x7c] sm:$0xf] %v597
      %662 = vst [vmem:[%s236 + $0x80] sm:$0xf] %v598
      %663 = vst [vmem:[%s236 + $0x84] sm:$0xf] %v599
      %664 = vst [vmem:[%s236 + $0x88] sm:$0xf] %v600
      %665 = vst [vmem:[%s236 + $0x8c] sm:$0xf] %v601
      %666 = vst [vmem:[%s236 + $0x90] sm:$0xf] %v602
      %667 = vst [vmem:[%s236 + $0x94] sm:$0xf] %v603
      %668 = vst [vmem:[%s236 + $0x98] sm:$0xf] %v604
      %669 = vst [vmem:[%s236 + $0x9c] sm:$0xf] %v605
      %670 = vst [vmem:[%s236 + $0xa0] sm:$0xf] %v606
      %671 = vst [vmem:[%s236 + $0xa4] sm:$0xf] %v607
      %672 = vst [vmem:[%s236 + $0xa8] sm:$0xf] %v608
      %673 = vst [vmem:[%s236 + $0xac] sm:$0xf] %v609
      %674 = vst [vmem:[%s236 + $0xb0] sm:$0xf] %v610
      %675 = vst [vmem:[%s236 + $0xb4] sm:$0xf] %v611
      %676 = vst [vmem:[%s236 + $0xb8] sm:$0xf] %v612
      %677 = vst [vmem:[%s236 + $0xbc] sm:$0xf] %v613
      %678 = vst [vmem:[%s236 + $0xc0] sm:$0xf] %v614
      %679 = vst [vmem:[%s236 + $0xc4] sm:$0xf] %v615
      %680 = vst [vmem:[%s236 + $0xc8] sm:$0xf] %v616
      %681 = vst [vmem:[%s236 + $0xcc] sm:$0xf] %v617
      %682 = vst [vmem:[%s236 + $0xd0] sm:$0xf] %v618
      %683 = vst [vmem:[%s236 + $0xd4] sm:$0xf] %v619
      %684 = vst [vmem:[%s236 + $0xd8] sm:$0xf] %v620
      %685 = vst [vmem:[%s236 + $0xdc] sm:$0xf] %v621
      %686 = vst [vmem:[%s236 + $0xe0] sm:$0xf] %v622
      %687 = vst [vmem:[%s236 + $0xe4] sm:$0xf] %v623
      %688 = vst [vmem:[%s236 + $0xe8] sm:$0xf] %v624
      %689 = vst [vmem:[%s236 + $0xec] sm:$0xf] %v625
      %690 = vst [vmem:[%s236 + $0xf0] sm:$0xf] %v626
      %691 = vst [vmem:[%s236 + $0xf4] sm:$0xf] %v627
      %692 = vst [vmem:[%s236 + $0xf8] sm:$0xf] %v628
      %693 = vst [vmem:[%s236 + $0xfc] sm:$0xf] %v629
      %s694 = smul.u32 64, %s19
      %p695 = scmp.lt.s32.totalorder %s18, 1
      %s696 = scalar_select %p695, %s18, 1
      %p697 = scmp.lt.s32.totalorder %s694, 63
      %s698 = scalar_select %p697, %s694, 63
      %s699 = smul.addr %s696, 64
      %s700 = sadd.s32 %s698, %s699
      %s701 = smul.addr %s700, 4
      %s702 = scalar_lea.vmem %s3, %s701
      // Predicated region
      $region33: #{up_block_forward.7} parent=31 // pred_check
        %p703 = pneg %p126
      $region34: #{up_block_forward.7} parent=31 // pred_check_branch
        %705 = sbr.rel (%p703) target = $region36
      $region35: #{up_block_forward.7} parent=31 // pred_region
        %s706 = smul.u32 64, %s19
      $region36: #{up_block_forward.7} parent=31 // pred_fallthru
        _
    $region32: #{up_block_forward.7} parent=5 // pred_fallthru
      _
    %p707 = scmp.le.s32.totalorder 2, %s9
    // Predicated region
    $region37: #{up_block_forward.7} parent=5 // pred_check
      %p708 = pneg %p707
    $region38: #{up_block_forward.7} parent=5 // pred_check_branch
      %710 = sbr.rel (%p708) target = $region40
    $region39: #{up_block_forward.7} parent=5 // pred_region
      %s711 = ssub.s32 %s9, 2
      // Predicated region
      $region41: #{up_block_forward.7} parent=39 // pred_check
        %p712 = pneg %p132
      $region42: #{up_block_forward.7} parent=39 // pred_check_branch
        %714 = sbr.rel (%p712) target = $region44
      $region43: #{up_block_forward.7} parent=39 // pred_region
        %s715 = smul.u32 64, %s21
        %p716 = scmp.lt.s32.totalorder %s20, 1
        %s717 = scalar_select %p716, %s20, 1
        %p718 = scmp.lt.s32.totalorder %s715, 63
        %s719 = scalar_select %p718, %s715, 63
        %s720 = smul.addr %s717, 64
        %s721 = sadd.s32 %s719, %s720
        %s722 = smul.addr %s721, 4
        %s723 = scalar_lea.vmem %s3, %s722
      $region44: #{up_block_forward.7} parent=39 // pred_fallthru
        _
    $region40: #{up_block_forward.7} parent=5 // pred_fallthru
      _
  $region6: #{up_block_forward.7} parent=0 // loop_footer
    %s13 = sadd.s32 1, %s9
  $region7: #{up_block_forward.7} parent=0 // loop_footer_branch
    %8 = sbr.rel target = $region3
  $region8: #{up_block_forward.7} parent=0 // loop_exit
    _

// kernel: up_block_forward.9
$region0: #{up_block_forward.9}
  #allocation0 [shape = 'u32[]', space=smem, size = 0x4, offset = 0x4, fixed_abs, tag = 'smem constant byte address 0x4 - core index']
  #allocation1 [shape = 'u32[72,128]{1,0:T(1,128)}', space=vmem, size = 0x9000, scoped, tag = 'internal scratch']
  %s0 = inlined_call_operand.vmem [shape: bf16[2,512,128], index: 0, kind: input, shape index: {}]
  %s1 = inlined_call_operand.vmem [shape: f32[2,1,128], index: 1, kind: input, shape index: {}]
  %s2 = inlined_call_operand.vmem [shape: f32[2,1,128], index: 2, kind: input, shape index: {}]
  %s3 = inlined_call_operand.vmem [shape: bf16[2,512,128], index: 3, kind: input, shape index: {}]
  %s4 = inlined_call_operand.vmem [shape: bf16[2,512,128], index: 4, kind: output, shape index: {}]
  %s5 = sld [smem:[#allocation0]]
  $region49: #{up_block_forward.9} parent=0
    _
  %s7 = ssub.s32 1, %s5
  %s8 = scalar_select 0, %s7, %s5
  loop: start=0, step=1, limit=4
  $region2: #{up_block_forward.9} parent=0 // loop_pre_header
    _
  $region3: #{up_block_forward.9} parent=0 // loop_header
    %s10 = sphi 0, %s14
    %p11 = scmp.ge.s32.totalorder %s10, 4
    %s17 = sphi 0, %s29
    %s18 = sphi 0, %s25
    %s19 = sphi 0, %s17
    %s20 = sphi 0, %s18
    %s21 = sphi 0, %s19
    %s22 = sphi 0, %s20
    %s34 = sphi 0, %s36
    %s37 = sphi 0, %s34
    %s38 = sphi 0, %s37
    %s54 = sphi 0, %s38
    %s60 = sphi 0, %s62
    %s63 = sphi 0, %s60
    %s64 = sphi 0, %s63
    %s80 = sphi 0, %s64
    %s86 = sphi 0, %s88
    %s89 = sphi 0, %s86
    %s90 = sphi 0, %s89
    %s106 = sphi 0, %s90
    %s114 = sphi 0, %s116
    %s117 = sphi 0, %s114
    %s118 = sphi 0, %s117
    %s134 = sphi 0, %s118
    %s142 = sphi 0, %s144
    %s145 = sphi 0, %s142
    %s146 = sphi 0, %s145
    %s162 = sphi 0, %s146
  $region4: #{up_block_forward.9} parent=0 // loop_header_branch
    %13 = sbr.rel (%p11) target = $region8
  $region5: #{up_block_forward.9} parent=0 // loop_body
    %s15 = ssub.s32 %s10, 1
    %s16 = ssub.s32 %s10, 2
    %s23 = sadd.s32 1, %s18
    %p24 = scmp.ge.s32.totalorder %s23, 1
    %s25 = scalar_select %p24, 0, %s23
    %s26 = sadd.s32 1, %s17
    %s27 = scalar_select %p24, %s26, %s17
    %p28 = scmp.ge.s32.totalorder %s27, 2
    %s29 = scalar_select %p28, 0, %s27
    %s30 = ssub.s32 %s17, %s29
    %s31 = ssub.s32 %s18, %s25
    %s32 = sor.u32 %s30, %s31
    %p33 = scmp.eq.s32.totalorder %s32, 0
    %s35 = sadd.s32 %s34, 1
    %s36 = scalar_select %p33, %s34, %s35
    %p39 = pneg %p33
    %p40 = scmp.eq.s32.totalorder %s10, 1
    %p41 = por %p39, %p40
    %p42 = scmp.ne.s32.totalorder %s34, %s37
    %p43 = scmp.eq.s32.totalorder %s10, 0
    %p44 = por %p42, %p43
    %p45 = scmp.ne.s32.totalorder %s34, %s37
    %p46 = scmp.eq.s32.totalorder %s15, 1
    %p47 = por %p45, %p46
    %p48 = scmp.ne.s32.totalorder %s37, %s38
    %p49 = scmp.eq.s32.totalorder %s15, 0
    %p50 = por %p48, %p49
    %p51 = scmp.ne.s32.totalorder %s37, %s38
    %p52 = scmp.eq.s32.totalorder %s16, 1
    %p53 = por %p51, %p52
    %p55 = scmp.ne.s32.totalorder %s38, %s54
    %p56 = scmp.eq.s32.totalorder %s16, 0
    %p57 = por %p55, %p56
    %s58 = ssub.s32 %s17, %s29
    %p59 = scmp.eq.s32.totalorder %s58, 0
    %s61 = sadd.s32 %s60, 1
    %s62 = scalar_select %p59, %s60, %s61
    %p65 = pneg %p59
    %p66 = scmp.eq.s32.totalorder %s10, 1
    %p67 = por %p65, %p66
    %p68 = scmp.ne.s32.totalorder %s60, %s63
    %p69 = scmp.eq.s32.totalorder %s10, 0
    %p70 = por %p68, %p69
    %p71 = scmp.ne.s32.totalorder %s60, %s63
    %p72 = scmp.eq.s32.totalorder %s15, 1
    %p73 = por %p71, %p72
    %p74 = scmp.ne.s32.totalorder %s63, %s64
    %p75 = scmp.eq.s32.totalorder %s15, 0
    %p76 = por %p74, %p75
    %p77 = scmp.ne.s32.totalorder %s63, %s64
    %p78 = scmp.eq.s32.totalorder %s16, 1
    %p79 = por %p77, %p78
    %p81 = scmp.ne.s32.totalorder %s64, %s80
    %p82 = scmp.eq.s32.totalorder %s16, 0
    %p83 = por %p81, %p82
    %s84 = ssub.s32 %s17, %s29
    %p85 = scmp.eq.s32.totalorder %s84, 0
    %s87 = sadd.s32 %s86, 1
    %s88 = scalar_select %p85, %s86, %s87
    %p91 = pneg %p85
    %p92 = scmp.eq.s32.totalorder %s10, 1
    %p93 = por %p91, %p92
    %p94 = scmp.ne.s32.totalorder %s86, %s89
    %p95 = scmp.eq.s32.totalorder %s10, 0
    %p96 = por %p94, %p95
    %p97 = scmp.ne.s32.totalorder %s86, %s89
    %p98 = scmp.eq.s32.totalorder %s15, 1
    %p99 = por %p97, %p98
    %p100 = scmp.ne.s32.totalorder %s89, %s90
    %p101 = scmp.eq.s32.totalorder %s15, 0
    %p102 = por %p100, %p101
    %p103 = scmp.ne.s32.totalorder %s89, %s90
    %p104 = scmp.eq.s32.totalorder %s16, 1
    %p105 = por %p103, %p104
    %p107 = scmp.ne.s32.totalorder %s90, %s106
    %p108 = scmp.eq.s32.totalorder %s16, 0
    %p109 = por %p107, %p108
    %s110 = ssub.s32 %s17, %s29
    %s111 = ssub.s32 %s18, %s25
    %s112 = sor.u32 %s110, %s111
    %p113 = scmp.eq.s32.totalorder %s112, 0
    %s115 = sadd.s32 %s114, 1
    %s116 = scalar_select %p113, %s114, %s115
    %p119 = pneg %p113
    %p120 = scmp.eq.s32.totalorder %s10, 1
    %p121 = por %p119, %p120
    %p122 = scmp.ne.s32.totalorder %s114, %s117
    %p123 = scmp.eq.s32.totalorder %s10, 0
    %p124 = por %p122, %p123
    %p125 = scmp.ne.s32.totalorder %s114, %s117
    %p126 = scmp.eq.s32.totalorder %s15, 1
    %p127 = por %p125, %p126
    %p128 = scmp.ne.s32.totalorder %s117, %s118
    %p129 = scmp.eq.s32.totalorder %s15, 0
    %p130 = por %p128, %p129
    %p131 = scmp.ne.s32.totalorder %s117, %s118
    %p132 = scmp.eq.s32.totalorder %s16, 1
    %p133 = por %p131, %p132
    %p135 = scmp.ne.s32.totalorder %s118, %s134
    %p136 = scmp.eq.s32.totalorder %s16, 0
    %p137 = por %p135, %p136
    %s138 = ssub.s32 %s17, %s29
    %s139 = ssub.s32 %s18, %s25
    %s140 = sor.u32 %s138, %s139
    %p141 = scmp.eq.s32.totalorder %s140, 0
    %s143 = sadd.s32 %s142, 1
    %s144 = scalar_select %p141, %s142, %s143
    %p147 = pneg %p141
    %p148 = scmp.eq.s32.totalorder %s10, 1
    %p149 = por %p147, %p148
    %p150 = scmp.ne.s32.totalorder %s142, %s145
    %p151 = scmp.eq.s32.totalorder %s10, 0
    %p152 = por %p150, %p151
    %p153 = scmp.ne.s32.totalorder %s142, %s145
    %p154 = scmp.eq.s32.totalorder %s15, 1
    %p155 = por %p153, %p154
    %p156 = scmp.ne.s32.totalorder %s145, %s146
    %p157 = scmp.eq.s32.totalorder %s15, 0
    %p158 = por %p156, %p157
    %p159 = scmp.ne.s32.totalorder %s145, %s146
    %p160 = scmp.eq.s32.totalorder %s16, 1
    %p161 = por %p159, %p160
    %p163 = scmp.ne.s32.totalorder %s146, %s162
    %p164 = scmp.eq.s32.totalorder %s16, 0
    %p165 = por %p163, %p164
    %p166 = scmp.le.s32.totalorder 1, %s10
    %p167 = scmp.lt.s32.totalorder %s10, 3
    %p168 = pnand %p166, %p167
    %p169 = pneg %p168
    // Predicated region
    $region9: #{up_block_forward.9} parent=5 // pred_check
      _
    $region10: #{up_block_forward.9} parent=5 // pred_check_branch
      %171 = sbr.rel (%p168) target = $region12
    $region11: #{up_block_forward.9} parent=5 // pred_region
      %s172 = ssub.s32 %s10, 1
    $region12: #{up_block_forward.9} parent=5 // pred_fallthru
      _
    %p173 = scmp.lt.s32.totalorder %s10, 2
    // Predicated region
    $region13: #{up_block_forward.9} parent=5 // pred_check
      %p174 = pneg %p173
    $region14: #{up_block_forward.9} parent=5 // pred_check_branch
      %176 = sbr.rel (%p174) target = $region16
    $region15: #{up_block_forward.9} parent=5 // pred_region
      // Predicated region
      $region17: #{up_block_forward.9} parent=15 // pred_check
        %p177 = pneg %p44
      $region18: #{up_block_forward.9} parent=15 // pred_check_branch
        %179 = sbr.rel (%p177) target = $region20
      $region19: #{up_block_forward.9} parent=15 // pred_region
        %s180 = smul.u32 64, %s18
        %p181 = scmp.lt.s32.totalorder %s17, 1
        %s182 = scalar_select %p181, %s17, 1
        %p183 = scmp.lt.s32.totalorder %s180, 63
        %s184 = scalar_select %p183, %s180, 63
        %s185 = smul.addr %s182, 64
        %s186 = sadd.s32 %s184, %s185
        %s187 = smul.addr %s186, 4
        %s188 = scalar_lea.vmem %s0, %s187
        %s189 = smul.u32 64, %s18
      $region20: #{up_block_forward.9} parent=15 // pred_fallthru
        _
      // Predicated region
      $region21: #{up_block_forward.9} parent=15 // pred_check
        %p190 = pneg %p70
      $region22: #{up_block_forward.9} parent=15 // pred_check_branch
        %192 = sbr.rel (%p190) target = $region24
      $region23: #{up_block_forward.9} parent=15 // pred_region
        %p193 = scmp.lt.s32.totalorder %s17, 1
        %s194 = scalar_select %p193, %s17, 1
        %s195 = scalar_lea.vmem %s1, %s194
      $region24: #{up_block_forward.9} parent=15 // pred_fallthru
        _
      // Predicated region
      $region25: #{up_block_forward.9} parent=15 // pred_check
        %p196 = pneg %p96
      $region26: #{up_block_forward.9} parent=15 // pred_check_branch
        %198 = sbr.rel (%p196) target = $region28
      $region27: #{up_block_forward.9} parent=15 // pred_region
        %p199 = scmp.lt.s32.totalorder %s17, 1
        %s200 = scalar_select %p199, %s17, 1
        %s201 = scalar_lea.vmem %s2, %s200
      $region28: #{up_block_forward.9} parent=15 // pred_fallthru
        _
      // Predicated region
      $region29: #{up_block_forward.9} parent=15 // pred_check
        %p202 = pneg %p124
      $region30: #{up_block_forward.9} parent=15 // pred_check_branch
        %204 = sbr.rel (%p202) target = $region32
      $region31: #{up_block_forward.9} parent=15 // pred_region
        %s205 = smul.u32 64, %s18
        %p206 = scmp.lt.s32.totalorder %s17, 1
        %s207 = scalar_select %p206, %s17, 1
        %p208 = scmp.lt.s32.totalorder %s205, 63
        %s209 = scalar_select %p208, %s205, 63
        %s210 = smul.addr %s207, 64
        %s211 = sadd.s32 %s209, %s210
        %s212 = smul.addr %s211, 4
        %s213 = scalar_lea.vmem %s3, %s212
        %s214 = smul.u32 64, %s18
      $region32: #{up_block_forward.9} parent=15 // pred_fallthru
        _
    $region16: #{up_block_forward.9} parent=5 // pred_fallthru
      _
    %p215 = scmp.le.s32.totalorder 1, %s10
    %p216 = scmp.lt.s32.totalorder %s10, 3
    %p217 = pnand %p215, %p216
    %p218 = pneg %p217
    // Predicated region
    $region33: #{up_block_forward.9} parent=5 // pred_check
      _
    $region34: #{up_block_forward.9} parent=5 // pred_check_branch
      %220 = sbr.rel (%p217) target = $region36
    $region35: #{up_block_forward.9} parent=5 // pred_region
      %s221 = ssub.s32 %s10, 1
      %s222 = smul.u32 64, %s20
      %p223 = scmp.lt.s32.totalorder %s19, 1
      %s224 = scalar_select %p223, %s19, 1
      %p225 = scmp.lt.s32.totalorder %s222, 63
      %s226 = scalar_select %p225, %s222, 63
      %s227 = smul.addr %s224, 64
      %s228 = sadd.s32 %s226, %s227
      %s229 = smul.addr %s228, 4
      %s230 = scalar_lea.vmem %s0, %s229
      %p231 = pneg %p50
      %p232 = pneg %p47
      %p233 = scmp.lt.s32.totalorder %s19, 1
      %s234 = scalar_select %p233, %s19, 1
      %s235 = scalar_lea.vmem %s1, %s234
      %p236 = pneg %p76
      %p237 = pneg %p73
      %p238 = scmp.lt.s32.totalorder %s19, 1
      %s239 = scalar_select %p238, %s19, 1
      %s240 = scalar_lea.vmem %s2, %s239
      %p241 = pneg %p102
      %p242 = pneg %p99
      %s243 = smul.u32 64, %s20
      %p244 = scmp.lt.s32.totalorder %s19, 1
      %s245 = scalar_select %p244, %s19, 1
      %p246 = scmp.lt.s32.totalorder %s243, 63
      %s247 = scalar_select %p246, %s243, 63
      %s248 = smul.addr %s245, 64
      %s249 = sadd.s32 %s247, %s248
      %s250 = smul.addr %s249, 4
      %s251 = scalar_lea.vmem %s3, %s250
      %p252 = pneg %p130
      %p253 = pneg %p127
      %p254 = pneg %p158
      %p255 = pneg %p155
      %s256 = smul.u32 64, %s20
      %p257 = scmp.lt.s32.totalorder %s19, 1
      %s258 = scalar_select %p257, %s19, 1
      %p259 = scmp.lt.s32.totalorder %s256, 63
      %s260 = scalar_select %p259, %s256, 63
      %s261 = smul.addr %s258, 64
      %s262 = sadd.s32 %s260, %s261
      %s263 = smul.addr %s262, 4
      %s264 = scalar_lea.vmem %s4, %s263
      %s265 = smul.u32 64, %s20
      %p266 = scmp.lt.s32.totalorder %s19, 1
      %s267 = scalar_select %p266, %s19, 1
      %p268 = scmp.lt.s32.totalorder %s265, 63
      %s269 = scalar_select %p268, %s265, 63
      %s270 = smul.addr %s267, 64
      %s271 = sadd.s32 %s269, %s270
      %s272 = smul.addr %s271, 4
      %s273 = scalar_lea.vmem %s0, %s272
      %s274 = smul.u32 64, %s20
      %p275 = scmp.lt.s32.totalorder %s19, 1
      %s276 = scalar_select %p275, %s19, 1
      %s277 = scalar_lea.vmem %s1, %s276
      %p278 = scmp.lt.s32.totalorder %s19, 1
      %s279 = scalar_select %p278, %s19, 1
      %s280 = scalar_lea.vmem %s2, %s279
      %s281 = smul.u32 64, %s20
      %p282 = scmp.lt.s32.totalorder %s19, 1
      %s283 = scalar_select %p282, %s19, 1
      %p284 = scmp.lt.s32.totalorder %s281, 63
      %s285 = scalar_select %p284, %s281, 63
      %s286 = smul.addr %s283, 64
      %s287 = sadd.s32 %s285, %s286
      %s288 = smul.addr %s287, 4
      %s289 = scalar_lea.vmem %s3, %s288
      %s290 = smul.u32 64, %s20
      %s291 = smul.u32 64, %s20
      %p292 = scmp.lt.s32.totalorder %s19, 1
      %s293 = scalar_select %p292, %s19, 1
      %p294 = scmp.lt.s32.totalorder %s291, 63
      %s295 = scalar_select %p294, %s291, 63
      %s296 = smul.addr %s293, 64
      %s297 = sadd.s32 %s295, %s296
      %s298 = smul.addr %s297, 4
      %s299 = scalar_lea.vmem %s4, %s298
      %s300 = smul.u32 64, %s20
      %v301 = vld [vmem:[%s273] sm:$0xf]
      %v302 = vld [vmem:[%s273 + $0x4] sm:$0xf]
      %v303 = vld [vmem:[%s273 + $0x8] sm:$0xf]
      %v304 = vld [vmem:[%s273 + $0xc] sm:$0xf]
      %v305 = vld [vmem:[%s273 + $0x10] sm:$0xf]
      %v306 = vld [vmem:[%s273 + $0x14] sm:$0xf]
      %v307 = vld [vmem:[%s273 + $0x18] sm:$0xf]
      %v308 = vld [vmem:[%s273 + $0x1c] sm:$0xf]
      %v309 = vld [vmem:[%s273 + $0x20] sm:$0xf]
      %v310 = vld [vmem:[%s273 + $0x24] sm:$0xf]
      %v311 = vld [vmem:[%s273 + $0x28] sm:$0xf]
      %v312 = vld [vmem:[%s273 + $0x2c] sm:$0xf]
      %v313 = vld [vmem:[%s273 + $0x30] sm:$0xf]
      %v314 = vld [vmem:[%s273 + $0x34] sm:$0xf]
      %v315 = vld [vmem:[%s273 + $0x38] sm:$0xf]
      %v316 = vld [vmem:[%s273 + $0x3c] sm:$0xf]
      %v317 = vld [vmem:[%s273 + $0x40] sm:$0xf]
      %v318 = vld [vmem:[%s273 + $0x44] sm:$0xf]
      %v319 = vld [vmem:[%s273 + $0x48] sm:$0xf]
      %v320 = vld [vmem:[%s273 + $0x4c] sm:$0xf]
      %v321 = vld [vmem:[%s273 + $0x50] sm:$0xf]
      %v322 = vld [vmem:[%s273 + $0x54] sm:$0xf]
      %v323 = vld [vmem:[%s273 + $0x58] sm:$0xf]
      %v324 = vld [vmem:[%s273 + $0x5c] sm:$0xf]
      %v325 = vld [vmem:[%s273 + $0x60] sm:$0xf]
      %v326 = vld [vmem:[%s273 + $0x64] sm:$0xf]
      %v327 = vld [vmem:[%s273 + $0x68] sm:$0xf]
      %v328 = vld [vmem:[%s273 + $0x6c] sm:$0xf]
      %v329 = vld [vmem:[%s273 + $0x70] sm:$0xf]
      %v330 = vld [vmem:[%s273 + $0x74] sm:$0xf]
      %v331 = vld [vmem:[%s273 + $0x78] sm:$0xf]
      %v332 = vld [vmem:[%s273 + $0x7c] sm:$0xf]
      %v333 = vld [vmem:[%s273 + $0x80] sm:$0xf]
      %v334 = vld [vmem:[%s273 + $0x84] sm:$0xf]
      %v335 = vld [vmem:[%s273 + $0x88] sm:$0xf]
      %v336 = vld [vmem:[%s273 + $0x8c] sm:$0xf]
      %v337 = vld [vmem:[%s273 + $0x90] sm:$0xf]
      %v338 = vld [vmem:[%s273 + $0x94] sm:$0xf]
      %v339 = vld [vmem:[%s273 + $0x98] sm:$0xf]
      %v340 = vld [vmem:[%s273 + $0x9c] sm:$0xf]
      %v341 = vld [vmem:[%s273 + $0xa0] sm:$0xf]
      %v342 = vld [vmem:[%s273 + $0xa4] sm:$0xf]
      %v343 = vld [vmem:[%s273 + $0xa8] sm:$0xf]
      %v344 = vld [vmem:[%s273 + $0xac] sm:$0xf]
      %v345 = vld [vmem:[%s273 + $0xb0] sm:$0xf]
      %v346 = vld [vmem:[%s273 + $0xb4] sm:$0xf]
      %v347 = vld [vmem:[%s273 + $0xb8] sm:$0xf]
      %v348 = vld [vmem:[%s273 + $0xbc] sm:$0xf]
      %v349 = vld [vmem:[%s273 + $0xc0] sm:$0xf]
      %v350 = vld [vmem:[%s273 + $0xc4] sm:$0xf]
      %v351 = vld [vmem:[%s273 + $0xc8] sm:$0xf]
      %v352 = vld [vmem:[%s273 + $0xcc] sm:$0xf]
      %v353 = vld [vmem:[%s273 + $0xd0] sm:$0xf]
      %v354 = vld [vmem:[%s273 + $0xd4] sm:$0xf]
      %v355 = vld [vmem:[%s273 + $0xd8] sm:$0xf]
      %v356 = vld [vmem:[%s273 + $0xdc] sm:$0xf]
      %v357 = vld [vmem:[%s273 + $0xe0] sm:$0xf]
      %v358 = vld [vmem:[%s273 + $0xe4] sm:$0xf]
      %v359 = vld [vmem:[%s273 + $0xe8] sm:$0xf]
      %v360 = vld [vmem:[%s273 + $0xec] sm:$0xf]
      %v361 = vld [vmem:[%s273 + $0xf0] sm:$0xf]
      %v362 = vld [vmem:[%s273 + $0xf4] sm:$0xf]
      %v363 = vld [vmem:[%s273 + $0xf8] sm:$0xf]
      %v364 = vld [vmem:[%s273 + $0xfc] sm:$0xf]
      %v365 = vunpack.c.l.bf16 %v301
      %v366 = vunpack.c.l.bf16 %v302
      %v367 = vunpack.c.l.bf16 %v303
      %v368 = vunpack.c.l.bf16 %v304
      %v369 = vunpack.c.l.bf16 %v305
      %v370 = vunpack.c.l.bf16 %v306
      %v371 = vunpack.c.l.bf16 %v307
      %v372 = vunpack.c.l.bf16 %v308
      %v373 = vunpack.c.l.bf16 %v309
      %v374 = vunpack.c.l.bf16 %v310
      %v375 = vunpack.c.l.bf16 %v311
      %v376 = vunpack.c.l.bf16 %v312
      %v377 = vunpack.c.l.bf16 %v313
      %v378 = vunpack.c.l.bf16 %v314
      %v379 = vunpack.c.l.bf16 %v315
      %v380 = vunpack.c.l.bf16 %v316
      %v381 = vunpack.c.l.bf16 %v317
      %v382 = vunpack.c.l.bf16 %v318
      %v383 = vunpack.c.l.bf16 %v319
      %v384 = vunpack.c.l.bf16 %v320
      %v385 = vunpack.c.l.bf16 %v321
      %v386 = vunpack.c.l.bf16 %v322
      %v387 = vunpack.c.l.bf16 %v323
      %v388 = vunpack.c.l.bf16 %v324
      %v389 = vunpack.c.l.bf16 %v325
      %v390 = vunpack.c.l.bf16 %v326
      %v391 = vunpack.c.l.bf16 %v327
      %v392 = vunpack.c.l.bf16 %v328
      %v393 = vunpack.c.l.bf16 %v329
      %v394 = vunpack.c.l.bf16 %v330
      %v395 = vunpack.c.l.bf16 %v331
      %v396 = vunpack.c.l.bf16 %v332
      %v397 = vunpack.c.l.bf16 %v333
      %v398 = vunpack.c.l.bf16 %v334
      %v399 = vunpack.c.l.bf16 %v335
      %v400 = vunpack.c.l.bf16 %v336
      %v401 = vunpack.c.l.bf16 %v337
      %v402 = vunpack.c.l.bf16 %v338
      %v403 = vunpack.c.l.bf16 %v339
      %v404 = vunpack.c.l.bf16 %v340
      %v405 = vunpack.c.l.bf16 %v341
      %v406 = vunpack.c.l.bf16 %v342
      %v407 = vunpack.c.l.bf16 %v343
      %v408 = vunpack.c.l.bf16 %v344
      %v409 = vunpack.c.l.bf16 %v345
      %v410 = vunpack.c.l.bf16 %v346
      %v411 = vunpack.c.l.bf16 %v347
      %v412 = vunpack.c.l.bf16 %v348
      %v413 = vunpack.c.l.bf16 %v349
      %v414 = vunpack.c.l.bf16 %v350
      %v415 = vunpack.c.l.bf16 %v351
      %v416 = vunpack.c.l.bf16 %v352
      %v417 = vunpack.c.l.bf16 %v353
      %v418 = vunpack.c.l.bf16 %v354
      %v419 = vunpack.c.l.bf16 %v355
      %v420 = vunpack.c.l.bf16 %v356
      %v421 = vunpack.c.l.bf16 %v357
      %v422 = vunpack.c.l.bf16 %v358
      %v423 = vunpack.c.l.bf16 %v359
      %v424 = vunpack.c.l.bf16 %v360
      %v425 = vunpack.c.l.bf16 %v361
      %v426 = vunpack.c.l.bf16 %v362
      %v427 = vunpack.c.l.bf16 %v363
      %v428 = vunpack.c.l.bf16 %v364
      %v429 = vld [vmem:[%s277] sm:$0x1]
      %v431 = vperm.slane %v429, 0
      %v433 = vmul.f32 %v365, %v431
      %v434 = vmul.f32 %v366, %v431
      %v435 = vmul.f32 %v367, %v431
      %v436 = vmul.f32 %v368, %v431
      %v437 = vmul.f32 %v369, %v431
      %v438 = vmul.f32 %v370, %v431
      %v439 = vmul.f32 %v371, %v431
      %v440 = vmul.f32 %v372, %v431
      %v441 = vmul.f32 %v373, %v431
      %v442 = vmul.f32 %v374, %v431
      %v443 = vmul.f32 %v375, %v431
      %v444 = vmul.f32 %v376, %v431
      %v445 = vmul.f32 %v377, %v431
      %v446 = vmul.f32 %v378, %v431
      %v447 = vmul.f32 %v379, %v431
      %v448 = vmul.f32 %v380, %v431
      %v449 = vmul.f32 %v381, %v431
      %v450 = vmul.f32 %v382, %v431
      %v451 = vmul.f32 %v383, %v431
      %v452 = vmul.f32 %v384, %v431
      %v453 = vmul.f32 %v385, %v431
      %v454 = vmul.f32 %v386, %v431
      %v455 = vmul.f32 %v387, %v431
      %v456 = vmul.f32 %v388, %v431
      %v457 = vmul.f32 %v389, %v431
      %v458 = vmul.f32 %v390, %v431
      %v459 = vmul.f32 %v391, %v431
      %v460 = vmul.f32 %v392, %v431
      %v461 = vmul.f32 %v393, %v431
      %v462 = vmul.f32 %v394, %v431
      %v463 = vmul.f32 %v395, %v431
      %v464 = vmul.f32 %v396, %v431
      %v465 = vmul.f32 %v397, %v431
      %v466 = vmul.f32 %v398, %v431
      %v467 = vmul.f32 %v399, %v431
      %v468 = vmul.f32 %v400, %v431
      %v469 = vmul.f32 %v401, %v431
      %v470 = vmul.f32 %v402, %v431
      %v471 = vmul.f32 %v403, %v431
      %v472 = vmul.f32 %v404, %v431
      %v473 = vmul.f32 %v405, %v431
      %v474 = vmul.f32 %v406, %v431
      %v475 = vmul.f32 %v407, %v431
      %v476 = vmul.f32 %v408, %v431
      %v477 = vmul.f32 %v409, %v431
      %v478 = vmul.f32 %v410, %v431
      %v479 = vmul.f32 %v411, %v431
      %v480 = vmul.f32 %v412, %v431
      %v481 = vmul.f32 %v413, %v431
      %v482 = vmul.f32 %v414, %v431
      %v483 = vmul.f32 %v415, %v431
      %v484 = vmul.f32 %v416, %v431
      %v485 = vmul.f32 %v417, %v431
      %v486 = vmul.f32 %v418, %v431
      %v487 = vmul.f32 %v419, %v431
      %v488 = vmul.f32 %v420, %v431
      %v489 = vmul.f32 %v421, %v431
      %v490 = vmul.f32 %v422, %v431
      %v491 = vmul.f32 %v423, %v431
      %v492 = vmul.f32 %v424, %v431
      %v493 = vmul.f32 %v425, %v431
      %v494 = vmul.f32 %v426, %v431
      %v495 = vmul.f32 %v427, %v431
      %v496 = vmul.f32 %v428, %v431
      %v497 = vld [vmem:[%s280] sm:$0x1]
      %v499 = vperm.slane %v497, 0
      %v501 = vadd.f32 %v433, %v499
      %v502 = vadd.f32 %v434, %v499
      %v503 = vadd.f32 %v435, %v499
      %v504 = vadd.f32 %v436, %v499
      %v505 = vadd.f32 %v437, %v499
      %v506 = vadd.f32 %v438, %v499
      %v507 = vadd.f32 %v439, %v499
      %v508 = vadd.f32 %v440, %v499
      %v509 = vadd.f32 %v441, %v499
      %v510 = vadd.f32 %v442, %v499
      %v511 = vadd.f32 %v443, %v499
      %v512 = vadd.f32 %v444, %v499
      %v513 = vadd.f32 %v445, %v499
      %v514 = vadd.f32 %v446, %v499
      %v515 = vadd.f32 %v447, %v499
      %v516 = vadd.f32 %v448, %v499
      %v517 = vadd.f32 %v449, %v499
      %v518 = vadd.f32 %v450, %v499
      %v519 = vadd.f32 %v451, %v499
      %v520 = vadd.f32 %v452, %v499
      %v521 = vadd.f32 %v453, %v499
      %v522 = vadd.f32 %v454, %v499
      %v523 = vadd.f32 %v455, %v499
      %v524 = vadd.f32 %v456, %v499
      %v525 = vadd.f32 %v457, %v499
      %v526 = vadd.f32 %v458, %v499
      %v527 = vadd.f32 %v459, %v499
      %v528 = vadd.f32 %v460, %v499
      %v529 = vadd.f32 %v461, %v499
      %v530 = vadd.f32 %v462, %v499
      %v531 = vadd.f32 %v463, %v499
      %v532 = vadd.f32 %v464, %v499
      %v533 = vadd.f32 %v465, %v499
      %v534 = vadd.f32 %v466, %v499
      %v535 = vadd.f32 %v467, %v499
      %v536 = vadd.f32 %v468, %v499
      %v537 = vadd.f32 %v469, %v499
      %v538 = vadd.f32 %v470, %v499
      %v539 = vadd.f32 %v471, %v499
      %v540 = vadd.f32 %v472, %v499
      %v541 = vadd.f32 %v473, %v499
      %v542 = vadd.f32 %v474, %v499
      %v543 = vadd.f32 %v475, %v499
      %v544 = vadd.f32 %v476, %v499
      %v545 = vadd.f32 %v477, %v499
      %v546 = vadd.f32 %v478, %v499
      %v547 = vadd.f32 %v479, %v499
      %v548 = vadd.f32 %v480, %v499
      %v549 = vadd.f32 %v481, %v499
      %v550 = vadd.f32 %v482, %v499
      %v551 = vadd.f32 %v483, %v499
      %v552 = vadd.f32 %v484, %v499
      %v553 = vadd.f32 %v485, %v499
      %v554 = vadd.f32 %v486, %v499
      %v555 = vadd.f32 %v487, %v499
      %v556 = vadd.f32 %v488, %v499
      %v557 = vadd.f32 %v489, %v499
      %v558 = vadd.f32 %v490, %v499
      %v559 = vadd.f32 %v491, %v499
      %v560 = vadd.f32 %v492, %v499
      %v561 = vadd.f32 %v493, %v499
      %v562 = vadd.f32 %v494, %v499
      %v563 = vadd.f32 %v495, %v499
      %v564 = vadd.f32 %v496, %v499
      %v565 = vld [vmem:[%s289] sm:$0xf]
      %v566 = vld [vmem:[%s289 + $0x4] sm:$0xf]
      %v567 = vld [vmem:[%s289 + $0x8] sm:$0xf]
      %v568 = vld [vmem:[%s289 + $0xc] sm:$0xf]
      %v569 = vld [vmem:[%s289 + $0x10] sm:$0xf]
      %v570 = vld [vmem:[%s289 + $0x14] sm:$0xf]
      %v571 = vld [vmem:[%s289 + $0x18] sm:$0xf]
      %v572 = vld [vmem:[%s289 + $0x1c] sm:$0xf]
      %v573 = vld [vmem:[%s289 + $0x20] sm:$0xf]
      %v574 = vld [vmem:[%s289 + $0x24] sm:$0xf]
      %v575 = vld [vmem:[%s289 + $0x28] sm:$0xf]
      %v576 = vld [vmem:[%s289 + $0x2c] sm:$0xf]
      %v577 = vld [vmem:[%s289 + $0x30] sm:$0xf]
      %v578 = vld [vmem:[%s289 + $0x34] sm:$0xf]
      %v579 = vld [vmem:[%s289 + $0x38] sm:$0xf]
      %v580 = vld [vmem:[%s289 + $0x3c] sm:$0xf]
      %v581 = vld [vmem:[%s289 + $0x40] sm:$0xf]
      %v582 = vld [vmem:[%s289 + $0x44] sm:$0xf]
      %v583 = vld [vmem:[%s289 + $0x48] sm:$0xf]
      %v584 = vld [vmem:[%s289 + $0x4c] sm:$0xf]
      %v585 = vld [vmem:[%s289 + $0x50] sm:$0xf]
      %v586 = vld [vmem:[%s289 + $0x54] sm:$0xf]
      %v587 = vld [vmem:[%s289 + $0x58] sm:$0xf]
      %v588 = vld [vmem:[%s289 + $0x5c] sm:$0xf]
      %v589 = vld [vmem:[%s289 + $0x60] sm:$0xf]
      %v590 = vld [vmem:[%s289 + $0x64] sm:$0xf]
      %v591 = vld [vmem:[%s289 + $0x68] sm:$0xf]
      %v592 = vld [vmem:[%s289 + $0x6c] sm:$0xf]
      %v593 = vld [vmem:[%s289 + $0x70] sm:$0xf]
      %v594 = vld [vmem:[%s289 + $0x74] sm:$0xf]
      %v595 = vld [vmem:[%s289 + $0x78] sm:$0xf]
      %v596 = vld [vmem:[%s289 + $0x7c] sm:$0xf]
      %v597 = vld [vmem:[%s289 + $0x80] sm:$0xf]
      %v598 = vld [vmem:[%s289 + $0x84] sm:$0xf]
      %v599 = vld [vmem:[%s289 + $0x88] sm:$0xf]
      %v600 = vld [vmem:[%s289 + $0x8c] sm:$0xf]
      %v601 = vld [vmem:[%s289 + $0x90] sm:$0xf]
      %v602 = vld [vmem:[%s289 + $0x94] sm:$0xf]
      %v603 = vld [vmem:[%s289 + $0x98] sm:$0xf]
      %v604 = vld [vmem:[%s289 + $0x9c] sm:$0xf]
      %v605 = vld [vmem:[%s289 + $0xa0] sm:$0xf]
      %v606 = vld [vmem:[%s289 + $0xa4] sm:$0xf]
      %v607 = vld [vmem:[%s289 + $0xa8] sm:$0xf]
      %v608 = vld [vmem:[%s289 + $0xac] sm:$0xf]
      %v609 = vld [vmem:[%s289 + $0xb0] sm:$0xf]
      %v610 = vld [vmem:[%s289 + $0xb4] sm:$0xf]
      %v611 = vld [vmem:[%s289 + $0xb8] sm:$0xf]
      %v612 = vld [vmem:[%s289 + $0xbc] sm:$0xf]
      %v613 = vld [vmem:[%s289 + $0xc0] sm:$0xf]
      %v614 = vld [vmem:[%s289 + $0xc4] sm:$0xf]
      %v615 = vld [vmem:[%s289 + $0xc8] sm:$0xf]
      %v616 = vld [vmem:[%s289 + $0xcc] sm:$0xf]
      %v617 = vld [vmem:[%s289 + $0xd0] sm:$0xf]
      %v618 = vld [vmem:[%s289 + $0xd4] sm:$0xf]
      %v619 = vld [vmem:[%s289 + $0xd8] sm:$0xf]
      %v620 = vld [vmem:[%s289 + $0xdc] sm:$0xf]
      %v621 = vld [vmem:[%s289 + $0xe0] sm:$0xf]
      %v622 = vld [vmem:[%s289 + $0xe4] sm:$0xf]
      %v623 = vld [vmem:[%s289 + $0xe8] sm:$0xf]
      %v624 = vld [vmem:[%s289 + $0xec] sm:$0xf]
      %v625 = vld [vmem:[%s289 + $0xf0] sm:$0xf]
      %v626 = vld [vmem:[%s289 + $0xf4] sm:$0xf]
      %v627 = vld [vmem:[%s289 + $0xf8] sm:$0xf]
      %v628 = vld [vmem:[%s289 + $0xfc] sm:$0xf]
      %v629 = vunpack.c.l.bf16 %v565
      %v630 = vunpack.c.l.bf16 %v566
      %v631 = vunpack.c.l.bf16 %v567
      %v632 = vunpack.c.l.bf16 %v568
      %v633 = vunpack.c.l.bf16 %v569
      %v634 = vunpack.c.l.bf16 %v570
      %v635 = vunpack.c.l.bf16 %v571
      %v636 = vunpack.c.l.bf16 %v572
      %v637 = vunpack.c.l.bf16 %v573
      %v638 = vunpack.c.l.bf16 %v574
      %v639 = vunpack.c.l.bf16 %v575
      %v640 = vunpack.c.l.bf16 %v576
      %v641 = vunpack.c.l.bf16 %v577
      %v642 = vunpack.c.l.bf16 %v578
      %v643 = vunpack.c.l.bf16 %v579
      %v644 = vunpack.c.l.bf16 %v580
      %v645 = vunpack.c.l.bf16 %v581
      %v646 = vunpack.c.l.bf16 %v582
      %v647 = vunpack.c.l.bf16 %v583
      %v648 = vunpack.c.l.bf16 %v584
      %v649 = vunpack.c.l.bf16 %v585
      %v650 = vunpack.c.l.bf16 %v586
      %v651 = vunpack.c.l.bf16 %v587
      %v652 = vunpack.c.l.bf16 %v588
      %v653 = vunpack.c.l.bf16 %v589
      %v654 = vunpack.c.l.bf16 %v590
      %v655 = vunpack.c.l.bf16 %v591
      %v656 = vunpack.c.l.bf16 %v592
      %v657 = vunpack.c.l.bf16 %v593
      %v658 = vunpack.c.l.bf16 %v594
      %v659 = vunpack.c.l.bf16 %v595
      %v660 = vunpack.c.l.bf16 %v596
      %v661 = vunpack.c.l.bf16 %v597
      %v662 = vunpack.c.l.bf16 %v598
      %v663 = vunpack.c.l.bf16 %v599
      %v664 = vunpack.c.l.bf16 %v600
      %v665 = vunpack.c.l.bf16 %v601
      %v666 = vunpack.c.l.bf16 %v602
      %v667 = vunpack.c.l.bf16 %v603
      %v668 = vunpack.c.l.bf16 %v604
      %v669 = vunpack.c.l.bf16 %v605
      %v670 = vunpack.c.l.bf16 %v606
      %v671 = vunpack.c.l.bf16 %v607
      %v672 = vunpack.c.l.bf16 %v608
      %v673 = vunpack.c.l.bf16 %v609
      %v674 = vunpack.c.l.bf16 %v610
      %v675 = vunpack.c.l.bf16 %v611
      %v676 = vunpack.c.l.bf16 %v612
      %v677 = vunpack.c.l.bf16 %v613
      %v678 = vunpack.c.l.bf16 %v614
      %v679 = vunpack.c.l.bf16 %v615
      %v680 = vunpack.c.l.bf16 %v616
      %v681 = vunpack.c.l.bf16 %v617
      %v682 = vunpack.c.l.bf16 %v618
      %v683 = vunpack.c.l.bf16 %v619
      %v684 = vunpack.c.l.bf16 %v620
      %v685 = vunpack.c.l.bf16 %v621
      %v686 = vunpack.c.l.bf16 %v622
      %v687 = vunpack.c.l.bf16 %v623
      %v688 = vunpack.c.l.bf16 %v624
      %v689 = vunpack.c.l.bf16 %v625
      %v690 = vunpack.c.l.bf16 %v626
      %v691 = vunpack.c.l.bf16 %v627
      %v692 = vunpack.c.l.bf16 %v628
      %v693 = vadd.f32 %v501, %v629
      %v694 = vadd.f32 %v502, %v630
      %v695 = vadd.f32 %v503, %v631
      %v696 = vadd.f32 %v504, %v632
      %v697 = vadd.f32 %v505, %v633
      %v698 = vadd.f32 %v506, %v634
      %v699 = vadd.f32 %v507, %v635
      %v700 = vadd.f32 %v508, %v636
      %v701 = vadd.f32 %v509, %v637
      %v702 = vadd.f32 %v510, %v638
      %v703 = vadd.f32 %v511, %v639
      %v704 = vadd.f32 %v512, %v640
      %v705 = vadd.f32 %v513, %v641
      %v706 = vadd.f32 %v514, %v642
      %v707 = vadd.f32 %v515, %v643
      %v708 = vadd.f32 %v516, %v644
      %v709 = vadd.f32 %v517, %v645
      %v710 = vadd.f32 %v518, %v646
      %v711 = vadd.f32 %v519, %v647
      %v712 = vadd.f32 %v520, %v648
      %v713 = vadd.f32 %v521, %v649
      %v714 = vadd.f32 %v522, %v650
      %v715 = vadd.f32 %v523, %v651
      %v716 = vadd.f32 %v524, %v652
      %v717 = vadd.f32 %v525, %v653
      %v718 = vadd.f32 %v526, %v654
      %v719 = vadd.f32 %v527, %v655
      %v720 = vadd.f32 %v528, %v656
      %v721 = vadd.f32 %v529, %v657
      %v722 = vadd.f32 %v530, %v658
      %v723 = vadd.f32 %v531, %v659
      %v724 = vadd.f32 %v532, %v660
      %v725 = vadd.f32 %v533, %v661
      %v726 = vadd.f32 %v534, %v662
      %v727 = vadd.f32 %v535, %v663
      %v728 = vadd.f32 %v536, %v664
      %v729 = vadd.f32 %v537, %v665
      %v730 = vadd.f32 %v538, %v666
      %v731 = vadd.f32 %v539, %v667
      %v732 = vadd.f32 %v540, %v668
      %v733 = vadd.f32 %v541, %v669
      %v734 = vadd.f32 %v542, %v670
      %v735 = vadd.f32 %v543, %v671
      %v736 = vadd.f32 %v544, %v672
      %v737 = vadd.f32 %v545, %v673
      %v738 = vadd.f32 %v546, %v674
      %v739 = vadd.f32 %v547, %v675
      %v740 = vadd.f32 %v548, %v676
      %v741 = vadd.f32 %v549, %v677
      %v742 = vadd.f32 %v550, %v678
      %v743 = vadd.f32 %v551, %v679
      %v744 = vadd.f32 %v552, %v680
      %v745 = vadd.f32 %v553, %v681
      %v746 = vadd.f32 %v554, %v682
      %v747 = vadd.f32 %v555, %v683
      %v748 = vadd.f32 %v556, %v684
      %v749 = vadd.f32 %v557, %v685
      %v750 = vadd.f32 %v558, %v686
      %v751 = vadd.f32 %v559, %v687
      %v752 = vadd.f32 %v560, %v688
      %v753 = vadd.f32 %v561, %v689
      %v754 = vadd.f32 %v562, %v690
      %v755 = vadd.f32 %v563, %v691
      %v756 = vadd.f32 %v564, %v692
      %v757 = vmax.f32 %v693, 0.0
      %v758 = vmax.f32 %v694, 0.0
      %v759 = vmax.f32 %v695, 0.0
      %v760 = vmax.f32 %v696, 0.0
      %v761 = vmax.f32 %v697, 0.0
      %v762 = vmax.f32 %v698, 0.0
      %v763 = vmax.f32 %v699, 0.0
      %v764 = vmax.f32 %v700, 0.0
      %v765 = vmax.f32 %v701, 0.0
      %v766 = vmax.f32 %v702, 0.0
      %v767 = vmax.f32 %v703, 0.0
      %v768 = vmax.f32 %v704, 0.0
      %v769 = vmax.f32 %v705, 0.0
      %v770 = vmax.f32 %v706, 0.0
      %v771 = vmax.f32 %v707, 0.0
      %v772 = vmax.f32 %v708, 0.0
      %v773 = vmax.f32 %v709, 0.0
      %v774 = vmax.f32 %v710, 0.0
      %v775 = vmax.f32 %v711, 0.0
      %v776 = vmax.f32 %v712, 0.0
      %v777 = vmax.f32 %v713, 0.0
      %v778 = vmax.f32 %v714, 0.0
      %v779 = vmax.f32 %v715, 0.0
      %v780 = vmax.f32 %v716, 0.0
      %v781 = vmax.f32 %v717, 0.0
      %v782 = vmax.f32 %v718, 0.0
      %v783 = vmax.f32 %v719, 0.0
      %v784 = vmax.f32 %v720, 0.0
      %v785 = vmax.f32 %v721, 0.0
      %v786 = vmax.f32 %v722, 0.0
      %v787 = vmax.f32 %v723, 0.0
      %v788 = vmax.f32 %v724, 0.0
      %v789 = vmax.f32 %v725, 0.0
      %v790 = vmax.f32 %v726, 0.0
      %v791 = vmax.f32 %v727, 0.0
      %v792 = vmax.f32 %v728, 0.0
      %v793 = vmax.f32 %v729, 0.0
      %v794 = vmax.f32 %v730, 0.0
      %v795 = vmax.f32 %v731, 0.0
      %v796 = vmax.f32 %v732, 0.0
      %v797 = vmax.f32 %v733, 0.0
      %v798 = vmax.f32 %v734, 0.0
      %v799 = vmax.f32 %v735, 0.0
      %v800 = vmax.f32 %v736, 0.0
      %v801 = vmax.f32 %v737, 0.0
      %v802 = vmax.f32 %v738, 0.0
      %v803 = vmax.f32 %v739, 0.0
      %v804 = vmax.f32 %v740, 0.0
      %v805 = vmax.f32 %v741, 0.0
      %v806 = vmax.f32 %v742, 0.0
      %v807 = vmax.f32 %v743, 0.0
      %v808 = vmax.f32 %v744, 0.0
      %v809 = vmax.f32 %v745, 0.0
      %v810 = vmax.f32 %v746, 0.0
      %v811 = vmax.f32 %v747, 0.0
      %v812 = vmax.f32 %v748, 0.0
      %v813 = vmax.f32 %v749, 0.0
      %v814 = vmax.f32 %v750, 0.0
      %v815 = vmax.f32 %v751, 0.0
      %v816 = vmax.f32 %v752, 0.0
      %v817 = vmax.f32 %v753, 0.0
      %v818 = vmax.f32 %v754, 0.0
      %v819 = vmax.f32 %v755, 0.0
      %v820 = vmax.f32 %v756, 0.0
      %v821 = vpack.c.bf16 %v757, %v757
      %v822 = vpack.c.bf16 %v758, %v758
      %v823 = vpack.c.bf16 %v759, %v759
      %v824 = vpack.c.bf16 %v760, %v760
      %v825 = vpack.c.bf16 %v761, %v761
      %v826 = vpack.c.bf16 %v762, %v762
      %v827 = vpack.c.bf16 %v763, %v763
      %v828 = vpack.c.bf16 %v764, %v764
      %v829 = vpack.c.bf16 %v765, %v765
      %v830 = vpack.c.bf16 %v766, %v766
      %v831 = vpack.c.bf16 %v767, %v767
      %v832 = vpack.c.bf16 %v768, %v768
      %v833 = vpack.c.bf16 %v769, %v769
      %v834 = vpack.c.bf16 %v770, %v770
      %v835 = vpack.c.bf16 %v771, %v771
      %v836 = vpack.c.bf16 %v772, %v772
      %v837 = vpack.c.bf16 %v773, %v773
      %v838 = vpack.c.bf16 %v774, %v774
      %v839 = vpack.c.bf16 %v775, %v775
      %v840 = vpack.c.bf16 %v776, %v776
      %v841 = vpack.c.bf16 %v777, %v777
      %v842 = vpack.c.bf16 %v778, %v778
      %v843 = vpack.c.bf16 %v779, %v779
      %v844 = vpack.c.bf16 %v780, %v780
      %v845 = vpack.c.bf16 %v781, %v781
      %v846 = vpack.c.bf16 %v782, %v782
      %v847 = vpack.c.bf16 %v783, %v783
      %v848 = vpack.c.bf16 %v784, %v784
      %v849 = vpack.c.bf16 %v785, %v785
      %v850 = vpack.c.bf16 %v786, %v786
      %v851 = vpack.c.bf16 %v787, %v787
      %v852 = vpack.c.bf16 %v788, %v788
      %v853 = vpack.c.bf16 %v789, %v789
      %v854 = vpack.c.bf16 %v790, %v790
      %v855 = vpack.c.bf16 %v791, %v791
      %v856 = vpack.c.bf16 %v792, %v792
      %v857 = vpack.c.bf16 %v793, %v793
      %v858 = vpack.c.bf16 %v794, %v794
      %v859 = vpack.c.bf16 %v795, %v795
      %v860 = vpack.c.bf16 %v796, %v796
      %v861 = vpack.c.bf16 %v797, %v797
      %v862 = vpack.c.bf16 %v798, %v798
      %v863 = vpack.c.bf16 %v799, %v799
      %v864 = vpack.c.bf16 %v800, %v800
      %v865 = vpack.c.bf16 %v801, %v801
      %v866 = vpack.c.bf16 %v802, %v802
      %v867 = vpack.c.bf16 %v803, %v803
      %v868 = vpack.c.bf16 %v804, %v804
      %v869 = vpack.c.bf16 %v805, %v805
      %v870 = vpack.c.bf16 %v806, %v806
      %v871 = vpack.c.bf16 %v807, %v807
      %v872 = vpack.c.bf16 %v808, %v808
      %v873 = vpack.c.bf16 %v809, %v809
      %v874 = vpack.c.bf16 %v810, %v810
      %v875 = vpack.c.bf16 %v811, %v811
      %v876 = vpack.c.bf16 %v812, %v812
      %v877 = vpack.c.bf16 %v813, %v813
      %v878 = vpack.c.bf16 %v814, %v814
      %v879 = vpack.c.bf16 %v815, %v815
      %v880 = vpack.c.bf16 %v816, %v816
      %v881 = vpack.c.bf16 %v817, %v817
      %v882 = vpack.c.bf16 %v818, %v818
      %v883 = vpack.c.bf16 %v819, %v819
      %v884 = vpack.c.bf16 %v820, %v820
      %885 = vst [vmem:[%s299] sm:$0xf] %v821
      %886 = vst [vmem:[%s299 + $0x4] sm:$0xf] %v822
      %887 = vst [vmem:[%s299 + $0x8] sm:$0xf] %v823
      %888 = vst [vmem:[%s299 + $0xc] sm:$0xf] %v824
      %889 = vst [vmem:[%s299 + $0x10] sm:$0xf] %v825
      %890 = vst [vmem:[%s299 + $0x14] sm:$0xf] %v826
      %891 = vst [vmem:[%s299 + $0x18] sm:$0xf] %v827
      %892 = vst [vmem:[%s299 + $0x1c] sm:$0xf] %v828
      %893 = vst [vmem:[%s299 + $0x20] sm:$0xf] %v829
      %894 = vst [vmem:[%s299 + $0x24] sm:$0xf] %v830
      %895 = vst [vmem:[%s299 + $0x28] sm:$0xf] %v831
      %896 = vst [vmem:[%s299 + $0x2c] sm:$0xf] %v832
      %897 = vst [vmem:[%s299 + $0x30] sm:$0xf] %v833
      %898 = vst [vmem:[%s299 + $0x34] sm:$0xf] %v834
      %899 = vst [vmem:[%s299 + $0x38] sm:$0xf] %v835
      %900 = vst [vmem:[%s299 + $0x3c] sm:$0xf] %v836
      %901 = vst [vmem:[%s299 + $0x40] sm:$0xf] %v837
      %902 = vst [vmem:[%s299 + $0x44] sm:$0xf] %v838
      %903 = vst [vmem:[%s299 + $0x48] sm:$0xf] %v839
      %904 = vst [vmem:[%s299 + $0x4c] sm:$0xf] %v840
      %905 = vst [vmem:[%s299 + $0x50] sm:$0xf] %v841
      %906 = vst [vmem:[%s299 + $0x54] sm:$0xf] %v842
      %907 = vst [vmem:[%s299 + $0x58] sm:$0xf] %v843
      %908 = vst [vmem:[%s299 + $0x5c] sm:$0xf] %v844
      %909 = vst [vmem:[%s299 + $0x60] sm:$0xf] %v845
      %910 = vst [vmem:[%s299 + $0x64] sm:$0xf] %v846
      %911 = vst [vmem:[%s299 + $0x68] sm:$0xf] %v847
      %912 = vst [vmem:[%s299 + $0x6c] sm:$0xf] %v848
      %913 = vst [vmem:[%s299 + $0x70] sm:$0xf] %v849
      %914 = vst [vmem:[%s299 + $0x74] sm:$0xf] %v850
      %915 = vst [vmem:[%s299 + $0x78] sm:$0xf] %v851
      %916 = vst [vmem:[%s299 + $0x7c] sm:$0xf] %v852
      %917 = vst [vmem:[%s299 + $0x80] sm:$0xf] %v853
      %918 = vst [vmem:[%s299 + $0x84] sm:$0xf] %v854
      %919 = vst [vmem:[%s299 + $0x88] sm:$0xf] %v855
      %920 = vst [vmem:[%s299 + $0x8c] sm:$0xf] %v856
      %921 = vst [vmem:[%s299 + $0x90] sm:$0xf] %v857
      %922 = vst [vmem:[%s299 + $0x94] sm:$0xf] %v858
      %923 = vst [vmem:[%s299 + $0x98] sm:$0xf] %v859
      %924 = vst [vmem:[%s299 + $0x9c] sm:$0xf] %v860
      %925 = vst [vmem:[%s299 + $0xa0] sm:$0xf] %v861
      %926 = vst [vmem:[%s299 + $0xa4] sm:$0xf] %v862
      %927 = vst [vmem:[%s299 + $0xa8] sm:$0xf] %v863
      %928 = vst [vmem:[%s299 + $0xac] sm:$0xf] %v864
      %929 = vst [vmem:[%s299 + $0xb0] sm:$0xf] %v865
      %930 = vst [vmem:[%s299 + $0xb4] sm:$0xf] %v866
      %931 = vst [vmem:[%s299 + $0xb8] sm:$0xf] %v867
      %932 = vst [vmem:[%s299 + $0xbc] sm:$0xf] %v868
      %933 = vst [vmem:[%s299 + $0xc0] sm:$0xf] %v869
      %934 = vst [vmem:[%s299 + $0xc4] sm:$0xf] %v870
      %935 = vst [vmem:[%s299 + $0xc8] sm:$0xf] %v871
      %936 = vst [vmem:[%s299 + $0xcc] sm:$0xf] %v872
      %937 = vst [vmem:[%s299 + $0xd0] sm:$0xf] %v873
      %938 = vst [vmem:[%s299 + $0xd4] sm:$0xf] %v874
      %939 = vst [vmem:[%s299 + $0xd8] sm:$0xf] %v875
      %940 = vst [vmem:[%s299 + $0xdc] sm:$0xf] %v876
      %941 = vst [vmem:[%s299 + $0xe0] sm:$0xf] %v877
      %942 = vst [vmem:[%s299 + $0xe4] sm:$0xf] %v878
      %943 = vst [vmem:[%s299 + $0xe8] sm:$0xf] %v879
      %944 = vst [vmem:[%s299 + $0xec] sm:$0xf] %v880
      %945 = vst [vmem:[%s299 + $0xf0] sm:$0xf] %v881
      %946 = vst [vmem:[%s299 + $0xf4] sm:$0xf] %v882
      %947 = vst [vmem:[%s299 + $0xf8] sm:$0xf] %v883
      %948 = vst [vmem:[%s299 + $0xfc] sm:$0xf] %v884
      %s949 = smul.u32 64, %s20
      %p950 = scmp.lt.s32.totalorder %s19, 1
      %s951 = scalar_select %p950, %s19, 1
      %p952 = scmp.lt.s32.totalorder %s949, 63
      %s953 = scalar_select %p952, %s949, 63
      %s954 = smul.addr %s951, 64
      %s955 = sadd.s32 %s953, %s954
      %s956 = smul.addr %s955, 4
      %s957 = scalar_lea.vmem %s4, %s956
      // Predicated region
      $region37: #{up_block_forward.9} parent=35 // pred_check
        %p958 = pneg %p155
      $region38: #{up_block_forward.9} parent=35 // pred_check_branch
        %960 = sbr.rel (%p958) target = $region40
      $region39: #{up_block_forward.9} parent=35 // pred_region
        %s961 = smul.u32 64, %s20
      $region40: #{up_block_forward.9} parent=35 // pred_fallthru
        _
    $region36: #{up_block_forward.9} parent=5 // pred_fallthru
      _
    %p962 = scmp.le.s32.totalorder 2, %s10
    // Predicated region
    $region41: #{up_block_forward.9} parent=5 // pred_check
      %p963 = pneg %p962
    $region42: #{up_block_forward.9} parent=5 // pred_check_branch
      %965 = sbr.rel (%p963) target = $region44
    $region43: #{up_block_forward.9} parent=5 // pred_region
      %s966 = ssub.s32 %s10, 2
      // Predicated region
      $region45: #{up_block_forward.9} parent=43 // pred_check
        %p967 = pneg %p161
      $region46: #{up_block_forward.9} parent=43 // pred_check_branch
        %969 = sbr.rel (%p967) target = $region48
      $region47: #{up_block_forward.9} parent=43 // pred_region
        %s970 = smul.u32 64, %s22
        %p971 = scmp.lt.s32.totalorder %s21, 1
        %s972 = scalar_select %p971, %s21, 1
        %p973 = scmp.lt.s32.totalorder %s970, 63
        %s974 = scalar_select %p973, %s970, 63
        %s975 = smul.addr %s972, 64
        %s976 = sadd.s32 %s974, %s975
        %s977 = smul.addr %s976, 4
        %s978 = scalar_lea.vmem %s4, %s977
      $region48: #{up_block_forward.9} parent=43 // pred_fallthru
        _
    $region44: #{up_block_forward.9} parent=5 // pred_fallthru
      _
  $region6: #{up_block_forward.9} parent=0 // loop_footer
    %s14 = sadd.s32 1, %s10
  $region7: #{up_block_forward.9} parent=0 // loop_footer_branch
    %9 = sbr.rel target = $region3
  $region8: #{up_block_forward.9} parent=0 // loop_exit
    _

// kernel: up_block_forward.11
$region0: #{up_block_forward.11}
  #allocation0 [shape = 'u32[]', space=smem, size = 0x4, offset = 0x4, fixed_abs, tag = 'smem constant byte address 0x4 - core index']
  #allocation1 [shape = 'u32[72,128]{1,0:T(1,128)}', space=vmem, size = 0x9000, scoped, tag = 'internal scratch']
  %s0 = inlined_call_operand.vmem [shape: bf16[2,512,128], index: 0, kind: input, shape index: {}]
  %s1 = inlined_call_operand.vmem [shape: f32[2,1,128], index: 1, kind: input, shape index: {}]
  %s2 = inlined_call_operand.vmem [shape: f32[2,1,128], index: 2, kind: input, shape index: {}]
  %s3 = inlined_call_operand.vmem [shape: f32[2,512,128], index: 3, kind: output, shape index: {}]
  %s4 = sld [smem:[#allocation0]]
  $region45: #{up_block_forward.11} parent=0
    _
  %s6 = ssub.s32 1, %s4
  %s7 = scalar_select 0, %s6, %s4
  loop: start=0, step=1, limit=4
  $region2: #{up_block_forward.11} parent=0 // loop_pre_header
    _
  $region3: #{up_block_forward.11} parent=0 // loop_header
    %s9 = sphi 0, %s13
    %p10 = scmp.ge.s32.totalorder %s9, 4
    %s16 = sphi 0, %s28
    %s17 = sphi 0, %s24
    %s18 = sphi 0, %s16
    %s19 = sphi 0, %s17
    %s20 = sphi 0, %s18
    %s21 = sphi 0, %s19
    %s33 = sphi 0, %s35
    %s36 = sphi 0, %s33
    %s37 = sphi 0, %s36
    %s53 = sphi 0, %s37
    %s59 = sphi 0, %s61
    %s62 = sphi 0, %s59
    %s63 = sphi 0, %s62
    %s79 = sphi 0, %s63
    %s85 = sphi 0, %s87
    %s88 = sphi 0, %s85
    %s89 = sphi 0, %s88
    %s105 = sphi 0, %s89
    %s113 = sphi 0, %s115
    %s116 = sphi 0, %s113
    %s117 = sphi 0, %s116
    %s133 = sphi 0, %s117
  $region4: #{up_block_forward.11} parent=0 // loop_header_branch
    %12 = sbr.rel (%p10) target = $region8
  $region5: #{up_block_forward.11} parent=0 // loop_body
    %s14 = ssub.s32 %s9, 1
    %s15 = ssub.s32 %s9, 2
    %s22 = sadd.s32 1, %s17
    %p23 = scmp.ge.s32.totalorder %s22, 1
    %s24 = scalar_select %p23, 0, %s22
    %s25 = sadd.s32 1, %s16
    %s26 = scalar_select %p23, %s25, %s16
    %p27 = scmp.ge.s32.totalorder %s26, 2
    %s28 = scalar_select %p27, 0, %s26
    %s29 = ssub.s32 %s16, %s28
    %s30 = ssub.s32 %s17, %s24
    %s31 = sor.u32 %s29, %s30
    %p32 = scmp.eq.s32.totalorder %s31, 0
    %s34 = sadd.s32 %s33, 1
    %s35 = scalar_select %p32, %s33, %s34
    %p38 = pneg %p32
    %p39 = scmp.eq.s32.totalorder %s9, 1
    %p40 = por %p38, %p39
    %p41 = scmp.ne.s32.totalorder %s33, %s36
    %p42 = scmp.eq.s32.totalorder %s9, 0
    %p43 = por %p41, %p42
    %p44 = scmp.ne.s32.totalorder %s33, %s36
    %p45 = scmp.eq.s32.totalorder %s14, 1
    %p46 = por %p44, %p45
    %p47 = scmp.ne.s32.totalorder %s36, %s37
    %p48 = scmp.eq.s32.totalorder %s14, 0
    %p49 = por %p47, %p48
    %p50 = scmp.ne.s32.totalorder %s36, %s37
    %p51 = scmp.eq.s32.totalorder %s15, 1
    %p52 = por %p50, %p51
    %p54 = scmp.ne.s32.totalorder %s37, %s53
    %p55 = scmp.eq.s32.totalorder %s15, 0
    %p56 = por %p54, %p55
    %s57 = ssub.s32 %s16, %s28
    %p58 = scmp.eq.s32.totalorder %s57, 0
    %s60 = sadd.s32 %s59, 1
    %s61 = scalar_select %p58, %s59, %s60
    %p64 = pneg %p58
    %p65 = scmp.eq.s32.totalorder %s9, 1
    %p66 = por %p64, %p65
    %p67 = scmp.ne.s32.totalorder %s59, %s62
    %p68 = scmp.eq.s32.totalorder %s9, 0
    %p69 = por %p67, %p68
    %p70 = scmp.ne.s32.totalorder %s59, %s62
    %p71 = scmp.eq.s32.totalorder %s14, 1
    %p72 = por %p70, %p71
    %p73 = scmp.ne.s32.totalorder %s62, %s63
    %p74 = scmp.eq.s32.totalorder %s14, 0
    %p75 = por %p73, %p74
    %p76 = scmp.ne.s32.totalorder %s62, %s63
    %p77 = scmp.eq.s32.totalorder %s15, 1
    %p78 = por %p76, %p77
    %p80 = scmp.ne.s32.totalorder %s63, %s79
    %p81 = scmp.eq.s32.totalorder %s15, 0
    %p82 = por %p80, %p81
    %s83 = ssub.s32 %s16, %s28
    %p84 = scmp.eq.s32.totalorder %s83, 0
    %s86 = sadd.s32 %s85, 1
    %s87 = scalar_select %p84, %s85, %s86
    %p90 = pneg %p84
    %p91 = scmp.eq.s32.totalorder %s9, 1
    %p92 = por %p90, %p91
    %p93 = scmp.ne.s32.totalorder %s85, %s88
    %p94 = scmp.eq.s32.totalorder %s9, 0
    %p95 = por %p93, %p94
    %p96 = scmp.ne.s32.totalorder %s85, %s88
    %p97 = scmp.eq.s32.totalorder %s14, 1
    %p98 = por %p96, %p97
    %p99 = scmp.ne.s32.totalorder %s88, %s89
    %p100 = scmp.eq.s32.totalorder %s14, 0
    %p101 = por %p99, %p100
    %p102 = scmp.ne.s32.totalorder %s88, %s89
    %p103 = scmp.eq.s32.totalorder %s15, 1
    %p104 = por %p102, %p103
    %p106 = scmp.ne.s32.totalorder %s89, %s105
    %p107 = scmp.eq.s32.totalorder %s15, 0
    %p108 = por %p106, %p107
    %s109 = ssub.s32 %s16, %s28
    %s110 = ssub.s32 %s17, %s24
    %s111 = sor.u32 %s109, %s110
    %p112 = scmp.eq.s32.totalorder %s111, 0
    %s114 = sadd.s32 %s113, 1
    %s115 = scalar_select %p112, %s113, %s114
    %p118 = pneg %p112
    %p119 = scmp.eq.s32.totalorder %s9, 1
    %p120 = por %p118, %p119
    %p121 = scmp.ne.s32.totalorder %s113, %s116
    %p122 = scmp.eq.s32.totalorder %s9, 0
    %p123 = por %p121, %p122
    %p124 = scmp.ne.s32.totalorder %s113, %s116
    %p125 = scmp.eq.s32.totalorder %s14, 1
    %p126 = por %p124, %p125
    %p127 = scmp.ne.s32.totalorder %s116, %s117
    %p128 = scmp.eq.s32.totalorder %s14, 0
    %p129 = por %p127, %p128
    %p130 = scmp.ne.s32.totalorder %s116, %s117
    %p131 = scmp.eq.s32.totalorder %s15, 1
    %p132 = por %p130, %p131
    %p134 = scmp.ne.s32.totalorder %s117, %s133
    %p135 = scmp.eq.s32.totalorder %s15, 0
    %p136 = por %p134, %p135
    %p137 = scmp.le.s32.totalorder 1, %s9
    %p138 = scmp.lt.s32.totalorder %s9, 3
    %p139 = pnand %p137, %p138
    %p140 = pneg %p139
    // Predicated region
    $region9: #{up_block_forward.11} parent=5 // pred_check
      _
    $region10: #{up_block_forward.11} parent=5 // pred_check_branch
      %142 = sbr.rel (%p139) target = $region12
    $region11: #{up_block_forward.11} parent=5 // pred_region
      %s143 = ssub.s32 %s9, 1
    $region12: #{up_block_forward.11} parent=5 // pred_fallthru
      _
    %p144 = scmp.lt.s32.totalorder %s9, 2
    // Predicated region
    $region13: #{up_block_forward.11} parent=5 // pred_check
      %p145 = pneg %p144
    $region14: #{up_block_forward.11} parent=5 // pred_check_branch
      %147 = sbr.rel (%p145) target = $region16
    $region15: #{up_block_forward.11} parent=5 // pred_region
      // Predicated region
      $region17: #{up_block_forward.11} parent=15 // pred_check
        %p148 = pneg %p43
      $region18: #{up_block_forward.11} parent=15 // pred_check_branch
        %150 = sbr.rel (%p148) target = $region20
      $region19: #{up_block_forward.11} parent=15 // pred_region
        %s151 = smul.u32 64, %s17
        %p152 = scmp.lt.s32.totalorder %s16, 1
        %s153 = scalar_select %p152, %s16, 1
        %p154 = scmp.lt.s32.totalorder %s151, 63
        %s155 = scalar_select %p154, %s151, 63
        %s156 = smul.addr %s153, 64
        %s157 = sadd.s32 %s155, %s156
        %s158 = smul.addr %s157, 4
        %s159 = scalar_lea.vmem %s0, %s158
        %s160 = smul.u32 64, %s17
      $region20: #{up_block_forward.11} parent=15 // pred_fallthru
        _
      // Predicated region
      $region21: #{up_block_forward.11} parent=15 // pred_check
        %p161 = pneg %p69
      $region22: #{up_block_forward.11} parent=15 // pred_check_branch
        %163 = sbr.rel (%p161) target = $region24
      $region23: #{up_block_forward.11} parent=15 // pred_region
        %p164 = scmp.lt.s32.totalorder %s16, 1
        %s165 = scalar_select %p164, %s16, 1
        %s166 = scalar_lea.vmem %s1, %s165
      $region24: #{up_block_forward.11} parent=15 // pred_fallthru
        _
      // Predicated region
      $region25: #{up_block_forward.11} parent=15 // pred_check
        %p167 = pneg %p95
      $region26: #{up_block_forward.11} parent=15 // pred_check_branch
        %169 = sbr.rel (%p167) target = $region28
      $region27: #{up_block_forward.11} parent=15 // pred_region
        %p170 = scmp.lt.s32.totalorder %s16, 1
        %s171 = scalar_select %p170, %s16, 1
        %s172 = scalar_lea.vmem %s2, %s171
      $region28: #{up_block_forward.11} parent=15 // pred_fallthru
        _
    $region16: #{up_block_forward.11} parent=5 // pred_fallthru
      _
    %p173 = scmp.le.s32.totalorder 1, %s9
    %p174 = scmp.lt.s32.totalorder %s9, 3
    %p175 = pnand %p173, %p174
    %p176 = pneg %p175
    // Predicated region
    $region29: #{up_block_forward.11} parent=5 // pred_check
      _
    $region30: #{up_block_forward.11} parent=5 // pred_check_branch
      %178 = sbr.rel (%p175) target = $region32
    $region31: #{up_block_forward.11} parent=5 // pred_region
      %s179 = ssub.s32 %s9, 1
      %s180 = smul.u32 64, %s19
      %p181 = scmp.lt.s32.totalorder %s18, 1
      %s182 = scalar_select %p181, %s18, 1
      %p183 = scmp.lt.s32.totalorder %s180, 63
      %s184 = scalar_select %p183, %s180, 63
      %s185 = smul.addr %s182, 64
      %s186 = sadd.s32 %s184, %s185
      %s187 = smul.addr %s186, 4
      %s188 = scalar_lea.vmem %s0, %s187
      %p189 = pneg %p49
      %p190 = pneg %p46
      %p191 = scmp.lt.s32.totalorder %s18, 1
      %s192 = scalar_select %p191, %s18, 1
      %s193 = scalar_lea.vmem %s1, %s192
      %p194 = pneg %p75
      %p195 = pneg %p72
      %p196 = scmp.lt.s32.totalorder %s18, 1
      %s197 = scalar_select %p196, %s18, 1
      %s198 = scalar_lea.vmem %s2, %s197
      %p199 = pneg %p101
      %p200 = pneg %p98
      %p201 = pneg %p129
      %p202 = pneg %p126
      %s203 = smul.u32 64, %s19
      %p204 = scmp.lt.s32.totalorder %s18, 1
      %s205 = scalar_select %p204, %s18, 1
      %p206 = scmp.lt.s32.totalorder %s203, 63
      %s207 = scalar_select %p206, %s203, 63
      %s208 = smul.addr %s205, 64
      %s209 = sadd.s32 %s207, %s208
      %s210 = smul.addr %s209, 8
      %s211 = scalar_lea.vmem %s3, %s210
      %s212 = smul.u32 64, %s19
      %p213 = scmp.lt.s32.totalorder %s18, 1
      %s214 = scalar_select %p213, %s18, 1
      %p215 = scmp.lt.s32.totalorder %s212, 63
      %s216 = scalar_select %p215, %s212, 63
      %s217 = smul.addr %s214, 64
      %s218 = sadd.s32 %s216, %s217
      %s219 = smul.addr %s218, 4
      %s220 = scalar_lea.vmem %s0, %s219
      %s221 = smul.u32 64, %s19
      %p222 = scmp.lt.s32.totalorder %s18, 1
      %s223 = scalar_select %p222, %s18, 1
      %s224 = scalar_lea.vmem %s1, %s223
      %p225 = scmp.lt.s32.totalorder %s18, 1
      %s226 = scalar_select %p225, %s18, 1
      %s227 = scalar_lea.vmem %s2, %s226
      %s228 = smul.u32 64, %s19
      %p229 = scmp.lt.s32.totalorder %s18, 1
      %s230 = scalar_select %p229, %s18, 1
      %p231 = scmp.lt.s32.totalorder %s228, 63
      %s232 = scalar_select %p231, %s228, 63
      %s233 = smul.addr %s230, 64
      %s234 = sadd.s32 %s232, %s233
      %s235 = smul.addr %s234, 8
      %s236 = scalar_lea.vmem %s3, %s235
      %s237 = smul.u32 64, %s19
      %v238 = vld [vmem:[%s220] sm:$0xf]
      %v239 = vld [vmem:[%s220 + $0x4] sm:$0xf]
      %v240 = vld [vmem:[%s220 + $0x8] sm:$0xf]
      %v241 = vld [vmem:[%s220 + $0xc] sm:$0xf]
      %v242 = vld [vmem:[%s220 + $0x10] sm:$0xf]
      %v243 = vld [vmem:[%s220 + $0x14] sm:$0xf]
      %v244 = vld [vmem:[%s220 + $0x18] sm:$0xf]
      %v245 = vld [vmem:[%s220 + $0x1c] sm:$0xf]
      %v246 = vld [vmem:[%s220 + $0x20] sm:$0xf]
      %v247 = vld [vmem:[%s220 + $0x24] sm:$0xf]
      %v248 = vld [vmem:[%s220 + $0x28] sm:$0xf]
      %v249 = vld [vmem:[%s220 + $0x2c] sm:$0xf]
      %v250 = vld [vmem:[%s220 + $0x30] sm:$0xf]
      %v251 = vld [vmem:[%s220 + $0x34] sm:$0xf]
      %v252 = vld [vmem:[%s220 + $0x38] sm:$0xf]
      %v253 = vld [vmem:[%s220 + $0x3c] sm:$0xf]
      %v254 = vld [vmem:[%s220 + $0x40] sm:$0xf]
      %v255 = vld [vmem:[%s220 + $0x44] sm:$0xf]
      %v256 = vld [vmem:[%s220 + $0x48] sm:$0xf]
      %v257 = vld [vmem:[%s220 + $0x4c] sm:$0xf]
      %v258 = vld [vmem:[%s220 + $0x50] sm:$0xf]
      %v259 = vld [vmem:[%s220 + $0x54] sm:$0xf]
      %v260 = vld [vmem:[%s220 + $0x58] sm:$0xf]
      %v261 = vld [vmem:[%s220 + $0x5c] sm:$0xf]
      %v262 = vld [vmem:[%s220 + $0x60] sm:$0xf]
      %v263 = vld [vmem:[%s220 + $0x64] sm:$0xf]
      %v264 = vld [vmem:[%s220 + $0x68] sm:$0xf]
      %v265 = vld [vmem:[%s220 + $0x6c] sm:$0xf]
      %v266 = vld [vmem:[%s220 + $0x70] sm:$0xf]
      %v267 = vld [vmem:[%s220 + $0x74] sm:$0xf]
      %v268 = vld [vmem:[%s220 + $0x78] sm:$0xf]
      %v269 = vld [vmem:[%s220 + $0x7c] sm:$0xf]
      %v270 = vld [vmem:[%s220 + $0x80] sm:$0xf]
      %v271 = vld [vmem:[%s220 + $0x84] sm:$0xf]
      %v272 = vld [vmem:[%s220 + $0x88] sm:$0xf]
      %v273 = vld [vmem:[%s220 + $0x8c] sm:$0xf]
      %v274 = vld [vmem:[%s220 + $0x90] sm:$0xf]
      %v275 = vld [vmem:[%s220 + $0x94] sm:$0xf]
      %v276 = vld [vmem:[%s220 + $0x98] sm:$0xf]
      %v277 = vld [vmem:[%s220 + $0x9c] sm:$0xf]
      %v278 = vld [vmem:[%s220 + $0xa0] sm:$0xf]
      %v279 = vld [vmem:[%s220 + $0xa4] sm:$0xf]
      %v280 = vld [vmem:[%s220 + $0xa8] sm:$0xf]
      %v281 = vld [vmem:[%s220 + $0xac] sm:$0xf]
      %v282 = vld [vmem:[%s220 + $0xb0] sm:$0xf]
      %v283 = vld [vmem:[%s220 + $0xb4] sm:$0xf]
      %v284 = vld [vmem:[%s220 + $0xb8] sm:$0xf]
      %v285 = vld [vmem:[%s220 + $0xbc] sm:$0xf]
      %v286 = vld [vmem:[%s220 + $0xc0] sm:$0xf]
      %v287 = vld [vmem:[%s220 + $0xc4] sm:$0xf]
      %v288 = vld [vmem:[%s220 + $0xc8] sm:$0xf]
      %v289 = vld [vmem:[%s220 + $0xcc] sm:$0xf]
      %v290 = vld [vmem:[%s220 + $0xd0] sm:$0xf]
      %v291 = vld [vmem:[%s220 + $0xd4] sm:$0xf]
      %v292 = vld [vmem:[%s220 + $0xd8] sm:$0xf]
      %v293 = vld [vmem:[%s220 + $0xdc] sm:$0xf]
      %v294 = vld [vmem:[%s220 + $0xe0] sm:$0xf]
      %v295 = vld [vmem:[%s220 + $0xe4] sm:$0xf]
      %v296 = vld [vmem:[%s220 + $0xe8] sm:$0xf]
      %v297 = vld [vmem:[%s220 + $0xec] sm:$0xf]
      %v298 = vld [vmem:[%s220 + $0xf0] sm:$0xf]
      %v299 = vld [vmem:[%s220 + $0xf4] sm:$0xf]
      %v300 = vld [vmem:[%s220 + $0xf8] sm:$0xf]
      %v301 = vld [vmem:[%s220 + $0xfc] sm:$0xf]
      %v302 = vunpack.c.l.bf16 %v238
      %v303 = vunpack.c.l.bf16 %v239
      %v304 = vunpack.c.l.bf16 %v240
      %v305 = vunpack.c.l.bf16 %v241
      %v306 = vunpack.c.l.bf16 %v242
      %v307 = vunpack.c.l.bf16 %v243
      %v308 = vunpack.c.l.bf16 %v244
      %v309 = vunpack.c.l.bf16 %v245
      %v310 = vunpack.c.l.bf16 %v246
      %v311 = vunpack.c.l.bf16 %v247
      %v312 = vunpack.c.l.bf16 %v248
      %v313 = vunpack.c.l.bf16 %v249
      %v314 = vunpack.c.l.bf16 %v250
      %v315 = vunpack.c.l.bf16 %v251
      %v316 = vunpack.c.l.bf16 %v252
      %v317 = vunpack.c.l.bf16 %v253
      %v318 = vunpack.c.l.bf16 %v254
      %v319 = vunpack.c.l.bf16 %v255
      %v320 = vunpack.c.l.bf16 %v256
      %v321 = vunpack.c.l.bf16 %v257
      %v322 = vunpack.c.l.bf16 %v258
      %v323 = vunpack.c.l.bf16 %v259
      %v324 = vunpack.c.l.bf16 %v260
      %v325 = vunpack.c.l.bf16 %v261
      %v326 = vunpack.c.l.bf16 %v262
      %v327 = vunpack.c.l.bf16 %v263
      %v328 = vunpack.c.l.bf16 %v264
      %v329 = vunpack.c.l.bf16 %v265
      %v330 = vunpack.c.l.bf16 %v266
      %v331 = vunpack.c.l.bf16 %v267
      %v332 = vunpack.c.l.bf16 %v268
      %v333 = vunpack.c.l.bf16 %v269
      %v334 = vunpack.c.l.bf16 %v270
      %v335 = vunpack.c.l.bf16 %v271
      %v336 = vunpack.c.l.bf16 %v272
      %v337 = vunpack.c.l.bf16 %v273
      %v338 = vunpack.c.l.bf16 %v274
      %v339 = vunpack.c.l.bf16 %v275
      %v340 = vunpack.c.l.bf16 %v276
      %v341 = vunpack.c.l.bf16 %v277
      %v342 = vunpack.c.l.bf16 %v278
      %v343 = vunpack.c.l.bf16 %v279
      %v344 = vunpack.c.l.bf16 %v280
      %v345 = vunpack.c.l.bf16 %v281
      %v346 = vunpack.c.l.bf16 %v282
      %v347 = vunpack.c.l.bf16 %v283
      %v348 = vunpack.c.l.bf16 %v284
      %v349 = vunpack.c.l.bf16 %v285
      %v350 = vunpack.c.l.bf16 %v286
      %v351 = vunpack.c.l.bf16 %v287
      %v352 = vunpack.c.l.bf16 %v288
      %v353 = vunpack.c.l.bf16 %v289
      %v354 = vunpack.c.l.bf16 %v290
      %v355 = vunpack.c.l.bf16 %v291
      %v356 = vunpack.c.l.bf16 %v292
      %v357 = vunpack.c.l.bf16 %v293
      %v358 = vunpack.c.l.bf16 %v294
      %v359 = vunpack.c.l.bf16 %v295
      %v360 = vunpack.c.l.bf16 %v296
      %v361 = vunpack.c.l.bf16 %v297
      %v362 = vunpack.c.l.bf16 %v298
      %v363 = vunpack.c.l.bf16 %v299
      %v364 = vunpack.c.l.bf16 %v300
      %v365 = vunpack.c.l.bf16 %v301
      %v366 = vld [vmem:[%s224] sm:$0x1]
      %v368 = vperm.slane %v366, 0
      %v370 = vmul.f32 %v302, %v368
      %v371 = vmul.f32 %v303, %v368
      %v372 = vmul.f32 %v304, %v368
      %v373 = vmul.f32 %v305, %v368
      %v374 = vmul.f32 %v306, %v368
      %v375 = vmul.f32 %v307, %v368
      %v376 = vmul.f32 %v308, %v368
      %v377 = vmul.f32 %v309, %v368
      %v378 = vmul.f32 %v310, %v368
      %v379 = vmul.f32 %v311, %v368
      %v380 = vmul.f32 %v312, %v368
      %v381 = vmul.f32 %v313, %v368
      %v382 = vmul.f32 %v314, %v368
      %v383 = vmul.f32 %v315, %v368
      %v384 = vmul.f32 %v316, %v368
      %v385 = vmul.f32 %v317, %v368
      %v386 = vmul.f32 %v318, %v368
      %v387 = vmul.f32 %v319, %v368
      %v388 = vmul.f32 %v320, %v368
      %v389 = vmul.f32 %v321, %v368
      %v390 = vmul.f32 %v322, %v368
      %v391 = vmul.f32 %v323, %v368
      %v392 = vmul.f32 %v324, %v368
      %v393 = vmul.f32 %v325, %v368
      %v394 = vmul.f32 %v326, %v368
      %v395 = vmul.f32 %v327, %v368
      %v396 = vmul.f32 %v328, %v368
      %v397 = vmul.f32 %v329, %v368
      %v398 = vmul.f32 %v330, %v368
      %v399 = vmul.f32 %v331, %v368
      %v400 = vmul.f32 %v332, %v368
      %v401 = vmul.f32 %v333, %v368
      %v402 = vmul.f32 %v334, %v368
      %v403 = vmul.f32 %v335, %v368
      %v404 = vmul.f32 %v336, %v368
      %v405 = vmul.f32 %v337, %v368
      %v406 = vmul.f32 %v338, %v368
      %v407 = vmul.f32 %v339, %v368
      %v408 = vmul.f32 %v340, %v368
      %v409 = vmul.f32 %v341, %v368
      %v410 = vmul.f32 %v342, %v368
      %v411 = vmul.f32 %v343, %v368
      %v412 = vmul.f32 %v344, %v368
      %v413 = vmul.f32 %v345, %v368
      %v414 = vmul.f32 %v346, %v368
      %v415 = vmul.f32 %v347, %v368
      %v416 = vmul.f32 %v348, %v368
      %v417 = vmul.f32 %v349, %v368
      %v418 = vmul.f32 %v350, %v368
      %v419 = vmul.f32 %v351, %v368
      %v420 = vmul.f32 %v352, %v368
      %v421 = vmul.f32 %v353, %v368
      %v422 = vmul.f32 %v354, %v368
      %v423 = vmul.f32 %v355, %v368
      %v424 = vmul.f32 %v356, %v368
      %v425 = vmul.f32 %v357, %v368
      %v426 = vmul.f32 %v358, %v368
      %v427 = vmul.f32 %v359, %v368
      %v428 = vmul.f32 %v360, %v368
      %v429 = vmul.f32 %v361, %v368
      %v430 = vmul.f32 %v362, %v368
      %v431 = vmul.f32 %v363, %v368
      %v432 = vmul.f32 %v364, %v368
      %v433 = vmul.f32 %v365, %v368
      %v434 = vld [vmem:[%s227] sm:$0x1]
      %v436 = vperm.slane %v434, 0
      %v438 = vadd.f32 %v370, %v436
      %v439 = vadd.f32 %v371, %v436
      %v440 = vadd.f32 %v372, %v436
      %v441 = vadd.f32 %v373, %v436
      %v442 = vadd.f32 %v374, %v436
      %v443 = vadd.f32 %v375, %v436
      %v444 = vadd.f32 %v376, %v436
      %v445 = vadd.f32 %v377, %v436
      %v446 = vadd.f32 %v378, %v436
      %v447 = vadd.f32 %v379, %v436
      %v448 = vadd.f32 %v380, %v436
      %v449 = vadd.f32 %v381, %v436
      %v450 = vadd.f32 %v382, %v436
      %v451 = vadd.f32 %v383, %v436
      %v452 = vadd.f32 %v384, %v436
      %v453 = vadd.f32 %v385, %v436
      %v454 = vadd.f32 %v386, %v436
      %v455 = vadd.f32 %v387, %v436
      %v456 = vadd.f32 %v388, %v436
      %v457 = vadd.f32 %v389, %v436
      %v458 = vadd.f32 %v390, %v436
      %v459 = vadd.f32 %v391, %v436
      %v460 = vadd.f32 %v392, %v436
      %v461 = vadd.f32 %v393, %v436
      %v462 = vadd.f32 %v394, %v436
      %v463 = vadd.f32 %v395, %v436
      %v464 = vadd.f32 %v396, %v436
      %v465 = vadd.f32 %v397, %v436
      %v466 = vadd.f32 %v398, %v436
      %v467 = vadd.f32 %v399, %v436
      %v468 = vadd.f32 %v400, %v436
      %v469 = vadd.f32 %v401, %v436
      %v470 = vadd.f32 %v402, %v436
      %v471 = vadd.f32 %v403, %v436
      %v472 = vadd.f32 %v404, %v436
      %v473 = vadd.f32 %v405, %v436
      %v474 = vadd.f32 %v406, %v436
      %v475 = vadd.f32 %v407, %v436
      %v476 = vadd.f32 %v408, %v436
      %v477 = vadd.f32 %v409, %v436
      %v478 = vadd.f32 %v410, %v436
      %v479 = vadd.f32 %v411, %v436
      %v480 = vadd.f32 %v412, %v436
      %v481 = vadd.f32 %v413, %v436
      %v482 = vadd.f32 %v414, %v436
      %v483 = vadd.f32 %v415, %v436
      %v484 = vadd.f32 %v416, %v436
      %v485 = vadd.f32 %v417, %v436
      %v486 = vadd.f32 %v418, %v436
      %v487 = vadd.f32 %v419, %v436
      %v488 = vadd.f32 %v420, %v436
      %v489 = vadd.f32 %v421, %v436
      %v490 = vadd.f32 %v422, %v436
      %v491 = vadd.f32 %v423, %v436
      %v492 = vadd.f32 %v424, %v436
      %v493 = vadd.f32 %v425, %v436
      %v494 = vadd.f32 %v426, %v436
      %v495 = vadd.f32 %v427, %v436
      %v496 = vadd.f32 %v428, %v436
      %v497 = vadd.f32 %v429, %v436
      %v498 = vadd.f32 %v430, %v436
      %v499 = vadd.f32 %v431, %v436
      %v500 = vadd.f32 %v432, %v436
      %v501 = vadd.f32 %v433, %v436
      %v502 = vmax.f32 %v438, 0.0
      %v503 = vmax.f32 %v439, 0.0
      %v504 = vmax.f32 %v440, 0.0
      %v505 = vmax.f32 %v441, 0.0
      %v506 = vmax.f32 %v442, 0.0
      %v507 = vmax.f32 %v443, 0.0
      %v508 = vmax.f32 %v444, 0.0
      %v509 = vmax.f32 %v445, 0.0
      %v510 = vmax.f32 %v446, 0.0
      %v511 = vmax.f32 %v447, 0.0
      %v512 = vmax.f32 %v448, 0.0
      %v513 = vmax.f32 %v449, 0.0
      %v514 = vmax.f32 %v450, 0.0
      %v515 = vmax.f32 %v451, 0.0
      %v516 = vmax.f32 %v452, 0.0
      %v517 = vmax.f32 %v453, 0.0
      %v518 = vmax.f32 %v454, 0.0
      %v519 = vmax.f32 %v455, 0.0
      %v520 = vmax.f32 %v456, 0.0
      %v521 = vmax.f32 %v457, 0.0
      %v522 = vmax.f32 %v458, 0.0
      %v523 = vmax.f32 %v459, 0.0
      %v524 = vmax.f32 %v460, 0.0
      %v525 = vmax.f32 %v461, 0.0
      %v526 = vmax.f32 %v462, 0.0
      %v527 = vmax.f32 %v463, 0.0
      %v528 = vmax.f32 %v464, 0.0
      %v529 = vmax.f32 %v465, 0.0
      %v530 = vmax.f32 %v466, 0.0
      %v531 = vmax.f32 %v467, 0.0
      %v532 = vmax.f32 %v468, 0.0
      %v533 = vmax.f32 %v469, 0.0
      %v534 = vmax.f32 %v470, 0.0
      %v535 = vmax.f32 %v471, 0.0
      %v536 = vmax.f32 %v472, 0.0
      %v537 = vmax.f32 %v473, 0.0
      %v538 = vmax.f32 %v474, 0.0
      %v539 = vmax.f32 %v475, 0.0
      %v540 = vmax.f32 %v476, 0.0
      %v541 = vmax.f32 %v477, 0.0
      %v542 = vmax.f32 %v478, 0.0
      %v543 = vmax.f32 %v479, 0.0
      %v544 = vmax.f32 %v480, 0.0
      %v545 = vmax.f32 %v481, 0.0
      %v546 = vmax.f32 %v482, 0.0
      %v547 = vmax.f32 %v483, 0.0
      %v548 = vmax.f32 %v484, 0.0
      %v549 = vmax.f32 %v485, 0.0
      %v550 = vmax.f32 %v486, 0.0
      %v551 = vmax.f32 %v487, 0.0
      %v552 = vmax.f32 %v488, 0.0
      %v553 = vmax.f32 %v489, 0.0
      %v554 = vmax.f32 %v490, 0.0
      %v555 = vmax.f32 %v491, 0.0
      %v556 = vmax.f32 %v492, 0.0
      %v557 = vmax.f32 %v493, 0.0
      %v558 = vmax.f32 %v494, 0.0
      %v559 = vmax.f32 %v495, 0.0
      %v560 = vmax.f32 %v496, 0.0
      %v561 = vmax.f32 %v497, 0.0
      %v562 = vmax.f32 %v498, 0.0
      %v563 = vmax.f32 %v499, 0.0
      %v564 = vmax.f32 %v500, 0.0
      %v565 = vmax.f32 %v501, 0.0
      %566 = vst [vmem:[%s236] sm:$0xff] %v502
      %567 = vst [vmem:[%s236 + $0x8] sm:$0xff] %v503
      %568 = vst [vmem:[%s236 + $0x10] sm:$0xff] %v504
      %569 = vst [vmem:[%s236 + $0x18] sm:$0xff] %v505
      %570 = vst [vmem:[%s236 + $0x20] sm:$0xff] %v506
      %571 = vst [vmem:[%s236 + $0x28] sm:$0xff] %v507
      %572 = vst [vmem:[%s236 + $0x30] sm:$0xff] %v508
      %573 = vst [vmem:[%s236 + $0x38] sm:$0xff] %v509
      %574 = vst [vmem:[%s236 + $0x40] sm:$0xff] %v510
      %575 = vst [vmem:[%s236 + $0x48] sm:$0xff] %v511
      %576 = vst [vmem:[%s236 + $0x50] sm:$0xff] %v512
      %577 = vst [vmem:[%s236 + $0x58] sm:$0xff] %v513
      %578 = vst [vmem:[%s236 + $0x60] sm:$0xff] %v514
      %579 = vst [vmem:[%s236 + $0x68] sm:$0xff] %v515
      %580 = vst [vmem:[%s236 + $0x70] sm:$0xff] %v516
      %581 = vst [vmem:[%s236 + $0x78] sm:$0xff] %v517
      %582 = vst [vmem:[%s236 + $0x80] sm:$0xff] %v518
      %583 = vst [vmem:[%s236 + $0x88] sm:$0xff] %v519
      %584 = vst [vmem:[%s236 + $0x90] sm:$0xff] %v520
      %585 = vst [vmem:[%s236 + $0x98] sm:$0xff] %v521
      %586 = vst [vmem:[%s236 + $0xa0] sm:$0xff] %v522
      %587 = vst [vmem:[%s236 + $0xa8] sm:$0xff] %v523
      %588 = vst [vmem:[%s236 + $0xb0] sm:$0xff] %v524
      %589 = vst [vmem:[%s236 + $0xb8] sm:$0xff] %v525
      %590 = vst [vmem:[%s236 + $0xc0] sm:$0xff] %v526
      %591 = vst [vmem:[%s236 + $0xc8] sm:$0xff] %v527
      %592 = vst [vmem:[%s236 + $0xd0] sm:$0xff] %v528
      %593 = vst [vmem:[%s236 + $0xd8] sm:$0xff] %v529
      %594 = vst [vmem:[%s236 + $0xe0] sm:$0xff] %v530
      %595 = vst [vmem:[%s236 + $0xe8] sm:$0xff] %v531
      %596 = vst [vmem:[%s236 + $0xf0] sm:$0xff] %v532
      %597 = vst [vmem:[%s236 + $0xf8] sm:$0xff] %v533
      %598 = vst [vmem:[%s236 + $0x100] sm:$0xff] %v534
      %599 = vst [vmem:[%s236 + $0x108] sm:$0xff] %v535
      %600 = vst [vmem:[%s236 + $0x110] sm:$0xff] %v536
      %601 = vst [vmem:[%s236 + $0x118] sm:$0xff] %v537
      %602 = vst [vmem:[%s236 + $0x120] sm:$0xff] %v538
      %603 = vst [vmem:[%s236 + $0x128] sm:$0xff] %v539
      %604 = vst [vmem:[%s236 + $0x130] sm:$0xff] %v540
      %605 = vst [vmem:[%s236 + $0x138] sm:$0xff] %v541
      %606 = vst [vmem:[%s236 + $0x140] sm:$0xff] %v542
      %607 = vst [vmem:[%s236 + $0x148] sm:$0xff] %v543
      %608 = vst [vmem:[%s236 + $0x150] sm:$0xff] %v544
      %609 = vst [vmem:[%s236 + $0x158] sm:$0xff] %v545
      %610 = vst [vmem:[%s236 + $0x160] sm:$0xff] %v546
      %611 = vst [vmem:[%s236 + $0x168] sm:$0xff] %v547
      %612 = vst [vmem:[%s236 + $0x170] sm:$0xff] %v548
      %613 = vst [vmem:[%s236 + $0x178] sm:$0xff] %v549
      %614 = vst [vmem:[%s236 + $0x180] sm:$0xff] %v550
      %615 = vst [vmem:[%s236 + $0x188] sm:$0xff] %v551
      %616 = vst [vmem:[%s236 + $0x190] sm:$0xff] %v552
      %617 = vst [vmem:[%s236 + $0x198] sm:$0xff] %v553
      %618 = vst [vmem:[%s236 + $0x1a0] sm:$0xff] %v554
      %619 = vst [vmem:[%s236 + $0x1a8] sm:$0xff] %v555
      %620 = vst [vmem:[%s236 + $0x1b0] sm:$0xff] %v556
      %621 = vst [vmem:[%s236 + $0x1b8] sm:$0xff] %v557
      %622 = vst [vmem:[%s236 + $0x1c0] sm:$0xff] %v558
      %623 = vst [vmem:[%s236 + $0x1c8] sm:$0xff] %v559
      %624 = vst [vmem:[%s236 + $0x1d0] sm:$0xff] %v560
      %625 = vst [vmem:[%s236 + $0x1d8] sm:$0xff] %v561
      %626 = vst [vmem:[%s236 + $0x1e0] sm:$0xff] %v562
      %627 = vst [vmem:[%s236 + $0x1e8] sm:$0xff] %v563
      %628 = vst [vmem:[%s236 + $0x1f0] sm:$0xff] %v564
      %629 = vst [vmem:[%s236 + $0x1f8] sm:$0xff] %v565
      %s630 = smul.u32 64, %s19
      %p631 = scmp.lt.s32.totalorder %s18, 1
      %s632 = scalar_select %p631, %s18, 1
      %p633 = scmp.lt.s32.totalorder %s630, 63
      %s634 = scalar_select %p633, %s630, 63
      %s635 = smul.addr %s632, 64
      %s636 = sadd.s32 %s634, %s635
      %s637 = smul.addr %s636, 8
      %s638 = scalar_lea.vmem %s3, %s637
      // Predicated region
      $region33: #{up_block_forward.11} parent=31 // pred_check
        %p639 = pneg %p126
      $region34: #{up_block_forward.11} parent=31 // pred_check_branch
        %641 = sbr.rel (%p639) target = $region36
      $region35: #{up_block_forward.11} parent=31 // pred_region
        %s642 = smul.u32 64, %s19
      $region36: #{up_block_forward.11} parent=31 // pred_fallthru
        _
    $region32: #{up_block_forward.11} parent=5 // pred_fallthru
      _
    %p643 = scmp.le.s32.totalorder 2, %s9
    // Predicated region
    $region37: #{up_block_forward.11} parent=5 // pred_check
      %p644 = pneg %p643
    $region38: #{up_block_forward.11} parent=5 // pred_check_branch
      %646 = sbr.rel (%p644) target = $region40
    $region39: #{up_block_forward.11} parent=5 // pred_region
      %s647 = ssub.s32 %s9, 2
      // Predicated region
      $region41: #{up_block_forward.11} parent=39 // pred_check
        %p648 = pneg %p132
      $region42: #{up_block_forward.11} parent=39 // pred_check_branch
        %650 = sbr.rel (%p648) target = $region44
      $region43: #{up_block_forward.11} parent=39 // pred_region
        %s651 = smul.u32 64, %s21
        %p652 = scmp.lt.s32.totalorder %s20, 1
        %s653 = scalar_select %p652, %s20, 1
        %p654 = scmp.lt.s32.totalorder %s651, 63
        %s655 = scalar_select %p654, %s651, 63
        %s656 = smul.addr %s653, 64
        %s657 = sadd.s32 %s655, %s656
        %s658 = smul.addr %s657, 8
        %s659 = scalar_lea.vmem %s3, %s658
      $region44: #{up_block_forward.11} parent=39 // pred_fallthru
        _
    $region40: #{up_block_forward.11} parent=5 // pred_fallthru
      _
  $region6: #{up_block_forward.11} parent=0 // loop_footer
    %s13 = sadd.s32 1, %s9
  $region7: #{up_block_forward.11} parent=0 // loop_footer_branch
    %8 = sbr.rel target = $region3
  $region8: #{up_block_forward.11} parent=0 // loop_exit
    _

// kernel: up_block_forward.10
$region0: #{up_block_forward.10}
  #allocation0 [shape = 'u32[]', space=smem, size = 0x4, offset = 0x4, fixed_abs, tag = 'smem constant byte address 0x4 - core index']
  #allocation1 [shape = 'u32[72,128]{1,0:T(1,128)}', space=vmem, size = 0x9000, scoped, tag = 'internal scratch']
  %s0 = inlined_call_operand.vmem [shape: bf16[2,512,128], index: 0, kind: input, shape index: {}]
  %s1 = inlined_call_operand.hbm [shape: bf16[128,128], index: 1, kind: input, shape index: {}]
  %s2 = inlined_call_operand.hbm [shape: f32[1,128], index: 2, kind: input, shape index: {}]
  %s3 = inlined_call_operand.vmem [shape: bf16[2,512,128], index: 3, kind: output, shape index: {0}]
  %s4 = inlined_call_operand.vmem [shape: f32[2,1,8,128], index: 4, kind: output, shape index: {1}]
  %s5 = inlined_call_operand.vmem [shape: f32[2,1,8,128], index: 5, kind: output, shape index: {2}]
  %6 = xla_tuple %s3, %s4, %s5
  %s7 = sld [smem:[#allocation0]]
  $region69: #{up_block_forward.10} parent=0
    _
  %s9 = ssub.s32 1, %s7
  %s10 = scalar_select 0, %s9, %s7
  $region1: #{up_block_forward.10} parent=0
    #allocation2 [shape = 'u8[32768]{0}', space=vmem, size = 0x8000, scoped, tag = 'input window, operand 1, single buffered']
    #allocation3 [shape = 's32[2]{0}', space=sflag, size = 0x8, scoped, tag = 'scoped memory for up_block_forward.10']
    #allocation4 [shape = 'u8[512]{0}', space=vmem, size = 0x400, scoped, tag = 'input window, operand 2, single buffered']
    #allocation5 [shape = 's32[1]{0}', space=sflag, size = 0x4, scoped, tag = 'scoped memory for up_block_forward.10']
    %11 = vsyncpa [#allocation3], 0
    %12 = vsyncpa [#allocation5], 0
    loop: start=0, step=1, limit=4
    $region2: #{up_block_forward.10} parent=1 // loop_pre_header
      _
    $region3: #{up_block_forward.10} parent=1 // loop_header
      %s14 = sphi 0, %s18
      %p15 = scmp.ge.s32.totalorder %s14, 4
      %s21 = sphi 0, %s33
      %s22 = sphi 0, %s29
      %s23 = sphi 0, %s21
      %s24 = sphi 0, %s22
      %s25 = sphi 0, %s23
      %s26 = sphi 0, %s24
      %s38 = sphi 0, %s40
      %s41 = sphi 0, %s38
      %s42 = sphi 0, %s41
      %s58 = sphi 0, %s42
      %s62 = sphi 0, %s62
      %s64 = sphi 0, %s62
      %s65 = sphi 0, %s64
      %s79 = sphi 0, %s65
      %s83 = sphi 0, %s83
      %s85 = sphi 0, %s83
      %s86 = sphi 0, %s85
      %s100 = sphi 0, %s86
      %s108 = sphi 0, %s110
      %s111 = sphi 0, %s108
      %s112 = sphi 0, %s111
      %s128 = sphi 0, %s112
      %s136 = sphi 0, %s138
      %s139 = sphi 0, %s136
      %s140 = sphi 0, %s139
      %s156 = sphi 0, %s140
      %s164 = sphi 0, %s166
      %s167 = sphi 0, %s164
      %s168 = sphi 0, %s167
      %s184 = sphi 0, %s168
    $region4: #{up_block_forward.10} parent=1 // loop_header_branch
      %17 = sbr.rel (%p15) target = $region8
    $region5: #{up_block_forward.10} parent=1 // loop_body
      %s19 = ssub.s32 %s14, 1
      %s20 = ssub.s32 %s14, 2
      %s27 = sadd.s32 1, %s22
      %p28 = scmp.ge.s32.totalorder %s27, 1
      %s29 = scalar_select %p28, 0, %s27
      %s30 = sadd.s32 1, %s21
      %s31 = scalar_select %p28, %s30, %s21
      %p32 = scmp.ge.s32.totalorder %s31, 2
      %s33 = scalar_select %p32, 0, %s31
      %s34 = ssub.s32 %s21, %s33
      %s35 = ssub.s32 %s22, %s29
      %s36 = sor.u32 %s34, %s35
      %p37 = scmp.eq.s32.totalorder %s36, 0
      %s39 = sadd.s32 %s38, 1
      %s40 = scalar_select %p37, %s38, %s39
      %p43 = pneg %p37
      %p44 = scmp.eq.s32.totalorder %s14, 1
      %p45 = por %p43, %p44
      %p46 = scmp.ne.s32.totalorder %s38, %s41
      %p47 = scmp.eq.s32.totalorder %s14, 0
      %p48 = por %p46, %p47
      %p49 = scmp.ne.s32.totalorder %s38, %s41
      %p50 = scmp.eq.s32.totalorder %s19, 1
      %p51 = por %p49, %p50
      %p52 = scmp.ne.s32.totalorder %s41, %s42
      %p53 = scmp.eq.s32.totalorder %s19, 0
      %p54 = por %p52, %p53
      %p55 = scmp.ne.s32.totalorder %s41, %s42
      %p56 = scmp.eq.s32.totalorder %s20, 1
      %p57 = por %p55, %p56
      %p59 = scmp.ne.s32.totalorder %s42, %s58
      %p60 = scmp.eq.s32.totalorder %s20, 0
      %p61 = por %p59, %p60
      %s63 = sadd.s32 %s62, 1
      %p66 = scmp.eq.s32.totalorder %s14, 1
      %p67 = scmp.ne.s32.totalorder %s62, %s64
      %p68 = scmp.eq.s32.totalorder %s14, 0
      %p69 = por %p67, %p68
      %p70 = scmp.ne.s32.totalorder %s62, %s64
      %p71 = scmp.eq.s32.totalorder %s19, 1
      %p72 = por %p70, %p71
      %p73 = scmp.ne.s32.totalorder %s64, %s65
      %p74 = scmp.eq.s32.totalorder %s19, 0
      %p75 = por %p73, %p74
      %p76 = scmp.ne.s32.totalorder %s64, %s65
      %p77 = scmp.eq.s32.totalorder %s20, 1
      %p78 = por %p76, %p77
      %p80 = scmp.ne.s32.totalorder %s65, %s79
      %p81 = scmp.eq.s32.totalorder %s20, 0
      %p82 = por %p80, %p81
      %s84 = sadd.s32 %s83, 1
      %p87 = scmp.eq.s32.totalorder %s14, 1
      %p88 = scmp.ne.s32.totalorder %s83, %s85
      %p89 = scmp.eq.s32.totalorder %s14, 0
      %p90 = por %p88, %p89
      %p91 = scmp.ne.s32.totalorder %s83, %s85
      %p92 = scmp.eq.s32.totalorder %s19, 1
      %p93 = por %p91, %p92
      %p94 = scmp.ne.s32.totalorder %s85, %s86
      %p95 = scmp.eq.s32.totalorder %s19, 0
      %p96 = por %p94, %p95
      %p97 = scmp.ne.s32.totalorder %s85, %s86
      %p98 = scmp.eq.s32.totalorder %s20, 1
      %p99 = por %p97, %p98
      %p101 = scmp.ne.s32.totalorder %s86, %s100
      %p102 = scmp.eq.s32.totalorder %s20, 0
      %p103 = por %p101, %p102
      %s104 = ssub.s32 %s21, %s33
      %s105 = ssub.s32 %s22, %s29
      %s106 = sor.u32 %s104, %s105
      %p107 = scmp.eq.s32.totalorder %s106, 0
      %s109 = sadd.s32 %s108, 1
      %s110 = scalar_select %p107, %s108, %s109
      %p113 = pneg %p107
      %p114 = scmp.eq.s32.totalorder %s14, 1
      %p115 = por %p113, %p114
      %p116 = scmp.ne.s32.totalorder %s108, %s111
      %p117 = scmp.eq.s32.totalorder %s14, 0
      %p118 = por %p116, %p117
      %p119 = scmp.ne.s32.totalorder %s108, %s111
      %p120 = scmp.eq.s32.totalorder %s19, 1
      %p121 = por %p119, %p120
      %p122 = scmp.ne.s32.totalorder %s111, %s112
      %p123 = scmp.eq.s32.totalorder %s19, 0
      %p124 = por %p122, %p123
      %p125 = scmp.ne.s32.totalorder %s111, %s112
      %p126 = scmp.eq.s32.totalorder %s20, 1
      %p127 = por %p125, %p126
      %p129 = scmp.ne.s32.totalorder %s112, %s128
      %p130 = scmp.eq.s32.totalorder %s20, 0
      %p131 = por %p129, %p130
      %s132 = ssub.s32 %s21, %s33
      %s133 = ssub.s32 %s22, %s29
      %s134 = sor.u32 %s132, %s133
      %p135 = scmp.eq.s32.totalorder %s134, 0
      %s137 = sadd.s32 %s136, 1
      %s138 = scalar_select %p135, %s136, %s137
      %p141 = pneg %p135
      %p142 = scmp.eq.s32.totalorder %s14, 1
      %p143 = por %p141, %p142
      %p144 = scmp.ne.s32.totalorder %s136, %s139
      %p145 = scmp.eq.s32.totalorder %s14, 0
      %p146 = por %p144, %p145
      %p147 = scmp.ne.s32.totalorder %s136, %s139
      %p148 = scmp.eq.s32.totalorder %s19, 1
      %p149 = por %p147, %p148
      %p150 = scmp.ne.s32.totalorder %s139, %s140
      %p151 = scmp.eq.s32.totalorder %s19, 0
      %p152 = por %p150, %p151
      %p153 = scmp.ne.s32.totalorder %s139, %s140
      %p154 = scmp.eq.s32.totalorder %s20, 1
      %p155 = por %p153, %p154
      %p157 = scmp.ne.s32.totalorder %s140, %s156
      %p158 = scmp.eq.s32.totalorder %s20, 0
      %p159 = por %p157, %p158
      %s160 = ssub.s32 %s21, %s33
      %s161 = ssub.s32 %s22, %s29
      %s162 = sor.u32 %s160, %s161
      %p163 = scmp.eq.s32.totalorder %s162, 0
      %s165 = sadd.s32 %s164, 1
      %s166 = scalar_select %p163, %s164, %s165
      %p169 = pneg %p163
      %p170 = scmp.eq.s32.totalorder %s14, 1
      %p171 = por %p169, %p170
      %p172 = scmp.ne.s32.totalorder %s164, %s167
      %p173 = scmp.eq.s32.totalorder %s14, 0
      %p174 = por %p172, %p173
      %p175 = scmp.ne.s32.totalorder %s164, %s167
      %p176 = scmp.eq.s32.totalorder %s19, 1
      %p177 = por %p175, %p176
      %p178 = scmp.ne.s32.totalorder %s167, %s168
      %p179 = scmp.eq.s32.totalorder %s19, 0
      %p180 = por %p178, %p179
      %p181 = scmp.ne.s32.totalorder %s167, %s168
      %p182 = scmp.eq.s32.totalorder %s20, 1
      %p183 = por %p181, %p182
      %p185 = scmp.ne.s32.totalorder %s168, %s184
      %p186 = scmp.eq.s32.totalorder %s20, 0
      %p187 = por %p185, %p186
      %p188 = scmp.le.s32.totalorder 1, %s14
      %p189 = scmp.lt.s32.totalorder %s14, 3
      %p190 = pnand %p188, %p189
      %p191 = pneg %p190
      // Predicated region
      $region9: #{up_block_forward.10} parent=5 // pred_check
        _
      $region10: #{up_block_forward.10} parent=5 // pred_check_branch
        %193 = sbr.rel (%p190) target = $region12
      $region11: #{up_block_forward.10} parent=5 // pred_region
        %s194 = ssub.s32 %s14, 1
        // Predicated region
        $region13: #{up_block_forward.10} parent=11 // pred_check
          %p195 = pneg %p75
        $region14: #{up_block_forward.10} parent=11 // pred_check_branch
          %197 = sbr.rel (%p195) target = $region16
        $region15: #{up_block_forward.10} parent=11 // pred_region
          %199 = vsyncadd [#allocation3], 0
          %s200 = sshll.u32 %s1, 4
          %s201 = int_to_ptr.hbm [resolvable:$true] %s200
          %s202 = sshll.u32 [#allocation2], 4
          %s203 = int_to_ptr.vmem [resolvable:$true] %s202
          %208 = dma.hbm_to_vmem [thread:$0]  %s201, 1024, %s203, [#allocation3], 64, 64, 4
        $region16: #{up_block_forward.10} parent=11 // pred_fallthru
          _
        // Predicated region
        $region17: #{up_block_forward.10} parent=11 // pred_check
          %p209 = pneg %p96
        $region18: #{up_block_forward.10} parent=11 // pred_check_branch
          %211 = sbr.rel (%p209) target = $region20
        $region19: #{up_block_forward.10} parent=11 // pred_region
          %213 = vsyncadd [#allocation5], 0
          %s215 = sshll.u32 %s2, 4
          %s216 = int_to_ptr.hbm [resolvable:$true] %s215
          %s217 = sshll.u32 [#allocation4], 4
          %s218 = int_to_ptr.vmem [resolvable:$true] %s217
          %220 = dma.hbm_to_vmem [thread:$0]  %s216, 16, %s218, [#allocation5]
        $region20: #{up_block_forward.10} parent=11 // pred_fallthru
          _
      $region12: #{up_block_forward.10} parent=5 // pred_fallthru
        _
      %p221 = scmp.lt.s32.totalorder %s14, 2
      // Predicated region
      $region21: #{up_block_forward.10} parent=5 // pred_check
        %p222 = pneg %p221
      $region22: #{up_block_forward.10} parent=5 // pred_check_branch
        %224 = sbr.rel (%p222) target = $region24
      $region23: #{up_block_forward.10} parent=5 // pred_region
        // Predicated region
        $region25: #{up_block_forward.10} parent=23 // pred_check
          %p225 = pneg %p48
        $region26: #{up_block_forward.10} parent=23 // pred_check_branch
          %227 = sbr.rel (%p225) target = $region28
        $region27: #{up_block_forward.10} parent=23 // pred_region
          %s228 = smul.u32 64, %s22
          %p229 = scmp.lt.s32.totalorder %s21, 1
          %s230 = scalar_select %p229, %s21, 1
          %p231 = scmp.lt.s32.totalorder %s228, 63
          %s232 = scalar_select %p231, %s228, 63
          %s233 = smul.addr %s230, 64
          %s234 = sadd.s32 %s232, %s233
          %s235 = smul.addr %s234, 4
          %s236 = scalar_lea.vmem %s0, %s235
          %s237 = smul.u32 64, %s22
        $region28: #{up_block_forward.10} parent=23 // pred_fallthru
          _
      $region24: #{up_block_forward.10} parent=5 // pred_fallthru
        _
      %p238 = scmp.le.s32.totalorder 1, %s14
      %p239 = scmp.lt.s32.totalorder %s14, 3
      %p240 = pnand %p238, %p239
      %p241 = pneg %p240
      // Predicated region
      $region29: #{up_block_forward.10} parent=5 // pred_check
        _
      $region30: #{up_block_forward.10} parent=5 // pred_check_branch
        %243 = sbr.rel (%p240) target = $region32
      $region31: #{up_block_forward.10} parent=5 // pred_region
        %s244 = ssub.s32 %s14, 1
        // Predicated region
        $region33: #{up_block_forward.10} parent=31 // pred_check
          %p245 = pneg %p75
        $region34: #{up_block_forward.10} parent=31 // pred_check_branch
          %247 = sbr.rel (%p245) target = $region36
        $region35: #{up_block_forward.10} parent=31 // pred_region
          %249 = dma.done [#allocation3], 1024
        $region36: #{up_block_forward.10} parent=31 // pred_fallthru
          _
        // Predicated region
        $region37: #{up_block_forward.10} parent=31 // pred_check
          %p250 = pneg %p96
        $region38: #{up_block_forward.10} parent=31 // pred_check_branch
          %252 = sbr.rel (%p250) target = $region40
        $region39: #{up_block_forward.10} parent=31 // pred_region
          %254 = dma.done [#allocation5], 16
        $region40: #{up_block_forward.10} parent=31 // pred_fallthru
          _
        %s255 = smul.u32 64, %s24
        %p256 = scmp.lt.s32.totalorder %s23, 1
        %s257 = scalar_select %p256, %s23, 1
        %p258 = scmp.lt.s32.totalorder %s255, 63
        %s259 = scalar_select %p258, %s255, 63
        %s260 = smul.addr %s257, 64
        %s261 = sadd.s32 %s259, %s260
        %s262 = smul.addr %s261, 4
        %s263 = scalar_lea.vmem %s0, %s262
        %p264 = pneg %p54
        %p265 = pneg %p51
        %p266 = pneg %p75
        %p267 = pneg %p72
        %p268 = pneg %p96
        %p269 = pneg %p93
        %p270 = pneg %p124
        %p271 = pneg %p121
        %s272 = smul.u32 64, %s24
        %p273 = scmp.lt.s32.totalorder %s23, 1
        %s274 = scalar_select %p273, %s23, 1
        %p275 = scmp.lt.s32.totalorder %s272, 63
        %s276 = scalar_select %p275, %s272, 63
        %s277 = smul.addr %s274, 64
        %s278 = sadd.s32 %s276, %s277
        %s279 = smul.addr %s278, 4
        %s280 = scalar_lea.vmem %s3, %s279
        %p281 = pneg %p152
        %p282 = pneg %p149
        %p283 = scmp.lt.s32.totalorder %s23, 1
        %s284 = scalar_select %p283, %s23, 1
        %p285 = scmp.lt.s32.totalorder %s24, 0
        %s286 = scalar_select %p285, %s24, 0
        %s287 = sadd.s32 %s286, %s284
        %s288 = smul.addr %s287, 8
        %s289 = scalar_lea.vmem %s4, %s288
        %p290 = pneg %p180
        %p291 = pneg %p177
        %p292 = scmp.lt.s32.totalorder %s23, 1
        %s293 = scalar_select %p292, %s23, 1
        %p294 = scmp.lt.s32.totalorder %s24, 0
        %s295 = scalar_select %p294, %s24, 0
        %s296 = sadd.s32 %s295, %s293
        %s297 = smul.addr %s296, 8
        %s298 = scalar_lea.vmem %s5, %s297
        %s299 = smul.u32 64, %s24
        %p300 = scmp.lt.s32.totalorder %s23, 1
        %s301 = scalar_select %p300, %s23, 1
        %p302 = scmp.lt.s32.totalorder %s299, 63
        %s303 = scalar_select %p302, %s299, 63
        %s304 = smul.addr %s301, 64
        %s305 = sadd.s32 %s303, %s304
        %s306 = smul.addr %s305, 4
        %s307 = scalar_lea.vmem %s0, %s306
        %s308 = smul.u32 64, %s24
        %s309 = smul.u32 64, %s24
        %p310 = scmp.lt.s32.totalorder %s23, 1
        %s311 = scalar_select %p310, %s23, 1
        %p312 = scmp.lt.s32.totalorder %s309, 63
        %s313 = scalar_select %p312, %s309, 63
        %s314 = smul.addr %s311, 64
        %s315 = sadd.s32 %s313, %s314
        %s316 = smul.addr %s315, 4
        %s317 = scalar_lea.vmem %s3, %s316
        %s318 = smul.u32 64, %s24
        %p319 = scmp.lt.s32.totalorder %s23, 1
        %s320 = scalar_select %p319, %s23, 1
        %p321 = scmp.lt.s32.totalorder %s24, 0
        %s322 = scalar_select %p321, %s24, 0
        %s323 = sadd.s32 %s322, %s320
        %s324 = smul.addr %s323, 8
        %s325 = scalar_lea.vmem %s4, %s324
        %p326 = scmp.lt.s32.totalorder %s23, 1
        %s327 = scalar_select %p326, %s23, 1
        %p328 = scmp.lt.s32.totalorder %s24, 0
        %s329 = scalar_select %p328, %s24, 0
        %s330 = sadd.s32 %s329, %s327
        %s331 = smul.addr %s330, 8
        %s332 = scalar_lea.vmem %s5, %s331
        %v333 = vld [vmem:[%s307] sm:$0xf]
        %v334 = vld [vmem:[%s307 + $0x4] sm:$0xf]
        %v335 = vld [vmem:[%s307 + $0x8] sm:$0xf]
        %v336 = vld [vmem:[%s307 + $0xc] sm:$0xf]
        %v337 = vld [vmem:[%s307 + $0x10] sm:$0xf]
        %v338 = vld [vmem:[%s307 + $0x14] sm:$0xf]
        %v339 = vld [vmem:[%s307 + $0x18] sm:$0xf]
        %v340 = vld [vmem:[%s307 + $0x1c] sm:$0xf]
        %v341 = vld [vmem:[%s307 + $0x20] sm:$0xf]
        %v342 = vld [vmem:[%s307 + $0x24] sm:$0xf]
        %v343 = vld [vmem:[%s307 + $0x28] sm:$0xf]
        %v344 = vld [vmem:[%s307 + $0x2c] sm:$0xf]
        %v345 = vld [vmem:[%s307 + $0x30] sm:$0xf]
        %v346 = vld [vmem:[%s307 + $0x34] sm:$0xf]
        %v347 = vld [vmem:[%s307 + $0x38] sm:$0xf]
        %v348 = vld [vmem:[%s307 + $0x3c] sm:$0xf]
        %v349 = vld [vmem:[%s307 + $0x40] sm:$0xf]
        %v350 = vld [vmem:[%s307 + $0x44] sm:$0xf]
        %v351 = vld [vmem:[%s307 + $0x48] sm:$0xf]
        %v352 = vld [vmem:[%s307 + $0x4c] sm:$0xf]
        %v353 = vld [vmem:[%s307 + $0x50] sm:$0xf]
        %v354 = vld [vmem:[%s307 + $0x54] sm:$0xf]
        %v355 = vld [vmem:[%s307 + $0x58] sm:$0xf]
        %v356 = vld [vmem:[%s307 + $0x5c] sm:$0xf]
        %v357 = vld [vmem:[%s307 + $0x60] sm:$0xf]
        %v358 = vld [vmem:[%s307 + $0x64] sm:$0xf]
        %v359 = vld [vmem:[%s307 + $0x68] sm:$0xf]
        %v360 = vld [vmem:[%s307 + $0x6c] sm:$0xf]
        %v361 = vld [vmem:[%s307 + $0x70] sm:$0xf]
        %v362 = vld [vmem:[%s307 + $0x74] sm:$0xf]
        %v363 = vld [vmem:[%s307 + $0x78] sm:$0xf]
        %v364 = vld [vmem:[%s307 + $0x7c] sm:$0xf]
        %v365 = vld [vmem:[%s307 + $0x80] sm:$0xf]
        %v366 = vld [vmem:[%s307 + $0x84] sm:$0xf]
        %v367 = vld [vmem:[%s307 + $0x88] sm:$0xf]
        %v368 = vld [vmem:[%s307 + $0x8c] sm:$0xf]
        %v369 = vld [vmem:[%s307 + $0x90] sm:$0xf]
        %v370 = vld [vmem:[%s307 + $0x94] sm:$0xf]
        %v371 = vld [vmem:[%s307 + $0x98] sm:$0xf]
        %v372 = vld [vmem:[%s307 + $0x9c] sm:$0xf]
        %v373 = vld [vmem:[%s307 + $0xa0] sm:$0xf]
        %v374 = vld [vmem:[%s307 + $0xa4] sm:$0xf]
        %v375 = vld [vmem:[%s307 + $0xa8] sm:$0xf]
        %v376 = vld [vmem:[%s307 + $0xac] sm:$0xf]
        %v377 = vld [vmem:[%s307 + $0xb0] sm:$0xf]
        %v378 = vld [vmem:[%s307 + $0xb4] sm:$0xf]
        %v379 = vld [vmem:[%s307 + $0xb8] sm:$0xf]
        %v380 = vld [vmem:[%s307 + $0xbc] sm:$0xf]
        %v381 = vld [vmem:[%s307 + $0xc0] sm:$0xf]
        %v382 = vld [vmem:[%s307 + $0xc4] sm:$0xf]
        %v383 = vld [vmem:[%s307 + $0xc8] sm:$0xf]
        %v384 = vld [vmem:[%s307 + $0xcc] sm:$0xf]
        %v385 = vld [vmem:[%s307 + $0xd0] sm:$0xf]
        %v386 = vld [vmem:[%s307 + $0xd4] sm:$0xf]
        %v387 = vld [vmem:[%s307 + $0xd8] sm:$0xf]
        %v388 = vld [vmem:[%s307 + $0xdc] sm:$0xf]
        %v389 = vld [vmem:[%s307 + $0xe0] sm:$0xf]
        %v390 = vld [vmem:[%s307 + $0xe4] sm:$0xf]
        %v391 = vld [vmem:[%s307 + $0xe8] sm:$0xf]
        %v392 = vld [vmem:[%s307 + $0xec] sm:$0xf]
        %v393 = vld [vmem:[%s307 + $0xf0] sm:$0xf]
        %v394 = vld [vmem:[%s307 + $0xf4] sm:$0xf]
        %v395 = vld [vmem:[%s307 + $0xf8] sm:$0xf]
        %v396 = vld [vmem:[%s307 + $0xfc] sm:$0xf]
        %v397 = vld [vmem:[#allocation2] sm:$0xf]
        %v398 = vld [vmem:[#allocation2 + $0x4] sm:$0xf]
        %v399 = vld [vmem:[#allocation2 + $0x8] sm:$0xf]
        %v400 = vld [vmem:[#allocation2 + $0xc] sm:$0xf]
        %v401 = vld [vmem:[#allocation2 + $0x10] sm:$0xf]
        %v402 = vld [vmem:[#allocation2 + $0x14] sm:$0xf]
        %v403 = vld [vmem:[#allocation2 + $0x18] sm:$0xf]
        %v404 = vld [vmem:[#allocation2 + $0x1c] sm:$0xf]
        %v405 = vld [vmem:[#allocation2 + $0x20] sm:$0xf]
        %v406 = vld [vmem:[#allocation2 + $0x24] sm:$0xf]
        %v407 = vld [vmem:[#allocation2 + $0x28] sm:$0xf]
        %v408 = vld [vmem:[#allocation2 + $0x2c] sm:$0xf]
        %v409 = vld [vmem:[#allocation2 + $0x30] sm:$0xf]
        %v410 = vld [vmem:[#allocation2 + $0x34] sm:$0xf]
        %v411 = vld [vmem:[#allocation2 + $0x38] sm:$0xf]
        %v412 = vld [vmem:[#allocation2 + $0x3c] sm:$0xf]
        %v413 = vld [vmem:[#allocation4] sm:$0x1]
        %v415 = vperm.slane %v413, 0
        %v481 = vunpack.c.l.b16 %v333
        %v482 = vunpack.c.l.b16 %v334
        %v483 = vunpack.c.l.b16 %v335
        %v484 = vunpack.c.l.b16 %v336
        %v485 = vunpack.c.l.b16 %v337
        %v486 = vunpack.c.l.b16 %v338
        %v487 = vunpack.c.l.b16 %v339
        %v488 = vunpack.c.l.b16 %v340
        %v489 = vunpack.c.l.b16 %v341
        %v490 = vunpack.c.l.b16 %v342
        %v491 = vunpack.c.l.b16 %v343
        %v492 = vunpack.c.l.b16 %v344
        %v493 = vunpack.c.l.b16 %v345
        %v494 = vunpack.c.l.b16 %v346
        %v495 = vunpack.c.l.b16 %v347
        %v496 = vunpack.c.l.b16 %v348
        %v497 = vunpack.c.l.b16 %v349
        %v498 = vunpack.c.l.b16 %v350
        %v499 = vunpack.c.l.b16 %v351
        %v500 = vunpack.c.l.b16 %v352
        %v501 = vunpack.c.l.b16 %v353
        %v502 = vunpack.c.l.b16 %v354
        %v503 = vunpack.c.l.b16 %v355
        %v504 = vunpack.c.l.b16 %v356
        %v505 = vunpack.c.l.b16 %v357
        %v506 = vunpack.c.l.b16 %v358
        %v507 = vunpack.c.l.b16 %v359
        %v508 = vunpack.c.l.b16 %v360
        %v509 = vunpack.c.l.b16 %v361
        %v510 = vunpack.c.l.b16 %v362
        %v511 = vunpack.c.l.b16 %v363
        %v512 = vunpack.c.l.b16 %v364
        %v513 = vunpack.c.l.b16 %v365
        %v514 = vunpack.c.l.b16 %v366
        %v515 = vunpack.c.l.b16 %v367
        %v516 = vunpack.c.l.b16 %v368
        %v517 = vunpack.c.l.b16 %v369
        %v518 = vunpack.c.l.b16 %v370
        %v519 = vunpack.c.l.b16 %v371
        %v520 = vunpack.c.l.b16 %v372
        %v521 = vunpack.c.l.b16 %v373
        %v522 = vunpack.c.l.b16 %v374
        %v523 = vunpack.c.l.b16 %v375
        %v524 = vunpack.c.l.b16 %v376
        %v525 = vunpack.c.l.b16 %v377
        %v526 = vunpack.c.l.b16 %v378
        %v527 = vunpack.c.l.b16 %v379
        %v528 = vunpack.c.l.b16 %v380
        %v529 = vunpack.c.l.b16 %v381
        %v530 = vunpack.c.l.b16 %v382
        %v531 = vunpack.c.l.b16 %v383
        %v532 = vunpack.c.l.b16 %v384
        %v533 = vunpack.c.l.b16 %v385
        %v534 = vunpack.c.l.b16 %v386
        %v535 = vunpack.c.l.b16 %v387
        %v536 = vunpack.c.l.b16 %v388
        %v537 = vunpack.c.l.b16 %v389
        %v538 = vunpack.c.l.b16 %v390
        %v539 = vunpack.c.l.b16 %v391
        %v540 = vunpack.c.l.b16 %v392
        %v541 = vunpack.c.l.b16 %v393
        %v542 = vunpack.c.l.b16 %v394
        %v543 = vunpack.c.l.b16 %v395
        %v544 = vunpack.c.l.b16 %v396
        %v545 = vpack.c.b16 %v482, %v481
        %v546 = vpack.c.b16 %v484, %v483
        %v547 = vpack.c.b16 %v486, %v485
        %v548 = vpack.c.b16 %v488, %v487
        %v549 = vpack.c.b16 %v490, %v489
        %v550 = vpack.c.b16 %v492, %v491
        %v551 = vpack.c.b16 %v494, %v493
        %v552 = vpack.c.b16 %v496, %v495
        %v553 = vpack.c.b16 %v498, %v497
        %v554 = vpack.c.b16 %v500, %v499
        %v555 = vpack.c.b16 %v502, %v501
        %v556 = vpack.c.b16 %v504, %v503
        %v557 = vpack.c.b16 %v506, %v505
        %v558 = vpack.c.b16 %v508, %v507
        %v559 = vpack.c.b16 %v510, %v509
        %v560 = vpack.c.b16 %v512, %v511
        %v561 = vpack.c.b16 %v514, %v513
        %v562 = vpack.c.b16 %v516, %v515
        %v563 = vpack.c.b16 %v518, %v517
        %v564 = vpack.c.b16 %v520, %v519
        %v565 = vpack.c.b16 %v522, %v521
        %v566 = vpack.c.b16 %v524, %v523
        %v567 = vpack.c.b16 %v526, %v525
        %v568 = vpack.c.b16 %v528, %v527
        %v569 = vpack.c.b16 %v530, %v529
        %v570 = vpack.c.b16 %v532, %v531
        %v571 = vpack.c.b16 %v534, %v533
        %v572 = vpack.c.b16 %v536, %v535
        %v573 = vpack.c.b16 %v538, %v537
        %v574 = vpack.c.b16 %v540, %v539
        %v575 = vpack.c.b16 %v542, %v541
        %v576 = vpack.c.b16 %v544, %v543
        %v625 = vunpack.c.l.b16 %v397
        %v626 = vunpack.c.l.b16 %v398
        %v627 = vunpack.c.l.b16 %v399
        %v628 = vunpack.c.l.b16 %v400
        %v629 = vunpack.c.l.b16 %v401
        %v630 = vunpack.c.l.b16 %v402
        %v631 = vunpack.c.l.b16 %v403
        %v632 = vunpack.c.l.b16 %v404
        %v633 = vunpack.c.l.b16 %v405
        %v634 = vunpack.c.l.b16 %v406
        %v635 = vunpack.c.l.b16 %v407
        %v636 = vunpack.c.l.b16 %v408
        %v637 = vunpack.c.l.b16 %v409
        %v638 = vunpack.c.l.b16 %v410
        %v639 = vunpack.c.l.b16 %v411
        %v640 = vunpack.c.l.b16 %v412
        %v641 = vpack.c.b16 %v626, %v625
        %v642 = vpack.c.b16 %v628, %v627
        %v643 = vpack.c.b16 %v630, %v629
        %v644 = vpack.c.b16 %v632, %v631
        %v645 = vpack.c.b16 %v634, %v633
        %v646 = vpack.c.b16 %v636, %v635
        %v647 = vpack.c.b16 %v638, %v637
        %v648 = vpack.c.b16 %v640, %v639
        %657 = vmatpush.bf16.msra.mxu0 %v648
        %658 = vmatpush.bf16.msra.mxu0 %v647
        %659 = vmatpush.bf16.msra.mxu0 %v646
        %660 = vmatpush.bf16.msra.mxu0 %v645
        %661 = vmatpush.bf16.msra.mxu0 %v644
        %662 = vmatpush.bf16.msra.mxu0 %v643
        %663 = vmatpush.bf16.msra.mxu0 %v642
        %664 = vmatpush.bf16.msra.mxu0 %v641
        %665 = vmatmul.bf16.gmra.mxu0 %v545
        %v666 = vpop.f32.mrf.mxu0
        %v667 = vadd.f32 %v415, %v666
        %v668 = vpop.f32.mrf.mxu0
        %v669 = vadd.f32 %v415, %v668
        %670 = vmatmul.bf16.gmra.mxu0 %v546
        %v671 = vpop.f32.mrf.mxu0
        %v672 = vadd.f32 %v415, %v671
        %v673 = vpop.f32.mrf.mxu0
        %v674 = vadd.f32 %v415, %v673
        %675 = vmatmul.bf16.gmra.mxu0 %v547
        %v676 = vpop.f32.mrf.mxu0
        %v677 = vadd.f32 %v415, %v676
        %v678 = vpop.f32.mrf.mxu0
        %v679 = vadd.f32 %v415, %v678
        %680 = vmatmul.bf16.gmra.mxu0 %v548
        %v681 = vpop.f32.mrf.mxu0
        %v682 = vadd.f32 %v415, %v681
        %v683 = vpop.f32.mrf.mxu0
        %v684 = vadd.f32 %v415, %v683
        %685 = vmatmul.bf16.gmra.mxu0 %v549
        %v686 = vpop.f32.mrf.mxu0
        %v687 = vadd.f32 %v415, %v686
        %v688 = vpop.f32.mrf.mxu0
        %v689 = vadd.f32 %v415, %v688
        %690 = vmatmul.bf16.gmra.mxu0 %v550
        %v691 = vpop.f32.mrf.mxu0
        %v692 = vadd.f32 %v415, %v691
        %v693 = vpop.f32.mrf.mxu0
        %v694 = vadd.f32 %v415, %v693
        %695 = vmatmul.bf16.gmra.mxu0 %v551
        %v696 = vpop.f32.mrf.mxu0
        %v697 = vadd.f32 %v415, %v696
        %v698 = vpop.f32.mrf.mxu0
        %v699 = vadd.f32 %v415, %v698
        %700 = vmatmul.bf16.gmra.mxu0 %v552
        %v701 = vpop.f32.mrf.mxu0
        %v702 = vadd.f32 %v415, %v701
        %v703 = vpop.f32.mrf.mxu0
        %v704 = vadd.f32 %v415, %v703
        %705 = vmatmul.bf16.gmra.mxu0 %v553
        %v706 = vpop.f32.mrf.mxu0
        %v707 = vadd.f32 %v415, %v706
        %v708 = vpop.f32.mrf.mxu0
        %v709 = vadd.f32 %v415, %v708
        %710 = vmatmul.bf16.gmra.mxu0 %v554
        %v711 = vpop.f32.mrf.mxu0
        %v712 = vadd.f32 %v415, %v711
        %v713 = vpop.f32.mrf.mxu0
        %v714 = vadd.f32 %v415, %v713
        %715 = vmatmul.bf16.gmra.mxu0 %v555
        %v716 = vpop.f32.mrf.mxu0
        %v717 = vadd.f32 %v415, %v716
        %v718 = vpop.f32.mrf.mxu0
        %v719 = vadd.f32 %v415, %v718
        %720 = vmatmul.bf16.gmra.mxu0 %v556
        %v721 = vpop.f32.mrf.mxu0
        %v722 = vadd.f32 %v415, %v721
        %v723 = vpop.f32.mrf.mxu0
        %v724 = vadd.f32 %v415, %v723
        %725 = vmatmul.bf16.gmra.mxu0 %v557
        %v726 = vpop.f32.mrf.mxu0
        %v727 = vadd.f32 %v415, %v726
        %v728 = vpop.f32.mrf.mxu0
        %v729 = vadd.f32 %v415, %v728
        %730 = vmatmul.bf16.gmra.mxu0 %v558
        %v731 = vpop.f32.mrf.mxu0
        %v732 = vadd.f32 %v415, %v731
        %v733 = vpop.f32.mrf.mxu0
        %v734 = vadd.f32 %v415, %v733
        %735 = vmatmul.bf16.gmra.mxu0 %v559
        %v736 = vpop.f32.mrf.mxu0
        %v737 = vadd.f32 %v415, %v736
        %v738 = vpop.f32.mrf.mxu0
        %v739 = vadd.f32 %v415, %v738
        %740 = vmatmul.bf16.gmra.mxu0 %v560
        %v741 = vpop.f32.mrf.mxu0
        %v742 = vadd.f32 %v415, %v741
        %v743 = vpop.f32.mrf.mxu0
        %v744 = vadd.f32 %v415, %v743
        %745 = vmatmul.bf16.gmra.mxu0 %v561
        %v746 = vpop.f32.mrf.mxu0
        %v747 = vadd.f32 %v415, %v746
        %v748 = vpop.f32.mrf.mxu0
        %v749 = vadd.f32 %v415, %v748
        %750 = vmatmul.bf16.gmra.mxu0 %v562
        %v751 = vpop.f32.mrf.mxu0
        %v752 = vadd.f32 %v415, %v751
        %v753 = vpop.f32.mrf.mxu0
        %v754 = vadd.f32 %v415, %v753
        %755 = vmatmul.bf16.gmra.mxu0 %v563
        %v756 = vpop.f32.mrf.mxu0
        %v757 = vadd.f32 %v415, %v756
        %v758 = vpop.f32.mrf.mxu0
        %v759 = vadd.f32 %v415, %v758
        %760 = vmatmul.bf16.gmra.mxu0 %v564
        %v761 = vpop.f32.mrf.mxu0
        %v762 = vadd.f32 %v415, %v761
        %v763 = vpop.f32.mrf.mxu0
        %v764 = vadd.f32 %v415, %v763
        %765 = vmatmul.bf16.gmra.mxu0 %v565
        %v766 = vpop.f32.mrf.mxu0
        %v767 = vadd.f32 %v415, %v766
        %v768 = vpop.f32.mrf.mxu0
        %v769 = vadd.f32 %v415, %v768
        %770 = vmatmul.bf16.gmra.mxu0 %v566
        %v771 = vpop.f32.mrf.mxu0
        %v772 = vadd.f32 %v415, %v771
        %v773 = vpop.f32.mrf.mxu0
        %v774 = vadd.f32 %v415, %v773
        %775 = vmatmul.bf16.gmra.mxu0 %v567
        %v776 = vpop.f32.mrf.mxu0
        %v777 = vadd.f32 %v415, %v776
        %v778 = vpop.f32.mrf.mxu0
        %v779 = vadd.f32 %v415, %v778
        %780 = vmatmul.bf16.gmra.mxu0 %v568
        %v781 = vpop.f32.mrf.mxu0
        %v782 = vadd.f32 %v415, %v781
        %v783 = vpop.f32.mrf.mxu0
        %v784 = vadd.f32 %v415, %v783
        %785 = vmatmul.bf16.gmra.mxu0 %v569
        %v786 = vpop.f32.mrf.mxu0
        %v787 = vadd.f32 %v415, %v786
        %v788 = vpop.f32.mrf.mxu0
        %v789 = vadd.f32 %v415, %v788
        %790 = vmatmul.bf16.gmra.mxu0 %v570
        %v791 = vpop.f32.mrf.mxu0
        %v792 = vadd.f32 %v415, %v791
        %v793 = vpop.f32.mrf.mxu0
        %v794 = vadd.f32 %v415, %v793
        %795 = vmatmul.bf16.gmra.mxu0 %v571
        %v796 = vpop.f32.mrf.mxu0
        %v797 = vadd.f32 %v415, %v796
        %v798 = vpop.f32.mrf.mxu0
        %v799 = vadd.f32 %v415, %v798
        %800 = vmatmul.bf16.gmra.mxu0 %v572
        %v801 = vpop.f32.mrf.mxu0
        %v802 = vadd.f32 %v415, %v801
        %v803 = vpop.f32.mrf.mxu0
        %v804 = vadd.f32 %v415, %v803
        %805 = vmatmul.bf16.gmra.mxu0 %v573
        %v806 = vpop.f32.mrf.mxu0
        %v807 = vadd.f32 %v415, %v806
        %v808 = vpop.f32.mrf.mxu0
        %v809 = vadd.f32 %v415, %v808
        %810 = vmatmul.bf16.gmra.mxu0 %v574
        %v811 = vpop.f32.mrf.mxu0
        %v812 = vadd.f32 %v415, %v811
        %v813 = vpop.f32.mrf.mxu0
        %v814 = vadd.f32 %v415, %v813
        %815 = vmatmul.bf16.gmra.mxu0 %v575
        %v816 = vpop.f32.mrf.mxu0
        %v817 = vadd.f32 %v415, %v816
        %v818 = vpop.f32.mrf.mxu0
        %v819 = vadd.f32 %v415, %v818
        %820 = vmatmul.bf16.gmra.mxu0 %v576
        %v821 = vpop.f32.mrf.mxu0
        %v822 = vadd.f32 %v415, %v821
        %v823 = vpop.f32.mrf.mxu0
        %v824 = vadd.f32 %v415, %v823
        %825 = vdwg.mxu0
        %v826 = vpack.c.bf16 %v667, %v667
        %v827 = vpack.c.bf16 %v669, %v669
        %v828 = vpack.c.bf16 %v672, %v672
        %v829 = vpack.c.bf16 %v674, %v674
        %v830 = vpack.c.bf16 %v677, %v677
        %v831 = vpack.c.bf16 %v679, %v679
        %v832 = vpack.c.bf16 %v682, %v682
        %v833 = vpack.c.bf16 %v684, %v684
        %v834 = vpack.c.bf16 %v687, %v687
        %v835 = vpack.c.bf16 %v689, %v689
        %v836 = vpack.c.bf16 %v692, %v692
        %v837 = vpack.c.bf16 %v694, %v694
        %v838 = vpack.c.bf16 %v697, %v697
        %v839 = vpack.c.bf16 %v699, %v699
        %v840 = vpack.c.bf16 %v702, %v702
        %v841 = vpack.c.bf16 %v704, %v704
        %v842 = vpack.c.bf16 %v707, %v707
        %v843 = vpack.c.bf16 %v709, %v709
        %v844 = vpack.c.bf16 %v712, %v712
        %v845 = vpack.c.bf16 %v714, %v714
        %v846 = vpack.c.bf16 %v717, %v717
        %v847 = vpack.c.bf16 %v719, %v719
        %v848 = vpack.c.bf16 %v722, %v722
        %v849 = vpack.c.bf16 %v724, %v724
        %v850 = vpack.c.bf16 %v727, %v727
        %v851 = vpack.c.bf16 %v729, %v729
        %v852 = vpack.c.bf16 %v732, %v732
        %v853 = vpack.c.bf16 %v734, %v734
        %v854 = vpack.c.bf16 %v737, %v737
        %v855 = vpack.c.bf16 %v739, %v739
        %v856 = vpack.c.bf16 %v742, %v742
        %v857 = vpack.c.bf16 %v744, %v744
        %v858 = vpack.c.bf16 %v747, %v747
        %v859 = vpack.c.bf16 %v749, %v749
        %v860 = vpack.c.bf16 %v752, %v752
        %v861 = vpack.c.bf16 %v754, %v754
        %v862 = vpack.c.bf16 %v757, %v757
        %v863 = vpack.c.bf16 %v759, %v759
        %v864 = vpack.c.bf16 %v762, %v762
        %v865 = vpack.c.bf16 %v764, %v764
        %v866 = vpack.c.bf16 %v767, %v767
        %v867 = vpack.c.bf16 %v769, %v769
        %v868 = vpack.c.bf16 %v772, %v772
        %v869 = vpack.c.bf16 %v774, %v774
        %v870 = vpack.c.bf16 %v777, %v777
        %v871 = vpack.c.bf16 %v779, %v779
        %v872 = vpack.c.bf16 %v782, %v782
        %v873 = vpack.c.bf16 %v784, %v784
        %v874 = vpack.c.bf16 %v787, %v787
        %v875 = vpack.c.bf16 %v789, %v789
        %v876 = vpack.c.bf16 %v792, %v792
        %v877 = vpack.c.bf16 %v794, %v794
        %v878 = vpack.c.bf16 %v797, %v797
        %v879 = vpack.c.bf16 %v799, %v799
        %v880 = vpack.c.bf16 %v802, %v802
        %v881 = vpack.c.bf16 %v804, %v804
        %v882 = vpack.c.bf16 %v807, %v807
        %v883 = vpack.c.bf16 %v809, %v809
        %v884 = vpack.c.bf16 %v812, %v812
        %v885 = vpack.c.bf16 %v814, %v814
        %v886 = vpack.c.bf16 %v817, %v817
        %v887 = vpack.c.bf16 %v819, %v819
        %v888 = vpack.c.bf16 %v822, %v822
        %v889 = vpack.c.bf16 %v824, %v824
        %890 = vst [vmem:[%s317] sm:$0xf] %v826
        %891 = vst [vmem:[%s317 + $0x4] sm:$0xf] %v827
        %892 = vst [vmem:[%s317 + $0x8] sm:$0xf] %v828
        %893 = vst [vmem:[%s317 + $0xc] sm:$0xf] %v829
        %894 = vst [vmem:[%s317 + $0x10] sm:$0xf] %v830
        %895 = vst [vmem:[%s317 + $0x14] sm:$0xf] %v831
        %896 = vst [vmem:[%s317 + $0x18] sm:$0xf] %v832
        %897 = vst [vmem:[%s317 + $0x1c] sm:$0xf] %v833
        %898 = vst [vmem:[%s317 + $0x20] sm:$0xf] %v834
        %899 = vst [vmem:[%s317 + $0x24] sm:$0xf] %v835
        %900 = vst [vmem:[%s317 + $0x28] sm:$0xf] %v836
        %901 = vst [vmem:[%s317 + $0x2c] sm:$0xf] %v837
        %902 = vst [vmem:[%s317 + $0x30] sm:$0xf] %v838
        %903 = vst [vmem:[%s317 + $0x34] sm:$0xf] %v839
        %904 = vst [vmem:[%s317 + $0x38] sm:$0xf] %v840
        %905 = vst [vmem:[%s317 + $0x3c] sm:$0xf] %v841
        %906 = vst [vmem:[%s317 + $0x40] sm:$0xf] %v842
        %907 = vst [vmem:[%s317 + $0x44] sm:$0xf] %v843
        %908 = vst [vmem:[%s317 + $0x48] sm:$0xf] %v844
        %909 = vst [vmem:[%s317 + $0x4c] sm:$0xf] %v845
        %910 = vst [vmem:[%s317 + $0x50] sm:$0xf] %v846
        %911 = vst [vmem:[%s317 + $0x54] sm:$0xf] %v847
        %912 = vst [vmem:[%s317 + $0x58] sm:$0xf] %v848
        %913 = vst [vmem:[%s317 + $0x5c] sm:$0xf] %v849
        %914 = vst [vmem:[%s317 + $0x60] sm:$0xf] %v850
        %915 = vst [vmem:[%s317 + $0x64] sm:$0xf] %v851
        %916 = vst [vmem:[%s317 + $0x68] sm:$0xf] %v852
        %917 = vst [vmem:[%s317 + $0x6c] sm:$0xf] %v853
        %918 = vst [vmem:[%s317 + $0x70] sm:$0xf] %v854
        %919 = vst [vmem:[%s317 + $0x74] sm:$0xf] %v855
        %920 = vst [vmem:[%s317 + $0x78] sm:$0xf] %v856
        %921 = vst [vmem:[%s317 + $0x7c] sm:$0xf] %v857
        %922 = vst [vmem:[%s317 + $0x80] sm:$0xf] %v858
        %923 = vst [vmem:[%s317 + $0x84] sm:$0xf] %v859
        %924 = vst [vmem:[%s317 + $0x88] sm:$0xf] %v860
        %925 = vst [vmem:[%s317 + $0x8c] sm:$0xf] %v861
        %926 = vst [vmem:[%s317 + $0x90] sm:$0xf] %v862
        %927 = vst [vmem:[%s317 + $0x94] sm:$0xf] %v863
        %928 = vst [vmem:[%s317 + $0x98] sm:$0xf] %v864
        %929 = vst [vmem:[%s317 + $0x9c] sm:$0xf] %v865
        %930 = vst [vmem:[%s317 + $0xa0] sm:$0xf] %v866
        %931 = vst [vmem:[%s317 + $0xa4] sm:$0xf] %v867
        %932 = vst [vmem:[%s317 + $0xa8] sm:$0xf] %v868
        %933 = vst [vmem:[%s317 + $0xac] sm:$0xf] %v869
        %934 = vst [vmem:[%s317 + $0xb0] sm:$0xf] %v870
        %935 = vst [vmem:[%s317 + $0xb4] sm:$0xf] %v871
        %936 = vst [vmem:[%s317 + $0xb8] sm:$0xf] %v872
        %937 = vst [vmem:[%s317 + $0xbc] sm:$0xf] %v873
        %938 = vst [vmem:[%s317 + $0xc0] sm:$0xf] %v874
        %939 = vst [vmem:[%s317 + $0xc4] sm:$0xf] %v875
        %940 = vst [vmem:[%s317 + $0xc8] sm:$0xf] %v876
        %941 = vst [vmem:[%s317 + $0xcc] sm:$0xf] %v877
        %942 = vst [vmem:[%s317 + $0xd0] sm:$0xf] %v878
        %943 = vst [vmem:[%s317 + $0xd4] sm:$0xf] %v879
        %944 = vst [vmem:[%s317 + $0xd8] sm:$0xf] %v880
        %945 = vst [vmem:[%s317 + $0xdc] sm:$0xf] %v881
        %946 = vst [vmem:[%s317 + $0xe0] sm:$0xf] %v882
        %947 = vst [vmem:[%s317 + $0xe4] sm:$0xf] %v883
        %948 = vst [vmem:[%s317 + $0xe8] sm:$0xf] %v884
        %949 = vst [vmem:[%s317 + $0xec] sm:$0xf] %v885
        %950 = vst [vmem:[%s317 + $0xf0] sm:$0xf] %v886
        %951 = vst [vmem:[%s317 + $0xf4] sm:$0xf] %v887
        %952 = vst [vmem:[%s317 + $0xf8] sm:$0xf] %v888
        %953 = vst [vmem:[%s317 + $0xfc] sm:$0xf] %v889
        %v954 = vadd.f32 %v667, %v669
        %v955 = vadd.f32 %v954, %v672
        %v956 = vadd.f32 %v955, %v674
        %v957 = vadd.f32 %v956, %v677
        %v958 = vadd.f32 %v957, %v679
        %v959 = vadd.f32 %v958, %v682
        %v960 = vadd.f32 %v959, %v684
        %v961 = vadd.f32 %v960, %v687
        %v962 = vadd.f32 %v961, %v689
        %v963 = vadd.f32 %v962, %v692
        %v964 = vadd.f32 %v963, %v694
        %v965 = vadd.f32 %v964, %v697
        %v966 = vadd.f32 %v965, %v699
        %v967 = vadd.f32 %v966, %v702
        %v968 = vadd.f32 %v967, %v704
        %v969 = vadd.f32 %v968, %v707
        %v970 = vadd.f32 %v969, %v709
        %v971 = vadd.f32 %v970, %v712
        %v972 = vadd.f32 %v971, %v714
        %v973 = vadd.f32 %v972, %v717
        %v974 = vadd.f32 %v973, %v719
        %v975 = vadd.f32 %v974, %v722
        %v976 = vadd.f32 %v975, %v724
        %v977 = vadd.f32 %v976, %v727
        %v978 = vadd.f32 %v977, %v729
        %v979 = vadd.f32 %v978, %v732
        %v980 = vadd.f32 %v979, %v734
        %v981 = vadd.f32 %v980, %v737
        %v982 = vadd.f32 %v981, %v739
        %v983 = vadd.f32 %v982, %v742
        %v984 = vadd.f32 %v983, %v744
        %v985 = vadd.f32 %v984, %v747
        %v986 = vadd.f32 %v985, %v749
        %v987 = vadd.f32 %v986, %v752
        %v988 = vadd.f32 %v987, %v754
        %v989 = vadd.f32 %v988, %v757
        %v990 = vadd.f32 %v989, %v759
        %v991 = vadd.f32 %v990, %v762
        %v992 = vadd.f32 %v991, %v764
        %v993 = vadd.f32 %v992, %v767
        %v994 = vadd.f32 %v993, %v769
        %v995 = vadd.f32 %v994, %v772
        %v996 = vadd.f32 %v995, %v774
        %v997 = vadd.f32 %v996, %v777
        %v998 = vadd.f32 %v997, %v779
        %v999 = vadd.f32 %v998, %v782
        %v1000 = vadd.f32 %v999, %v784
        %v1001 = vadd.f32 %v1000, %v787
        %v1002 = vadd.f32 %v1001, %v789
        %v1003 = vadd.f32 %v1002, %v792
        %v1004 = vadd.f32 %v1003, %v794
        %v1005 = vadd.f32 %v1004, %v797
        %v1006 = vadd.f32 %v1005, %v799
        %v1007 = vadd.f32 %v1006, %v802
        %v1008 = vadd.f32 %v1007, %v804
        %v1009 = vadd.f32 %v1008, %v807
        %v1010 = vadd.f32 %v1009, %v809
        %v1011 = vadd.f32 %v1010, %v812
        %v1012 = vadd.f32 %v1011, %v814
        %v1013 = vadd.f32 %v1012, %v817
        %v1014 = vadd.f32 %v1013, %v819
        %v1015 = vadd.f32 %v1014, %v822
        %v1016 = vadd.f32 %v1015, %v824
        %1017 = vadd.xlane.f32.xlu0 %v1016
        %v1018 = vpop.xlane.xlu0 %1017
        %v1019 = vrot.slane %v1018, 4
        %v1020 = vadd.f32 %v1018, %v1019
        %v1021 = vrot.slane %v1020, 2
        %v1022 = vadd.f32 %v1020, %v1021
        %v1023 = vrot.slane %v1022, 1
        %v1024 = vadd.f32 %v1022, %v1023
        %s1025 = vtos %v1024
        %v1026 = vstv %s1025
        %v1027 = vadd.f32 %v1026, 0.0
        %1028 = vst [vmem:[%s325] sm:$0xff] %v1027
        %v1029 = vmul.f32 %v667, %v667
        %v1030 = vmul.f32 %v669, %v669
        %v1031 = vmul.f32 %v672, %v672
        %v1032 = vmul.f32 %v674, %v674
        %v1033 = vmul.f32 %v677, %v677
        %v1034 = vmul.f32 %v679, %v679
        %v1035 = vmul.f32 %v682, %v682
        %v1036 = vmul.f32 %v684, %v684
        %v1037 = vmul.f32 %v687, %v687
        %v1038 = vmul.f32 %v689, %v689
        %v1039 = vmul.f32 %v692, %v692
        %v1040 = vmul.f32 %v694, %v694
        %v1041 = vmul.f32 %v697, %v697
        %v1042 = vmul.f32 %v699, %v699
        %v1043 = vmul.f32 %v702, %v702
        %v1044 = vmul.f32 %v704, %v704
        %v1045 = vmul.f32 %v707, %v707
        %v1046 = vmul.f32 %v709, %v709
        %v1047 = vmul.f32 %v712, %v712
        %v1048 = vmul.f32 %v714, %v714
        %v1049 = vmul.f32 %v717, %v717
        %v1050 = vmul.f32 %v719, %v719
        %v1051 = vmul.f32 %v722, %v722
        %v1052 = vmul.f32 %v724, %v724
        %v1053 = vmul.f32 %v727, %v727
        %v1054 = vmul.f32 %v729, %v729
        %v1055 = vmul.f32 %v732, %v732
        %v1056 = vmul.f32 %v734, %v734
        %v1057 = vmul.f32 %v737, %v737
        %v1058 = vmul.f32 %v739, %v739
        %v1059 = vmul.f32 %v742, %v742
        %v1060 = vmul.f32 %v744, %v744
        %v1061 = vmul.f32 %v747, %v747
        %v1062 = vmul.f32 %v749, %v749
        %v1063 = vmul.f32 %v752, %v752
        %v1064 = vmul.f32 %v754, %v754
        %v1065 = vmul.f32 %v757, %v757
        %v1066 = vmul.f32 %v759, %v759
        %v1067 = vmul.f32 %v762, %v762
        %v1068 = vmul.f32 %v764, %v764
        %v1069 = vmul.f32 %v767, %v767
        %v1070 = vmul.f32 %v769, %v769
        %v1071 = vmul.f32 %v772, %v772
        %v1072 = vmul.f32 %v774, %v774
        %v1073 = vmul.f32 %v777, %v777
        %v1074 = vmul.f32 %v779, %v779
        %v1075 = vmul.f32 %v782, %v782
        %v1076 = vmul.f32 %v784, %v784
        %v1077 = vmul.f32 %v787, %v787
        %v1078 = vmul.f32 %v789, %v789
        %v1079 = vmul.f32 %v792, %v792
        %v1080 = vmul.f32 %v794, %v794
        %v1081 = vmul.f32 %v797, %v797
        %v1082 = vmul.f32 %v799, %v799
        %v1083 = vmul.f32 %v802, %v802
        %v1084 = vmul.f32 %v804, %v804
        %v1085 = vmul.f32 %v807, %v807
        %v1086 = vmul.f32 %v809, %v809
        %v1087 = vmul.f32 %v812, %v812
        %v1088 = vmul.f32 %v814, %v814
        %v1089 = vmul.f32 %v817, %v817
        %v1090 = vmul.f32 %v819, %v819
        %v1091 = vmul.f32 %v822, %v822
        %v1092 = vmul.f32 %v824, %v824
        %v1093 = vadd.f32 %v1029, %v1030
        %v1094 = vadd.f32 %v1093, %v1031
        %v1095 = vadd.f32 %v1094, %v1032
        %v1096 = vadd.f32 %v1095, %v1033
        %v1097 = vadd.f32 %v1096, %v1034
        %v1098 = vadd.f32 %v1097, %v1035
        %v1099 = vadd.f32 %v1098, %v1036
        %v1100 = vadd.f32 %v1099, %v1037
        %v1101 = vadd.f32 %v1100, %v1038
        %v1102 = vadd.f32 %v1101, %v1039
        %v1103 = vadd.f32 %v1102, %v1040
        %v1104 = vadd.f32 %v1103, %v1041
        %v1105 = vadd.f32 %v1104, %v1042
        %v1106 = vadd.f32 %v1105, %v1043
        %v1107 = vadd.f32 %v1106, %v1044
        %v1108 = vadd.f32 %v1107, %v1045
        %v1109 = vadd.f32 %v1108, %v1046
        %v1110 = vadd.f32 %v1109, %v1047
        %v1111 = vadd.f32 %v1110, %v1048
        %v1112 = vadd.f32 %v1111, %v1049
        %v1113 = vadd.f32 %v1112, %v1050
        %v1114 = vadd.f32 %v1113, %v1051
        %v1115 = vadd.f32 %v1114, %v1052
        %v1116 = vadd.f32 %v1115, %v1053
        %v1117 = vadd.f32 %v1116, %v1054
        %v1118 = vadd.f32 %v1117, %v1055
        %v1119 = vadd.f32 %v1118, %v1056
        %v1120 = vadd.f32 %v1119, %v1057
        %v1121 = vadd.f32 %v1120, %v1058
        %v1122 = vadd.f32 %v1121, %v1059
        %v1123 = vadd.f32 %v1122, %v1060
        %v1124 = vadd.f32 %v1123, %v1061
        %v1125 = vadd.f32 %v1124, %v1062
        %v1126 = vadd.f32 %v1125, %v1063
        %v1127 = vadd.f32 %v1126, %v1064
        %v1128 = vadd.f32 %v1127, %v1065
        %v1129 = vadd.f32 %v1128, %v1066
        %v1130 = vadd.f32 %v1129, %v1067
        %v1131 = vadd.f32 %v1130, %v1068
        %v1132 = vadd.f32 %v1131, %v1069
        %v1133 = vadd.f32 %v1132, %v1070
        %v1134 = vadd.f32 %v1133, %v1071
        %v1135 = vadd.f32 %v1134, %v1072
        %v1136 = vadd.f32 %v1135, %v1073
        %v1137 = vadd.f32 %v1136, %v1074
        %v1138 = vadd.f32 %v1137, %v1075
        %v1139 = vadd.f32 %v1138, %v1076
        %v1140 = vadd.f32 %v1139, %v1077
        %v1141 = vadd.f32 %v1140, %v1078
        %v1142 = vadd.f32 %v1141, %v1079
        %v1143 = vadd.f32 %v1142, %v1080
        %v1144 = vadd.f32 %v1143, %v1081
        %v1145 = vadd.f32 %v1144, %v1082
        %v1146 = vadd.f32 %v1145, %v1083
        %v1147 = vadd.f32 %v1146, %v1084
        %v1148 = vadd.f32 %v1147, %v1085
        %v1149 = vadd.f32 %v1148, %v1086
        %v1150 = vadd.f32 %v1149, %v1087
        %v1151 = vadd.f32 %v1150, %v1088
        %v1152 = vadd.f32 %v1151, %v1089
        %v1153 = vadd.f32 %v1152, %v1090
        %v1154 = vadd.f32 %v1153, %v1091
        %v1155 = vadd.f32 %v1154, %v1092
        %1156 = vadd.xlane.f32.xlu0 %v1155
        %v1157 = vpop.xlane.xlu0 %1156
        %v1158 = vrot.slane %v1157, 4
        %v1159 = vadd.f32 %v1157, %v1158
        %v1160 = vrot.slane %v1159, 2
        %v1161 = vadd.f32 %v1159, %v1160
        %v1162 = vrot.slane %v1161, 1
        %v1163 = vadd.f32 %v1161, %v1162
        %s1164 = vtos %v1163
        %v1165 = vstv %s1164
        %v1166 = vadd.f32 %v1165, 0.0
        %1167 = vst [vmem:[%s332] sm:$0xff] %v1166
        %s1168 = smul.u32 64, %s24
        %p1169 = scmp.lt.s32.totalorder %s23, 1
        %s1170 = scalar_select %p1169, %s23, 1
        %p1171 = scmp.lt.s32.totalorder %s1168, 63
        %s1172 = scalar_select %p1171, %s1168, 63
        %s1173 = smul.addr %s1170, 64
        %s1174 = sadd.s32 %s1172, %s1173
        %s1175 = smul.addr %s1174, 4
        %s1176 = scalar_lea.vmem %s3, %s1175
        %p1177 = scmp.lt.s32.totalorder %s23, 1
        %s1178 = scalar_select %p1177, %s23, 1
        %p1179 = scmp.lt.s32.totalorder %s24, 0
        %s1180 = scalar_select %p1179, %s24, 0
        %s1181 = sadd.s32 %s1180, %s1178
        %s1182 = smul.addr %s1181, 8
        %s1183 = scalar_lea.vmem %s4, %s1182
        %p1184 = scmp.lt.s32.totalorder %s23, 1
        %s1185 = scalar_select %p1184, %s23, 1
        %p1186 = scmp.lt.s32.totalorder %s24, 0
        %s1187 = scalar_select %p1186, %s24, 0
        %s1188 = sadd.s32 %s1187, %s1185
        %s1189 = smul.addr %s1188, 8
        %s1190 = scalar_lea.vmem %s5, %s1189
        // Predicated region
        $region41: #{up_block_forward.10} parent=31 // pred_check
          %p1191 = pneg %p121
        $region42: #{up_block_forward.10} parent=31 // pred_check_branch
          %1193 = sbr.rel (%p1191) target = $region44
        $region43: #{up_block_forward.10} parent=31 // pred_region
          %s1194 = smul.u32 64, %s24
        $region44: #{up_block_forward.10} parent=31 // pred_fallthru
          _
        // Predicated region
        $region45: #{up_block_forward.10} parent=31 // pred_check
          %p1195 = pneg %p149
        $region46: #{up_block_forward.10} parent=31 // pred_check_branch
          %1197 = sbr.rel (%p1195) target = $region48
        $region47: #{up_block_forward.10} parent=31 // pred_region
          _
        $region48: #{up_block_forward.10} parent=31 // pred_fallthru
          _
        // Predicated region
        $region49: #{up_block_forward.10} parent=31 // pred_check
          %p1198 = pneg %p177
        $region50: #{up_block_forward.10} parent=31 // pred_check_branch
          %1200 = sbr.rel (%p1198) target = $region52
        $region51: #{up_block_forward.10} parent=31 // pred_region
          _
        $region52: #{up_block_forward.10} parent=31 // pred_fallthru
          _
      $region32: #{up_block_forward.10} parent=5 // pred_fallthru
        _
      %p1201 = scmp.le.s32.totalorder 2, %s14
      // Predicated region
      $region53: #{up_block_forward.10} parent=5 // pred_check
        %p1202 = pneg %p1201
      $region54: #{up_block_forward.10} parent=5 // pred_check_branch
        %1204 = sbr.rel (%p1202) target = $region56
      $region55: #{up_block_forward.10} parent=5 // pred_region
        %s1205 = ssub.s32 %s14, 2
        // Predicated region
        $region57: #{up_block_forward.10} parent=55 // pred_check
          %p1206 = pneg %p127
        $region58: #{up_block_forward.10} parent=55 // pred_check_branch
          %1208 = sbr.rel (%p1206) target = $region60
        $region59: #{up_block_forward.10} parent=55 // pred_region
          %s1209 = smul.u32 64, %s26
          %p1210 = scmp.lt.s32.totalorder %s25, 1
          %s1211 = scalar_select %p1210, %s25, 1
          %p1212 = scmp.lt.s32.totalorder %s1209, 63
          %s1213 = scalar_select %p1212, %s1209, 63
          %s1214 = smul.addr %s1211, 64
          %s1215 = sadd.s32 %s1213, %s1214
          %s1216 = smul.addr %s1215, 4
          %s1217 = scalar_lea.vmem %s3, %s1216
        $region60: #{up_block_forward.10} parent=55 // pred_fallthru
          _
        // Predicated region
        $region61: #{up_block_forward.10} parent=55 // pred_check
          %p1218 = pneg %p155
        $region62: #{up_block_forward.10} parent=55 // pred_check_branch
          %1220 = sbr.rel (%p1218) target = $region64
        $region63: #{up_block_forward.10} parent=55 // pred_region
          %p1221 = scmp.lt.s32.totalorder %s25, 1
          %s1222 = scalar_select %p1221, %s25, 1
          %p1223 = scmp.lt.s32.totalorder %s26, 0
          %s1224 = scalar_select %p1223, %s26, 0
          %s1225 = sadd.s32 %s1224, %s1222
          %s1226 = smul.addr %s1225, 8
          %s1227 = scalar_lea.vmem %s4, %s1226
        $region64: #{up_block_forward.10} parent=55 // pred_fallthru
          _
        // Predicated region
        $region65: #{up_block_forward.10} parent=55 // pred_check
          %p1228 = pneg %p183
        $region66: #{up_block_forward.10} parent=55 // pred_check_branch
          %1230 = sbr.rel (%p1228) target = $region68
        $region67: #{up_block_forward.10} parent=55 // pred_region
          %p1231 = scmp.lt.s32.totalorder %s25, 1
          %s1232 = scalar_select %p1231, %s25, 1
          %p1233 = scmp.lt.s32.totalorder %s26, 0
          %s1234 = scalar_select %p1233, %s26, 0
          %s1235 = sadd.s32 %s1234, %s1232
          %s1236 = smul.addr %s1235, 8
          %s1237 = scalar_lea.vmem %s5, %s1236
        $region68: #{up_block_forward.10} parent=55 // pred_fallthru
          _
      $region56: #{up_block_forward.10} parent=5 // pred_fallthru
        _
    $region6: #{up_block_forward.10} parent=1 // loop_footer
      %s18 = sadd.s32 1, %s14
    $region7: #{up_block_forward.10} parent=1 // loop_footer_branch
      %13 = sbr.rel target = $region3
    $region8: #{up_block_forward.10} parent=1 // loop_exit
      _
    %1238 = vsyncpa [#allocation3], 1
    %s1239 = scalar_lea.sflag [#allocation3], 1
    %1240 = vsyncpa %s1239, 1
    %1241 = vsyncpa [#allocation5], 1

// kernel: up_block_forward.6
$region0: #{up_block_forward.6}
  #allocation0 [shape = 'u32[]', space=smem, size = 0x4, offset = 0x4, fixed_abs, tag = 'smem constant byte address 0x4 - core index']
  #allocation1 [shape = 'u32[72,128]{1,0:T(1,128)}', space=vmem, size = 0x9000, scoped, tag = 'internal scratch']
  %s0 = inlined_call_operand.vmem [shape: bf16[2,10,10,10,128], index: 0, kind: input, shape index: {}, may-alias: {0,1,2}]
  %s1 = inlined_call_operand.vmem [shape: bf16[2,10,10,10,128], index: 1, kind: input, shape index: {}, may-alias: {0,1,2}]
  %s2 = inlined_call_operand.vmem [shape: bf16[2,10,10,10,128], index: 2, kind: input, shape index: {}, may-alias: {0,1,2}]
  %s3 = inlined_call_operand.hbm [shape: bf16[27,128,128], index: 3, kind: input, shape index: {}]
  %s4 = inlined_call_operand.hbm [shape: f32[1,128], index: 4, kind: input, shape index: {}]
  %s5 = inlined_call_operand.vmem [shape: bf16[2,8,64,128], index: 5, kind: output, shape index: {0}]
  %s6 = inlined_call_operand.vmem [shape: f32[2,8,8,128], index: 6, kind: output, shape index: {1}]
  %s7 = inlined_call_operand.vmem [shape: f32[2,8,8,128], index: 7, kind: output, shape index: {2}]
  %8 = xla_tuple %s5, %s6, %s7
  %s9 = sld [smem:[#allocation0]]
  $region77: #{up_block_forward.6} parent=0
    _
  %s11 = ssub.s32 1, %s9
  %s12 = scalar_select 0, %s11, %s9
  $region1: #{up_block_forward.6} parent=0
    #allocation2 [shape = 'u8[884736]{0}', space=vmem, size = 0xd8000, scoped, tag = 'input window, operand 3, single buffered']
    #allocation3 [shape = 's32[2]{0}', space=sflag, size = 0x8, scoped, tag = 'scoped memory for up_block_forward.6']
    #allocation4 [shape = 'u8[512]{0}', space=vmem, size = 0x400, scoped, tag = 'input window, operand 4, single buffered']
    #allocation5 [shape = 's32[1]{0}', space=sflag, size = 0x4, scoped, tag = 'scoped memory for up_block_forward.6']
    %13 = vsyncpa [#allocation3], 0
    %14 = vsyncpa [#allocation5], 0
    loop: start=0, step=1, limit=18
    $region2: #{up_block_forward.6} parent=1 // loop_pre_header
      _
    $region3: #{up_block_forward.6} parent=1 // loop_header
      %s16 = sphi 0, %s20
      %p17 = scmp.ge.s32.totalorder %s16, 18
      %s23 = sphi 0, %s35
      %s24 = sphi 0, %s31
      %s25 = sphi 0, %s23
      %s26 = sphi 0, %s24
      %s27 = sphi 0, %s25
      %s28 = sphi 0, %s26
      %s40 = sphi 0, %s42
      %s43 = sphi 0, %s40
      %s44 = sphi 0, %s43
      %s60 = sphi 0, %s44
      %s70 = sphi 0, %s72
      %s73 = sphi 0, %s70
      %s74 = sphi 0, %s73
      %s90 = sphi 0, %s74
      %s100 = sphi 0, %s102
      %s103 = sphi 0, %s100
      %s104 = sphi 0, %s103
      %s120 = sphi 0, %s104
      %s124 = sphi 0, %s124
      %s126 = sphi 0, %s124
      %s127 = sphi 0, %s126
      %s141 = sphi 0, %s127
      %s145 = sphi 0, %s145
      %s147 = sphi 0, %s145
      %s148 = sphi 0, %s147
      %s162 = sphi 0, %s148
      %s170 = sphi 0, %s172
      %s173 = sphi 0, %s170
      %s174 = sphi 0, %s173
      %s190 = sphi 0, %s174
      %s198 = sphi 0, %s200
      %s201 = sphi 0, %s198
      %s202 = sphi 0, %s201
      %s218 = sphi 0, %s202
      %s226 = sphi 0, %s228
      %s229 = sphi 0, %s226
      %s230 = sphi 0, %s229
      %s246 = sphi 0, %s230
    $region4: #{up_block_forward.6} parent=1 // loop_header_branch
      %19 = sbr.rel (%p17) target = $region8
    $region5: #{up_block_forward.6} parent=1 // loop_body
      %s21 = ssub.s32 %s16, 1
      %s22 = ssub.s32 %s16, 2
      %s29 = sadd.s32 1, %s24
      %p30 = scmp.ge.s32.totalorder %s29, 8
      %s31 = scalar_select %p30, 0, %s29
      %s32 = sadd.s32 1, %s23
      %s33 = scalar_select %p30, %s32, %s23
      %p34 = scmp.ge.s32.totalorder %s33, 2
      %s35 = scalar_select %p34, 0, %s33
      %s36 = ssub.s32 %s23, %s35
      %s37 = ssub.s32 %s24, %s31
      %s38 = sor.u32 %s36, %s37
      %p39 = scmp.eq.s32.totalorder %s38, 0
      %s41 = sadd.s32 %s40, 1
      %s42 = scalar_select %p39, %s40, %s41
      %p45 = pneg %p39
      %p46 = scmp.eq.s32.totalorder %s16, 15
      %p47 = por %p45, %p46
      %p48 = scmp.ne.s32.totalorder %s40, %s43
      %p49 = scmp.eq.s32.totalorder %s16, 0
      %p50 = por %p48, %p49
      %p51 = scmp.ne.s32.totalorder %s40, %s43
      %p52 = scmp.eq.s32.totalorder %s21, 15
      %p53 = por %p51, %p52
      %p54 = scmp.ne.s32.totalorder %s43, %s44
      %p55 = scmp.eq.s32.totalorder %s21, 0
      %p56 = por %p54, %p55
      %p57 = scmp.ne.s32.totalorder %s43, %s44
      %p58 = scmp.eq.s32.totalorder %s22, 15
      %p59 = por %p57, %p58
      %p61 = scmp.ne.s32.totalorder %s44, %s60
      %p62 = scmp.eq.s32.totalorder %s22, 0
      %p63 = por %p61, %p62
      %s64 = sadd.s32 %s24, 1
      %s65 = sadd.s32 %s31, 1
      %s66 = ssub.s32 %s23, %s35
      %s67 = ssub.s32 %s64, %s65
      %s68 = sor.u32 %s66, %s67
      %p69 = scmp.eq.s32.totalorder %s68, 0
      %s71 = sadd.s32 %s70, 1
      %s72 = scalar_select %p69, %s70, %s71
      %p75 = pneg %p69
      %p76 = scmp.eq.s32.totalorder %s16, 15
      %p77 = por %p75, %p76
      %p78 = scmp.ne.s32.totalorder %s70, %s73
      %p79 = scmp.eq.s32.totalorder %s16, 0
      %p80 = por %p78, %p79
      %p81 = scmp.ne.s32.totalorder %s70, %s73
      %p82 = scmp.eq.s32.totalorder %s21, 15
      %p83 = por %p81, %p82
      %p84 = scmp.ne.s32.totalorder %s73, %s74
      %p85 = scmp.eq.s32.totalorder %s21, 0
      %p86 = por %p84, %p85
      %p87 = scmp.ne.s32.totalorder %s73, %s74
      %p88 = scmp.eq.s32.totalorder %s22, 15
      %p89 = por %p87, %p88
      %p91 = scmp.ne.s32.totalorder %s74, %s90
      %p92 = scmp.eq.s32.totalorder %s22, 0
      %p93 = por %p91, %p92
      %s94 = sadd.s32 %s24, 2
      %s95 = sadd.s32 %s31, 2
      %s96 = ssub.s32 %s23, %s35
      %s97 = ssub.s32 %s94, %s95
      %s98 = sor.u32 %s96, %s97
      %p99 = scmp.eq.s32.totalorder %s98, 0
      %s101 = sadd.s32 %s100, 1
      %s102 = scalar_select %p99, %s100, %s101
      %p105 = pneg %p99
      %p106 = scmp.eq.s32.totalorder %s16, 15
      %p107 = por %p105, %p106
      %p108 = scmp.ne.s32.totalorder %s100, %s103
      %p109 = scmp.eq.s32.totalorder %s16, 0
      %p110 = por %p108, %p109
      %p111 = scmp.ne.s32.totalorder %s100, %s103
      %p112 = scmp.eq.s32.totalorder %s21, 15
      %p113 = por %p111, %p112
      %p114 = scmp.ne.s32.totalorder %s103, %s104
      %p115 = scmp.eq.s32.totalorder %s21, 0
      %p116 = por %p114, %p115
      %p117 = scmp.ne.s32.totalorder %s103, %s104
      %p118 = scmp.eq.s32.totalorder %s22, 15
      %p119 = por %p117, %p118
      %p121 = scmp.ne.s32.totalorder %s104, %s120
      %p122 = scmp.eq.s32.totalorder %s22, 0
      %p123 = por %p121, %p122
      %s125 = sadd.s32 %s124, 1
      %p128 = scmp.eq.s32.totalorder %s16, 15
      %p129 = scmp.ne.s32.totalorder %s124, %s126
      %p130 = scmp.eq.s32.totalorder %s16, 0
      %p131 = por %p129, %p130
      %p132 = scmp.ne.s32.totalorder %s124, %s126
      %p133 = scmp.eq.s32.totalorder %s21, 15
      %p134 = por %p132, %p133
      %p135 = scmp.ne.s32.totalorder %s126, %s127
      %p136 = scmp.eq.s32.totalorder %s21, 0
      %p137 = por %p135, %p136
      %p138 = scmp.ne.s32.totalorder %s126, %s127
      %p139 = scmp.eq.s32.totalorder %s22, 15
      %p140 = por %p138, %p139
      %p142 = scmp.ne.s32.totalorder %s127, %s141
      %p143 = scmp.eq.s32.totalorder %s22, 0
      %p144 = por %p142, %p143
      %s146 = sadd.s32 %s145, 1
      %p149 = scmp.eq.s32.totalorder %s16, 15
      %p150 = scmp.ne.s32.totalorder %s145, %s147
      %p151 = scmp.eq.s32.totalorder %s16, 0
      %p152 = por %p150, %p151
      %p153 = scmp.ne.s32.totalorder %s145, %s147
      %p154 = scmp.eq.s32.totalorder %s21, 15
      %p155 = por %p153, %p154
      %p156 = scmp.ne.s32.totalorder %s147, %s148
      %p157 = scmp.eq.s32.totalorder %s21, 0
      %p158 = por %p156, %p157
      %p159 = scmp.ne.s32.totalorder %s147, %s148
      %p160 = scmp.eq.s32.totalorder %s22, 15
      %p161 = por %p159, %p160
      %p163 = scmp.ne.s32.totalorder %s148, %s162
      %p164 = scmp.eq.s32.totalorder %s22, 0
      %p165 = por %p163, %p164
      %s166 = ssub.s32 %s23, %s35
      %s167 = ssub.s32 %s24, %s31
      %s168 = sor.u32 %s166, %s167
      %p169 = scmp.eq.s32.totalorder %s168, 0
      %s171 = sadd.s32 %s170, 1
      %s172 = scalar_select %p169, %s170, %s171
      %p175 = pneg %p169
      %p176 = scmp.eq.s32.totalorder %s16, 15
      %p177 = por %p175, %p176
      %p178 = scmp.ne.s32.totalorder %s170, %s173
      %p179 = scmp.eq.s32.totalorder %s16, 0
      %p180 = por %p178, %p179
      %p181 = scmp.ne.s32.totalorder %s170, %s173
      %p182 = scmp.eq.s32.totalorder %s21, 15
      %p183 = por %p181, %p182
      %p184 = scmp.ne.s32.totalorder %s173, %s174
      %p185 = scmp.eq.s32.totalorder %s21, 0
      %p186 = por %p184, %p185
      %p187 = scmp.ne.s32.totalorder %s173, %s174
      %p188 = scmp.eq.s32.totalorder %s22, 15
      %p189 = por %p187, %p188
      %p191 = scmp.ne.s32.totalorder %s174, %s190
      %p192 = scmp.eq.s32.totalorder %s22, 0
      %p193 = por %p191, %p192
      %s194 = ssub.s32 %s23, %s35
      %s195 = ssub.s32 %s24, %s31
      %s196 = sor.u32 %s194, %s195
      %p197 = scmp.eq.s32.totalorder %s196, 0
      %s199 = sadd.s32 %s198, 1
      %s200 = scalar_select %p197, %s198, %s199
      %p203 = pneg %p197
      %p204 = scmp.eq.s32.totalorder %s16, 15
      %p205 = por %p203, %p204
      %p206 = scmp.ne.s32.totalorder %s198, %s201
      %p207 = scmp.eq.s32.totalorder %s16, 0
      %p208 = por %p206, %p207
      %p209 = scmp.ne.s32.totalorder %s198, %s201
      %p210 = scmp.eq.s32.totalorder %s21, 15
      %p211 = por %p209, %p210
      %p212 = scmp.ne.s32.totalorder %s201, %s202
      %p213 = scmp.eq.s32.totalorder %s21, 0
      %p214 = por %p212, %p213
      %p215 = scmp.ne.s32.totalorder %s201, %s202
      %p216 = scmp.eq.s32.totalorder %s22, 15
      %p217 = por %p215, %p216
      %p219 = scmp.ne.s32.totalorder %s202, %s218
      %p220 = scmp.eq.s32.totalorder %s22, 0
      %p221 = por %p219, %p220
      %s222 = ssub.s32 %s23, %s35
      %s223 = ssub.s32 %s24, %s31
      %s224 = sor.u32 %s222, %s223
      %p225 = scmp.eq.s32.totalorder %s224, 0
      %s227 = sadd.s32 %s226, 1
      %s228 = scalar_select %p225, %s226, %s227
      %p231 = pneg %p225
      %p232 = scmp.eq.s32.totalorder %s16, 15
      %p233 = por %p231, %p232
      %p234 = scmp.ne.s32.totalorder %s226, %s229
      %p235 = scmp.eq.s32.totalorder %s16, 0
      %p236 = por %p234, %p235
      %p237 = scmp.ne.s32.totalorder %s226, %s229
      %p238 = scmp.eq.s32.totalorder %s21, 15
      %p239 = por %p237, %p238
      %p240 = scmp.ne.s32.totalorder %s229, %s230
      %p241 = scmp.eq.s32.totalorder %s21, 0
      %p242 = por %p240, %p241
      %p243 = scmp.ne.s32.totalorder %s229, %s230
      %p244 = scmp.eq.s32.totalorder %s22, 15
      %p245 = por %p243, %p244
      %p247 = scmp.ne.s32.totalorder %s230, %s246
      %p248 = scmp.eq.s32.totalorder %s22, 0
      %p249 = por %p247, %p248
      %p250 = scmp.le.s32.totalorder 1, %s16
      %p251 = scmp.lt.s32.totalorder %s16, 17
      %p252 = pnand %p250, %p251
      %p253 = pneg %p252
      // Predicated region
      $region9: #{up_block_forward.6} parent=5 // pred_check
        _
      $region10: #{up_block_forward.6} parent=5 // pred_check_branch
        %255 = sbr.rel (%p252) target = $region12
      $region11: #{up_block_forward.6} parent=5 // pred_region
        %s256 = ssub.s32 %s16, 1
        // Predicated region
        $region13: #{up_block_forward.6} parent=11 // pred_check
          %p257 = pneg %p137
        $region14: #{up_block_forward.6} parent=11 // pred_check_branch
          %259 = sbr.rel (%p257) target = $region16
        $region15: #{up_block_forward.6} parent=11 // pred_region
          %261 = vsyncadd [#allocation3], 0
          %s262 = sshll.u32 %s3, 4
          %s263 = int_to_ptr.hbm [resolvable:$true] %s262
          %s264 = sshll.u32 [#allocation2], 4
          %s265 = int_to_ptr.vmem [resolvable:$true] %s264
          %270 = dma.hbm_to_vmem [thread:$0]  %s263, 27648, %s265, [#allocation3], 64, 64, 4
        $region16: #{up_block_forward.6} parent=11 // pred_fallthru
          _
        // Predicated region
        $region17: #{up_block_forward.6} parent=11 // pred_check
          %p271 = pneg %p158
        $region18: #{up_block_forward.6} parent=11 // pred_check_branch
          %273 = sbr.rel (%p271) target = $region20
        $region19: #{up_block_forward.6} parent=11 // pred_region
          %275 = vsyncadd [#allocation5], 0
          %s277 = sshll.u32 %s4, 4
          %s278 = int_to_ptr.hbm [resolvable:$true] %s277
          %s279 = sshll.u32 [#allocation4], 4
          %s280 = int_to_ptr.vmem [resolvable:$true] %s279
          %282 = dma.hbm_to_vmem [thread:$0]  %s278, 16, %s280, [#allocation5]
        $region20: #{up_block_forward.6} parent=11 // pred_fallthru
          _
      $region12: #{up_block_forward.6} parent=5 // pred_fallthru
        _
      %p283 = scmp.lt.s32.totalorder %s16, 16
      // Predicated region
      $region21: #{up_block_forward.6} parent=5 // pred_check
        %p284 = pneg %p283
      $region22: #{up_block_forward.6} parent=5 // pred_check_branch
        %286 = sbr.rel (%p284) target = $region24
      $region23: #{up_block_forward.6} parent=5 // pred_region
        // Predicated region
        $region25: #{up_block_forward.6} parent=23 // pred_check
          %p287 = pneg %p50
        $region26: #{up_block_forward.6} parent=23 // pred_check_branch
          %289 = sbr.rel (%p287) target = $region28
        $region27: #{up_block_forward.6} parent=23 // pred_region
          %p290 = scmp.lt.s32.totalorder %s23, 1
          %s291 = scalar_select %p290, %s23, 1
          %p292 = scmp.lt.s32.totalorder %s24, 9
          %s293 = scalar_select %p292, %s24, 9
          %s294 = smul.addr %s293, 20
          %s295 = smul.addr %s291, 200
          %s296 = sadd.s32 %s294, %s295
          %s297 = smul.addr %s296, 4
          %s298 = scalar_lea.vmem %s0, %s297
        $region28: #{up_block_forward.6} parent=23 // pred_fallthru
          _
        // Predicated region
        $region29: #{up_block_forward.6} parent=23 // pred_check
          %p299 = pneg %p80
        $region30: #{up_block_forward.6} parent=23 // pred_check_branch
          %301 = sbr.rel (%p299) target = $region32
        $region31: #{up_block_forward.6} parent=23 // pred_region
          %s302 = sadd.s32 %s24, 1
          %p303 = scmp.lt.s32.totalorder %s23, 1
          %s304 = scalar_select %p303, %s23, 1
          %p305 = scmp.lt.s32.totalorder %s302, 9
          %s306 = scalar_select %p305, %s302, 9
          %s307 = smul.addr %s306, 20
          %s308 = smul.addr %s304, 200
          %s309 = sadd.s32 %s307, %s308
          %s310 = smul.addr %s309, 4
          %s311 = scalar_lea.vmem %s1, %s310
          %s312 = sadd.s32 %s24, 1
        $region32: #{up_block_forward.6} parent=23 // pred_fallthru
          _
        // Predicated region
        $region33: #{up_block_forward.6} parent=23 // pred_check
          %p313 = pneg %p110
        $region34: #{up_block_forward.6} parent=23 // pred_check_branch
          %315 = sbr.rel (%p313) target = $region36
        $region35: #{up_block_forward.6} parent=23 // pred_region
          %s316 = sadd.s32 %s24, 2
          %p317 = scmp.lt.s32.totalorder %s23, 1
          %s318 = scalar_select %p317, %s23, 1
          %p319 = scmp.lt.s32.totalorder %s316, 9
          %s320 = scalar_select %p319, %s316, 9
          %s321 = smul.addr %s320, 20
          %s322 = smul.addr %s318, 200
          %s323 = sadd.s32 %s321, %s322
          %s324 = smul.addr %s323, 4
          %s325 = scalar_lea.vmem %s2, %s324
          %s326 = sadd.s32 %s24, 2
        $region36: #{up_block_forward.6} parent=23 // pred_fallthru
          _
      $region24: #{up_block_forward.6} parent=5 // pred_fallthru
        _
      %p327 = scmp.le.s32.totalorder 1, %s16
      %p328 = scmp.lt.s32.totalorder %s16, 17
      %p329 = pnand %p327, %p328
      %p330 = pneg %p329
      // Predicated region
      $region37: #{up_block_forward.6} parent=5 // pred_check
        _
      $region38: #{up_block_forward.6} parent=5 // pred_check_branch
        %332 = sbr.rel (%p329) target = $region40
      $region39: #{up_block_forward.6} parent=5 // pred_region
        %s333 = ssub.s32 %s16, 1
        // Predicated region
        $region41: #{up_block_forward.6} parent=39 // pred_check
          %p334 = pneg %p137
        $region42: #{up_block_forward.6} parent=39 // pred_check_branch
          %336 = sbr.rel (%p334) target = $region44
        $region43: #{up_block_forward.6} parent=39 // pred_region
          %338 = dma.done [#allocation3], 27648
        $region44: #{up_block_forward.6} parent=39 // pred_fallthru
          _
        // Predicated region
        $region45: #{up_block_forward.6} parent=39 // pred_check
          %p339 = pneg %p158
        $region46: #{up_block_forward.6} parent=39 // pred_check_branch
          %341 = sbr.rel (%p339) target = $region48
        $region47: #{up_block_forward.6} parent=39 // pred_region
          %343 = dma.done [#allocation5], 16
        $region48: #{up_block_forward.6} parent=39 // pred_fallthru
          _
        %p344 = scmp.lt.s32.totalorder %s25, 1
        %s345 = scalar_select %p344, %s25, 1
        %p346 = scmp.lt.s32.totalorder %s26, 9
        %s347 = scalar_select %p346, %s26, 9
        %s348 = smul.addr %s347, 20
        %s349 = smul.addr %s345, 200
        %s350 = sadd.s32 %s348, %s349
        %s351 = smul.addr %s350, 4
        %s352 = scalar_lea.vmem %s0, %s351
        %p353 = pneg %p56
        %p354 = pneg %p53
        %s355 = sadd.s32 %s26, 1
        %p356 = scmp.lt.s32.totalorder %s25, 1
        %s357 = scalar_select %p356, %s25, 1
        %p358 = scmp.lt.s32.totalorder %s355, 9
        %s359 = scalar_select %p358, %s355, 9
        %s360 = smul.addr %s359, 20
        %s361 = smul.addr %s357, 200
        %s362 = sadd.s32 %s360, %s361
        %s363 = smul.addr %s362, 4
        %s364 = scalar_lea.vmem %s1, %s363
        %p365 = pneg %p86
        %p366 = pneg %p83
        %s367 = sadd.s32 %s26, 2
        %p368 = scmp.lt.s32.totalorder %s25, 1
        %s369 = scalar_select %p368, %s25, 1
        %p370 = scmp.lt.s32.totalorder %s367, 9
        %s371 = scalar_select %p370, %s367, 9
        %s372 = smul.addr %s371, 20
        %s373 = smul.addr %s369, 200
        %s374 = sadd.s32 %s372, %s373
        %s375 = smul.addr %s374, 4
        %s376 = scalar_lea.vmem %s2, %s375
        %p377 = pneg %p116
        %p378 = pneg %p113
        %p379 = pneg %p137
        %p380 = pneg %p134
        %p381 = pneg %p158
        %p382 = pneg %p155
        %p383 = pneg %p186
        %p384 = pneg %p183
        %p385 = scmp.lt.s32.totalorder %s25, 1
        %s386 = scalar_select %p385, %s25, 1
        %p387 = scmp.lt.s32.totalorder %s26, 7
        %s388 = scalar_select %p387, %s26, 7
        %s389 = smul.addr %s388, 8
        %s390 = smul.addr %s386, 64
        %s391 = sadd.s32 %s389, %s390
        %s392 = smul.addr %s391, 4
        %s393 = scalar_lea.vmem %s5, %s392
        %p394 = pneg %p214
        %p395 = pneg %p211
        %p396 = scmp.lt.s32.totalorder %s25, 1
        %s397 = scalar_select %p396, %s25, 1
        %p398 = scmp.lt.s32.totalorder %s26, 7
        %s399 = scalar_select %p398, %s26, 7
        %s400 = smul.addr %s397, 8
        %s401 = sadd.s32 %s399, %s400
        %s402 = smul.addr %s401, 8
        %s403 = scalar_lea.vmem %s6, %s402
        %p404 = pneg %p242
        %p405 = pneg %p239
        %p406 = scmp.lt.s32.totalorder %s25, 1
        %s407 = scalar_select %p406, %s25, 1
        %p408 = scmp.lt.s32.totalorder %s26, 7
        %s409 = scalar_select %p408, %s26, 7
        %s410 = smul.addr %s407, 8
        %s411 = sadd.s32 %s409, %s410
        %s412 = smul.addr %s411, 8
        %s413 = scalar_lea.vmem %s7, %s412
        %p414 = scmp.lt.s32.totalorder %s25, 1
        %s415 = scalar_select %p414, %s25, 1
        %p416 = scmp.lt.s32.totalorder %s26, 9
        %s417 = scalar_select %p416, %s26, 9
        %s418 = smul.addr %s417, 20
        %s419 = smul.addr %s415, 200
        %s420 = sadd.s32 %s418, %s419
        %s421 = smul.addr %s420, 4
        %s422 = scalar_lea.vmem %s0, %s421
        %s423 = sadd.s32 %s26, 1
        %p424 = scmp.lt.s32.totalorder %s25, 1
        %s425 = scalar_select %p424, %s25, 1
        %p426 = scmp.lt.s32.totalorder %s423, 9
        %s427 = scalar_select %p426, %s423, 9
        %s428 = smul.addr %s427, 20
        %s429 = smul.addr %s425, 200
        %s430 = sadd.s32 %s428, %s429
        %s431 = smul.addr %s430, 4
        %s432 = scalar_lea.vmem %s1, %s431
        %s433 = sadd.s32 %s26, 1
        %s434 = sadd.s32 %s26, 2
        %p435 = scmp.lt.s32.totalorder %s25, 1
        %s436 = scalar_select %p435, %s25, 1
        %p437 = scmp.lt.s32.totalorder %s434, 9
        %s438 = scalar_select %p437, %s434, 9
        %s439 = smul.addr %s438, 20
        %s440 = smul.addr %s436, 200
        %s441 = sadd.s32 %s439, %s440
        %s442 = smul.addr %s441, 4
        %s443 = scalar_lea.vmem %s2, %s442
        %s444 = sadd.s32 %s26, 2
        %p445 = scmp.lt.s32.totalorder %s25, 1
        %s446 = scalar_select %p445, %s25, 1
        %p447 = scmp.lt.s32.totalorder %s26, 7
        %s448 = scalar_select %p447, %s26, 7
        %s449 = smul.addr %s448, 8
        %s450 = smul.addr %s446, 64
        %s451 = sadd.s32 %s449, %s450
        %s452 = smul.addr %s451, 4
        %s453 = scalar_lea.vmem %s5, %s452
        %p454 = scmp.lt.s32.totalorder %s25, 1
        %s455 = scalar_select %p454, %s25, 1
        %p456 = scmp.lt.s32.totalorder %s26, 7
        %s457 = scalar_select %p456, %s26, 7
        %s458 = smul.addr %s455, 8
        %s459 = sadd.s32 %s457, %s458
        %s460 = smul.addr %s459, 8
        %s461 = scalar_lea.vmem %s6, %s460
        %p462 = scmp.lt.s32.totalorder %s25, 1
        %s463 = scalar_select %p462, %s25, 1
        %p464 = scmp.lt.s32.totalorder %s26, 7
        %s465 = scalar_select %p464, %s26, 7
        %s466 = smul.addr %s463, 8
        %s467 = sadd.s32 %s465, %s466
        %s468 = smul.addr %s467, 8
        %s469 = scalar_lea.vmem %s7, %s468
        %v470 = vld [vmem:[%s422] sm:$0xf]
        %v471 = vld [vmem:[%s422 + $0x8] sm:$0xf]
        %v472 = vld [vmem:[%s422 + $0x10] sm:$0xf]
        %v473 = vld [vmem:[%s422 + $0x18] sm:$0xf]
        %v474 = vld [vmem:[%s422 + $0x20] sm:$0xf]
        %v475 = vld [vmem:[%s422 + $0x28] sm:$0xf]
        %v476 = vld [vmem:[%s422 + $0x30] sm:$0xf]
        %v477 = vld [vmem:[%s422 + $0x38] sm:$0xf]
        %v478 = vld [vmem:[#allocation2] sm:$0xf]
        %v479 = vld [vmem:[#allocation2 + $0x4] sm:$0xf]
        %v480 = vld [vmem:[#allocation2 + $0x8] sm:$0xf]
        %v481 = vld [vmem:[#allocation2 + $0xc] sm:$0xf]
        %v482 = vld [vmem:[#allocation2 + $0x10] sm:$0xf]
        %v483 = vld [vmem:[#allocation2 + $0x14] sm:$0xf]
        %v484 = vld [vmem:[#allocation2 + $0x18] sm:$0xf]
        %v485 = vld [vmem:[#allocation2 + $0x1c] sm:$0xf]
        %v486 = vld [vmem:[#allocation2 + $0x20] sm:$0xf]
        %v487 = vld [vmem:[#allocation2 + $0x24] sm:$0xf]
        %v488 = vld [vmem:[#allocation2 + $0x28] sm:$0xf]
        %v489 = vld [vmem:[#allocation2 + $0x2c] sm:$0xf]
        %v490 = vld [vmem:[#allocation2 + $0x30] sm:$0xf]
        %v491 = vld [vmem:[#allocation2 + $0x34] sm:$0xf]
        %v492 = vld [vmem:[#allocation2 + $0x38] sm:$0xf]
        %v493 = vld [vmem:[#allocation2 + $0x3c] sm:$0xf]
        %v494 = vld [vmem:[%s422 + $0x4] sm:$0x1]
        %v495 = vld [vmem:[%s422 + $0xc] sm:$0x1]
        %v496 = vld [vmem:[%s422 + $0x14] sm:$0x1]
        %v497 = vld [vmem:[%s422 + $0x1c] sm:$0x1]
        %v498 = vld [vmem:[%s422 + $0x24] sm:$0x1]
        %v499 = vld [vmem:[%s422 + $0x2c] sm:$0x1]
        %v500 = vld [vmem:[%s422 + $0x34] sm:$0x1]
        %v501 = vld [vmem:[%s422 + $0x3c] sm:$0x1]
        %vm502 = vsmask.f32 3328
        %vm503 = vsmask.f32 7440
        %vm504 = vmor %vm502, %vm503
        %v506 = vshrl.u32 %v470, 16
        %v508 = vrot.slane %v506, 4
        %v509 = vshll.u32 %v470, 16
        %v511 = vrot.slane %v509, 5
        %v512 = vor.u32 %v508, %v511
        %v513 = vrot.slane %v512, 4
        %v515 = vshll.u32 %v494, 16
        %v517 = vrot.slane %v515, 5
        %v518 = vsel %vm504, %v513, %v517
        %v520 = vshrl.u32 %v471, 16
        %v522 = vrot.slane %v520, 4
        %v523 = vshll.u32 %v471, 16
        %v525 = vrot.slane %v523, 5
        %v526 = vor.u32 %v522, %v525
        %v527 = vrot.slane %v526, 4
        %v529 = vshll.u32 %v495, 16
        %v531 = vrot.slane %v529, 5
        %v532 = vsel %vm504, %v527, %v531
        %v534 = vshrl.u32 %v472, 16
        %v536 = vrot.slane %v534, 4
        %v537 = vshll.u32 %v472, 16
        %v539 = vrot.slane %v537, 5
        %v540 = vor.u32 %v536, %v539
        %v541 = vrot.slane %v540, 4
        %v543 = vshll.u32 %v496, 16
        %v545 = vrot.slane %v543, 5
        %v546 = vsel %vm504, %v541, %v545
        %v548 = vshrl.u32 %v473, 16
        %v550 = vrot.slane %v548, 4
        %v551 = vshll.u32 %v473, 16
        %v553 = vrot.slane %v551, 5
        %v554 = vor.u32 %v550, %v553
        %v555 = vrot.slane %v554, 4
        %v557 = vshll.u32 %v497, 16
        %v559 = vrot.slane %v557, 5
        %v560 = vsel %vm504, %v555, %v559
        %v562 = vshrl.u32 %v474, 16
        %v564 = vrot.slane %v562, 4
        %v565 = vshll.u32 %v474, 16
        %v567 = vrot.slane %v565, 5
        %v568 = vor.u32 %v564, %v567
        %v569 = vrot.slane %v568, 4
        %v571 = vshll.u32 %v498, 16
        %v573 = vrot.slane %v571, 5
        %v574 = vsel %vm504, %v569, %v573
        %v576 = vshrl.u32 %v475, 16
        %v578 = vrot.slane %v576, 4
        %v579 = vshll.u32 %v475, 16
        %v581 = vrot.slane %v579, 5
        %v582 = vor.u32 %v578, %v581
        %v583 = vrot.slane %v582, 4
        %v585 = vshll.u32 %v499, 16
        %v587 = vrot.slane %v585, 5
        %v588 = vsel %vm504, %v583, %v587
        %v590 = vshrl.u32 %v476, 16
        %v592 = vrot.slane %v590, 4
        %v593 = vshll.u32 %v476, 16
        %v595 = vrot.slane %v593, 5
        %v596 = vor.u32 %v592, %v595
        %v597 = vrot.slane %v596, 4
        %v599 = vshll.u32 %v500, 16
        %v601 = vrot.slane %v599, 5
        %v602 = vsel %vm504, %v597, %v601
        %v604 = vshrl.u32 %v477, 16
        %v606 = vrot.slane %v604, 4
        %v607 = vshll.u32 %v477, 16
        %v609 = vrot.slane %v607, 5
        %v610 = vor.u32 %v606, %v609
        %v611 = vrot.slane %v610, 4
        %v613 = vshll.u32 %v501, 16
        %v615 = vrot.slane %v613, 5
        %v616 = vsel %vm504, %v611, %v615
        %s617 = scalar_lea.vmem [#allocation2], 64
        %v618 = vld [vmem:[%s617] sm:$0xf]
        %v619 = vld [vmem:[%s617 + $0x4] sm:$0xf]
        %v620 = vld [vmem:[%s617 + $0x8] sm:$0xf]
        %v621 = vld [vmem:[%s617 + $0xc] sm:$0xf]
        %v622 = vld [vmem:[%s617 + $0x10] sm:$0xf]
        %v623 = vld [vmem:[%s617 + $0x14] sm:$0xf]
        %v624 = vld [vmem:[%s617 + $0x18] sm:$0xf]
        %v625 = vld [vmem:[%s617 + $0x1c] sm:$0xf]
        %v626 = vld [vmem:[%s617 + $0x20] sm:$0xf]
        %v627 = vld [vmem:[%s617 + $0x24] sm:$0xf]
        %v628 = vld [vmem:[%s617 + $0x28] sm:$0xf]
        %v629 = vld [vmem:[%s617 + $0x2c] sm:$0xf]
        %v630 = vld [vmem:[%s617 + $0x30] sm:$0xf]
        %v631 = vld [vmem:[%s617 + $0x34] sm:$0xf]
        %v632 = vld [vmem:[%s617 + $0x38] sm:$0xf]
        %v633 = vld [vmem:[%s617 + $0x3c] sm:$0xf]
        %v634 = vunpack.c.l.b16 %v518
        %v635 = vunpack.c.l.b16 %v532
        %v636 = vunpack.c.l.b16 %v546
        %v637 = vunpack.c.l.b16 %v560
        %v638 = vunpack.c.l.b16 %v574
        %v639 = vunpack.c.l.b16 %v588
        %v640 = vunpack.c.l.b16 %v602
        %v641 = vunpack.c.l.b16 %v616
        %v642 = vpack.c.b16 %v635, %v634
        %v643 = vpack.c.b16 %v637, %v636
        %v644 = vpack.c.b16 %v639, %v638
        %v645 = vpack.c.b16 %v641, %v640
        %v666 = vunpack.c.l.b16 %v618
        %v667 = vunpack.c.l.b16 %v619
        %v668 = vunpack.c.l.b16 %v620
        %v669 = vunpack.c.l.b16 %v621
        %v670 = vunpack.c.l.b16 %v622
        %v671 = vunpack.c.l.b16 %v623
        %v672 = vunpack.c.l.b16 %v624
        %v673 = vunpack.c.l.b16 %v625
        %v674 = vunpack.c.l.b16 %v626
        %v675 = vunpack.c.l.b16 %v627
        %v676 = vunpack.c.l.b16 %v628
        %v677 = vunpack.c.l.b16 %v629
        %v678 = vunpack.c.l.b16 %v630
        %v679 = vunpack.c.l.b16 %v631
        %v680 = vunpack.c.l.b16 %v632
        %v681 = vunpack.c.l.b16 %v633
        %v682 = vpack.c.b16 %v667, %v666
        %v683 = vpack.c.b16 %v669, %v668
        %v684 = vpack.c.b16 %v671, %v670
        %v685 = vpack.c.b16 %v673, %v672
        %v686 = vpack.c.b16 %v675, %v674
        %v687 = vpack.c.b16 %v677, %v676
        %v688 = vpack.c.b16 %v679, %v678
        %v689 = vpack.c.b16 %v681, %v680
        %698 = vmatpush.bf16.msra.mxu0 %v689
        %699 = vmatpush.bf16.msra.mxu0 %v688
        %700 = vmatpush.bf16.msra.mxu0 %v687
        %701 = vmatpush.bf16.msra.mxu0 %v686
        %702 = vmatpush.bf16.msra.mxu0 %v685
        %703 = vmatpush.bf16.msra.mxu0 %v684
        %704 = vmatpush.bf16.msra.mxu0 %v683
        %705 = vmatpush.bf16.msra.mxu0 %v682
        %706 = vmatmul.bf16.gmra.mxu0 %v642
        %v707 = vpop.f32.mrf.mxu0
        %v708 = vadd.f32 0.0, %v707
        %v709 = vpop.f32.mrf.mxu0
        %v710 = vadd.f32 0.0, %v709
        %711 = vmatmul.bf16.gmra.mxu0 %v643
        %v712 = vpop.f32.mrf.mxu0
        %v713 = vadd.f32 0.0, %v712
        %v714 = vpop.f32.mrf.mxu0
        %v715 = vadd.f32 0.0, %v714
        %716 = vmatmul.bf16.gmra.mxu0 %v644
        %v717 = vpop.f32.mrf.mxu0
        %v718 = vadd.f32 0.0, %v717
        %v719 = vpop.f32.mrf.mxu0
        %v720 = vadd.f32 0.0, %v719
        %721 = vmatmul.bf16.gmra.mxu0 %v645
        %v722 = vpop.f32.mrf.mxu0
        %v723 = vadd.f32 0.0, %v722
        %v724 = vpop.f32.mrf.mxu0
        %v725 = vadd.f32 0.0, %v724
        %726 = vdwg.mxu0
        %v735 = vunpack.c.l.b16 %v470
        %v736 = vunpack.c.l.b16 %v471
        %v737 = vunpack.c.l.b16 %v472
        %v738 = vunpack.c.l.b16 %v473
        %v739 = vunpack.c.l.b16 %v474
        %v740 = vunpack.c.l.b16 %v475
        %v741 = vunpack.c.l.b16 %v476
        %v742 = vunpack.c.l.b16 %v477
        %v743 = vpack.c.b16 %v736, %v735
        %v744 = vpack.c.b16 %v738, %v737
        %v745 = vpack.c.b16 %v740, %v739
        %v746 = vpack.c.b16 %v742, %v741
        %v767 = vunpack.c.l.b16 %v478
        %v768 = vunpack.c.l.b16 %v479
        %v769 = vunpack.c.l.b16 %v480
        %v770 = vunpack.c.l.b16 %v481
        %v771 = vunpack.c.l.b16 %v482
        %v772 = vunpack.c.l.b16 %v483
        %v773 = vunpack.c.l.b16 %v484
        %v774 = vunpack.c.l.b16 %v485
        %v775 = vunpack.c.l.b16 %v486
        %v776 = vunpack.c.l.b16 %v487
        %v777 = vunpack.c.l.b16 %v488
        %v778 = vunpack.c.l.b16 %v489
        %v779 = vunpack.c.l.b16 %v490
        %v780 = vunpack.c.l.b16 %v491
        %v781 = vunpack.c.l.b16 %v492
        %v782 = vunpack.c.l.b16 %v493
        %v783 = vpack.c.b16 %v768, %v767
        %v784 = vpack.c.b16 %v770, %v769
        %v785 = vpack.c.b16 %v772, %v771
        %v786 = vpack.c.b16 %v774, %v773
        %v787 = vpack.c.b16 %v776, %v775
        %v788 = vpack.c.b16 %v778, %v777
        %v789 = vpack.c.b16 %v780, %v779
        %v790 = vpack.c.b16 %v782, %v781
        %799 = vmatpush.bf16.msra.mxu0 %v790
        %800 = vmatpush.bf16.msra.mxu0 %v789
        %801 = vmatpush.bf16.msra.mxu0 %v788
        %802 = vmatpush.bf16.msra.mxu0 %v787
        %803 = vmatpush.bf16.msra.mxu0 %v786
        %804 = vmatpush.bf16.msra.mxu0 %v785
        %805 = vmatpush.bf16.msra.mxu0 %v784
        %806 = vmatpush.bf16.msra.mxu0 %v783
        %807 = vmatmul.bf16.gmra.mxu0 %v743
        %v808 = vpop.f32.mrf.mxu0
        %v809 = vadd.f32 %v708, %v808
        %v810 = vpop.f32.mrf.mxu0
        %v811 = vadd.f32 %v710, %v810
        %812 = vmatmul.bf16.gmra.mxu0 %v744
        %v813 = vpop.f32.mrf.mxu0
        %v814 = vadd.f32 %v713, %v813
        %v815 = vpop.f32.mrf.mxu0
        %v816 = vadd.f32 %v715, %v815
        %817 = vmatmul.bf16.gmra.mxu0 %v745
        %v818 = vpop.f32.mrf.mxu0
        %v819 = vadd.f32 %v718, %v818
        %v820 = vpop.f32.mrf.mxu0
        %v821 = vadd.f32 %v720, %v820
        %822 = vmatmul.bf16.gmra.mxu0 %v746
        %v823 = vpop.f32.mrf.mxu0
        %v824 = vadd.f32 %v723, %v823
        %v825 = vpop.f32.mrf.mxu0
        %v826 = vadd.f32 %v725, %v825
        %827 = vdwg.mxu0
        %v828 = vld [vmem:[%s422] sm:$0xe]
        %v829 = vld [vmem:[%s422 + $0x8] sm:$0xe]
        %v830 = vld [vmem:[%s422 + $0x10] sm:$0xe]
        %v831 = vld [vmem:[%s422 + $0x18] sm:$0xe]
        %v832 = vld [vmem:[%s422 + $0x20] sm:$0xe]
        %v833 = vld [vmem:[%s422 + $0x28] sm:$0xe]
        %v834 = vld [vmem:[%s422 + $0x30] sm:$0xe]
        %v835 = vld [vmem:[%s422 + $0x38] sm:$0xe]
        %vm852 = vcmask 1042432
        %vm853 = vcmask 1046532
        %vm854 = vmor %vm852, %vm853
        %v855 = vrot.slane %v828, 5
        %v856 = vrot.slane %v855, 4
        %v857 = vrot.slane %v494, 5
        %v858 = vsel %vm854, %v856, %v857
        %v859 = vrot.slane %v829, 5
        %v860 = vrot.slane %v859, 4
        %v861 = vrot.slane %v495, 5
        %v862 = vsel %vm854, %v860, %v861
        %v863 = vrot.slane %v830, 5
        %v864 = vrot.slane %v863, 4
        %v865 = vrot.slane %v496, 5
        %v866 = vsel %vm854, %v864, %v865
        %v867 = vrot.slane %v831, 5
        %v868 = vrot.slane %v867, 4
        %v869 = vrot.slane %v497, 5
        %v870 = vsel %vm854, %v868, %v869
        %v871 = vrot.slane %v832, 5
        %v872 = vrot.slane %v871, 4
        %v873 = vrot.slane %v498, 5
        %v874 = vsel %vm854, %v872, %v873
        %v875 = vrot.slane %v833, 5
        %v876 = vrot.slane %v875, 4
        %v877 = vrot.slane %v499, 5
        %v878 = vsel %vm854, %v876, %v877
        %v879 = vrot.slane %v834, 5
        %v880 = vrot.slane %v879, 4
        %v881 = vrot.slane %v500, 5
        %v882 = vsel %vm854, %v880, %v881
        %v883 = vrot.slane %v835, 5
        %v884 = vrot.slane %v883, 4
        %v885 = vrot.slane %v501, 5
        %v886 = vsel %vm854, %v884, %v885
        %s887 = scalar_lea.vmem [#allocation2], 128
        %v888 = vld [vmem:[%s887] sm:$0xf]
        %v889 = vld [vmem:[%s887 + $0x4] sm:$0xf]
        %v890 = vld [vmem:[%s887 + $0x8] sm:$0xf]
        %v891 = vld [vmem:[%s887 + $0xc] sm:$0xf]
        %v892 = vld [vmem:[%s887 + $0x10] sm:$0xf]
        %v893 = vld [vmem:[%s887 + $0x14] sm:$0xf]
        %v894 = vld [vmem:[%s887 + $0x18] sm:$0xf]
        %v895 = vld [vmem:[%s887 + $0x1c] sm:$0xf]
        %v896 = vld [vmem:[%s887 + $0x20] sm:$0xf]
        %v897 = vld [vmem:[%s887 + $0x24] sm:$0xf]
        %v898 = vld [vmem:[%s887 + $0x28] sm:$0xf]
        %v899 = vld [vmem:[%s887 + $0x2c] sm:$0xf]
        %v900 = vld [vmem:[%s887 + $0x30] sm:$0xf]
        %v901 = vld [vmem:[%s887 + $0x34] sm:$0xf]
        %v902 = vld [vmem:[%s887 + $0x38] sm:$0xf]
        %v903 = vld [vmem:[%s887 + $0x3c] sm:$0xf]
        %v904 = vunpack.c.l.b16 %v858
        %v905 = vunpack.c.l.b16 %v862
        %v906 = vunpack.c.l.b16 %v866
        %v907 = vunpack.c.l.b16 %v870
        %v908 = vunpack.c.l.b16 %v874
        %v909 = vunpack.c.l.b16 %v878
        %v910 = vunpack.c.l.b16 %v882
        %v911 = vunpack.c.l.b16 %v886
        %v912 = vpack.c.b16 %v905, %v904
        %v913 = vpack.c.b16 %v907, %v906
        %v914 = vpack.c.b16 %v909, %v908
        %v915 = vpack.c.b16 %v911, %v910
        %v936 = vunpack.c.l.b16 %v888
        %v937 = vunpack.c.l.b16 %v889
        %v938 = vunpack.c.l.b16 %v890
        %v939 = vunpack.c.l.b16 %v891
        %v940 = vunpack.c.l.b16 %v892
        %v941 = vunpack.c.l.b16 %v893
        %v942 = vunpack.c.l.b16 %v894
        %v943 = vunpack.c.l.b16 %v895
        %v944 = vunpack.c.l.b16 %v896
        %v945 = vunpack.c.l.b16 %v897
        %v946 = vunpack.c.l.b16 %v898
        %v947 = vunpack.c.l.b16 %v899
        %v948 = vunpack.c.l.b16 %v900
        %v949 = vunpack.c.l.b16 %v901
        %v950 = vunpack.c.l.b16 %v902
        %v951 = vunpack.c.l.b16 %v903
        %v952 = vpack.c.b16 %v937, %v936
        %v953 = vpack.c.b16 %v939, %v938
        %v954 = vpack.c.b16 %v941, %v940
        %v955 = vpack.c.b16 %v943, %v942
        %v956 = vpack.c.b16 %v945, %v944
        %v957 = vpack.c.b16 %v947, %v946
        %v958 = vpack.c.b16 %v949, %v948
        %v959 = vpack.c.b16 %v951, %v950
        %968 = vmatpush.bf16.msra.mxu0 %v959
        %969 = vmatpush.bf16.msra.mxu0 %v958
        %970 = vmatpush.bf16.msra.mxu0 %v957
        %971 = vmatpush.bf16.msra.mxu0 %v956
        %972 = vmatpush.bf16.msra.mxu0 %v955
        %973 = vmatpush.bf16.msra.mxu0 %v954
        %974 = vmatpush.bf16.msra.mxu0 %v953
        %975 = vmatpush.bf16.msra.mxu0 %v952
        %976 = vmatmul.bf16.gmra.mxu0 %v912
        %v977 = vpop.f32.mrf.mxu0
        %v978 = vadd.f32 0.0, %v977
        %v979 = vpop.f32.mrf.mxu0
        %v980 = vadd.f32 0.0, %v979
        %981 = vmatmul.bf16.gmra.mxu0 %v913
        %v982 = vpop.f32.mrf.mxu0
        %v983 = vadd.f32 0.0, %v982
        %v984 = vpop.f32.mrf.mxu0
        %v985 = vadd.f32 0.0, %v984
        %986 = vmatmul.bf16.gmra.mxu0 %v914
        %v987 = vpop.f32.mrf.mxu0
        %v988 = vadd.f32 0.0, %v987
        %v989 = vpop.f32.mrf.mxu0
        %v990 = vadd.f32 0.0, %v989
        %991 = vmatmul.bf16.gmra.mxu0 %v915
        %v992 = vpop.f32.mrf.mxu0
        %v993 = vadd.f32 0.0, %v992
        %v994 = vpop.f32.mrf.mxu0
        %v995 = vadd.f32 0.0, %v994
        %996 = vdwg.mxu0
        %v997 = vadd.f32 %v809, %v978
        %v998 = vadd.f32 %v811, %v980
        %v999 = vadd.f32 %v814, %v983
        %v1000 = vadd.f32 %v816, %v985
        %v1001 = vadd.f32 %v819, %v988
        %v1002 = vadd.f32 %v821, %v990
        %v1003 = vadd.f32 %v824, %v993
        %v1004 = vadd.f32 %v826, %v995
        %s1005 = scalar_lea.vmem %s422, 8
        %v1006 = vld [vmem:[%s1005] sm:$0xf]
        %v1007 = vld [vmem:[%s1005 + $0x8] sm:$0xf]
        %v1008 = vld [vmem:[%s1005 + $0x10] sm:$0xf]
        %v1009 = vld [vmem:[%s1005 + $0x18] sm:$0xf]
        %v1010 = vld [vmem:[%s1005 + $0x20] sm:$0xf]
        %v1011 = vld [vmem:[%s1005 + $0x28] sm:$0xf]
        %v1012 = vld [vmem:[%s1005 + $0x30] sm:$0xf]
        %v1013 = vld [vmem:[%s1005 + $0x38] sm:$0xf]
        %s1014 = scalar_lea.vmem [#allocation2], 192
        %v1015 = vld [vmem:[%s1014] sm:$0xf]
        %v1016 = vld [vmem:[%s1014 + $0x4] sm:$0xf]
        %v1017 = vld [vmem:[%s1014 + $0x8] sm:$0xf]
        %v1018 = vld [vmem:[%s1014 + $0xc] sm:$0xf]
        %v1019 = vld [vmem:[%s1014 + $0x10] sm:$0xf]
        %v1020 = vld [vmem:[%s1014 + $0x14] sm:$0xf]
        %v1021 = vld [vmem:[%s1014 + $0x18] sm:$0xf]
        %v1022 = vld [vmem:[%s1014 + $0x1c] sm:$0xf]
        %v1023 = vld [vmem:[%s1014 + $0x20] sm:$0xf]
        %v1024 = vld [vmem:[%s1014 + $0x24] sm:$0xf]
        %v1025 = vld [vmem:[%s1014 + $0x28] sm:$0xf]
        %v1026 = vld [vmem:[%s1014 + $0x2c] sm:$0xf]
        %v1027 = vld [vmem:[%s1014 + $0x30] sm:$0xf]
        %v1028 = vld [vmem:[%s1014 + $0x34] sm:$0xf]
        %v1029 = vld [vmem:[%s1014 + $0x38] sm:$0xf]
        %v1030 = vld [vmem:[%s1014 + $0x3c] sm:$0xf]
        %v1039 = vunpack.c.l.b16 %v1006
        %v1040 = vunpack.c.l.b16 %v1007
        %v1041 = vunpack.c.l.b16 %v1008
        %v1042 = vunpack.c.l.b16 %v1009
        %v1043 = vunpack.c.l.b16 %v1010
        %v1044 = vunpack.c.l.b16 %v1011
        %v1045 = vunpack.c.l.b16 %v1012
        %v1046 = vunpack.c.l.b16 %v1013
        %v1047 = vpack.c.b16 %v1040, %v1039
        %v1048 = vpack.c.b16 %v1042, %v1041
        %v1049 = vpack.c.b16 %v1044, %v1043
        %v1050 = vpack.c.b16 %v1046, %v1045
        %v1071 = vunpack.c.l.b16 %v1015
        %v1072 = vunpack.c.l.b16 %v1016
        %v1073 = vunpack.c.l.b16 %v1017
        %v1074 = vunpack.c.l.b16 %v1018
        %v1075 = vunpack.c.l.b16 %v1019
        %v1076 = vunpack.c.l.b16 %v1020
        %v1077 = vunpack.c.l.b16 %v1021
        %v1078 = vunpack.c.l.b16 %v1022
        %v1079 = vunpack.c.l.b16 %v1023
        %v1080 = vunpack.c.l.b16 %v1024
        %v1081 = vunpack.c.l.b16 %v1025
        %v1082 = vunpack.c.l.b16 %v1026
        %v1083 = vunpack.c.l.b16 %v1027
        %v1084 = vunpack.c.l.b16 %v1028
        %v1085 = vunpack.c.l.b16 %v1029
        %v1086 = vunpack.c.l.b16 %v1030
        %v1087 = vpack.c.b16 %v1072, %v1071
        %v1088 = vpack.c.b16 %v1074, %v1073
        %v1089 = vpack.c.b16 %v1076, %v1075
        %v1090 = vpack.c.b16 %v1078, %v1077
        %v1091 = vpack.c.b16 %v1080, %v1079
        %v1092 = vpack.c.b16 %v1082, %v1081
        %v1093 = vpack.c.b16 %v1084, %v1083
        %v1094 = vpack.c.b16 %v1086, %v1085
        %1103 = vmatpush.bf16.msra.mxu0 %v1094
        %1104 = vmatpush.bf16.msra.mxu0 %v1093
        %1105 = vmatpush.bf16.msra.mxu0 %v1092
        %1106 = vmatpush.bf16.msra.mxu0 %v1091
        %1107 = vmatpush.bf16.msra.mxu0 %v1090
        %1108 = vmatpush.bf16.msra.mxu0 %v1089
        %1109 = vmatpush.bf16.msra.mxu0 %v1088
        %1110 = vmatpush.bf16.msra.mxu0 %v1087
        %1111 = vmatmul.bf16.gmra.mxu0 %v1047
        %v1112 = vpop.f32.mrf.mxu0
        %v1113 = vadd.f32 0.0, %v1112
        %v1114 = vpop.f32.mrf.mxu0
        %v1115 = vadd.f32 0.0, %v1114
        %1116 = vmatmul.bf16.gmra.mxu0 %v1048
        %v1117 = vpop.f32.mrf.mxu0
        %v1118 = vadd.f32 0.0, %v1117
        %v1119 = vpop.f32.mrf.mxu0
        %v1120 = vadd.f32 0.0, %v1119
        %1121 = vmatmul.bf16.gmra.mxu0 %v1049
        %v1122 = vpop.f32.mrf.mxu0
        %v1123 = vadd.f32 0.0, %v1122
        %v1124 = vpop.f32.mrf.mxu0
        %v1125 = vadd.f32 0.0, %v1124
        %1126 = vmatmul.bf16.gmra.mxu0 %v1050
        %v1127 = vpop.f32.mrf.mxu0
        %v1128 = vadd.f32 0.0, %v1127
        %v1129 = vpop.f32.mrf.mxu0
        %v1130 = vadd.f32 0.0, %v1129
        %1131 = vdwg.mxu0
        %v1132 = vadd.f32 %v997, %v1113
        %v1133 = vadd.f32 %v998, %v1115
        %v1134 = vadd.f32 %v999, %v1118
        %v1135 = vadd.f32 %v1000, %v1120
        %v1136 = vadd.f32 %v1001, %v1123
        %v1137 = vadd.f32 %v1002, %v1125
        %v1138 = vadd.f32 %v1003, %v1128
        %v1139 = vadd.f32 %v1004, %v1130
        %v1140 = vld [vmem:[%s1005] sm:$0xf]
        %v1141 = vld [vmem:[%s1005 + $0x4] sm:$0x1]
        %v1142 = vld [vmem:[%s1005 + $0x8] sm:$0xf]
        %v1143 = vld [vmem:[%s1005 + $0xc] sm:$0x1]
        %v1144 = vld [vmem:[%s1005 + $0x10] sm:$0xf]
        %v1145 = vld [vmem:[%s1005 + $0x14] sm:$0x1]
        %v1146 = vld [vmem:[%s1005 + $0x18] sm:$0xf]
        %v1147 = vld [vmem:[%s1005 + $0x1c] sm:$0x1]
        %v1148 = vld [vmem:[%s1005 + $0x20] sm:$0xf]
        %v1149 = vld [vmem:[%s1005 + $0x24] sm:$0x1]
        %v1150 = vld [vmem:[%s1005 + $0x28] sm:$0xf]
        %v1151 = vld [vmem:[%s1005 + $0x2c] sm:$0x1]
        %v1152 = vld [vmem:[%s1005 + $0x30] sm:$0xf]
        %v1153 = vld [vmem:[%s1005 + $0x34] sm:$0x1]
        %v1154 = vld [vmem:[%s1005 + $0x38] sm:$0xf]
        %v1155 = vld [vmem:[%s1005 + $0x3c] sm:$0x1]
        %v1157 = vshrl.u32 %v1140, 16
        %v1159 = vrot.slane %v1157, 4
        %v1160 = vshll.u32 %v1140, 16
        %v1162 = vrot.slane %v1160, 5
        %v1163 = vor.u32 %v1159, %v1162
        %v1164 = vrot.slane %v1163, 4
        %v1166 = vshll.u32 %v1141, 16
        %v1168 = vrot.slane %v1166, 5
        %v1169 = vsel %vm504, %v1164, %v1168
        %v1171 = vshrl.u32 %v1142, 16
        %v1173 = vrot.slane %v1171, 4
        %v1174 = vshll.u32 %v1142, 16
        %v1176 = vrot.slane %v1174, 5
        %v1177 = vor.u32 %v1173, %v1176
        %v1178 = vrot.slane %v1177, 4
        %v1180 = vshll.u32 %v1143, 16
        %v1182 = vrot.slane %v1180, 5
        %v1183 = vsel %vm504, %v1178, %v1182
        %v1185 = vshrl.u32 %v1144, 16
        %v1187 = vrot.slane %v1185, 4
        %v1188 = vshll.u32 %v1144, 16
        %v1190 = vrot.slane %v1188, 5
        %v1191 = vor.u32 %v1187, %v1190
        %v1192 = vrot.slane %v1191, 4
        %v1194 = vshll.u32 %v1145, 16
        %v1196 = vrot.slane %v1194, 5
        %v1197 = vsel %vm504, %v1192, %v1196
        %v1199 = vshrl.u32 %v1146, 16
        %v1201 = vrot.slane %v1199, 4
        %v1202 = vshll.u32 %v1146, 16
        %v1204 = vrot.slane %v1202, 5
        %v1205 = vor.u32 %v1201, %v1204
        %v1206 = vrot.slane %v1205, 4
        %v1208 = vshll.u32 %v1147, 16
        %v1210 = vrot.slane %v1208, 5
        %v1211 = vsel %vm504, %v1206, %v1210
        %v1213 = vshrl.u32 %v1148, 16
        %v1215 = vrot.slane %v1213, 4
        %v1216 = vshll.u32 %v1148, 16
        %v1218 = vrot.slane %v1216, 5
        %v1219 = vor.u32 %v1215, %v1218
        %v1220 = vrot.slane %v1219, 4
        %v1222 = vshll.u32 %v1149, 16
        %v1224 = vrot.slane %v1222, 5
        %v1225 = vsel %vm504, %v1220, %v1224
        %v1227 = vshrl.u32 %v1150, 16
        %v1229 = vrot.slane %v1227, 4
        %v1230 = vshll.u32 %v1150, 16
        %v1232 = vrot.slane %v1230, 5
        %v1233 = vor.u32 %v1229, %v1232
        %v1234 = vrot.slane %v1233, 4
        %v1236 = vshll.u32 %v1151, 16
        %v1238 = vrot.slane %v1236, 5
        %v1239 = vsel %vm504, %v1234, %v1238
        %v1241 = vshrl.u32 %v1152, 16
        %v1243 = vrot.slane %v1241, 4
        %v1244 = vshll.u32 %v1152, 16
        %v1246 = vrot.slane %v1244, 5
        %v1247 = vor.u32 %v1243, %v1246
        %v1248 = vrot.slane %v1247, 4
        %v1250 = vshll.u32 %v1153, 16
        %v1252 = vrot.slane %v1250, 5
        %v1253 = vsel %vm504, %v1248, %v1252
        %v1255 = vshrl.u32 %v1154, 16
        %v1257 = vrot.slane %v1255, 4
        %v1258 = vshll.u32 %v1154, 16
        %v1260 = vrot.slane %v1258, 5
        %v1261 = vor.u32 %v1257, %v1260
        %v1262 = vrot.slane %v1261, 4
        %v1264 = vshll.u32 %v1155, 16
        %v1266 = vrot.slane %v1264, 5
        %v1267 = vsel %vm504, %v1262, %v1266
        %s1268 = scalar_lea.vmem [#allocation2], 256
        %v1269 = vld [vmem:[%s1268] sm:$0xf]
        %v1270 = vld [vmem:[%s1268 + $0x4] sm:$0xf]
        %v1271 = vld [vmem:[%s1268 + $0x8] sm:$0xf]
        %v1272 = vld [vmem:[%s1268 + $0xc] sm:$0xf]
        %v1273 = vld [vmem:[%s1268 + $0x10] sm:$0xf]
        %v1274 = vld [vmem:[%s1268 + $0x14] sm:$0xf]
        %v1275 = vld [vmem:[%s1268 + $0x18] sm:$0xf]
        %v1276 = vld [vmem:[%s1268 + $0x1c] sm:$0xf]
        %v1277 = vld [vmem:[%s1268 + $0x20] sm:$0xf]
        %v1278 = vld [vmem:[%s1268 + $0x24] sm:$0xf]
        %v1279 = vld [vmem:[%s1268 + $0x28] sm:$0xf]
        %v1280 = vld [vmem:[%s1268 + $0x2c] sm:$0xf]
        %v1281 = vld [vmem:[%s1268 + $0x30] sm:$0xf]
        %v1282 = vld [vmem:[%s1268 + $0x34] sm:$0xf]
        %v1283 = vld [vmem:[%s1268 + $0x38] sm:$0xf]
        %v1284 = vld [vmem:[%s1268 + $0x3c] sm:$0xf]
        %v1285 = vunpack.c.l.b16 %v1169
        %v1286 = vunpack.c.l.b16 %v1183
        %v1287 = vunpack.c.l.b16 %v1197
        %v1288 = vunpack.c.l.b16 %v1211
        %v1289 = vunpack.c.l.b16 %v1225
        %v1290 = vunpack.c.l.b16 %v1239
        %v1291 = vunpack.c.l.b16 %v1253
        %v1292 = vunpack.c.l.b16 %v1267
        %v1293 = vpack.c.b16 %v1286, %v1285
        %v1294 = vpack.c.b16 %v1288, %v1287
        %v1295 = vpack.c.b16 %v1290, %v1289
        %v1296 = vpack.c.b16 %v1292, %v1291
        %v1317 = vunpack.c.l.b16 %v1269
        %v1318 = vunpack.c.l.b16 %v1270
        %v1319 = vunpack.c.l.b16 %v1271
        %v1320 = vunpack.c.l.b16 %v1272
        %v1321 = vunpack.c.l.b16 %v1273
        %v1322 = vunpack.c.l.b16 %v1274
        %v1323 = vunpack.c.l.b16 %v1275
        %v1324 = vunpack.c.l.b16 %v1276
        %v1325 = vunpack.c.l.b16 %v1277
        %v1326 = vunpack.c.l.b16 %v1278
        %v1327 = vunpack.c.l.b16 %v1279
        %v1328 = vunpack.c.l.b16 %v1280
        %v1329 = vunpack.c.l.b16 %v1281
        %v1330 = vunpack.c.l.b16 %v1282
        %v1331 = vunpack.c.l.b16 %v1283
        %v1332 = vunpack.c.l.b16 %v1284
        %v1333 = vpack.c.b16 %v1318, %v1317
        %v1334 = vpack.c.b16 %v1320, %v1319
        %v1335 = vpack.c.b16 %v1322, %v1321
        %v1336 = vpack.c.b16 %v1324, %v1323
        %v1337 = vpack.c.b16 %v1326, %v1325
        %v1338 = vpack.c.b16 %v1328, %v1327
        %v1339 = vpack.c.b16 %v1330, %v1329
        %v1340 = vpack.c.b16 %v1332, %v1331
        %1349 = vmatpush.bf16.msra.mxu0 %v1340
        %1350 = vmatpush.bf16.msra.mxu0 %v1339
        %1351 = vmatpush.bf16.msra.mxu0 %v1338
        %1352 = vmatpush.bf16.msra.mxu0 %v1337
        %1353 = vmatpush.bf16.msra.mxu0 %v1336
        %1354 = vmatpush.bf16.msra.mxu0 %v1335
        %1355 = vmatpush.bf16.msra.mxu0 %v1334
        %1356 = vmatpush.bf16.msra.mxu0 %v1333
        %1357 = vmatmul.bf16.gmra.mxu0 %v1293
        %v1358 = vpop.f32.mrf.mxu0
        %v1359 = vadd.f32 0.0, %v1358
        %v1360 = vpop.f32.mrf.mxu0
        %v1361 = vadd.f32 0.0, %v1360
        %1362 = vmatmul.bf16.gmra.mxu0 %v1294
        %v1363 = vpop.f32.mrf.mxu0
        %v1364 = vadd.f32 0.0, %v1363
        %v1365 = vpop.f32.mrf.mxu0
        %v1366 = vadd.f32 0.0, %v1365
        %1367 = vmatmul.bf16.gmra.mxu0 %v1295
        %v1368 = vpop.f32.mrf.mxu0
        %v1369 = vadd.f32 0.0, %v1368
        %v1370 = vpop.f32.mrf.mxu0
        %v1371 = vadd.f32 0.0, %v1370
        %1372 = vmatmul.bf16.gmra.mxu0 %v1296
        %v1373 = vpop.f32.mrf.mxu0
        %v1374 = vadd.f32 0.0, %v1373
        %v1375 = vpop.f32.mrf.mxu0
        %v1376 = vadd.f32 0.0, %v1375
        %1377 = vdwg.mxu0
        %v1378 = vadd.f32 %v1132, %v1359
        %v1379 = vadd.f32 %v1133, %v1361
        %v1380 = vadd.f32 %v1134, %v1364
        %v1381 = vadd.f32 %v1135, %v1366
        %v1382 = vadd.f32 %v1136, %v1369
        %v1383 = vadd.f32 %v1137, %v1371
        %v1384 = vadd.f32 %v1138, %v1374
        %v1385 = vadd.f32 %v1139, %v1376
        %v1386 = vld [vmem:[%s1005] sm:$0xe]
        %v1387 = vld [vmem:[%s1005 + $0x8] sm:$0xe]
        %v1388 = vld [vmem:[%s1005 + $0x10] sm:$0xe]
        %v1389 = vld [vmem:[%s1005 + $0x18] sm:$0xe]
        %v1390 = vld [vmem:[%s1005 + $0x20] sm:$0xe]
        %v1391 = vld [vmem:[%s1005 + $0x28] sm:$0xe]
        %v1392 = vld [vmem:[%s1005 + $0x30] sm:$0xe]
        %v1393 = vld [vmem:[%s1005 + $0x38] sm:$0xe]
        %v1410 = vrot.slane %v1386, 5
        %v1411 = vrot.slane %v1410, 4
        %v1412 = vrot.slane %v1141, 5
        %v1413 = vsel %vm854, %v1411, %v1412
        %v1414 = vrot.slane %v1387, 5
        %v1415 = vrot.slane %v1414, 4
        %v1416 = vrot.slane %v1143, 5
        %v1417 = vsel %vm854, %v1415, %v1416
        %v1418 = vrot.slane %v1388, 5
        %v1419 = vrot.slane %v1418, 4
        %v1420 = vrot.slane %v1145, 5
        %v1421 = vsel %vm854, %v1419, %v1420
        %v1422 = vrot.slane %v1389, 5
        %v1423 = vrot.slane %v1422, 4
        %v1424 = vrot.slane %v1147, 5
        %v1425 = vsel %vm854, %v1423, %v1424
        %v1426 = vrot.slane %v1390, 5
        %v1427 = vrot.slane %v1426, 4
        %v1428 = vrot.slane %v1149, 5
        %v1429 = vsel %vm854, %v1427, %v1428
        %v1430 = vrot.slane %v1391, 5
        %v1431 = vrot.slane %v1430, 4
        %v1432 = vrot.slane %v1151, 5
        %v1433 = vsel %vm854, %v1431, %v1432
        %v1434 = vrot.slane %v1392, 5
        %v1435 = vrot.slane %v1434, 4
        %v1436 = vrot.slane %v1153, 5
        %v1437 = vsel %vm854, %v1435, %v1436
        %v1438 = vrot.slane %v1393, 5
        %v1439 = vrot.slane %v1438, 4
        %v1440 = vrot.slane %v1155, 5
        %v1441 = vsel %vm854, %v1439, %v1440
        %s1442 = scalar_lea.vmem [#allocation2], 320
        %v1443 = vld [vmem:[%s1442] sm:$0xf]
        %v1444 = vld [vmem:[%s1442 + $0x4] sm:$0xf]
        %v1445 = vld [vmem:[%s1442 + $0x8] sm:$0xf]
        %v1446 = vld [vmem:[%s1442 + $0xc] sm:$0xf]
        %v1447 = vld [vmem:[%s1442 + $0x10] sm:$0xf]
        %v1448 = vld [vmem:[%s1442 + $0x14] sm:$0xf]
        %v1449 = vld [vmem:[%s1442 + $0x18] sm:$0xf]
        %v1450 = vld [vmem:[%s1442 + $0x1c] sm:$0xf]
        %v1451 = vld [vmem:[%s1442 + $0x20] sm:$0xf]
        %v1452 = vld [vmem:[%s1442 + $0x24] sm:$0xf]
        %v1453 = vld [vmem:[%s1442 + $0x28] sm:$0xf]
        %v1454 = vld [vmem:[%s1442 + $0x2c] sm:$0xf]
        %v1455 = vld [vmem:[%s1442 + $0x30] sm:$0xf]
        %v1456 = vld [vmem:[%s1442 + $0x34] sm:$0xf]
        %v1457 = vld [vmem:[%s1442 + $0x38] sm:$0xf]
        %v1458 = vld [vmem:[%s1442 + $0x3c] sm:$0xf]
        %v1459 = vunpack.c.l.b16 %v1413
        %v1460 = vunpack.c.l.b16 %v1417
        %v1461 = vunpack.c.l.b16 %v1421
        %v1462 = vunpack.c.l.b16 %v1425
        %v1463 = vunpack.c.l.b16 %v1429
        %v1464 = vunpack.c.l.b16 %v1433
        %v1465 = vunpack.c.l.b16 %v1437
        %v1466 = vunpack.c.l.b16 %v1441
        %v1467 = vpack.c.b16 %v1460, %v1459
        %v1468 = vpack.c.b16 %v1462, %v1461
        %v1469 = vpack.c.b16 %v1464, %v1463
        %v1470 = vpack.c.b16 %v1466, %v1465
        %v1491 = vunpack.c.l.b16 %v1443
        %v1492 = vunpack.c.l.b16 %v1444
        %v1493 = vunpack.c.l.b16 %v1445
        %v1494 = vunpack.c.l.b16 %v1446
        %v1495 = vunpack.c.l.b16 %v1447
        %v1496 = vunpack.c.l.b16 %v1448
        %v1497 = vunpack.c.l.b16 %v1449
        %v1498 = vunpack.c.l.b16 %v1450
        %v1499 = vunpack.c.l.b16 %v1451
        %v1500 = vunpack.c.l.b16 %v1452
        %v1501 = vunpack.c.l.b16 %v1453
        %v1502 = vunpack.c.l.b16 %v1454
        %v1503 = vunpack.c.l.b16 %v1455
        %v1504 = vunpack.c.l.b16 %v1456
        %v1505 = vunpack.c.l.b16 %v1457
        %v1506 = vunpack.c.l.b16 %v1458
        %v1507 = vpack.c.b16 %v1492, %v1491
        %v1508 = vpack.c.b16 %v1494, %v1493
        %v1509 = vpack.c.b16 %v1496, %v1495
        %v1510 = vpack.c.b16 %v1498, %v1497
        %v1511 = vpack.c.b16 %v1500, %v1499
        %v1512 = vpack.c.b16 %v1502, %v1501
        %v1513 = vpack.c.b16 %v1504, %v1503
        %v1514 = vpack.c.b16 %v1506, %v1505
        %1523 = vmatpush.bf16.msra.mxu0 %v1514
        %1524 = vmatpush.bf16.msra.mxu0 %v1513
        %1525 = vmatpush.bf16.msra.mxu0 %v1512
        %1526 = vmatpush.bf16.msra.mxu0 %v1511
        %1527 = vmatpush.bf16.msra.mxu0 %v1510
        %1528 = vmatpush.bf16.msra.mxu0 %v1509
        %1529 = vmatpush.bf16.msra.mxu0 %v1508
        %1530 = vmatpush.bf16.msra.mxu0 %v1507
        %1531 = vmatmul.bf16.gmra.mxu0 %v1467
        %v1532 = vpop.f32.mrf.mxu0
        %v1533 = vadd.f32 0.0, %v1532
        %v1534 = vpop.f32.mrf.mxu0
        %v1535 = vadd.f32 0.0, %v1534
        %1536 = vmatmul.bf16.gmra.mxu0 %v1468
        %v1537 = vpop.f32.mrf.mxu0
        %v1538 = vadd.f32 0.0, %v1537
        %v1539 = vpop.f32.mrf.mxu0
        %v1540 = vadd.f32 0.0, %v1539
        %1541 = vmatmul.bf16.gmra.mxu0 %v1469
        %v1542 = vpop.f32.mrf.mxu0
        %v1543 = vadd.f32 0.0, %v1542
        %v1544 = vpop.f32.mrf.mxu0
        %v1545 = vadd.f32 0.0, %v1544
        %1546 = vmatmul.bf16.gmra.mxu0 %v1470
        %v1547 = vpop.f32.mrf.mxu0
        %v1548 = vadd.f32 0.0, %v1547
        %v1549 = vpop.f32.mrf.mxu0
        %v1550 = vadd.f32 0.0, %v1549
        %1551 = vdwg.mxu0
        %v1552 = vadd.f32 %v1378, %v1533
        %v1553 = vadd.f32 %v1379, %v1535
        %v1554 = vadd.f32 %v1380, %v1538
        %v1555 = vadd.f32 %v1381, %v1540
        %v1556 = vadd.f32 %v1382, %v1543
        %v1557 = vadd.f32 %v1383, %v1545
        %v1558 = vadd.f32 %v1384, %v1548
        %v1559 = vadd.f32 %v1385, %v1550
        %s1560 = scalar_lea.vmem %s422, 16
        %v1561 = vld [vmem:[%s1560] sm:$0xf]
        %v1562 = vld [vmem:[%s1560 + $0x8] sm:$0xf]
        %v1563 = vld [vmem:[%s1560 + $0x10] sm:$0xf]
        %v1564 = vld [vmem:[%s1560 + $0x18] sm:$0xf]
        %v1565 = vld [vmem:[%s1560 + $0x20] sm:$0xf]
        %v1566 = vld [vmem:[%s1560 + $0x28] sm:$0xf]
        %v1567 = vld [vmem:[%s1560 + $0x30] sm:$0xf]
        %v1568 = vld [vmem:[%s1560 + $0x38] sm:$0xf]
        %s1569 = scalar_lea.vmem [#allocation2], 384
        %v1570 = vld [vmem:[%s1569] sm:$0xf]
        %v1571 = vld [vmem:[%s1569 + $0x4] sm:$0xf]
        %v1572 = vld [vmem:[%s1569 + $0x8] sm:$0xf]
        %v1573 = vld [vmem:[%s1569 + $0xc] sm:$0xf]
        %v1574 = vld [vmem:[%s1569 + $0x10] sm:$0xf]
        %v1575 = vld [vmem:[%s1569 + $0x14] sm:$0xf]
        %v1576 = vld [vmem:[%s1569 + $0x18] sm:$0xf]
        %v1577 = vld [vmem:[%s1569 + $0x1c] sm:$0xf]
        %v1578 = vld [vmem:[%s1569 + $0x20] sm:$0xf]
        %v1579 = vld [vmem:[%s1569 + $0x24] sm:$0xf]
        %v1580 = vld [vmem:[%s1569 + $0x28] sm:$0xf]
        %v1581 = vld [vmem:[%s1569 + $0x2c] sm:$0xf]
        %v1582 = vld [vmem:[%s1569 + $0x30] sm:$0xf]
        %v1583 = vld [vmem:[%s1569 + $0x34] sm:$0xf]
        %v1584 = vld [vmem:[%s1569 + $0x38] sm:$0xf]
        %v1585 = vld [vmem:[%s1569 + $0x3c] sm:$0xf]
        %v1594 = vunpack.c.l.b16 %v1561
        %v1595 = vunpack.c.l.b16 %v1562
        %v1596 = vunpack.c.l.b16 %v1563
        %v1597 = vunpack.c.l.b16 %v1564
        %v1598 = vunpack.c.l.b16 %v1565
        %v1599 = vunpack.c.l.b16 %v1566
        %v1600 = vunpack.c.l.b16 %v1567
        %v1601 = vunpack.c.l.b16 %v1568
        %v1602 = vpack.c.b16 %v1595, %v1594
        %v1603 = vpack.c.b16 %v1597, %v1596
        %v1604 = vpack.c.b16 %v1599, %v1598
        %v1605 = vpack.c.b16 %v1601, %v1600
        %v1626 = vunpack.c.l.b16 %v1570
        %v1627 = vunpack.c.l.b16 %v1571
        %v1628 = vunpack.c.l.b16 %v1572
        %v1629 = vunpack.c.l.b16 %v1573
        %v1630 = vunpack.c.l.b16 %v1574
        %v1631 = vunpack.c.l.b16 %v1575
        %v1632 = vunpack.c.l.b16 %v1576
        %v1633 = vunpack.c.l.b16 %v1577
        %v1634 = vunpack.c.l.b16 %v1578
        %v1635 = vunpack.c.l.b16 %v1579
        %v1636 = vunpack.c.l.b16 %v1580
        %v1637 = vunpack.c.l.b16 %v1581
        %v1638 = vunpack.c.l.b16 %v1582
        %v1639 = vunpack.c.l.b16 %v1583
        %v1640 = vunpack.c.l.b16 %v1584
        %v1641 = vunpack.c.l.b16 %v1585
        %v1642 = vpack.c.b16 %v1627, %v1626
        %v1643 = vpack.c.b16 %v1629, %v1628
        %v1644 = vpack.c.b16 %v1631, %v1630
        %v1645 = vpack.c.b16 %v1633, %v1632
        %v1646 = vpack.c.b16 %v1635, %v1634
        %v1647 = vpack.c.b16 %v1637, %v1636
        %v1648 = vpack.c.b16 %v1639, %v1638
        %v1649 = vpack.c.b16 %v1641, %v1640
        %1658 = vmatpush.bf16.msra.mxu0 %v1649
        %1659 = vmatpush.bf16.msra.mxu0 %v1648
        %1660 = vmatpush.bf16.msra.mxu0 %v1647
        %1661 = vmatpush.bf16.msra.mxu0 %v1646
        %1662 = vmatpush.bf16.msra.mxu0 %v1645
        %1663 = vmatpush.bf16.msra.mxu0 %v1644
        %1664 = vmatpush.bf16.msra.mxu0 %v1643
        %1665 = vmatpush.bf16.msra.mxu0 %v1642
        %1666 = vmatmul.bf16.gmra.mxu0 %v1602
        %v1667 = vpop.f32.mrf.mxu0
        %v1668 = vadd.f32 0.0, %v1667
        %v1669 = vpop.f32.mrf.mxu0
        %v1670 = vadd.f32 0.0, %v1669
        %1671 = vmatmul.bf16.gmra.mxu0 %v1603
        %v1672 = vpop.f32.mrf.mxu0
        %v1673 = vadd.f32 0.0, %v1672
        %v1674 = vpop.f32.mrf.mxu0
        %v1675 = vadd.f32 0.0, %v1674
        %1676 = vmatmul.bf16.gmra.mxu0 %v1604
        %v1677 = vpop.f32.mrf.mxu0
        %v1678 = vadd.f32 0.0, %v1677
        %v1679 = vpop.f32.mrf.mxu0
        %v1680 = vadd.f32 0.0, %v1679
        %1681 = vmatmul.bf16.gmra.mxu0 %v1605
        %v1682 = vpop.f32.mrf.mxu0
        %v1683 = vadd.f32 0.0, %v1682
        %v1684 = vpop.f32.mrf.mxu0
        %v1685 = vadd.f32 0.0, %v1684
        %1686 = vdwg.mxu0
        %v1687 = vadd.f32 %v1552, %v1668
        %v1688 = vadd.f32 %v1553, %v1670
        %v1689 = vadd.f32 %v1554, %v1673
        %v1690 = vadd.f32 %v1555, %v1675
        %v1691 = vadd.f32 %v1556, %v1678
        %v1692 = vadd.f32 %v1557, %v1680
        %v1693 = vadd.f32 %v1558, %v1683
        %v1694 = vadd.f32 %v1559, %v1685
        %v1695 = vld [vmem:[%s1560] sm:$0xf]
        %v1696 = vld [vmem:[%s1560 + $0x4] sm:$0x1]
        %v1697 = vld [vmem:[%s1560 + $0x8] sm:$0xf]
        %v1698 = vld [vmem:[%s1560 + $0xc] sm:$0x1]
        %v1699 = vld [vmem:[%s1560 + $0x10] sm:$0xf]
        %v1700 = vld [vmem:[%s1560 + $0x14] sm:$0x1]
        %v1701 = vld [vmem:[%s1560 + $0x18] sm:$0xf]
        %v1702 = vld [vmem:[%s1560 + $0x1c] sm:$0x1]
        %v1703 = vld [vmem:[%s1560 + $0x20] sm:$0xf]
        %v1704 = vld [vmem:[%s1560 + $0x24] sm:$0x1]
        %v1705 = vld [vmem:[%s1560 + $0x28] sm:$0xf]
        %v1706 = vld [vmem:[%s1560 + $0x2c] sm:$0x1]
        %v1707 = vld [vmem:[%s1560 + $0x30] sm:$0xf]
        %v1708 = vld [vmem:[%s1560 + $0x34] sm:$0x1]
        %v1709 = vld [vmem:[%s1560 + $0x38] sm:$0xf]
        %v1710 = vld [vmem:[%s1560 + $0x3c] sm:$0x1]
        %v1712 = vshrl.u32 %v1695, 16
        %v1714 = vrot.slane %v1712, 4
        %v1715 = vshll.u32 %v1695, 16
        %v1717 = vrot.slane %v1715, 5
        %v1718 = vor.u32 %v1714, %v1717
        %v1719 = vrot.slane %v1718, 4
        %v1721 = vshll.u32 %v1696, 16
        %v1723 = vrot.slane %v1721, 5
        %v1724 = vsel %vm504, %v1719, %v1723
        %v1726 = vshrl.u32 %v1697, 16
        %v1728 = vrot.slane %v1726, 4
        %v1729 = vshll.u32 %v1697, 16
        %v1731 = vrot.slane %v1729, 5
        %v1732 = vor.u32 %v1728, %v1731
        %v1733 = vrot.slane %v1732, 4
        %v1735 = vshll.u32 %v1698, 16
        %v1737 = vrot.slane %v1735, 5
        %v1738 = vsel %vm504, %v1733, %v1737
        %v1740 = vshrl.u32 %v1699, 16
        %v1742 = vrot.slane %v1740, 4
        %v1743 = vshll.u32 %v1699, 16
        %v1745 = vrot.slane %v1743, 5
        %v1746 = vor.u32 %v1742, %v1745
        %v1747 = vrot.slane %v1746, 4
        %v1749 = vshll.u32 %v1700, 16
        %v1751 = vrot.slane %v1749, 5
        %v1752 = vsel %vm504, %v1747, %v1751
        %v1754 = vshrl.u32 %v1701, 16
        %v1756 = vrot.slane %v1754, 4
        %v1757 = vshll.u32 %v1701, 16
        %v1759 = vrot.slane %v1757, 5
        %v1760 = vor.u32 %v1756, %v1759
        %v1761 = vrot.slane %v1760, 4
        %v1763 = vshll.u32 %v1702, 16
        %v1765 = vrot.slane %v1763, 5
        %v1766 = vsel %vm504, %v1761, %v1765
        %v1768 = vshrl.u32 %v1703, 16
        %v1770 = vrot.slane %v1768, 4
        %v1771 = vshll.u32 %v1703, 16
        %v1773 = vrot.slane %v1771, 5
        %v1774 = vor.u32 %v1770, %v1773
        %v1775 = vrot.slane %v1774, 4
        %v1777 = vshll.u32 %v1704, 16
        %v1779 = vrot.slane %v1777, 5
        %v1780 = vsel %vm504, %v1775, %v1779
        %v1782 = vshrl.u32 %v1705, 16
        %v1784 = vrot.slane %v1782, 4
        %v1785 = vshll.u32 %v1705, 16
        %v1787 = vrot.slane %v1785, 5
        %v1788 = vor.u32 %v1784, %v1787
        %v1789 = vrot.slane %v1788, 4
        %v1791 = vshll.u32 %v1706, 16
        %v1793 = vrot.slane %v1791, 5
        %v1794 = vsel %vm504, %v1789, %v1793
        %v1796 = vshrl.u32 %v1707, 16
        %v1798 = vrot.slane %v1796, 4
        %v1799 = vshll.u32 %v1707, 16
        %v1801 = vrot.slane %v1799, 5
        %v1802 = vor.u32 %v1798, %v1801
        %v1803 = vrot.slane %v1802, 4
        %v1805 = vshll.u32 %v1708, 16
        %v1807 = vrot.slane %v1805, 5
        %v1808 = vsel %vm504, %v1803, %v1807
        %v1810 = vshrl.u32 %v1709, 16
        %v1812 = vrot.slane %v1810, 4
        %v1813 = vshll.u32 %v1709, 16
        %v1815 = vrot.slane %v1813, 5
        %v1816 = vor.u32 %v1812, %v1815
        %v1817 = vrot.slane %v1816, 4
        %v1819 = vshll.u32 %v1710, 16
        %v1821 = vrot.slane %v1819, 5
        %v1822 = vsel %vm504, %v1817, %v1821
        %s1823 = scalar_lea.vmem [#allocation2], 448
        %v1824 = vld [vmem:[%s1823] sm:$0xf]
        %v1825 = vld [vmem:[%s1823 + $0x4] sm:$0xf]
        %v1826 = vld [vmem:[%s1823 + $0x8] sm:$0xf]
        %v1827 = vld [vmem:[%s1823 + $0xc] sm:$0xf]
        %v1828 = vld [vmem:[%s1823 + $0x10] sm:$0xf]
        %v1829 = vld [vmem:[%s1823 + $0x14] sm:$0xf]
        %v1830 = vld [vmem:[%s1823 + $0x18] sm:$0xf]
        %v1831 = vld [vmem:[%s1823 + $0x1c] sm:$0xf]
        %v1832 = vld [vmem:[%s1823 + $0x20] sm:$0xf]
        %v1833 = vld [vmem:[%s1823 + $0x24] sm:$0xf]
        %v1834 = vld [vmem:[%s1823 + $0x28] sm:$0xf]
        %v1835 = vld [vmem:[%s1823 + $0x2c] sm:$0xf]
        %v1836 = vld [vmem:[%s1823 + $0x30] sm:$0xf]
        %v1837 = vld [vmem:[%s1823 + $0x34] sm:$0xf]
        %v1838 = vld [vmem:[%s1823 + $0x38] sm:$0xf]
        %v1839 = vld [vmem:[%s1823 + $0x3c] sm:$0xf]
        %v1840 = vunpack.c.l.b16 %v1724
        %v1841 = vunpack.c.l.b16 %v1738
        %v1842 = vunpack.c.l.b16 %v1752
        %v1843 = vunpack.c.l.b16 %v1766
        %v1844 = vunpack.c.l.b16 %v1780
        %v1845 = vunpack.c.l.b16 %v1794
        %v1846 = vunpack.c.l.b16 %v1808
        %v1847 = vunpack.c.l.b16 %v1822
        %v1848 = vpack.c.b16 %v1841, %v1840
        %v1849 = vpack.c.b16 %v1843, %v1842
        %v1850 = vpack.c.b16 %v1845, %v1844
        %v1851 = vpack.c.b16 %v1847, %v1846
        %v1872 = vunpack.c.l.b16 %v1824
        %v1873 = vunpack.c.l.b16 %v1825
        %v1874 = vunpack.c.l.b16 %v1826
        %v1875 = vunpack.c.l.b16 %v1827
        %v1876 = vunpack.c.l.b16 %v1828
        %v1877 = vunpack.c.l.b16 %v1829
        %v1878 = vunpack.c.l.b16 %v1830
        %v1879 = vunpack.c.l.b16 %v1831
        %v1880 = vunpack.c.l.b16 %v1832
        %v1881 = vunpack.c.l.b16 %v1833
        %v1882 = vunpack.c.l.b16 %v1834
        %v1883 = vunpack.c.l.b16 %v1835
        %v1884 = vunpack.c.l.b16 %v1836
        %v1885 = vunpack.c.l.b16 %v1837
        %v1886 = vunpack.c.l.b16 %v1838
        %v1887 = vunpack.c.l.b16 %v1839
        %v1888 = vpack.c.b16 %v1873, %v1872
        %v1889 = vpack.c.b16 %v1875, %v1874
        %v1890 = vpack.c.b16 %v1877, %v1876
        %v1891 = vpack.c.b16 %v1879, %v1878
        %v1892 = vpack.c.b16 %v1881, %v1880
        %v1893 = vpack.c.b16 %v1883, %v1882
        %v1894 = vpack.c.b16 %v1885, %v1884
        %v1895 = vpack.c.b16 %v1887, %v1886
        %1904 = vmatpush.bf16.msra.mxu0 %v1895
        %1905 = vmatpush.bf16.msra.mxu0 %v1894
        %1906 = vmatpush.bf16.msra.mxu0 %v1893
        %1907 = vmatpush.bf16.msra.mxu0 %v1892
        %1908 = vmatpush.bf16.msra.mxu0 %v1891
        %1909 = vmatpush.bf16.msra.mxu0 %v1890
        %1910 = vmatpush.bf16.msra.mxu0 %v1889
        %1911 = vmatpush.bf16.msra.mxu0 %v1888
        %1912 = vmatmul.bf16.gmra.mxu0 %v1848
        %v1913 = vpop.f32.mrf.mxu0
        %v1914 = vadd.f32 0.0, %v1913
        %v1915 = vpop.f32.mrf.mxu0
        %v1916 = vadd.f32 0.0, %v1915
        %1917 = vmatmul.bf16.gmra.mxu0 %v1849
        %v1918 = vpop.f32.mrf.mxu0
        %v1919 = vadd.f32 0.0, %v1918
        %v1920 = vpop.f32.mrf.mxu0
        %v1921 = vadd.f32 0.0, %v1920
        %1922 = vmatmul.bf16.gmra.mxu0 %v1850
        %v1923 = vpop.f32.mrf.mxu0
        %v1924 = vadd.f32 0.0, %v1923
        %v1925 = vpop.f32.mrf.mxu0
        %v1926 = vadd.f32 0.0, %v1925
        %1927 = vmatmul.bf16.gmra.mxu0 %v1851
        %v1928 = vpop.f32.mrf.mxu0
        %v1929 = vadd.f32 0.0, %v1928
        %v1930 = vpop.f32.mrf.mxu0
        %v1931 = vadd.f32 0.0, %v1930
        %1932 = vdwg.mxu0
        %v1933 = vadd.f32 %v1687, %v1914
        %v1934 = vadd.f32 %v1688, %v1916
        %v1935 = vadd.f32 %v1689, %v1919
        %v1936 = vadd.f32 %v1690, %v1921
        %v1937 = vadd.f32 %v1691, %v1924
        %v1938 = vadd.f32 %v1692, %v1926
        %v1939 = vadd.f32 %v1693, %v1929
        %v1940 = vadd.f32 %v1694, %v1931
        %v1941 = vld [vmem:[%s1560] sm:$0xe]
        %v1942 = vld [vmem:[%s1560 + $0x8] sm:$0xe]
        %v1943 = vld [vmem:[%s1560 + $0x10] sm:$0xe]
        %v1944 = vld [vmem:[%s1560 + $0x18] sm:$0xe]
        %v1945 = vld [vmem:[%s1560 + $0x20] sm:$0xe]
        %v1946 = vld [vmem:[%s1560 + $0x28] sm:$0xe]
        %v1947 = vld [vmem:[%s1560 + $0x30] sm:$0xe]
        %v1948 = vld [vmem:[%s1560 + $0x38] sm:$0xe]
        %v1965 = vrot.slane %v1941, 5
        %v1966 = vrot.slane %v1965, 4
        %v1967 = vrot.slane %v1696, 5
        %v1968 = vsel %vm854, %v1966, %v1967
        %v1969 = vrot.slane %v1942, 5
        %v1970 = vrot.slane %v1969, 4
        %v1971 = vrot.slane %v1698, 5
        %v1972 = vsel %vm854, %v1970, %v1971
        %v1973 = vrot.slane %v1943, 5
        %v1974 = vrot.slane %v1973, 4
        %v1975 = vrot.slane %v1700, 5
        %v1976 = vsel %vm854, %v1974, %v1975
        %v1977 = vrot.slane %v1944, 5
        %v1978 = vrot.slane %v1977, 4
        %v1979 = vrot.slane %v1702, 5
        %v1980 = vsel %vm854, %v1978, %v1979
        %v1981 = vrot.slane %v1945, 5
        %v1982 = vrot.slane %v1981, 4
        %v1983 = vrot.slane %v1704, 5
        %v1984 = vsel %vm854, %v1982, %v1983
        %v1985 = vrot.slane %v1946, 5
        %v1986 = vrot.slane %v1985, 4
        %v1987 = vrot.slane %v1706, 5
        %v1988 = vsel %vm854, %v1986, %v1987
        %v1989 = vrot.slane %v1947, 5
        %v1990 = vrot.slane %v1989, 4
        %v1991 = vrot.slane %v1708, 5
        %v1992 = vsel %vm854, %v1990, %v1991
        %v1993 = vrot.slane %v1948, 5
        %v1994 = vrot.slane %v1993, 4
        %v1995 = vrot.slane %v1710, 5
        %v1996 = vsel %vm854, %v1994, %v1995
        %s1997 = scalar_lea.vmem [#allocation2], 512
        %v1998 = vld [vmem:[%s1997] sm:$0xf]
        %v1999 = vld [vmem:[%s1997 + $0x4] sm:$0xf]
        %v2000 = vld [vmem:[%s1997 + $0x8] sm:$0xf]
        %v2001 = vld [vmem:[%s1997 + $0xc] sm:$0xf]
        %v2002 = vld [vmem:[%s1997 + $0x10] sm:$0xf]
        %v2003 = vld [vmem:[%s1997 + $0x14] sm:$0xf]
        %v2004 = vld [vmem:[%s1997 + $0x18] sm:$0xf]
        %v2005 = vld [vmem:[%s1997 + $0x1c] sm:$0xf]
        %v2006 = vld [vmem:[%s1997 + $0x20] sm:$0xf]
        %v2007 = vld [vmem:[%s1997 + $0x24] sm:$0xf]
        %v2008 = vld [vmem:[%s1997 + $0x28] sm:$0xf]
        %v2009 = vld [vmem:[%s1997 + $0x2c] sm:$0xf]
        %v2010 = vld [vmem:[%s1997 + $0x30] sm:$0xf]
        %v2011 = vld [vmem:[%s1997 + $0x34] sm:$0xf]
        %v2012 = vld [vmem:[%s1997 + $0x38] sm:$0xf]
        %v2013 = vld [vmem:[%s1997 + $0x3c] sm:$0xf]
        %v2014 = vunpack.c.l.b16 %v1968
        %v2015 = vunpack.c.l.b16 %v1972
        %v2016 = vunpack.c.l.b16 %v1976
        %v2017 = vunpack.c.l.b16 %v1980
        %v2018 = vunpack.c.l.b16 %v1984
        %v2019 = vunpack.c.l.b16 %v1988
        %v2020 = vunpack.c.l.b16 %v1992
        %v2021 = vunpack.c.l.b16 %v1996
        %v2022 = vpack.c.b16 %v2015, %v2014
        %v2023 = vpack.c.b16 %v2017, %v2016
        %v2024 = vpack.c.b16 %v2019, %v2018
        %v2025 = vpack.c.b16 %v2021, %v2020
        %v2046 = vunpack.c.l.b16 %v1998
        %v2047 = vunpack.c.l.b16 %v1999
        %v2048 = vunpack.c.l.b16 %v2000
        %v2049 = vunpack.c.l.b16 %v2001
        %v2050 = vunpack.c.l.b16 %v2002
        %v2051 = vunpack.c.l.b16 %v2003
        %v2052 = vunpack.c.l.b16 %v2004
        %v2053 = vunpack.c.l.b16 %v2005
        %v2054 = vunpack.c.l.b16 %v2006
        %v2055 = vunpack.c.l.b16 %v2007
        %v2056 = vunpack.c.l.b16 %v2008
        %v2057 = vunpack.c.l.b16 %v2009
        %v2058 = vunpack.c.l.b16 %v2010
        %v2059 = vunpack.c.l.b16 %v2011
        %v2060 = vunpack.c.l.b16 %v2012
        %v2061 = vunpack.c.l.b16 %v2013
        %v2062 = vpack.c.b16 %v2047, %v2046
        %v2063 = vpack.c.b16 %v2049, %v2048
        %v2064 = vpack.c.b16 %v2051, %v2050
        %v2065 = vpack.c.b16 %v2053, %v2052
        %v2066 = vpack.c.b16 %v2055, %v2054
        %v2067 = vpack.c.b16 %v2057, %v2056
        %v2068 = vpack.c.b16 %v2059, %v2058
        %v2069 = vpack.c.b16 %v2061, %v2060
        %2078 = vmatpush.bf16.msra.mxu0 %v2069
        %2079 = vmatpush.bf16.msra.mxu0 %v2068
        %2080 = vmatpush.bf16.msra.mxu0 %v2067
        %2081 = vmatpush.bf16.msra.mxu0 %v2066
        %2082 = vmatpush.bf16.msra.mxu0 %v2065
        %2083 = vmatpush.bf16.msra.mxu0 %v2064
        %2084 = vmatpush.bf16.msra.mxu0 %v2063
        %2085 = vmatpush.bf16.msra.mxu0 %v2062
        %2086 = vmatmul.bf16.gmra.mxu0 %v2022
        %v2087 = vpop.f32.mrf.mxu0
        %v2088 = vadd.f32 0.0, %v2087
        %v2089 = vpop.f32.mrf.mxu0
        %v2090 = vadd.f32 0.0, %v2089
        %2091 = vmatmul.bf16.gmra.mxu0 %v2023
        %v2092 = vpop.f32.mrf.mxu0
        %v2093 = vadd.f32 0.0, %v2092
        %v2094 = vpop.f32.mrf.mxu0
        %v2095 = vadd.f32 0.0, %v2094
        %2096 = vmatmul.bf16.gmra.mxu0 %v2024
        %v2097 = vpop.f32.mrf.mxu0
        %v2098 = vadd.f32 0.0, %v2097
        %v2099 = vpop.f32.mrf.mxu0
        %v2100 = vadd.f32 0.0, %v2099
        %2101 = vmatmul.bf16.gmra.mxu0 %v2025
        %v2102 = vpop.f32.mrf.mxu0
        %v2103 = vadd.f32 0.0, %v2102
        %v2104 = vpop.f32.mrf.mxu0
        %v2105 = vadd.f32 0.0, %v2104
        %2106 = vdwg.mxu0
        %v2107 = vadd.f32 %v1933, %v2088
        %v2108 = vadd.f32 %v1934, %v2090
        %v2109 = vadd.f32 %v1935, %v2093
        %v2110 = vadd.f32 %v1936, %v2095
        %v2111 = vadd.f32 %v1937, %v2098
        %v2112 = vadd.f32 %v1938, %v2100
        %v2113 = vadd.f32 %v1939, %v2103
        %v2114 = vadd.f32 %v1940, %v2105
        %v2115 = vld [vmem:[%s432] sm:$0xf]
        %v2116 = vld [vmem:[%s432 + $0x8] sm:$0xf]
        %v2117 = vld [vmem:[%s432 + $0x10] sm:$0xf]
        %v2118 = vld [vmem:[%s432 + $0x18] sm:$0xf]
        %v2119 = vld [vmem:[%s432 + $0x20] sm:$0xf]
        %v2120 = vld [vmem:[%s432 + $0x28] sm:$0xf]
        %v2121 = vld [vmem:[%s432 + $0x30] sm:$0xf]
        %v2122 = vld [vmem:[%s432 + $0x38] sm:$0xf]
        %s2123 = scalar_lea.vmem [#allocation2], 576
        %v2124 = vld [vmem:[%s2123] sm:$0xf]
        %v2125 = vld [vmem:[%s2123 + $0x4] sm:$0xf]
        %v2126 = vld [vmem:[%s2123 + $0x8] sm:$0xf]
        %v2127 = vld [vmem:[%s2123 + $0xc] sm:$0xf]
        %v2128 = vld [vmem:[%s2123 + $0x10] sm:$0xf]
        %v2129 = vld [vmem:[%s2123 + $0x14] sm:$0xf]
        %v2130 = vld [vmem:[%s2123 + $0x18] sm:$0xf]
        %v2131 = vld [vmem:[%s2123 + $0x1c] sm:$0xf]
        %v2132 = vld [vmem:[%s2123 + $0x20] sm:$0xf]
        %v2133 = vld [vmem:[%s2123 + $0x24] sm:$0xf]
        %v2134 = vld [vmem:[%s2123 + $0x28] sm:$0xf]
        %v2135 = vld [vmem:[%s2123 + $0x2c] sm:$0xf]
        %v2136 = vld [vmem:[%s2123 + $0x30] sm:$0xf]
        %v2137 = vld [vmem:[%s2123 + $0x34] sm:$0xf]
        %v2138 = vld [vmem:[%s2123 + $0x38] sm:$0xf]
        %v2139 = vld [vmem:[%s2123 + $0x3c] sm:$0xf]
        %v2148 = vunpack.c.l.b16 %v2115
        %v2149 = vunpack.c.l.b16 %v2116
        %v2150 = vunpack.c.l.b16 %v2117
        %v2151 = vunpack.c.l.b16 %v2118
        %v2152 = vunpack.c.l.b16 %v2119
        %v2153 = vunpack.c.l.b16 %v2120
        %v2154 = vunpack.c.l.b16 %v2121
        %v2155 = vunpack.c.l.b16 %v2122
        %v2156 = vpack.c.b16 %v2149, %v2148
        %v2157 = vpack.c.b16 %v2151, %v2150
        %v2158 = vpack.c.b16 %v2153, %v2152
        %v2159 = vpack.c.b16 %v2155, %v2154
        %v2180 = vunpack.c.l.b16 %v2124
        %v2181 = vunpack.c.l.b16 %v2125
        %v2182 = vunpack.c.l.b16 %v2126
        %v2183 = vunpack.c.l.b16 %v2127
        %v2184 = vunpack.c.l.b16 %v2128
        %v2185 = vunpack.c.l.b16 %v2129
        %v2186 = vunpack.c.l.b16 %v2130
        %v2187 = vunpack.c.l.b16 %v2131
        %v2188 = vunpack.c.l.b16 %v2132
        %v2189 = vunpack.c.l.b16 %v2133
        %v2190 = vunpack.c.l.b16 %v2134
        %v2191 = vunpack.c.l.b16 %v2135
        %v2192 = vunpack.c.l.b16 %v2136
        %v2193 = vunpack.c.l.b16 %v2137
        %v2194 = vunpack.c.l.b16 %v2138
        %v2195 = vunpack.c.l.b16 %v2139
        %v2196 = vpack.c.b16 %v2181, %v2180
        %v2197 = vpack.c.b16 %v2183, %v2182
        %v2198 = vpack.c.b16 %v2185, %v2184
        %v2199 = vpack.c.b16 %v2187, %v2186
        %v2200 = vpack.c.b16 %v2189, %v2188
        %v2201 = vpack.c.b16 %v2191, %v2190
        %v2202 = vpack.c.b16 %v2193, %v2192
        %v2203 = vpack.c.b16 %v2195, %v2194
        %2212 = vmatpush.bf16.msra.mxu0 %v2203
        %2213 = vmatpush.bf16.msra.mxu0 %v2202
        %2214 = vmatpush.bf16.msra.mxu0 %v2201
        %2215 = vmatpush.bf16.msra.mxu0 %v2200
        %2216 = vmatpush.bf16.msra.mxu0 %v2199
        %2217 = vmatpush.bf16.msra.mxu0 %v2198
        %2218 = vmatpush.bf16.msra.mxu0 %v2197
        %2219 = vmatpush.bf16.msra.mxu0 %v2196
        %2220 = vmatmul.bf16.gmra.mxu0 %v2156
        %v2221 = vpop.f32.mrf.mxu0
        %v2222 = vadd.f32 0.0, %v2221
        %v2223 = vpop.f32.mrf.mxu0
        %v2224 = vadd.f32 0.0, %v2223
        %2225 = vmatmul.bf16.gmra.mxu0 %v2157
        %v2226 = vpop.f32.mrf.mxu0
        %v2227 = vadd.f32 0.0, %v2226
        %v2228 = vpop.f32.mrf.mxu0
        %v2229 = vadd.f32 0.0, %v2228
        %2230 = vmatmul.bf16.gmra.mxu0 %v2158
        %v2231 = vpop.f32.mrf.mxu0
        %v2232 = vadd.f32 0.0, %v2231
        %v2233 = vpop.f32.mrf.mxu0
        %v2234 = vadd.f32 0.0, %v2233
        %2235 = vmatmul.bf16.gmra.mxu0 %v2159
        %v2236 = vpop.f32.mrf.mxu0
        %v2237 = vadd.f32 0.0, %v2236
        %v2238 = vpop.f32.mrf.mxu0
        %v2239 = vadd.f32 0.0, %v2238
        %2240 = vdwg.mxu0
        %v2241 = vadd.f32 %v2107, %v2222
        %v2242 = vadd.f32 %v2108, %v2224
        %v2243 = vadd.f32 %v2109, %v2227
        %v2244 = vadd.f32 %v2110, %v2229
        %v2245 = vadd.f32 %v2111, %v2232
        %v2246 = vadd.f32 %v2112, %v2234
        %v2247 = vadd.f32 %v2113, %v2237
        %v2248 = vadd.f32 %v2114, %v2239
        %v2249 = vld [vmem:[%s432] sm:$0xf]
        %v2250 = vld [vmem:[%s432 + $0x4] sm:$0x1]
        %v2251 = vld [vmem:[%s432 + $0x8] sm:$0xf]
        %v2252 = vld [vmem:[%s432 + $0xc] sm:$0x1]
        %v2253 = vld [vmem:[%s432 + $0x10] sm:$0xf]
        %v2254 = vld [vmem:[%s432 + $0x14] sm:$0x1]
        %v2255 = vld [vmem:[%s432 + $0x18] sm:$0xf]
        %v2256 = vld [vmem:[%s432 + $0x1c] sm:$0x1]
        %v2257 = vld [vmem:[%s432 + $0x20] sm:$0xf]
        %v2258 = vld [vmem:[%s432 + $0x24] sm:$0x1]
        %v2259 = vld [vmem:[%s432 + $0x28] sm:$0xf]
        %v2260 = vld [vmem:[%s432 + $0x2c] sm:$0x1]
        %v2261 = vld [vmem:[%s432 + $0x30] sm:$0xf]
        %v2262 = vld [vmem:[%s432 + $0x34] sm:$0x1]
        %v2263 = vld [vmem:[%s432 + $0x38] sm:$0xf]
        %v2264 = vld [vmem:[%s432 + $0x3c] sm:$0x1]
        %v2266 = vshrl.u32 %v2249, 16
        %v2268 = vrot.slane %v2266, 4
        %v2269 = vshll.u32 %v2249, 16
        %v2271 = vrot.slane %v2269, 5
        %v2272 = vor.u32 %v2268, %v2271
        %v2273 = vrot.slane %v2272, 4
        %v2275 = vshll.u32 %v2250, 16
        %v2277 = vrot.slane %v2275, 5
        %v2278 = vsel %vm504, %v2273, %v2277
        %v2280 = vshrl.u32 %v2251, 16
        %v2282 = vrot.slane %v2280, 4
        %v2283 = vshll.u32 %v2251, 16
        %v2285 = vrot.slane %v2283, 5
        %v2286 = vor.u32 %v2282, %v2285
        %v2287 = vrot.slane %v2286, 4
        %v2289 = vshll.u32 %v2252, 16
        %v2291 = vrot.slane %v2289, 5
        %v2292 = vsel %vm504, %v2287, %v2291
        %v2294 = vshrl.u32 %v2253, 16
        %v2296 = vrot.slane %v2294, 4
        %v2297 = vshll.u32 %v2253, 16
        %v2299 = vrot.slane %v2297, 5
        %v2300 = vor.u32 %v2296, %v2299
        %v2301 = vrot.slane %v2300, 4
        %v2303 = vshll.u32 %v2254, 16
        %v2305 = vrot.slane %v2303, 5
        %v2306 = vsel %vm504, %v2301, %v2305
        %v2308 = vshrl.u32 %v2255, 16
        %v2310 = vrot.slane %v2308, 4
        %v2311 = vshll.u32 %v2255, 16
        %v2313 = vrot.slane %v2311, 5
        %v2314 = vor.u32 %v2310, %v2313
        %v2315 = vrot.slane %v2314, 4
        %v2317 = vshll.u32 %v2256, 16
        %v2319 = vrot.slane %v2317, 5
        %v2320 = vsel %vm504, %v2315, %v2319
        %v2322 = vshrl.u32 %v2257, 16
        %v2324 = vrot.slane %v2322, 4
        %v2325 = vshll.u32 %v2257, 16
        %v2327 = vrot.slane %v2325, 5
        %v2328 = vor.u32 %v2324, %v2327
        %v2329 = vrot.slane %v2328, 4
        %v2331 = vshll.u32 %v2258, 16
        %v2333 = vrot.slane %v2331, 5
        %v2334 = vsel %vm504, %v2329, %v2333
        %v2336 = vshrl.u32 %v2259, 16
        %v2338 = vrot.slane %v2336, 4
        %v2339 = vshll.u32 %v2259, 16
        %v2341 = vrot.slane %v2339, 5
        %v2342 = vor.u32 %v2338, %v2341
        %v2343 = vrot.slane %v2342, 4
        %v2345 = vshll.u32 %v2260, 16
        %v2347 = vrot.slane %v2345, 5
        %v2348 = vsel %vm504, %v2343, %v2347
        %v2350 = vshrl.u32 %v2261, 16
        %v2352 = vrot.slane %v2350, 4
        %v2353 = vshll.u32 %v2261, 16
        %v2355 = vrot.slane %v2353, 5
        %v2356 = vor.u32 %v2352, %v2355
        %v2357 = vrot.slane %v2356, 4
        %v2359 = vshll.u32 %v2262, 16
        %v2361 = vrot.slane %v2359, 5
        %v2362 = vsel %vm504, %v2357, %v2361
        %v2364 = vshrl.u32 %v2263, 16
        %v2366 = vrot.slane %v2364, 4
        %v2367 = vshll.u32 %v2263, 16
        %v2369 = vrot.slane %v2367, 5
        %v2370 = vor.u32 %v2366, %v2369
        %v2371 = vrot.slane %v2370, 4
        %v2373 = vshll.u32 %v2264, 16
        %v2375 = vrot.slane %v2373, 5
        %v2376 = vsel %vm504, %v2371, %v2375
        %s2377 = scalar_lea.vmem [#allocation2], 640
        %v2378 = vld [vmem:[%s2377] sm:$0xf]
        %v2379 = vld [vmem:[%s2377 + $0x4] sm:$0xf]
        %v2380 = vld [vmem:[%s2377 + $0x8] sm:$0xf]
        %v2381 = vld [vmem:[%s2377 + $0xc] sm:$0xf]
        %v2382 = vld [vmem:[%s2377 + $0x10] sm:$0xf]
        %v2383 = vld [vmem:[%s2377 + $0x14] sm:$0xf]
        %v2384 = vld [vmem:[%s2377 + $0x18] sm:$0xf]
        %v2385 = vld [vmem:[%s2377 + $0x1c] sm:$0xf]
        %v2386 = vld [vmem:[%s2377 + $0x20] sm:$0xf]
        %v2387 = vld [vmem:[%s2377 + $0x24] sm:$0xf]
        %v2388 = vld [vmem:[%s2377 + $0x28] sm:$0xf]
        %v2389 = vld [vmem:[%s2377 + $0x2c] sm:$0xf]
        %v2390 = vld [vmem:[%s2377 + $0x30] sm:$0xf]
        %v2391 = vld [vmem:[%s2377 + $0x34] sm:$0xf]
        %v2392 = vld [vmem:[%s2377 + $0x38] sm:$0xf]
        %v2393 = vld [vmem:[%s2377 + $0x3c] sm:$0xf]
        %v2394 = vunpack.c.l.b16 %v2278
        %v2395 = vunpack.c.l.b16 %v2292
        %v2396 = vunpack.c.l.b16 %v2306
        %v2397 = vunpack.c.l.b16 %v2320
        %v2398 = vunpack.c.l.b16 %v2334
        %v2399 = vunpack.c.l.b16 %v2348
        %v2400 = vunpack.c.l.b16 %v2362
        %v2401 = vunpack.c.l.b16 %v2376
        %v2402 = vpack.c.b16 %v2395, %v2394
        %v2403 = vpack.c.b16 %v2397, %v2396
        %v2404 = vpack.c.b16 %v2399, %v2398
        %v2405 = vpack.c.b16 %v2401, %v2400
        %v2426 = vunpack.c.l.b16 %v2378
        %v2427 = vunpack.c.l.b16 %v2379
        %v2428 = vunpack.c.l.b16 %v2380
        %v2429 = vunpack.c.l.b16 %v2381
        %v2430 = vunpack.c.l.b16 %v2382
        %v2431 = vunpack.c.l.b16 %v2383
        %v2432 = vunpack.c.l.b16 %v2384
        %v2433 = vunpack.c.l.b16 %v2385
        %v2434 = vunpack.c.l.b16 %v2386
        %v2435 = vunpack.c.l.b16 %v2387
        %v2436 = vunpack.c.l.b16 %v2388
        %v2437 = vunpack.c.l.b16 %v2389
        %v2438 = vunpack.c.l.b16 %v2390
        %v2439 = vunpack.c.l.b16 %v2391
        %v2440 = vunpack.c.l.b16 %v2392
        %v2441 = vunpack.c.l.b16 %v2393
        %v2442 = vpack.c.b16 %v2427, %v2426
        %v2443 = vpack.c.b16 %v2429, %v2428
        %v2444 = vpack.c.b16 %v2431, %v2430
        %v2445 = vpack.c.b16 %v2433, %v2432
        %v2446 = vpack.c.b16 %v2435, %v2434
        %v2447 = vpack.c.b16 %v2437, %v2436
        %v2448 = vpack.c.b16 %v2439, %v2438
        %v2449 = vpack.c.b16 %v2441, %v2440
        %2458 = vmatpush.bf16.msra.mxu0 %v2449
        %2459 = vmatpush.bf16.msra.mxu0 %v2448
        %2460 = vmatpush.bf16.msra.mxu0 %v2447
        %2461 = vmatpush.bf16.msra.mxu0 %v2446
        %2462 = vmatpush.bf16.msra.mxu0 %v2445
        %2463 = vmatpush.bf16.msra.mxu0 %v2444
        %2464 = vmatpush.bf16.msra.mxu0 %v2443
        %2465 = vmatpush.bf16.msra.mxu0 %v2442
        %2466 = vmatmul.bf16.gmra.mxu0 %v2402
        %v2467 = vpop.f32.mrf.mxu0
        %v2468 = vadd.f32 0.0, %v2467
        %v2469 = vpop.f32.mrf.mxu0
        %v2470 = vadd.f32 0.0, %v2469
        %2471 = vmatmul.bf16.gmra.mxu0 %v2403
        %v2472 = vpop.f32.mrf.mxu0
        %v2473 = vadd.f32 0.0, %v2472
        %v2474 = vpop.f32.mrf.mxu0
        %v2475 = vadd.f32 0.0, %v2474
        %2476 = vmatmul.bf16.gmra.mxu0 %v2404
        %v2477 = vpop.f32.mrf.mxu0
        %v2478 = vadd.f32 0.0, %v2477
        %v2479 = vpop.f32.mrf.mxu0
        %v2480 = vadd.f32 0.0, %v2479
        %2481 = vmatmul.bf16.gmra.mxu0 %v2405
        %v2482 = vpop.f32.mrf.mxu0
        %v2483 = vadd.f32 0.0, %v2482
        %v2484 = vpop.f32.mrf.mxu0
        %v2485 = vadd.f32 0.0, %v2484
        %2486 = vdwg.mxu0
        %v2487 = vadd.f32 %v2241, %v2468
        %v2488 = vadd.f32 %v2242, %v2470
        %v2489 = vadd.f32 %v2243, %v2473
        %v2490 = vadd.f32 %v2244, %v2475
        %v2491 = vadd.f32 %v2245, %v2478
        %v2492 = vadd.f32 %v2246, %v2480
        %v2493 = vadd.f32 %v2247, %v2483
        %v2494 = vadd.f32 %v2248, %v2485
        %v2495 = vld [vmem:[%s432] sm:$0xe]
        %v2496 = vld [vmem:[%s432 + $0x8] sm:$0xe]
        %v2497 = vld [vmem:[%s432 + $0x10] sm:$0xe]
        %v2498 = vld [vmem:[%s432 + $0x18] sm:$0xe]
        %v2499 = vld [vmem:[%s432 + $0x20] sm:$0xe]
        %v2500 = vld [vmem:[%s432 + $0x28] sm:$0xe]
        %v2501 = vld [vmem:[%s432 + $0x30] sm:$0xe]
        %v2502 = vld [vmem:[%s432 + $0x38] sm:$0xe]
        %v2519 = vrot.slane %v2495, 5
        %v2520 = vrot.slane %v2519, 4
        %v2521 = vrot.slane %v2250, 5
        %v2522 = vsel %vm854, %v2520, %v2521
        %v2523 = vrot.slane %v2496, 5
        %v2524 = vrot.slane %v2523, 4
        %v2525 = vrot.slane %v2252, 5
        %v2526 = vsel %vm854, %v2524, %v2525
        %v2527 = vrot.slane %v2497, 5
        %v2528 = vrot.slane %v2527, 4
        %v2529 = vrot.slane %v2254, 5
        %v2530 = vsel %vm854, %v2528, %v2529
        %v2531 = vrot.slane %v2498, 5
        %v2532 = vrot.slane %v2531, 4
        %v2533 = vrot.slane %v2256, 5
        %v2534 = vsel %vm854, %v2532, %v2533
        %v2535 = vrot.slane %v2499, 5
        %v2536 = vrot.slane %v2535, 4
        %v2537 = vrot.slane %v2258, 5
        %v2538 = vsel %vm854, %v2536, %v2537
        %v2539 = vrot.slane %v2500, 5
        %v2540 = vrot.slane %v2539, 4
        %v2541 = vrot.slane %v2260, 5
        %v2542 = vsel %vm854, %v2540, %v2541
        %v2543 = vrot.slane %v2501, 5
        %v2544 = vrot.slane %v2543, 4
        %v2545 = vrot.slane %v2262, 5
        %v2546 = vsel %vm854, %v2544, %v2545
        %v2547 = vrot.slane %v2502, 5
        %v2548 = vrot.slane %v2547, 4
        %v2549 = vrot.slane %v2264, 5
        %v2550 = vsel %vm854, %v2548, %v2549
        %s2551 = scalar_lea.vmem [#allocation2], 704
        %v2552 = vld [vmem:[%s2551] sm:$0xf]
        %v2553 = vld [vmem:[%s2551 + $0x4] sm:$0xf]
        %v2554 = vld [vmem:[%s2551 + $0x8] sm:$0xf]
        %v2555 = vld [vmem:[%s2551 + $0xc] sm:$0xf]
        %v2556 = vld [vmem:[%s2551 + $0x10] sm:$0xf]
        %v2557 = vld [vmem:[%s2551 + $0x14] sm:$0xf]
        %v2558 = vld [vmem:[%s2551 + $0x18] sm:$0xf]
        %v2559 = vld [vmem:[%s2551 + $0x1c] sm:$0xf]
        %v2560 = vld [vmem:[%s2551 + $0x20] sm:$0xf]
        %v2561 = vld [vmem:[%s2551 + $0x24] sm:$0xf]
        %v2562 = vld [vmem:[%s2551 + $0x28] sm:$0xf]
        %v2563 = vld [vmem:[%s2551 + $0x2c] sm:$0xf]
        %v2564 = vld [vmem:[%s2551 + $0x30] sm:$0xf]
        %v2565 = vld [vmem:[%s2551 + $0x34] sm:$0xf]
        %v2566 = vld [vmem:[%s2551 + $0x38] sm:$0xf]
        %v2567 = vld [vmem:[%s2551 + $0x3c] sm:$0xf]
        %v2568 = vunpack.c.l.b16 %v2522
        %v2569 = vunpack.c.l.b16 %v2526
        %v2570 = vunpack.c.l.b16 %v2530
        %v2571 = vunpack.c.l.b16 %v2534
        %v2572 = vunpack.c.l.b16 %v2538
        %v2573 = vunpack.c.l.b16 %v2542
        %v2574 = vunpack.c.l.b16 %v2546
        %v2575 = vunpack.c.l.b16 %v2550
        %v2576 = vpack.c.b16 %v2569, %v2568
        %v2577 = vpack.c.b16 %v2571, %v2570
        %v2578 = vpack.c.b16 %v2573, %v2572
        %v2579 = vpack.c.b16 %v2575, %v2574
        %v2600 = vunpack.c.l.b16 %v2552
        %v2601 = vunpack.c.l.b16 %v2553
        %v2602 = vunpack.c.l.b16 %v2554
        %v2603 = vunpack.c.l.b16 %v2555
        %v2604 = vunpack.c.l.b16 %v2556
        %v2605 = vunpack.c.l.b16 %v2557
        %v2606 = vunpack.c.l.b16 %v2558
        %v2607 = vunpack.c.l.b16 %v2559
        %v2608 = vunpack.c.l.b16 %v2560
        %v2609 = vunpack.c.l.b16 %v2561
        %v2610 = vunpack.c.l.b16 %v2562
        %v2611 = vunpack.c.l.b16 %v2563
        %v2612 = vunpack.c.l.b16 %v2564
        %v2613 = vunpack.c.l.b16 %v2565
        %v2614 = vunpack.c.l.b16 %v2566
        %v2615 = vunpack.c.l.b16 %v2567
        %v2616 = vpack.c.b16 %v2601, %v2600
        %v2617 = vpack.c.b16 %v2603, %v2602
        %v2618 = vpack.c.b16 %v2605, %v2604
        %v2619 = vpack.c.b16 %v2607, %v2606
        %v2620 = vpack.c.b16 %v2609, %v2608
        %v2621 = vpack.c.b16 %v2611, %v2610
        %v2622 = vpack.c.b16 %v2613, %v2612
        %v2623 = vpack.c.b16 %v2615, %v2614
        %2632 = vmatpush.bf16.msra.mxu0 %v2623
        %2633 = vmatpush.bf16.msra.mxu0 %v2622
        %2634 = vmatpush.bf16.msra.mxu0 %v2621
        %2635 = vmatpush.bf16.msra.mxu0 %v2620
        %2636 = vmatpush.bf16.msra.mxu0 %v2619
        %2637 = vmatpush.bf16.msra.mxu0 %v2618
        %2638 = vmatpush.bf16.msra.mxu0 %v2617
        %2639 = vmatpush.bf16.msra.mxu0 %v2616
        %2640 = vmatmul.bf16.gmra.mxu0 %v2576
        %v2641 = vpop.f32.mrf.mxu0
        %v2642 = vadd.f32 0.0, %v2641
        %v2643 = vpop.f32.mrf.mxu0
        %v2644 = vadd.f32 0.0, %v2643
        %2645 = vmatmul.bf16.gmra.mxu0 %v2577
        %v2646 = vpop.f32.mrf.mxu0
        %v2647 = vadd.f32 0.0, %v2646
        %v2648 = vpop.f32.mrf.mxu0
        %v2649 = vadd.f32 0.0, %v2648
        %2650 = vmatmul.bf16.gmra.mxu0 %v2578
        %v2651 = vpop.f32.mrf.mxu0
        %v2652 = vadd.f32 0.0, %v2651
        %v2653 = vpop.f32.mrf.mxu0
        %v2654 = vadd.f32 0.0, %v2653
        %2655 = vmatmul.bf16.gmra.mxu0 %v2579
        %v2656 = vpop.f32.mrf.mxu0
        %v2657 = vadd.f32 0.0, %v2656
        %v2658 = vpop.f32.mrf.mxu0
        %v2659 = vadd.f32 0.0, %v2658
        %2660 = vdwg.mxu0
        %v2661 = vadd.f32 %v2487, %v2642
        %v2662 = vadd.f32 %v2488, %v2644
        %v2663 = vadd.f32 %v2489, %v2647
        %v2664 = vadd.f32 %v2490, %v2649
        %v2665 = vadd.f32 %v2491, %v2652
        %v2666 = vadd.f32 %v2492, %v2654
        %v2667 = vadd.f32 %v2493, %v2657
        %v2668 = vadd.f32 %v2494, %v2659
        %s2669 = scalar_lea.vmem %s432, 8
        %v2670 = vld [vmem:[%s2669] sm:$0xf]
        %v2671 = vld [vmem:[%s2669 + $0x8] sm:$0xf]
        %v2672 = vld [vmem:[%s2669 + $0x10] sm:$0xf]
        %v2673 = vld [vmem:[%s2669 + $0x18] sm:$0xf]
        %v2674 = vld [vmem:[%s2669 + $0x20] sm:$0xf]
        %v2675 = vld [vmem:[%s2669 + $0x28] sm:$0xf]
        %v2676 = vld [vmem:[%s2669 + $0x30] sm:$0xf]
        %v2677 = vld [vmem:[%s2669 + $0x38] sm:$0xf]
        %s2678 = scalar_lea.vmem [#allocation2], 768
        %v2679 = vld [vmem:[%s2678] sm:$0xf]
        %v2680 = vld [vmem:[%s2678 + $0x4] sm:$0xf]
        %v2681 = vld [vmem:[%s2678 + $0x8] sm:$0xf]
        %v2682 = vld [vmem:[%s2678 + $0xc] sm:$0xf]
        %v2683 = vld [vmem:[%s2678 + $0x10] sm:$0xf]
        %v2684 = vld [vmem:[%s2678 + $0x14] sm:$0xf]
        %v2685 = vld [vmem:[%s2678 + $0x18] sm:$0xf]
        %v2686 = vld [vmem:[%s2678 + $0x1c] sm:$0xf]
        %v2687 = vld [vmem:[%s2678 + $0x20] sm:$0xf]
        %v2688 = vld [vmem:[%s2678 + $0x24] sm:$0xf]
        %v2689 = vld [vmem:[%s2678 + $0x28] sm:$0xf]
        %v2690 = vld [vmem:[%s2678 + $0x2c] sm:$0xf]
        %v2691 = vld [vmem:[%s2678 + $0x30] sm:$0xf]
        %v2692 = vld [vmem:[%s2678 + $0x34] sm:$0xf]
        %v2693 = vld [vmem:[%s2678 + $0x38] sm:$0xf]
        %v2694 = vld [vmem:[%s2678 + $0x3c] sm:$0xf]
        %v2703 = vunpack.c.l.b16 %v2670
        %v2704 = vunpack.c.l.b16 %v2671
        %v2705 = vunpack.c.l.b16 %v2672
        %v2706 = vunpack.c.l.b16 %v2673
        %v2707 = vunpack.c.l.b16 %v2674
        %v2708 = vunpack.c.l.b16 %v2675
        %v2709 = vunpack.c.l.b16 %v2676
        %v2710 = vunpack.c.l.b16 %v2677
        %v2711 = vpack.c.b16 %v2704, %v2703
        %v2712 = vpack.c.b16 %v2706, %v2705
        %v2713 = vpack.c.b16 %v2708, %v2707
        %v2714 = vpack.c.b16 %v2710, %v2709
        %v2735 = vunpack.c.l.b16 %v2679
        %v2736 = vunpack.c.l.b16 %v2680
        %v2737 = vunpack.c.l.b16 %v2681
        %v2738 = vunpack.c.l.b16 %v2682
        %v2739 = vunpack.c.l.b16 %v2683
        %v2740 = vunpack.c.l.b16 %v2684
        %v2741 = vunpack.c.l.b16 %v2685
        %v2742 = vunpack.c.l.b16 %v2686
        %v2743 = vunpack.c.l.b16 %v2687
        %v2744 = vunpack.c.l.b16 %v2688
        %v2745 = vunpack.c.l.b16 %v2689
        %v2746 = vunpack.c.l.b16 %v2690
        %v2747 = vunpack.c.l.b16 %v2691
        %v2748 = vunpack.c.l.b16 %v2692
        %v2749 = vunpack.c.l.b16 %v2693
        %v2750 = vunpack.c.l.b16 %v2694
        %v2751 = vpack.c.b16 %v2736, %v2735
        %v2752 = vpack.c.b16 %v2738, %v2737
        %v2753 = vpack.c.b16 %v2740, %v2739
        %v2754 = vpack.c.b16 %v2742, %v2741
        %v2755 = vpack.c.b16 %v2744, %v2743
        %v2756 = vpack.c.b16 %v2746, %v2745
        %v2757 = vpack.c.b16 %v2748, %v2747
        %v2758 = vpack.c.b16 %v2750, %v2749
        %2767 = vmatpush.bf16.msra.mxu0 %v2758
        %2768 = vmatpush.bf16.msra.mxu0 %v2757
        %2769 = vmatpush.bf16.msra.mxu0 %v2756
        %2770 = vmatpush.bf16.msra.mxu0 %v2755
        %2771 = vmatpush.bf16.msra.mxu0 %v2754
        %2772 = vmatpush.bf16.msra.mxu0 %v2753
        %2773 = vmatpush.bf16.msra.mxu0 %v2752
        %2774 = vmatpush.bf16.msra.mxu0 %v2751
        %2775 = vmatmul.bf16.gmra.mxu0 %v2711
        %v2776 = vpop.f32.mrf.mxu0
        %v2777 = vadd.f32 0.0, %v2776
        %v2778 = vpop.f32.mrf.mxu0
        %v2779 = vadd.f32 0.0, %v2778
        %2780 = vmatmul.bf16.gmra.mxu0 %v2712
        %v2781 = vpop.f32.mrf.mxu0
        %v2782 = vadd.f32 0.0, %v2781
        %v2783 = vpop.f32.mrf.mxu0
        %v2784 = vadd.f32 0.0, %v2783
        %2785 = vmatmul.bf16.gmra.mxu0 %v2713
        %v2786 = vpop.f32.mrf.mxu0
        %v2787 = vadd.f32 0.0, %v2786
        %v2788 = vpop.f32.mrf.mxu0
        %v2789 = vadd.f32 0.0, %v2788
        %2790 = vmatmul.bf16.gmra.mxu0 %v2714
        %v2791 = vpop.f32.mrf.mxu0
        %v2792 = vadd.f32 0.0, %v2791
        %v2793 = vpop.f32.mrf.mxu0
        %v2794 = vadd.f32 0.0, %v2793
        %2795 = vdwg.mxu0
        %v2796 = vadd.f32 %v2661, %v2777
        %v2797 = vadd.f32 %v2662, %v2779
        %v2798 = vadd.f32 %v2663, %v2782
        %v2799 = vadd.f32 %v2664, %v2784
        %v2800 = vadd.f32 %v2665, %v2787
        %v2801 = vadd.f32 %v2666, %v2789
        %v2802 = vadd.f32 %v2667, %v2792
        %v2803 = vadd.f32 %v2668, %v2794
        %v2804 = vld [vmem:[%s2669] sm:$0xf]
        %v2805 = vld [vmem:[%s2669 + $0x4] sm:$0x1]
        %v2806 = vld [vmem:[%s2669 + $0x8] sm:$0xf]
        %v2807 = vld [vmem:[%s2669 + $0xc] sm:$0x1]
        %v2808 = vld [vmem:[%s2669 + $0x10] sm:$0xf]
        %v2809 = vld [vmem:[%s2669 + $0x14] sm:$0x1]
        %v2810 = vld [vmem:[%s2669 + $0x18] sm:$0xf]
        %v2811 = vld [vmem:[%s2669 + $0x1c] sm:$0x1]
        %v2812 = vld [vmem:[%s2669 + $0x20] sm:$0xf]
        %v2813 = vld [vmem:[%s2669 + $0x24] sm:$0x1]
        %v2814 = vld [vmem:[%s2669 + $0x28] sm:$0xf]
        %v2815 = vld [vmem:[%s2669 + $0x2c] sm:$0x1]
        %v2816 = vld [vmem:[%s2669 + $0x30] sm:$0xf]
        %v2817 = vld [vmem:[%s2669 + $0x34] sm:$0x1]
        %v2818 = vld [vmem:[%s2669 + $0x38] sm:$0xf]
        %v2819 = vld [vmem:[%s2669 + $0x3c] sm:$0x1]
        %v2821 = vshrl.u32 %v2804, 16
        %v2823 = vrot.slane %v2821, 4
        %v2824 = vshll.u32 %v2804, 16
        %v2826 = vrot.slane %v2824, 5
        %v2827 = vor.u32 %v2823, %v2826
        %v2828 = vrot.slane %v2827, 4
        %v2830 = vshll.u32 %v2805, 16
        %v2832 = vrot.slane %v2830, 5
        %v2833 = vsel %vm504, %v2828, %v2832
        %v2835 = vshrl.u32 %v2806, 16
        %v2837 = vrot.slane %v2835, 4
        %v2838 = vshll.u32 %v2806, 16
        %v2840 = vrot.slane %v2838, 5
        %v2841 = vor.u32 %v2837, %v2840
        %v2842 = vrot.slane %v2841, 4
        %v2844 = vshll.u32 %v2807, 16
        %v2846 = vrot.slane %v2844, 5
        %v2847 = vsel %vm504, %v2842, %v2846
        %v2849 = vshrl.u32 %v2808, 16
        %v2851 = vrot.slane %v2849, 4
        %v2852 = vshll.u32 %v2808, 16
        %v2854 = vrot.slane %v2852, 5
        %v2855 = vor.u32 %v2851, %v2854
        %v2856 = vrot.slane %v2855, 4
        %v2858 = vshll.u32 %v2809, 16
        %v2860 = vrot.slane %v2858, 5
        %v2861 = vsel %vm504, %v2856, %v2860
        %v2863 = vshrl.u32 %v2810, 16
        %v2865 = vrot.slane %v2863, 4
        %v2866 = vshll.u32 %v2810, 16
        %v2868 = vrot.slane %v2866, 5
        %v2869 = vor.u32 %v2865, %v2868
        %v2870 = vrot.slane %v2869, 4
        %v2872 = vshll.u32 %v2811, 16
        %v2874 = vrot.slane %v2872, 5
        %v2875 = vsel %vm504, %v2870, %v2874
        %v2877 = vshrl.u32 %v2812, 16
        %v2879 = vrot.slane %v2877, 4
        %v2880 = vshll.u32 %v2812, 16
        %v2882 = vrot.slane %v2880, 5
        %v2883 = vor.u32 %v2879, %v2882
        %v2884 = vrot.slane %v2883, 4
        %v2886 = vshll.u32 %v2813, 16
        %v2888 = vrot.slane %v2886, 5
        %v2889 = vsel %vm504, %v2884, %v2888
        %v2891 = vshrl.u32 %v2814, 16
        %v2893 = vrot.slane %v2891, 4
        %v2894 = vshll.u32 %v2814, 16
        %v2896 = vrot.slane %v2894, 5
        %v2897 = vor.u32 %v2893, %v2896
        %v2898 = vrot.slane %v2897, 4
        %v2900 = vshll.u32 %v2815, 16
        %v2902 = vrot.slane %v2900, 5
        %v2903 = vsel %vm504, %v2898, %v2902
        %v2905 = vshrl.u32 %v2816, 16
        %v2907 = vrot.slane %v2905, 4
        %v2908 = vshll.u32 %v2816, 16
        %v2910 = vrot.slane %v2908, 5
        %v2911 = vor.u32 %v2907, %v2910
        %v2912 = vrot.slane %v2911, 4
        %v2914 = vshll.u32 %v2817, 16
        %v2916 = vrot.slane %v2914, 5
        %v2917 = vsel %vm504, %v2912, %v2916
        %v2919 = vshrl.u32 %v2818, 16
        %v2921 = vrot.slane %v2919, 4
        %v2922 = vshll.u32 %v2818, 16
        %v2924 = vrot.slane %v2922, 5
        %v2925 = vor.u32 %v2921, %v2924
        %v2926 = vrot.slane %v2925, 4
        %v2928 = vshll.u32 %v2819, 16
        %v2930 = vrot.slane %v2928, 5
        %v2931 = vsel %vm504, %v2926, %v2930
        %s2932 = scalar_lea.vmem [#allocation2], 832
        %v2933 = vld [vmem:[%s2932] sm:$0xf]
        %v2934 = vld [vmem:[%s2932 + $0x4] sm:$0xf]
        %v2935 = vld [vmem:[%s2932 + $0x8] sm:$0xf]
        %v2936 = vld [vmem:[%s2932 + $0xc] sm:$0xf]
        %v2937 = vld [vmem:[%s2932 + $0x10] sm:$0xf]
        %v2938 = vld [vmem:[%s2932 + $0x14] sm:$0xf]
        %v2939 = vld [vmem:[%s2932 + $0x18] sm:$0xf]
        %v2940 = vld [vmem:[%s2932 + $0x1c] sm:$0xf]
        %v2941 = vld [vmem:[%s2932 + $0x20] sm:$0xf]
        %v2942 = vld [vmem:[%s2932 + $0x24] sm:$0xf]
        %v2943 = vld [vmem:[%s2932 + $0x28] sm:$0xf]
        %v2944 = vld [vmem:[%s2932 + $0x2c] sm:$0xf]
        %v2945 = vld [vmem:[%s2932 + $0x30] sm:$0xf]
        %v2946 = vld [vmem:[%s2932 + $0x34] sm:$0xf]
        %v2947 = vld [vmem:[%s2932 + $0x38] sm:$0xf]
        %v2948 = vld [vmem:[%s2932 + $0x3c] sm:$0xf]
        %v2949 = vunpack.c.l.b16 %v2833
        %v2950 = vunpack.c.l.b16 %v2847
        %v2951 = vunpack.c.l.b16 %v2861
        %v2952 = vunpack.c.l.b16 %v2875
        %v2953 = vunpack.c.l.b16 %v2889
        %v2954 = vunpack.c.l.b16 %v2903
        %v2955 = vunpack.c.l.b16 %v2917
        %v2956 = vunpack.c.l.b16 %v2931
        %v2957 = vpack.c.b16 %v2950, %v2949
        %v2958 = vpack.c.b16 %v2952, %v2951
        %v2959 = vpack.c.b16 %v2954, %v2953
        %v2960 = vpack.c.b16 %v2956, %v2955
        %v2981 = vunpack.c.l.b16 %v2933
        %v2982 = vunpack.c.l.b16 %v2934
        %v2983 = vunpack.c.l.b16 %v2935
        %v2984 = vunpack.c.l.b16 %v2936
        %v2985 = vunpack.c.l.b16 %v2937
        %v2986 = vunpack.c.l.b16 %v2938
        %v2987 = vunpack.c.l.b16 %v2939
        %v2988 = vunpack.c.l.b16 %v2940
        %v2989 = vunpack.c.l.b16 %v2941
        %v2990 = vunpack.c.l.b16 %v2942
        %v2991 = vunpack.c.l.b16 %v2943
        %v2992 = vunpack.c.l.b16 %v2944
        %v2993 = vunpack.c.l.b16 %v2945
        %v2994 = vunpack.c.l.b16 %v2946
        %v2995 = vunpack.c.l.b16 %v2947
        %v2996 = vunpack.c.l.b16 %v2948
        %v2997 = vpack.c.b16 %v2982, %v2981
        %v2998 = vpack.c.b16 %v2984, %v2983
        %v2999 = vpack.c.b16 %v2986, %v2985
        %v3000 = vpack.c.b16 %v2988, %v2987
        %v3001 = vpack.c.b16 %v2990, %v2989
        %v3002 = vpack.c.b16 %v2992, %v2991
        %v3003 = vpack.c.b16 %v2994, %v2993
        %v3004 = vpack.c.b16 %v2996, %v2995
        %3013 = vmatpush.bf16.msra.mxu0 %v3004
        %3014 = vmatpush.bf16.msra.mxu0 %v3003
        %3015 = vmatpush.bf16.msra.mxu0 %v3002
        %3016 = vmatpush.bf16.msra.mxu0 %v3001
        %3017 = vmatpush.bf16.msra.mxu0 %v3000
        %3018 = vmatpush.bf16.msra.mxu0 %v2999
        %3019 = vmatpush.bf16.msra.mxu0 %v2998
        %3020 = vmatpush.bf16.msra.mxu0 %v2997
        %3021 = vmatmul.bf16.gmra.mxu0 %v2957
        %v3022 = vpop.f32.mrf.mxu0
        %v3023 = vadd.f32 0.0, %v3022
        %v3024 = vpop.f32.mrf.mxu0
        %v3025 = vadd.f32 0.0, %v3024
        %3026 = vmatmul.bf16.gmra.mxu0 %v2958
        %v3027 = vpop.f32.mrf.mxu0
        %v3028 = vadd.f32 0.0, %v3027
        %v3029 = vpop.f32.mrf.mxu0
        %v3030 = vadd.f32 0.0, %v3029
        %3031 = vmatmul.bf16.gmra.mxu0 %v2959
        %v3032 = vpop.f32.mrf.mxu0
        %v3033 = vadd.f32 0.0, %v3032
        %v3034 = vpop.f32.mrf.mxu0
        %v3035 = vadd.f32 0.0, %v3034
        %3036 = vmatmul.bf16.gmra.mxu0 %v2960
        %v3037 = vpop.f32.mrf.mxu0
        %v3038 = vadd.f32 0.0, %v3037
        %v3039 = vpop.f32.mrf.mxu0
        %v3040 = vadd.f32 0.0, %v3039
        %3041 = vdwg.mxu0
        %v3042 = vadd.f32 %v2796, %v3023
        %v3043 = vadd.f32 %v2797, %v3025
        %v3044 = vadd.f32 %v2798, %v3028
        %v3045 = vadd.f32 %v2799, %v3030
        %v3046 = vadd.f32 %v2800, %v3033
        %v3047 = vadd.f32 %v2801, %v3035
        %v3048 = vadd.f32 %v2802, %v3038
        %v3049 = vadd.f32 %v2803, %v3040
        %v3050 = vld [vmem:[%s2669] sm:$0xe]
        %v3051 = vld [vmem:[%s2669 + $0x8] sm:$0xe]
        %v3052 = vld [vmem:[%s2669 + $0x10] sm:$0xe]
        %v3053 = vld [vmem:[%s2669 + $0x18] sm:$0xe]
        %v3054 = vld [vmem:[%s2669 + $0x20] sm:$0xe]
        %v3055 = vld [vmem:[%s2669 + $0x28] sm:$0xe]
        %v3056 = vld [vmem:[%s2669 + $0x30] sm:$0xe]
        %v3057 = vld [vmem:[%s2669 + $0x38] sm:$0xe]
        %v3074 = vrot.slane %v3050, 5
        %v3075 = vrot.slane %v3074, 4
        %v3076 = vrot.slane %v2805, 5
        %v3077 = vsel %vm854, %v3075, %v3076
        %v3078 = vrot.slane %v3051, 5
        %v3079 = vrot.slane %v3078, 4
        %v3080 = vrot.slane %v2807, 5
        %v3081 = vsel %vm854, %v3079, %v3080
        %v3082 = vrot.slane %v3052, 5
        %v3083 = vrot.slane %v3082, 4
        %v3084 = vrot.slane %v2809, 5
        %v3085 = vsel %vm854, %v3083, %v3084
        %v3086 = vrot.slane %v3053, 5
        %v3087 = vrot.slane %v3086, 4
        %v3088 = vrot.slane %v2811, 5
        %v3089 = vsel %vm854, %v3087, %v3088
        %v3090 = vrot.slane %v3054, 5
        %v3091 = vrot.slane %v3090, 4
        %v3092 = vrot.slane %v2813, 5
        %v3093 = vsel %vm854, %v3091, %v3092
        %v3094 = vrot.slane %v3055, 5
        %v3095 = vrot.slane %v3094, 4
        %v3096 = vrot.slane %v2815, 5
        %v3097 = vsel %vm854, %v3095, %v3096
        %v3098 = vrot.slane %v3056, 5
        %v3099 = vrot.slane %v3098, 4
        %v3100 = vrot.slane %v2817, 5
        %v3101 = vsel %vm854, %v3099, %v3100
        %v3102 = vrot.slane %v3057, 5
        %v3103 = vrot.slane %v3102, 4
        %v3104 = vrot.slane %v2819, 5
        %v3105 = vsel %vm854, %v3103, %v3104
        %s3106 = scalar_lea.vmem [#allocation2], 896
        %v3107 = vld [vmem:[%s3106] sm:$0xf]
        %v3108 = vld [vmem:[%s3106 + $0x4] sm:$0xf]
        %v3109 = vld [vmem:[%s3106 + $0x8] sm:$0xf]
        %v3110 = vld [vmem:[%s3106 + $0xc] sm:$0xf]
        %v3111 = vld [vmem:[%s3106 + $0x10] sm:$0xf]
        %v3112 = vld [vmem:[%s3106 + $0x14] sm:$0xf]
        %v3113 = vld [vmem:[%s3106 + $0x18] sm:$0xf]
        %v3114 = vld [vmem:[%s3106 + $0x1c] sm:$0xf]
        %v3115 = vld [vmem:[%s3106 + $0x20] sm:$0xf]
        %v3116 = vld [vmem:[%s3106 + $0x24] sm:$0xf]
        %v3117 = vld [vmem:[%s3106 + $0x28] sm:$0xf]
        %v3118 = vld [vmem:[%s3106 + $0x2c] sm:$0xf]
        %v3119 = vld [vmem:[%s3106 + $0x30] sm:$0xf]
        %v3120 = vld [vmem:[%s3106 + $0x34] sm:$0xf]
        %v3121 = vld [vmem:[%s3106 + $0x38] sm:$0xf]
        %v3122 = vld [vmem:[%s3106 + $0x3c] sm:$0xf]
        %v3123 = vunpack.c.l.b16 %v3077
        %v3124 = vunpack.c.l.b16 %v3081
        %v3125 = vunpack.c.l.b16 %v3085
        %v3126 = vunpack.c.l.b16 %v3089
        %v3127 = vunpack.c.l.b16 %v3093
        %v3128 = vunpack.c.l.b16 %v3097
        %v3129 = vunpack.c.l.b16 %v3101
        %v3130 = vunpack.c.l.b16 %v3105
        %v3131 = vpack.c.b16 %v3124, %v3123
        %v3132 = vpack.c.b16 %v3126, %v3125
        %v3133 = vpack.c.b16 %v3128, %v3127
        %v3134 = vpack.c.b16 %v3130, %v3129
        %v3155 = vunpack.c.l.b16 %v3107
        %v3156 = vunpack.c.l.b16 %v3108
        %v3157 = vunpack.c.l.b16 %v3109
        %v3158 = vunpack.c.l.b16 %v3110
        %v3159 = vunpack.c.l.b16 %v3111
        %v3160 = vunpack.c.l.b16 %v3112
        %v3161 = vunpack.c.l.b16 %v3113
        %v3162 = vunpack.c.l.b16 %v3114
        %v3163 = vunpack.c.l.b16 %v3115
        %v3164 = vunpack.c.l.b16 %v3116
        %v3165 = vunpack.c.l.b16 %v3117
        %v3166 = vunpack.c.l.b16 %v3118
        %v3167 = vunpack.c.l.b16 %v3119
        %v3168 = vunpack.c.l.b16 %v3120
        %v3169 = vunpack.c.l.b16 %v3121
        %v3170 = vunpack.c.l.b16 %v3122
        %v3171 = vpack.c.b16 %v3156, %v3155
        %v3172 = vpack.c.b16 %v3158, %v3157
        %v3173 = vpack.c.b16 %v3160, %v3159
        %v3174 = vpack.c.b16 %v3162, %v3161
        %v3175 = vpack.c.b16 %v3164, %v3163
        %v3176 = vpack.c.b16 %v3166, %v3165
        %v3177 = vpack.c.b16 %v3168, %v3167
        %v3178 = vpack.c.b16 %v3170, %v3169
        %3187 = vmatpush.bf16.msra.mxu0 %v3178
        %3188 = vmatpush.bf16.msra.mxu0 %v3177
        %3189 = vmatpush.bf16.msra.mxu0 %v3176
        %3190 = vmatpush.bf16.msra.mxu0 %v3175
        %3191 = vmatpush.bf16.msra.mxu0 %v3174
        %3192 = vmatpush.bf16.msra.mxu0 %v3173
        %3193 = vmatpush.bf16.msra.mxu0 %v3172
        %3194 = vmatpush.bf16.msra.mxu0 %v3171
        %3195 = vmatmul.bf16.gmra.mxu0 %v3131
        %v3196 = vpop.f32.mrf.mxu0
        %v3197 = vadd.f32 0.0, %v3196
        %v3198 = vpop.f32.mrf.mxu0
        %v3199 = vadd.f32 0.0, %v3198
        %3200 = vmatmul.bf16.gmra.mxu0 %v3132
        %v3201 = vpop.f32.mrf.mxu0
        %v3202 = vadd.f32 0.0, %v3201
        %v3203 = vpop.f32.mrf.mxu0
        %v3204 = vadd.f32 0.0, %v3203
        %3205 = vmatmul.bf16.gmra.mxu0 %v3133
        %v3206 = vpop.f32.mrf.mxu0
        %v3207 = vadd.f32 0.0, %v3206
        %v3208 = vpop.f32.mrf.mxu0
        %v3209 = vadd.f32 0.0, %v3208
        %3210 = vmatmul.bf16.gmra.mxu0 %v3134
        %v3211 = vpop.f32.mrf.mxu0
        %v3212 = vadd.f32 0.0, %v3211
        %v3213 = vpop.f32.mrf.mxu0
        %v3214 = vadd.f32 0.0, %v3213
        %3215 = vdwg.mxu0
        %v3216 = vadd.f32 %v3042, %v3197
        %v3217 = vadd.f32 %v3043, %v3199
        %v3218 = vadd.f32 %v3044, %v3202
        %v3219 = vadd.f32 %v3045, %v3204
        %v3220 = vadd.f32 %v3046, %v3207
        %v3221 = vadd.f32 %v3047, %v3209
        %v3222 = vadd.f32 %v3048, %v3212
        %v3223 = vadd.f32 %v3049, %v3214
        %s3224 = scalar_lea.vmem %s432, 16
        %v3225 = vld [vmem:[%s3224] sm:$0xf]
        %v3226 = vld [vmem:[%s3224 + $0x8] sm:$0xf]
        %v3227 = vld [vmem:[%s3224 + $0x10] sm:$0xf]
        %v3228 = vld [vmem:[%s3224 + $0x18] sm:$0xf]
        %v3229 = vld [vmem:[%s3224 + $0x20] sm:$0xf]
        %v3230 = vld [vmem:[%s3224 + $0x28] sm:$0xf]
        %v3231 = vld [vmem:[%s3224 + $0x30] sm:$0xf]
        %v3232 = vld [vmem:[%s3224 + $0x38] sm:$0xf]
        %s3233 = scalar_lea.vmem [#allocation2], 960
        %v3234 = vld [vmem:[%s3233] sm:$0xf]
        %v3235 = vld [vmem:[%s3233 + $0x4] sm:$0xf]
        %v3236 = vld [vmem:[%s3233 + $0x8] sm:$0xf]
        %v3237 = vld [vmem:[%s3233 + $0xc] sm:$0xf]
        %v3238 = vld [vmem:[%s3233 + $0x10] sm:$0xf]
        %v3239 = vld [vmem:[%s3233 + $0x14] sm:$0xf]
        %v3240 = vld [vmem:[%s3233 + $0x18] sm:$0xf]
        %v3241 = vld [vmem:[%s3233 + $0x1c] sm:$0xf]
        %v3242 = vld [vmem:[%s3233 + $0x20] sm:$0xf]
        %v3243 = vld [vmem:[%s3233 + $0x24] sm:$0xf]
        %v3244 = vld [vmem:[%s3233 + $0x28] sm:$0xf]
        %v3245 = vld [vmem:[%s3233 + $0x2c] sm:$0xf]
        %v3246 = vld [vmem:[%s3233 + $0x30] sm:$0xf]
        %v3247 = vld [vmem:[%s3233 + $0x34] sm:$0xf]
        %v3248 = vld [vmem:[%s3233 + $0x38] sm:$0xf]
        %v3249 = vld [vmem:[%s3233 + $0x3c] sm:$0xf]
        %v3258 = vunpack.c.l.b16 %v3225
        %v3259 = vunpack.c.l.b16 %v3226
        %v3260 = vunpack.c.l.b16 %v3227
        %v3261 = vunpack.c.l.b16 %v3228
        %v3262 = vunpack.c.l.b16 %v3229
        %v3263 = vunpack.c.l.b16 %v3230
        %v3264 = vunpack.c.l.b16 %v3231
        %v3265 = vunpack.c.l.b16 %v3232
        %v3266 = vpack.c.b16 %v3259, %v3258
        %v3267 = vpack.c.b16 %v3261, %v3260
        %v3268 = vpack.c.b16 %v3263, %v3262
        %v3269 = vpack.c.b16 %v3265, %v3264
        %v3290 = vunpack.c.l.b16 %v3234
        %v3291 = vunpack.c.l.b16 %v3235
        %v3292 = vunpack.c.l.b16 %v3236
        %v3293 = vunpack.c.l.b16 %v3237
        %v3294 = vunpack.c.l.b16 %v3238
        %v3295 = vunpack.c.l.b16 %v3239
        %v3296 = vunpack.c.l.b16 %v3240
        %v3297 = vunpack.c.l.b16 %v3241
        %v3298 = vunpack.c.l.b16 %v3242
        %v3299 = vunpack.c.l.b16 %v3243
        %v3300 = vunpack.c.l.b16 %v3244
        %v3301 = vunpack.c.l.b16 %v3245
        %v3302 = vunpack.c.l.b16 %v3246
        %v3303 = vunpack.c.l.b16 %v3247
        %v3304 = vunpack.c.l.b16 %v3248
        %v3305 = vunpack.c.l.b16 %v3249
        %v3306 = vpack.c.b16 %v3291, %v3290
        %v3307 = vpack.c.b16 %v3293, %v3292
        %v3308 = vpack.c.b16 %v3295, %v3294
        %v3309 = vpack.c.b16 %v3297, %v3296
        %v3310 = vpack.c.b16 %v3299, %v3298
        %v3311 = vpack.c.b16 %v3301, %v3300
        %v3312 = vpack.c.b16 %v3303, %v3302
        %v3313 = vpack.c.b16 %v3305, %v3304
        %3322 = vmatpush.bf16.msra.mxu0 %v3313
        %3323 = vmatpush.bf16.msra.mxu0 %v3312
        %3324 = vmatpush.bf16.msra.mxu0 %v3311
        %3325 = vmatpush.bf16.msra.mxu0 %v3310
        %3326 = vmatpush.bf16.msra.mxu0 %v3309
        %3327 = vmatpush.bf16.msra.mxu0 %v3308
        %3328 = vmatpush.bf16.msra.mxu0 %v3307
        %3329 = vmatpush.bf16.msra.mxu0 %v3306
        %3330 = vmatmul.bf16.gmra.mxu0 %v3266
        %v3331 = vpop.f32.mrf.mxu0
        %v3332 = vadd.f32 0.0, %v3331
        %v3333 = vpop.f32.mrf.mxu0
        %v3334 = vadd.f32 0.0, %v3333
        %3335 = vmatmul.bf16.gmra.mxu0 %v3267
        %v3336 = vpop.f32.mrf.mxu0
        %v3337 = vadd.f32 0.0, %v3336
        %v3338 = vpop.f32.mrf.mxu0
        %v3339 = vadd.f32 0.0, %v3338
        %3340 = vmatmul.bf16.gmra.mxu0 %v3268
        %v3341 = vpop.f32.mrf.mxu0
        %v3342 = vadd.f32 0.0, %v3341
        %v3343 = vpop.f32.mrf.mxu0
        %v3344 = vadd.f32 0.0, %v3343
        %3345 = vmatmul.bf16.gmra.mxu0 %v3269
        %v3346 = vpop.f32.mrf.mxu0
        %v3347 = vadd.f32 0.0, %v3346
        %v3348 = vpop.f32.mrf.mxu0
        %v3349 = vadd.f32 0.0, %v3348
        %3350 = vdwg.mxu0
        %v3351 = vadd.f32 %v3216, %v3332
        %v3352 = vadd.f32 %v3217, %v3334
        %v3353 = vadd.f32 %v3218, %v3337
        %v3354 = vadd.f32 %v3219, %v3339
        %v3355 = vadd.f32 %v3220, %v3342
        %v3356 = vadd.f32 %v3221, %v3344
        %v3357 = vadd.f32 %v3222, %v3347
        %v3358 = vadd.f32 %v3223, %v3349
        %v3359 = vld [vmem:[%s3224] sm:$0xf]
        %v3360 = vld [vmem:[%s3224 + $0x4] sm:$0x1]
        %v3361 = vld [vmem:[%s3224 + $0x8] sm:$0xf]
        %v3362 = vld [vmem:[%s3224 + $0xc] sm:$0x1]
        %v3363 = vld [vmem:[%s3224 + $0x10] sm:$0xf]
        %v3364 = vld [vmem:[%s3224 + $0x14] sm:$0x1]
        %v3365 = vld [vmem:[%s3224 + $0x18] sm:$0xf]
        %v3366 = vld [vmem:[%s3224 + $0x1c] sm:$0x1]
        %v3367 = vld [vmem:[%s3224 + $0x20] sm:$0xf]
        %v3368 = vld [vmem:[%s3224 + $0x24] sm:$0x1]
        %v3369 = vld [vmem:[%s3224 + $0x28] sm:$0xf]
        %v3370 = vld [vmem:[%s3224 + $0x2c] sm:$0x1]
        %v3371 = vld [vmem:[%s3224 + $0x30] sm:$0xf]
        %v3372 = vld [vmem:[%s3224 + $0x34] sm:$0x1]
        %v3373 = vld [vmem:[%s3224 + $0x38] sm:$0xf]
        %v3374 = vld [vmem:[%s3224 + $0x3c] sm:$0x1]
        %v3376 = vshrl.u32 %v3359, 16
        %v3378 = vrot.slane %v3376, 4
        %v3379 = vshll.u32 %v3359, 16
        %v3381 = vrot.slane %v3379, 5
        %v3382 = vor.u32 %v3378, %v3381
        %v3383 = vrot.slane %v3382, 4
        %v3385 = vshll.u32 %v3360, 16
        %v3387 = vrot.slane %v3385, 5
        %v3388 = vsel %vm504, %v3383, %v3387
        %v3390 = vshrl.u32 %v3361, 16
        %v3392 = vrot.slane %v3390, 4
        %v3393 = vshll.u32 %v3361, 16
        %v3395 = vrot.slane %v3393, 5
        %v3396 = vor.u32 %v3392, %v3395
        %v3397 = vrot.slane %v3396, 4
        %v3399 = vshll.u32 %v3362, 16
        %v3401 = vrot.slane %v3399, 5
        %v3402 = vsel %vm504, %v3397, %v3401
        %v3404 = vshrl.u32 %v3363, 16
        %v3406 = vrot.slane %v3404, 4
        %v3407 = vshll.u32 %v3363, 16
        %v3409 = vrot.slane %v3407, 5
        %v3410 = vor.u32 %v3406, %v3409
        %v3411 = vrot.slane %v3410, 4
        %v3413 = vshll.u32 %v3364, 16
        %v3415 = vrot.slane %v3413, 5
        %v3416 = vsel %vm504, %v3411, %v3415
        %v3418 = vshrl.u32 %v3365, 16
        %v3420 = vrot.slane %v3418, 4
        %v3421 = vshll.u32 %v3365, 16
        %v3423 = vrot.slane %v3421, 5
        %v3424 = vor.u32 %v3420, %v3423
        %v3425 = vrot.slane %v3424, 4
        %v3427 = vshll.u32 %v3366, 16
        %v3429 = vrot.slane %v3427, 5
        %v3430 = vsel %vm504, %v3425, %v3429
        %v3432 = vshrl.u32 %v3367, 16
        %v3434 = vrot.slane %v3432, 4
        %v3435 = vshll.u32 %v3367, 16
        %v3437 = vrot.slane %v3435, 5
        %v3438 = vor.u32 %v3434, %v3437
        %v3439 = vrot.slane %v3438, 4
        %v3441 = vshll.u32 %v3368, 16
        %v3443 = vrot.slane %v3441, 5
        %v3444 = vsel %vm504, %v3439, %v3443
        %v3446 = vshrl.u32 %v3369, 16
        %v3448 = vrot.slane %v3446, 4
        %v3449 = vshll.u32 %v3369, 16
        %v3451 = vrot.slane %v3449, 5
        %v3452 = vor.u32 %v3448, %v3451
        %v3453 = vrot.slane %v3452, 4
        %v3455 = vshll.u32 %v3370, 16
        %v3457 = vrot.slane %v3455, 5
        %v3458 = vsel %vm504, %v3453, %v3457
        %v3460 = vshrl.u32 %v3371, 16
        %v3462 = vrot.slane %v3460, 4
        %v3463 = vshll.u32 %v3371, 16
        %v3465 = vrot.slane %v3463, 5
        %v3466 = vor.u32 %v3462, %v3465
        %v3467 = vrot.slane %v3466, 4
        %v3469 = vshll.u32 %v3372, 16
        %v3471 = vrot.slane %v3469, 5
        %v3472 = vsel %vm504, %v3467, %v3471
        %v3474 = vshrl.u32 %v3373, 16
        %v3476 = vrot.slane %v3474, 4
        %v3477 = vshll.u32 %v3373, 16
        %v3479 = vrot.slane %v3477, 5
        %v3480 = vor.u32 %v3476, %v3479
        %v3481 = vrot.slane %v3480, 4
        %v3483 = vshll.u32 %v3374, 16
        %v3485 = vrot.slane %v3483, 5
        %v3486 = vsel %vm504, %v3481, %v3485
        %s3487 = scalar_lea.vmem [#allocation2], 1024
        %v3488 = vld [vmem:[%s3487] sm:$0xf]
        %v3489 = vld [vmem:[%s3487 + $0x4] sm:$0xf]
        %v3490 = vld [vmem:[%s3487 + $0x8] sm:$0xf]
        %v3491 = vld [vmem:[%s3487 + $0xc] sm:$0xf]
        %v3492 = vld [vmem:[%s3487 + $0x10] sm:$0xf]
        %v3493 = vld [vmem:[%s3487 + $0x14] sm:$0xf]
        %v3494 = vld [vmem:[%s3487 + $0x18] sm:$0xf]
        %v3495 = vld [vmem:[%s3487 + $0x1c] sm:$0xf]
        %v3496 = vld [vmem:[%s3487 + $0x20] sm:$0xf]
        %v3497 = vld [vmem:[%s3487 + $0x24] sm:$0xf]
        %v3498 = vld [vmem:[%s3487 + $0x28] sm:$0xf]
        %v3499 = vld [vmem:[%s3487 + $0x2c] sm:$0xf]
        %v3500 = vld [vmem:[%s3487 + $0x30] sm:$0xf]
        %v3501 = vld [vmem:[%s3487 + $0x34] sm:$0xf]
        %v3502 = vld [vmem:[%s3487 + $0x38] sm:$0xf]
        %v3503 = vld [vmem:[%s3487 + $0x3c] sm:$0xf]
        %v3504 = vunpack.c.l.b16 %v3388
        %v3505 = vunpack.c.l.b16 %v3402
        %v3506 = vunpack.c.l.b16 %v3416
        %v3507 = vunpack.c.l.b16 %v3430
        %v3508 = vunpack.c.l.b16 %v3444
        %v3509 = vunpack.c.l.b16 %v3458
        %v3510 = vunpack.c.l.b16 %v3472
        %v3511 = vunpack.c.l.b16 %v3486
        %v3512 = vpack.c.b16 %v3505, %v3504
        %v3513 = vpack.c.b16 %v3507, %v3506
        %v3514 = vpack.c.b16 %v3509, %v3508
        %v3515 = vpack.c.b16 %v3511, %v3510
        %v3536 = vunpack.c.l.b16 %v3488
        %v3537 = vunpack.c.l.b16 %v3489
        %v3538 = vunpack.c.l.b16 %v3490
        %v3539 = vunpack.c.l.b16 %v3491
        %v3540 = vunpack.c.l.b16 %v3492
        %v3541 = vunpack.c.l.b16 %v3493
        %v3542 = vunpack.c.l.b16 %v3494
        %v3543 = vunpack.c.l.b16 %v3495
        %v3544 = vunpack.c.l.b16 %v3496
        %v3545 = vunpack.c.l.b16 %v3497
        %v3546 = vunpack.c.l.b16 %v3498
        %v3547 = vunpack.c.l.b16 %v3499
        %v3548 = vunpack.c.l.b16 %v3500
        %v3549 = vunpack.c.l.b16 %v3501
        %v3550 = vunpack.c.l.b16 %v3502
        %v3551 = vunpack.c.l.b16 %v3503
        %v3552 = vpack.c.b16 %v3537, %v3536
        %v3553 = vpack.c.b16 %v3539, %v3538
        %v3554 = vpack.c.b16 %v3541, %v3540
        %v3555 = vpack.c.b16 %v3543, %v3542
        %v3556 = vpack.c.b16 %v3545, %v3544
        %v3557 = vpack.c.b16 %v3547, %v3546
        %v3558 = vpack.c.b16 %v3549, %v3548
        %v3559 = vpack.c.b16 %v3551, %v3550
        %3568 = vmatpush.bf16.msra.mxu0 %v3559
        %3569 = vmatpush.bf16.msra.mxu0 %v3558
        %3570 = vmatpush.bf16.msra.mxu0 %v3557
        %3571 = vmatpush.bf16.msra.mxu0 %v3556
        %3572 = vmatpush.bf16.msra.mxu0 %v3555
        %3573 = vmatpush.bf16.msra.mxu0 %v3554
        %3574 = vmatpush.bf16.msra.mxu0 %v3553
        %3575 = vmatpush.bf16.msra.mxu0 %v3552
        %3576 = vmatmul.bf16.gmra.mxu0 %v3512
        %v3577 = vpop.f32.mrf.mxu0
        %v3578 = vadd.f32 0.0, %v3577
        %v3579 = vpop.f32.mrf.mxu0
        %v3580 = vadd.f32 0.0, %v3579
        %3581 = vmatmul.bf16.gmra.mxu0 %v3513
        %v3582 = vpop.f32.mrf.mxu0
        %v3583 = vadd.f32 0.0, %v3582
        %v3584 = vpop.f32.mrf.mxu0
        %v3585 = vadd.f32 0.0, %v3584
        %3586 = vmatmul.bf16.gmra.mxu0 %v3514
        %v3587 = vpop.f32.mrf.mxu0
        %v3588 = vadd.f32 0.0, %v3587
        %v3589 = vpop.f32.mrf.mxu0
        %v3590 = vadd.f32 0.0, %v3589
        %3591 = vmatmul.bf16.gmra.mxu0 %v3515
        %v3592 = vpop.f32.mrf.mxu0
        %v3593 = vadd.f32 0.0, %v3592
        %v3594 = vpop.f32.mrf.mxu0
        %v3595 = vadd.f32 0.0, %v3594
        %3596 = vdwg.mxu0
        %v3597 = vadd.f32 %v3351, %v3578
        %v3598 = vadd.f32 %v3352, %v3580
        %v3599 = vadd.f32 %v3353, %v3583
        %v3600 = vadd.f32 %v3354, %v3585
        %v3601 = vadd.f32 %v3355, %v3588
        %v3602 = vadd.f32 %v3356, %v3590
        %v3603 = vadd.f32 %v3357, %v3593
        %v3604 = vadd.f32 %v3358, %v3595
        %v3605 = vld [vmem:[%s3224] sm:$0xe]
        %v3606 = vld [vmem:[%s3224 + $0x8] sm:$0xe]
        %v3607 = vld [vmem:[%s3224 + $0x10] sm:$0xe]
        %v3608 = vld [vmem:[%s3224 + $0x18] sm:$0xe]
        %v3609 = vld [vmem:[%s3224 + $0x20] sm:$0xe]
        %v3610 = vld [vmem:[%s3224 + $0x28] sm:$0xe]
        %v3611 = vld [vmem:[%s3224 + $0x30] sm:$0xe]
        %v3612 = vld [vmem:[%s3224 + $0x38] sm:$0xe]
        %v3629 = vrot.slane %v3605, 5
        %v3630 = vrot.slane %v3629, 4
        %v3631 = vrot.slane %v3360, 5
        %v3632 = vsel %vm854, %v3630, %v3631
        %v3633 = vrot.slane %v3606, 5
        %v3634 = vrot.slane %v3633, 4
        %v3635 = vrot.slane %v3362, 5
        %v3636 = vsel %vm854, %v3634, %v3635
        %v3637 = vrot.slane %v3607, 5
        %v3638 = vrot.slane %v3637, 4
        %v3639 = vrot.slane %v3364, 5
        %v3640 = vsel %vm854, %v3638, %v3639
        %v3641 = vrot.slane %v3608, 5
        %v3642 = vrot.slane %v3641, 4
        %v3643 = vrot.slane %v3366, 5
        %v3644 = vsel %vm854, %v3642, %v3643
        %v3645 = vrot.slane %v3609, 5
        %v3646 = vrot.slane %v3645, 4
        %v3647 = vrot.slane %v3368, 5
        %v3648 = vsel %vm854, %v3646, %v3647
        %v3649 = vrot.slane %v3610, 5
        %v3650 = vrot.slane %v3649, 4
        %v3651 = vrot.slane %v3370, 5
        %v3652 = vsel %vm854, %v3650, %v3651
        %v3653 = vrot.slane %v3611, 5
        %v3654 = vrot.slane %v3653, 4
        %v3655 = vrot.slane %v3372, 5
        %v3656 = vsel %vm854, %v3654, %v3655
        %v3657 = vrot.slane %v3612, 5
        %v3658 = vrot.slane %v3657, 4
        %v3659 = vrot.slane %v3374, 5
        %v3660 = vsel %vm854, %v3658, %v3659
        %s3661 = scalar_lea.vmem [#allocation2], 1088
        %v3662 = vld [vmem:[%s3661] sm:$0xf]
        %v3663 = vld [vmem:[%s3661 + $0x4] sm:$0xf]
        %v3664 = vld [vmem:[%s3661 + $0x8] sm:$0xf]
        %v3665 = vld [vmem:[%s3661 + $0xc] sm:$0xf]
        %v3666 = vld [vmem:[%s3661 + $0x10] sm:$0xf]
        %v3667 = vld [vmem:[%s3661 + $0x14] sm:$0xf]
        %v3668 = vld [vmem:[%s3661 + $0x18] sm:$0xf]
        %v3669 = vld [vmem:[%s3661 + $0x1c] sm:$0xf]
        %v3670 = vld [vmem:[%s3661 + $0x20] sm:$0xf]
        %v3671 = vld [vmem:[%s3661 + $0x24] sm:$0xf]
        %v3672 = vld [vmem:[%s3661 + $0x28] sm:$0xf]
        %v3673 = vld [vmem:[%s3661 + $0x2c] sm:$0xf]
        %v3674 = vld [vmem:[%s3661 + $0x30] sm:$0xf]
        %v3675 = vld [vmem:[%s3661 + $0x34] sm:$0xf]
        %v3676 = vld [vmem:[%s3661 + $0x38] sm:$0xf]
        %v3677 = vld [vmem:[%s3661 + $0x3c] sm:$0xf]
        %v3678 = vunpack.c.l.b16 %v3632
        %v3679 = vunpack.c.l.b16 %v3636
        %v3680 = vunpack.c.l.b16 %v3640
        %v3681 = vunpack.c.l.b16 %v3644
        %v3682 = vunpack.c.l.b16 %v3648
        %v3683 = vunpack.c.l.b16 %v3652
        %v3684 = vunpack.c.l.b16 %v3656
        %v3685 = vunpack.c.l.b16 %v3660
        %v3686 = vpack.c.b16 %v3679, %v3678
        %v3687 = vpack.c.b16 %v3681, %v3680
        %v3688 = vpack.c.b16 %v3683, %v3682
        %v3689 = vpack.c.b16 %v3685, %v3684
        %v3710 = vunpack.c.l.b16 %v3662
        %v3711 = vunpack.c.l.b16 %v3663
        %v3712 = vunpack.c.l.b16 %v3664
        %v3713 = vunpack.c.l.b16 %v3665
        %v3714 = vunpack.c.l.b16 %v3666
        %v3715 = vunpack.c.l.b16 %v3667
        %v3716 = vunpack.c.l.b16 %v3668
        %v3717 = vunpack.c.l.b16 %v3669
        %v3718 = vunpack.c.l.b16 %v3670
        %v3719 = vunpack.c.l.b16 %v3671
        %v3720 = vunpack.c.l.b16 %v3672
        %v3721 = vunpack.c.l.b16 %v3673
        %v3722 = vunpack.c.l.b16 %v3674
        %v3723 = vunpack.c.l.b16 %v3675
        %v3724 = vunpack.c.l.b16 %v3676
        %v3725 = vunpack.c.l.b16 %v3677
        %v3726 = vpack.c.b16 %v3711, %v3710
        %v3727 = vpack.c.b16 %v3713, %v3712
        %v3728 = vpack.c.b16 %v3715, %v3714
        %v3729 = vpack.c.b16 %v3717, %v3716
        %v3730 = vpack.c.b16 %v3719, %v3718
        %v3731 = vpack.c.b16 %v3721, %v3720
        %v3732 = vpack.c.b16 %v3723, %v3722
        %v3733 = vpack.c.b16 %v3725, %v3724
        %3742 = vmatpush.bf16.msra.mxu0 %v3733
        %3743 = vmatpush.bf16.msra.mxu0 %v3732
        %3744 = vmatpush.bf16.msra.mxu0 %v3731
        %3745 = vmatpush.bf16.msra.mxu0 %v3730
        %3746 = vmatpush.bf16.msra.mxu0 %v3729
        %3747 = vmatpush.bf16.msra.mxu0 %v3728
        %3748 = vmatpush.bf16.msra.mxu0 %v3727
        %3749 = vmatpush.bf16.msra.mxu0 %v3726
        %3750 = vmatmul.bf16.gmra.mxu0 %v3686
        %v3751 = vpop.f32.mrf.mxu0
        %v3752 = vadd.f32 0.0, %v3751
        %v3753 = vpop.f32.mrf.mxu0
        %v3754 = vadd.f32 0.0, %v3753
        %3755 = vmatmul.bf16.gmra.mxu0 %v3687
        %v3756 = vpop.f32.mrf.mxu0
        %v3757 = vadd.f32 0.0, %v3756
        %v3758 = vpop.f32.mrf.mxu0
        %v3759 = vadd.f32 0.0, %v3758
        %3760 = vmatmul.bf16.gmra.mxu0 %v3688
        %v3761 = vpop.f32.mrf.mxu0
        %v3762 = vadd.f32 0.0, %v3761
        %v3763 = vpop.f32.mrf.mxu0
        %v3764 = vadd.f32 0.0, %v3763
        %3765 = vmatmul.bf16.gmra.mxu0 %v3689
        %v3766 = vpop.f32.mrf.mxu0
        %v3767 = vadd.f32 0.0, %v3766
        %v3768 = vpop.f32.mrf.mxu0
        %v3769 = vadd.f32 0.0, %v3768
        %3770 = vdwg.mxu0
        %v3771 = vadd.f32 %v3597, %v3752
        %v3772 = vadd.f32 %v3598, %v3754
        %v3773 = vadd.f32 %v3599, %v3757
        %v3774 = vadd.f32 %v3600, %v3759
        %v3775 = vadd.f32 %v3601, %v3762
        %v3776 = vadd.f32 %v3602, %v3764
        %v3777 = vadd.f32 %v3603, %v3767
        %v3778 = vadd.f32 %v3604, %v3769
        %v3779 = vld [vmem:[%s443] sm:$0xf]
        %v3780 = vld [vmem:[%s443 + $0x8] sm:$0xf]
        %v3781 = vld [vmem:[%s443 + $0x10] sm:$0xf]
        %v3782 = vld [vmem:[%s443 + $0x18] sm:$0xf]
        %v3783 = vld [vmem:[%s443 + $0x20] sm:$0xf]
        %v3784 = vld [vmem:[%s443 + $0x28] sm:$0xf]
        %v3785 = vld [vmem:[%s443 + $0x30] sm:$0xf]
        %v3786 = vld [vmem:[%s443 + $0x38] sm:$0xf]
        %s3787 = scalar_lea.vmem [#allocation2], 1152
        %v3788 = vld [vmem:[%s3787] sm:$0xf]
        %v3789 = vld [vmem:[%s3787 + $0x4] sm:$0xf]
        %v3790 = vld [vmem:[%s3787 + $0x8] sm:$0xf]
        %v3791 = vld [vmem:[%s3787 + $0xc] sm:$0xf]
        %v3792 = vld [vmem:[%s3787 + $0x10] sm:$0xf]
        %v3793 = vld [vmem:[%s3787 + $0x14] sm:$0xf]
        %v3794 = vld [vmem:[%s3787 + $0x18] sm:$0xf]
        %v3795 = vld [vmem:[%s3787 + $0x1c] sm:$0xf]
        %v3796 = vld [vmem:[%s3787 + $0x20] sm:$0xf]
        %v3797 = vld [vmem:[%s3787 + $0x24] sm:$0xf]
        %v3798 = vld [vmem:[%s3787 + $0x28] sm:$0xf]
        %v3799 = vld [vmem:[%s3787 + $0x2c] sm:$0xf]
        %v3800 = vld [vmem:[%s3787 + $0x30] sm:$0xf]
        %v3801 = vld [vmem:[%s3787 + $0x34] sm:$0xf]
        %v3802 = vld [vmem:[%s3787 + $0x38] sm:$0xf]
        %v3803 = vld [vmem:[%s3787 + $0x3c] sm:$0xf]
        %v3812 = vunpack.c.l.b16 %v3779
        %v3813 = vunpack.c.l.b16 %v3780
        %v3814 = vunpack.c.l.b16 %v3781
        %v3815 = vunpack.c.l.b16 %v3782
        %v3816 = vunpack.c.l.b16 %v3783
        %v3817 = vunpack.c.l.b16 %v3784
        %v3818 = vunpack.c.l.b16 %v3785
        %v3819 = vunpack.c.l.b16 %v3786
        %v3820 = vpack.c.b16 %v3813, %v3812
        %v3821 = vpack.c.b16 %v3815, %v3814
        %v3822 = vpack.c.b16 %v3817, %v3816
        %v3823 = vpack.c.b16 %v3819, %v3818
        %v3844 = vunpack.c.l.b16 %v3788
        %v3845 = vunpack.c.l.b16 %v3789
        %v3846 = vunpack.c.l.b16 %v3790
        %v3847 = vunpack.c.l.b16 %v3791
        %v3848 = vunpack.c.l.b16 %v3792
        %v3849 = vunpack.c.l.b16 %v3793
        %v3850 = vunpack.c.l.b16 %v3794
        %v3851 = vunpack.c.l.b16 %v3795
        %v3852 = vunpack.c.l.b16 %v3796
        %v3853 = vunpack.c.l.b16 %v3797
        %v3854 = vunpack.c.l.b16 %v3798
        %v3855 = vunpack.c.l.b16 %v3799
        %v3856 = vunpack.c.l.b16 %v3800
        %v3857 = vunpack.c.l.b16 %v3801
        %v3858 = vunpack.c.l.b16 %v3802
        %v3859 = vunpack.c.l.b16 %v3803
        %v3860 = vpack.c.b16 %v3845, %v3844
        %v3861 = vpack.c.b16 %v3847, %v3846
        %v3862 = vpack.c.b16 %v3849, %v3848
        %v3863 = vpack.c.b16 %v3851, %v3850
        %v3864 = vpack.c.b16 %v3853, %v3852
        %v3865 = vpack.c.b16 %v3855, %v3854
        %v3866 = vpack.c.b16 %v3857, %v3856
        %v3867 = vpack.c.b16 %v3859, %v3858
        %3876 = vmatpush.bf16.msra.mxu0 %v3867
        %3877 = vmatpush.bf16.msra.mxu0 %v3866
        %3878 = vmatpush.bf16.msra.mxu0 %v3865
        %3879 = vmatpush.bf16.msra.mxu0 %v3864
        %3880 = vmatpush.bf16.msra.mxu0 %v3863
        %3881 = vmatpush.bf16.msra.mxu0 %v3862
        %3882 = vmatpush.bf16.msra.mxu0 %v3861
        %3883 = vmatpush.bf16.msra.mxu0 %v3860
        %3884 = vmatmul.bf16.gmra.mxu0 %v3820
        %v3885 = vpop.f32.mrf.mxu0
        %v3886 = vadd.f32 0.0, %v3885
        %v3887 = vpop.f32.mrf.mxu0
        %v3888 = vadd.f32 0.0, %v3887
        %3889 = vmatmul.bf16.gmra.mxu0 %v3821
        %v3890 = vpop.f32.mrf.mxu0
        %v3891 = vadd.f32 0.0, %v3890
        %v3892 = vpop.f32.mrf.mxu0
        %v3893 = vadd.f32 0.0, %v3892
        %3894 = vmatmul.bf16.gmra.mxu0 %v3822
        %v3895 = vpop.f32.mrf.mxu0
        %v3896 = vadd.f32 0.0, %v3895
        %v3897 = vpop.f32.mrf.mxu0
        %v3898 = vadd.f32 0.0, %v3897
        %3899 = vmatmul.bf16.gmra.mxu0 %v3823
        %v3900 = vpop.f32.mrf.mxu0
        %v3901 = vadd.f32 0.0, %v3900
        %v3902 = vpop.f32.mrf.mxu0
        %v3903 = vadd.f32 0.0, %v3902
        %3904 = vdwg.mxu0
        %v3905 = vadd.f32 %v3771, %v3886
        %v3906 = vadd.f32 %v3772, %v3888
        %v3907 = vadd.f32 %v3773, %v3891
        %v3908 = vadd.f32 %v3774, %v3893
        %v3909 = vadd.f32 %v3775, %v3896
        %v3910 = vadd.f32 %v3776, %v3898
        %v3911 = vadd.f32 %v3777, %v3901
        %v3912 = vadd.f32 %v3778, %v3903
        %v3913 = vld [vmem:[%s443] sm:$0xf]
        %v3914 = vld [vmem:[%s443 + $0x4] sm:$0x1]
        %v3915 = vld [vmem:[%s443 + $0x8] sm:$0xf]
        %v3916 = vld [vmem:[%s443 + $0xc] sm:$0x1]
        %v3917 = vld [vmem:[%s443 + $0x10] sm:$0xf]
        %v3918 = vld [vmem:[%s443 + $0x14] sm:$0x1]
        %v3919 = vld [vmem:[%s443 + $0x18] sm:$0xf]
        %v3920 = vld [vmem:[%s443 + $0x1c] sm:$0x1]
        %v3921 = vld [vmem:[%s443 + $0x20] sm:$0xf]
        %v3922 = vld [vmem:[%s443 + $0x24] sm:$0x1]
        %v3923 = vld [vmem:[%s443 + $0x28] sm:$0xf]
        %v3924 = vld [vmem:[%s443 + $0x2c] sm:$0x1]
        %v3925 = vld [vmem:[%s443 + $0x30] sm:$0xf]
        %v3926 = vld [vmem:[%s443 + $0x34] sm:$0x1]
        %v3927 = vld [vmem:[%s443 + $0x38] sm:$0xf]
        %v3928 = vld [vmem:[%s443 + $0x3c] sm:$0x1]
        %v3930 = vshrl.u32 %v3913, 16
        %v3932 = vrot.slane %v3930, 4
        %v3933 = vshll.u32 %v3913, 16
        %v3935 = vrot.slane %v3933, 5
        %v3936 = vor.u32 %v3932, %v3935
        %v3937 = vrot.slane %v3936, 4
        %v3939 = vshll.u32 %v3914, 16
        %v3941 = vrot.slane %v3939, 5
        %v3942 = vsel %vm504, %v3937, %v3941
        %v3944 = vshrl.u32 %v3915, 16
        %v3946 = vrot.slane %v3944, 4
        %v3947 = vshll.u32 %v3915, 16
        %v3949 = vrot.slane %v3947, 5
        %v3950 = vor.u32 %v3946, %v3949
        %v3951 = vrot.slane %v3950, 4
        %v3953 = vshll.u32 %v3916, 16
        %v3955 = vrot.slane %v3953, 5
        %v3956 = vsel %vm504, %v3951, %v3955
        %v3958 = vshrl.u32 %v3917, 16
        %v3960 = vrot.slane %v3958, 4
        %v3961 = vshll.u32 %v3917, 16
        %v3963 = vrot.slane %v3961, 5
        %v3964 = vor.u32 %v3960, %v3963
        %v3965 = vrot.slane %v3964, 4
        %v3967 = vshll.u32 %v3918, 16
        %v3969 = vrot.slane %v3967, 5
        %v3970 = vsel %vm504, %v3965, %v3969
        %v3972 = vshrl.u32 %v3919, 16
        %v3974 = vrot.slane %v3972, 4
        %v3975 = vshll.u32 %v3919, 16
        %v3977 = vrot.slane %v3975, 5
        %v3978 = vor.u32 %v3974, %v3977
        %v3979 = vrot.slane %v3978, 4
        %v3981 = vshll.u32 %v3920, 16
        %v3983 = vrot.slane %v3981, 5
        %v3984 = vsel %vm504, %v3979, %v3983
        %v3986 = vshrl.u32 %v3921, 16
        %v3988 = vrot.slane %v3986, 4
        %v3989 = vshll.u32 %v3921, 16
        %v3991 = vrot.slane %v3989, 5
        %v3992 = vor.u32 %v3988, %v3991
        %v3993 = vrot.slane %v3992, 4
        %v3995 = vshll.u32 %v3922, 16
        %v3997 = vrot.slane %v3995, 5
        %v3998 = vsel %vm504, %v3993, %v3997
        %v4000 = vshrl.u32 %v3923, 16
        %v4002 = vrot.slane %v4000, 4
        %v4003 = vshll.u32 %v3923, 16
        %v4005 = vrot.slane %v4003, 5
        %v4006 = vor.u32 %v4002, %v4005
        %v4007 = vrot.slane %v4006, 4
        %v4009 = vshll.u32 %v3924, 16
        %v4011 = vrot.slane %v4009, 5
        %v4012 = vsel %vm504, %v4007, %v4011
        %v4014 = vshrl.u32 %v3925, 16
        %v4016 = vrot.slane %v4014, 4
        %v4017 = vshll.u32 %v3925, 16
        %v4019 = vrot.slane %v4017, 5
        %v4020 = vor.u32 %v4016, %v4019
        %v4021 = vrot.slane %v4020, 4
        %v4023 = vshll.u32 %v3926, 16
        %v4025 = vrot.slane %v4023, 5
        %v4026 = vsel %vm504, %v4021, %v4025
        %v4028 = vshrl.u32 %v3927, 16
        %v4030 = vrot.slane %v4028, 4
        %v4031 = vshll.u32 %v3927, 16
        %v4033 = vrot.slane %v4031, 5
        %v4034 = vor.u32 %v4030, %v4033
        %v4035 = vrot.slane %v4034, 4
        %v4037 = vshll.u32 %v3928, 16
        %v4039 = vrot.slane %v4037, 5
        %v4040 = vsel %vm504, %v4035, %v4039
        %s4041 = scalar_lea.vmem [#allocation2], 1216
        %v4042 = vld [vmem:[%s4041] sm:$0xf]
        %v4043 = vld [vmem:[%s4041 + $0x4] sm:$0xf]
        %v4044 = vld [vmem:[%s4041 + $0x8] sm:$0xf]
        %v4045 = vld [vmem:[%s4041 + $0xc] sm:$0xf]
        %v4046 = vld [vmem:[%s4041 + $0x10] sm:$0xf]
        %v4047 = vld [vmem:[%s4041 + $0x14] sm:$0xf]
        %v4048 = vld [vmem:[%s4041 + $0x18] sm:$0xf]
        %v4049 = vld [vmem:[%s4041 + $0x1c] sm:$0xf]
        %v4050 = vld [vmem:[%s4041 + $0x20] sm:$0xf]
        %v4051 = vld [vmem:[%s4041 + $0x24] sm:$0xf]
        %v4052 = vld [vmem:[%s4041 + $0x28] sm:$0xf]
        %v4053 = vld [vmem:[%s4041 + $0x2c] sm:$0xf]
        %v4054 = vld [vmem:[%s4041 + $0x30] sm:$0xf]
        %v4055 = vld [vmem:[%s4041 + $0x34] sm:$0xf]
        %v4056 = vld [vmem:[%s4041 + $0x38] sm:$0xf]
        %v4057 = vld [vmem:[%s4041 + $0x3c] sm:$0xf]
        %v4058 = vunpack.c.l.b16 %v3942
        %v4059 = vunpack.c.l.b16 %v3956
        %v4060 = vunpack.c.l.b16 %v3970
        %v4061 = vunpack.c.l.b16 %v3984
        %v4062 = vunpack.c.l.b16 %v3998
        %v4063 = vunpack.c.l.b16 %v4012
        %v4064 = vunpack.c.l.b16 %v4026
        %v4065 = vunpack.c.l.b16 %v4040
        %v4066 = vpack.c.b16 %v4059, %v4058
        %v4067 = vpack.c.b16 %v4061, %v4060
        %v4068 = vpack.c.b16 %v4063, %v4062
        %v4069 = vpack.c.b16 %v4065, %v4064
        %v4090 = vunpack.c.l.b16 %v4042
        %v4091 = vunpack.c.l.b16 %v4043
        %v4092 = vunpack.c.l.b16 %v4044
        %v4093 = vunpack.c.l.b16 %v4045
        %v4094 = vunpack.c.l.b16 %v4046
        %v4095 = vunpack.c.l.b16 %v4047
        %v4096 = vunpack.c.l.b16 %v4048
        %v4097 = vunpack.c.l.b16 %v4049
        %v4098 = vunpack.c.l.b16 %v4050
        %v4099 = vunpack.c.l.b16 %v4051
        %v4100 = vunpack.c.l.b16 %v4052
        %v4101 = vunpack.c.l.b16 %v4053
        %v4102 = vunpack.c.l.b16 %v4054
        %v4103 = vunpack.c.l.b16 %v4055
        %v4104 = vunpack.c.l.b16 %v4056
        %v4105 = vunpack.c.l.b16 %v4057
        %v4106 = vpack.c.b16 %v4091, %v4090
        %v4107 = vpack.c.b16 %v4093, %v4092
        %v4108 = vpack.c.b16 %v4095, %v4094
        %v4109 = vpack.c.b16 %v4097, %v4096
        %v4110 = vpack.c.b16 %v4099, %v4098
        %v4111 = vpack.c.b16 %v4101, %v4100
        %v4112 = vpack.c.b16 %v4103, %v4102
        %v4113 = vpack.c.b16 %v4105, %v4104
        %4122 = vmatpush.bf16.msra.mxu0 %v4113
        %4123 = vmatpush.bf16.msra.mxu0 %v4112
        %4124 = vmatpush.bf16.msra.mxu0 %v4111
        %4125 = vmatpush.bf16.msra.mxu0 %v4110
        %4126 = vmatpush.bf16.msra.mxu0 %v4109
        %4127 = vmatpush.bf16.msra.mxu0 %v4108
        %4128 = vmatpush.bf16.msra.mxu0 %v4107
        %4129 = vmatpush.bf16.msra.mxu0 %v4106
        %4130 = vmatmul.bf16.gmra.mxu0 %v4066
        %v4131 = vpop.f32.mrf.mxu0
        %v4132 = vadd.f32 0.0, %v4131
        %v4133 = vpop.f32.mrf.mxu0
        %v4134 = vadd.f32 0.0, %v4133
        %4135 = vmatmul.bf16.gmra.mxu0 %v4067
        %v4136 = vpop.f32.mrf.mxu0
        %v4137 = vadd.f32 0.0, %v4136
        %v4138 = vpop.f32.mrf.mxu0
        %v4139 = vadd.f32 0.0, %v4138
        %4140 = vmatmul.bf16.gmra.mxu0 %v4068
        %v4141 = vpop.f32.mrf.mxu0
        %v4142 = vadd.f32 0.0, %v4141
        %v4143 = vpop.f32.mrf.mxu0
        %v4144 = vadd.f32 0.0, %v4143
        %4145 = vmatmul.bf16.gmra.mxu0 %v4069
        %v4146 = vpop.f32.mrf.mxu0
        %v4147 = vadd.f32 0.0, %v4146
        %v4148 = vpop.f32.mrf.mxu0
        %v4149 = vadd.f32 0.0, %v4148
        %4150 = vdwg.mxu0
        %v4151 = vadd.f32 %v3905, %v4132
        %v4152 = vadd.f32 %v3906, %v4134
        %v4153 = vadd.f32 %v3907, %v4137
        %v4154 = vadd.f32 %v3908, %v4139
        %v4155 = vadd.f32 %v3909, %v4142
        %v4156 = vadd.f32 %v3910, %v4144
        %v4157 = vadd.f32 %v3911, %v4147
        %v4158 = vadd.f32 %v3912, %v4149
        %v4159 = vld [vmem:[%s443] sm:$0xe]
        %v4160 = vld [vmem:[%s443 + $0x8] sm:$0xe]
        %v4161 = vld [vmem:[%s443 + $0x10] sm:$0xe]
        %v4162 = vld [vmem:[%s443 + $0x18] sm:$0xe]
        %v4163 = vld [vmem:[%s443 + $0x20] sm:$0xe]
        %v4164 = vld [vmem:[%s443 + $0x28] sm:$0xe]
        %v4165 = vld [vmem:[%s443 + $0x30] sm:$0xe]
        %v4166 = vld [vmem:[%s443 + $0x38] sm:$0xe]
        %v4183 = vrot.slane %v4159, 5
        %v4184 = vrot.slane %v4183, 4
        %v4185 = vrot.slane %v3914, 5
        %v4186 = vsel %vm854, %v4184, %v4185
        %v4187 = vrot.slane %v4160, 5
        %v4188 = vrot.slane %v4187, 4
        %v4189 = vrot.slane %v3916, 5
        %v4190 = vsel %vm854, %v4188, %v4189
        %v4191 = vrot.slane %v4161, 5
        %v4192 = vrot.slane %v4191, 4
        %v4193 = vrot.slane %v3918, 5
        %v4194 = vsel %vm854, %v4192, %v4193
        %v4195 = vrot.slane %v4162, 5
        %v4196 = vrot.slane %v4195, 4
        %v4197 = vrot.slane %v3920, 5
        %v4198 = vsel %vm854, %v4196, %v4197
        %v4199 = vrot.slane %v4163, 5
        %v4200 = vrot.slane %v4199, 4
        %v4201 = vrot.slane %v3922, 5
        %v4202 = vsel %vm854, %v4200, %v4201
        %v4203 = vrot.slane %v4164, 5
        %v4204 = vrot.slane %v4203, 4
        %v4205 = vrot.slane %v3924, 5
        %v4206 = vsel %vm854, %v4204, %v4205
        %v4207 = vrot.slane %v4165, 5
        %v4208 = vrot.slane %v4207, 4
        %v4209 = vrot.slane %v3926, 5
        %v4210 = vsel %vm854, %v4208, %v4209
        %v4211 = vrot.slane %v4166, 5
        %v4212 = vrot.slane %v4211, 4
        %v4213 = vrot.slane %v3928, 5
        %v4214 = vsel %vm854, %v4212, %v4213
        %s4215 = scalar_lea.vmem [#allocation2], 1280
        %v4216 = vld [vmem:[%s4215] sm:$0xf]
        %v4217 = vld [vmem:[%s4215 + $0x4] sm:$0xf]
        %v4218 = vld [vmem:[%s4215 + $0x8] sm:$0xf]
        %v4219 = vld [vmem:[%s4215 + $0xc] sm:$0xf]
        %v4220 = vld [vmem:[%s4215 + $0x10] sm:$0xf]
        %v4221 = vld [vmem:[%s4215 + $0x14] sm:$0xf]
        %v4222 = vld [vmem:[%s4215 + $0x18] sm:$0xf]
        %v4223 = vld [vmem:[%s4215 + $0x1c] sm:$0xf]
        %v4224 = vld [vmem:[%s4215 + $0x20] sm:$0xf]
        %v4225 = vld [vmem:[%s4215 + $0x24] sm:$0xf]
        %v4226 = vld [vmem:[%s4215 + $0x28] sm:$0xf]
        %v4227 = vld [vmem:[%s4215 + $0x2c] sm:$0xf]
        %v4228 = vld [vmem:[%s4215 + $0x30] sm:$0xf]
        %v4229 = vld [vmem:[%s4215 + $0x34] sm:$0xf]
        %v4230 = vld [vmem:[%s4215 + $0x38] sm:$0xf]
        %v4231 = vld [vmem:[%s4215 + $0x3c] sm:$0xf]
        %v4232 = vunpack.c.l.b16 %v4186
        %v4233 = vunpack.c.l.b16 %v4190
        %v4234 = vunpack.c.l.b16 %v4194
        %v4235 = vunpack.c.l.b16 %v4198
        %v4236 = vunpack.c.l.b16 %v4202
        %v4237 = vunpack.c.l.b16 %v4206
        %v4238 = vunpack.c.l.b16 %v4210
        %v4239 = vunpack.c.l.b16 %v4214
        %v4240 = vpack.c.b16 %v4233, %v4232
        %v4241 = vpack.c.b16 %v4235, %v4234
        %v4242 = vpack.c.b16 %v4237, %v4236
        %v4243 = vpack.c.b16 %v4239, %v4238
        %v4264 = vunpack.c.l.b16 %v4216
        %v4265 = vunpack.c.l.b16 %v4217
        %v4266 = vunpack.c.l.b16 %v4218
        %v4267 = vunpack.c.l.b16 %v4219
        %v4268 = vunpack.c.l.b16 %v4220
        %v4269 = vunpack.c.l.b16 %v4221
        %v4270 = vunpack.c.l.b16 %v4222
        %v4271 = vunpack.c.l.b16 %v4223
        %v4272 = vunpack.c.l.b16 %v4224
        %v4273 = vunpack.c.l.b16 %v4225
        %v4274 = vunpack.c.l.b16 %v4226
        %v4275 = vunpack.c.l.b16 %v4227
        %v4276 = vunpack.c.l.b16 %v4228
        %v4277 = vunpack.c.l.b16 %v4229
        %v4278 = vunpack.c.l.b16 %v4230
        %v4279 = vunpack.c.l.b16 %v4231
        %v4280 = vpack.c.b16 %v4265, %v4264
        %v4281 = vpack.c.b16 %v4267, %v4266
        %v4282 = vpack.c.b16 %v4269, %v4268
        %v4283 = vpack.c.b16 %v4271, %v4270
        %v4284 = vpack.c.b16 %v4273, %v4272
        %v4285 = vpack.c.b16 %v4275, %v4274
        %v4286 = vpack.c.b16 %v4277, %v4276
        %v4287 = vpack.c.b16 %v4279, %v4278
        %4296 = vmatpush.bf16.msra.mxu0 %v4287
        %4297 = vmatpush.bf16.msra.mxu0 %v4286
        %4298 = vmatpush.bf16.msra.mxu0 %v4285
        %4299 = vmatpush.bf16.msra.mxu0 %v4284
        %4300 = vmatpush.bf16.msra.mxu0 %v4283
        %4301 = vmatpush.bf16.msra.mxu0 %v4282
        %4302 = vmatpush.bf16.msra.mxu0 %v4281
        %4303 = vmatpush.bf16.msra.mxu0 %v4280
        %4304 = vmatmul.bf16.gmra.mxu0 %v4240
        %v4305 = vpop.f32.mrf.mxu0
        %v4306 = vadd.f32 0.0, %v4305
        %v4307 = vpop.f32.mrf.mxu0
        %v4308 = vadd.f32 0.0, %v4307
        %4309 = vmatmul.bf16.gmra.mxu0 %v4241
        %v4310 = vpop.f32.mrf.mxu0
        %v4311 = vadd.f32 0.0, %v4310
        %v4312 = vpop.f32.mrf.mxu0
        %v4313 = vadd.f32 0.0, %v4312
        %4314 = vmatmul.bf16.gmra.mxu0 %v4242
        %v4315 = vpop.f32.mrf.mxu0
        %v4316 = vadd.f32 0.0, %v4315
        %v4317 = vpop.f32.mrf.mxu0
        %v4318 = vadd.f32 0.0, %v4317
        %4319 = vmatmul.bf16.gmra.mxu0 %v4243
        %v4320 = vpop.f32.mrf.mxu0
        %v4321 = vadd.f32 0.0, %v4320
        %v4322 = vpop.f32.mrf.mxu0
        %v4323 = vadd.f32 0.0, %v4322
        %4324 = vdwg.mxu0
        %v4325 = vadd.f32 %v4151, %v4306
        %v4326 = vadd.f32 %v4152, %v4308
        %v4327 = vadd.f32 %v4153, %v4311
        %v4328 = vadd.f32 %v4154, %v4313
        %v4329 = vadd.f32 %v4155, %v4316
        %v4330 = vadd.f32 %v4156, %v4318
        %v4331 = vadd.f32 %v4157, %v4321
        %v4332 = vadd.f32 %v4158, %v4323
        %s4333 = scalar_lea.vmem %s443, 8
        %v4334 = vld [vmem:[%s4333] sm:$0xf]
        %v4335 = vld [vmem:[%s4333 + $0x8] sm:$0xf]
        %v4336 = vld [vmem:[%s4333 + $0x10] sm:$0xf]
        %v4337 = vld [vmem:[%s4333 + $0x18] sm:$0xf]
        %v4338 = vld [vmem:[%s4333 + $0x20] sm:$0xf]
        %v4339 = vld [vmem:[%s4333 + $0x28] sm:$0xf]
        %v4340 = vld [vmem:[%s4333 + $0x30] sm:$0xf]
        %v4341 = vld [vmem:[%s4333 + $0x38] sm:$0xf]
        %s4342 = scalar_lea.vmem [#allocation2], 1344
        %v4343 = vld [vmem:[%s4342] sm:$0xf]
        %v4344 = vld [vmem:[%s4342 + $0x4] sm:$0xf]
        %v4345 = vld [vmem:[%s4342 + $0x8] sm:$0xf]
        %v4346 = vld [vmem:[%s4342 + $0xc] sm:$0xf]
        %v4347 = vld [vmem:[%s4342 + $0x10] sm:$0xf]
        %v4348 = vld [vmem:[%s4342 + $0x14] sm:$0xf]
        %v4349 = vld [vmem:[%s4342 + $0x18] sm:$0xf]
        %v4350 = vld [vmem:[%s4342 + $0x1c] sm:$0xf]
        %v4351 = vld [vmem:[%s4342 + $0x20] sm:$0xf]
        %v4352 = vld [vmem:[%s4342 + $0x24] sm:$0xf]
        %v4353 = vld [vmem:[%s4342 + $0x28] sm:$0xf]
        %v4354 = vld [vmem:[%s4342 + $0x2c] sm:$0xf]
        %v4355 = vld [vmem:[%s4342 + $0x30] sm:$0xf]
        %v4356 = vld [vmem:[%s4342 + $0x34] sm:$0xf]
        %v4357 = vld [vmem:[%s4342 + $0x38] sm:$0xf]
        %v4358 = vld [vmem:[%s4342 + $0x3c] sm:$0xf]
        %v4367 = vunpack.c.l.b16 %v4334
        %v4368 = vunpack.c.l.b16 %v4335
        %v4369 = vunpack.c.l.b16 %v4336
        %v4370 = vunpack.c.l.b16 %v4337
        %v4371 = vunpack.c.l.b16 %v4338
        %v4372 = vunpack.c.l.b16 %v4339
        %v4373 = vunpack.c.l.b16 %v4340
        %v4374 = vunpack.c.l.b16 %v4341
        %v4375 = vpack.c.b16 %v4368, %v4367
        %v4376 = vpack.c.b16 %v4370, %v4369
        %v4377 = vpack.c.b16 %v4372, %v4371
        %v4378 = vpack.c.b16 %v4374, %v4373
        %v4399 = vunpack.c.l.b16 %v4343
        %v4400 = vunpack.c.l.b16 %v4344
        %v4401 = vunpack.c.l.b16 %v4345
        %v4402 = vunpack.c.l.b16 %v4346
        %v4403 = vunpack.c.l.b16 %v4347
        %v4404 = vunpack.c.l.b16 %v4348
        %v4405 = vunpack.c.l.b16 %v4349
        %v4406 = vunpack.c.l.b16 %v4350
        %v4407 = vunpack.c.l.b16 %v4351
        %v4408 = vunpack.c.l.b16 %v4352
        %v4409 = vunpack.c.l.b16 %v4353
        %v4410 = vunpack.c.l.b16 %v4354
        %v4411 = vunpack.c.l.b16 %v4355
        %v4412 = vunpack.c.l.b16 %v4356
        %v4413 = vunpack.c.l.b16 %v4357
        %v4414 = vunpack.c.l.b16 %v4358
        %v4415 = vpack.c.b16 %v4400, %v4399
        %v4416 = vpack.c.b16 %v4402, %v4401
        %v4417 = vpack.c.b16 %v4404, %v4403
        %v4418 = vpack.c.b16 %v4406, %v4405
        %v4419 = vpack.c.b16 %v4408, %v4407
        %v4420 = vpack.c.b16 %v4410, %v4409
        %v4421 = vpack.c.b16 %v4412, %v4411
        %v4422 = vpack.c.b16 %v4414, %v4413
        %4431 = vmatpush.bf16.msra.mxu0 %v4422
        %4432 = vmatpush.bf16.msra.mxu0 %v4421
        %4433 = vmatpush.bf16.msra.mxu0 %v4420
        %4434 = vmatpush.bf16.msra.mxu0 %v4419
        %4435 = vmatpush.bf16.msra.mxu0 %v4418
        %4436 = vmatpush.bf16.msra.mxu0 %v4417
        %4437 = vmatpush.bf16.msra.mxu0 %v4416
        %4438 = vmatpush.bf16.msra.mxu0 %v4415
        %4439 = vmatmul.bf16.gmra.mxu0 %v4375
        %v4440 = vpop.f32.mrf.mxu0
        %v4441 = vadd.f32 0.0, %v4440
        %v4442 = vpop.f32.mrf.mxu0
        %v4443 = vadd.f32 0.0, %v4442
        %4444 = vmatmul.bf16.gmra.mxu0 %v4376
        %v4445 = vpop.f32.mrf.mxu0
        %v4446 = vadd.f32 0.0, %v4445
        %v4447 = vpop.f32.mrf.mxu0
        %v4448 = vadd.f32 0.0, %v4447
        %4449 = vmatmul.bf16.gmra.mxu0 %v4377
        %v4450 = vpop.f32.mrf.mxu0
        %v4451 = vadd.f32 0.0, %v4450
        %v4452 = vpop.f32.mrf.mxu0
        %v4453 = vadd.f32 0.0, %v4452
        %4454 = vmatmul.bf16.gmra.mxu0 %v4378
        %v4455 = vpop.f32.mrf.mxu0
        %v4456 = vadd.f32 0.0, %v4455
        %v4457 = vpop.f32.mrf.mxu0
        %v4458 = vadd.f32 0.0, %v4457
        %4459 = vdwg.mxu0
        %v4460 = vadd.f32 %v4325, %v4441
        %v4461 = vadd.f32 %v4326, %v4443
        %v4462 = vadd.f32 %v4327, %v4446
        %v4463 = vadd.f32 %v4328, %v4448
        %v4464 = vadd.f32 %v4329, %v4451
        %v4465 = vadd.f32 %v4330, %v4453
        %v4466 = vadd.f32 %v4331, %v4456
        %v4467 = vadd.f32 %v4332, %v4458
        %v4468 = vld [vmem:[%s4333] sm:$0xf]
        %v4469 = vld [vmem:[%s4333 + $0x4] sm:$0x1]
        %v4470 = vld [vmem:[%s4333 + $0x8] sm:$0xf]
        %v4471 = vld [vmem:[%s4333 + $0xc] sm:$0x1]
        %v4472 = vld [vmem:[%s4333 + $0x10] sm:$0xf]
        %v4473 = vld [vmem:[%s4333 + $0x14] sm:$0x1]
        %v4474 = vld [vmem:[%s4333 + $0x18] sm:$0xf]
        %v4475 = vld [vmem:[%s4333 + $0x1c] sm:$0x1]
        %v4476 = vld [vmem:[%s4333 + $0x20] sm:$0xf]
        %v4477 = vld [vmem:[%s4333 + $0x24] sm:$0x1]
        %v4478 = vld [vmem:[%s4333 + $0x28] sm:$0xf]
        %v4479 = vld [vmem:[%s4333 + $0x2c] sm:$0x1]
        %v4480 = vld [vmem:[%s4333 + $0x30] sm:$0xf]
        %v4481 = vld [vmem:[%s4333 + $0x34] sm:$0x1]
        %v4482 = vld [vmem:[%s4333 + $0x38] sm:$0xf]
        %v4483 = vld [vmem:[%s4333 + $0x3c] sm:$0x1]
        %v4485 = vshrl.u32 %v4468, 16
        %v4487 = vrot.slane %v4485, 4
        %v4488 = vshll.u32 %v4468, 16
        %v4490 = vrot.slane %v4488, 5
        %v4491 = vor.u32 %v4487, %v4490
        %v4492 = vrot.slane %v4491, 4
        %v4494 = vshll.u32 %v4469, 16
        %v4496 = vrot.slane %v4494, 5
        %v4497 = vsel %vm504, %v4492, %v4496
        %v4499 = vshrl.u32 %v4470, 16
        %v4501 = vrot.slane %v4499, 4
        %v4502 = vshll.u32 %v4470, 16
        %v4504 = vrot.slane %v4502, 5
        %v4505 = vor.u32 %v4501, %v4504
        %v4506 = vrot.slane %v4505, 4
        %v4508 = vshll.u32 %v4471, 16
        %v4510 = vrot.slane %v4508, 5
        %v4511 = vsel %vm504, %v4506, %v4510
        %v4513 = vshrl.u32 %v4472, 16
        %v4515 = vrot.slane %v4513, 4
        %v4516 = vshll.u32 %v4472, 16
        %v4518 = vrot.slane %v4516, 5
        %v4519 = vor.u32 %v4515, %v4518
        %v4520 = vrot.slane %v4519, 4
        %v4522 = vshll.u32 %v4473, 16
        %v4524 = vrot.slane %v4522, 5
        %v4525 = vsel %vm504, %v4520, %v4524
        %v4527 = vshrl.u32 %v4474, 16
        %v4529 = vrot.slane %v4527, 4
        %v4530 = vshll.u32 %v4474, 16
        %v4532 = vrot.slane %v4530, 5
        %v4533 = vor.u32 %v4529, %v4532
        %v4534 = vrot.slane %v4533, 4
        %v4536 = vshll.u32 %v4475, 16
        %v4538 = vrot.slane %v4536, 5
        %v4539 = vsel %vm504, %v4534, %v4538
        %v4541 = vshrl.u32 %v4476, 16
        %v4543 = vrot.slane %v4541, 4
        %v4544 = vshll.u32 %v4476, 16
        %v4546 = vrot.slane %v4544, 5
        %v4547 = vor.u32 %v4543, %v4546
        %v4548 = vrot.slane %v4547, 4
        %v4550 = vshll.u32 %v4477, 16
        %v4552 = vrot.slane %v4550, 5
        %v4553 = vsel %vm504, %v4548, %v4552
        %v4555 = vshrl.u32 %v4478, 16
        %v4557 = vrot.slane %v4555, 4
        %v4558 = vshll.u32 %v4478, 16
        %v4560 = vrot.slane %v4558, 5
        %v4561 = vor.u32 %v4557, %v4560
        %v4562 = vrot.slane %v4561, 4
        %v4564 = vshll.u32 %v4479, 16
        %v4566 = vrot.slane %v4564, 5
        %v4567 = vsel %vm504, %v4562, %v4566
        %v4569 = vshrl.u32 %v4480, 16
        %v4571 = vrot.slane %v4569, 4
        %v4572 = vshll.u32 %v4480, 16
        %v4574 = vrot.slane %v4572, 5
        %v4575 = vor.u32 %v4571, %v4574
        %v4576 = vrot.slane %v4575, 4
        %v4578 = vshll.u32 %v4481, 16
        %v4580 = vrot.slane %v4578, 5
        %v4581 = vsel %vm504, %v4576, %v4580
        %v4583 = vshrl.u32 %v4482, 16
        %v4585 = vrot.slane %v4583, 4
        %v4586 = vshll.u32 %v4482, 16
        %v4588 = vrot.slane %v4586, 5
        %v4589 = vor.u32 %v4585, %v4588
        %v4590 = vrot.slane %v4589, 4
        %v4592 = vshll.u32 %v4483, 16
        %v4594 = vrot.slane %v4592, 5
        %v4595 = vsel %vm504, %v4590, %v4594
        %s4596 = scalar_lea.vmem [#allocation2], 1408
        %v4597 = vld [vmem:[%s4596] sm:$0xf]
        %v4598 = vld [vmem:[%s4596 + $0x4] sm:$0xf]
        %v4599 = vld [vmem:[%s4596 + $0x8] sm:$0xf]
        %v4600 = vld [vmem:[%s4596 + $0xc] sm:$0xf]
        %v4601 = vld [vmem:[%s4596 + $0x10] sm:$0xf]
        %v4602 = vld [vmem:[%s4596 + $0x14] sm:$0xf]
        %v4603 = vld [vmem:[%s4596 + $0x18] sm:$0xf]
        %v4604 = vld [vmem:[%s4596 + $0x1c] sm:$0xf]
        %v4605 = vld [vmem:[%s4596 + $0x20] sm:$0xf]
        %v4606 = vld [vmem:[%s4596 + $0x24] sm:$0xf]
        %v4607 = vld [vmem:[%s4596 + $0x28] sm:$0xf]
        %v4608 = vld [vmem:[%s4596 + $0x2c] sm:$0xf]
        %v4609 = vld [vmem:[%s4596 + $0x30] sm:$0xf]
        %v4610 = vld [vmem:[%s4596 + $0x34] sm:$0xf]
        %v4611 = vld [vmem:[%s4596 + $0x38] sm:$0xf]
        %v4612 = vld [vmem:[%s4596 + $0x3c] sm:$0xf]
        %v4613 = vunpack.c.l.b16 %v4497
        %v4614 = vunpack.c.l.b16 %v4511
        %v4615 = vunpack.c.l.b16 %v4525
        %v4616 = vunpack.c.l.b16 %v4539
        %v4617 = vunpack.c.l.b16 %v4553
        %v4618 = vunpack.c.l.b16 %v4567
        %v4619 = vunpack.c.l.b16 %v4581
        %v4620 = vunpack.c.l.b16 %v4595
        %v4621 = vpack.c.b16 %v4614, %v4613
        %v4622 = vpack.c.b16 %v4616, %v4615
        %v4623 = vpack.c.b16 %v4618, %v4617
        %v4624 = vpack.c.b16 %v4620, %v4619
        %v4645 = vunpack.c.l.b16 %v4597
        %v4646 = vunpack.c.l.b16 %v4598
        %v4647 = vunpack.c.l.b16 %v4599
        %v4648 = vunpack.c.l.b16 %v4600
        %v4649 = vunpack.c.l.b16 %v4601
        %v4650 = vunpack.c.l.b16 %v4602
        %v4651 = vunpack.c.l.b16 %v4603
        %v4652 = vunpack.c.l.b16 %v4604
        %v4653 = vunpack.c.l.b16 %v4605
        %v4654 = vunpack.c.l.b16 %v4606
        %v4655 = vunpack.c.l.b16 %v4607
        %v4656 = vunpack.c.l.b16 %v4608
        %v4657 = vunpack.c.l.b16 %v4609
        %v4658 = vunpack.c.l.b16 %v4610
        %v4659 = vunpack.c.l.b16 %v4611
        %v4660 = vunpack.c.l.b16 %v4612
        %v4661 = vpack.c.b16 %v4646, %v4645
        %v4662 = vpack.c.b16 %v4648, %v4647
        %v4663 = vpack.c.b16 %v4650, %v4649
        %v4664 = vpack.c.b16 %v4652, %v4651
        %v4665 = vpack.c.b16 %v4654, %v4653
        %v4666 = vpack.c.b16 %v4656, %v4655
        %v4667 = vpack.c.b16 %v4658, %v4657
        %v4668 = vpack.c.b16 %v4660, %v4659
        %4677 = vmatpush.bf16.msra.mxu0 %v4668
        %4678 = vmatpush.bf16.msra.mxu0 %v4667
        %4679 = vmatpush.bf16.msra.mxu0 %v4666
        %4680 = vmatpush.bf16.msra.mxu0 %v4665
        %4681 = vmatpush.bf16.msra.mxu0 %v4664
        %4682 = vmatpush.bf16.msra.mxu0 %v4663
        %4683 = vmatpush.bf16.msra.mxu0 %v4662
        %4684 = vmatpush.bf16.msra.mxu0 %v4661
        %4685 = vmatmul.bf16.gmra.mxu0 %v4621
        %v4686 = vpop.f32.mrf.mxu0
        %v4687 = vadd.f32 0.0, %v4686
        %v4688 = vpop.f32.mrf.mxu0
        %v4689 = vadd.f32 0.0, %v4688
        %4690 = vmatmul.bf16.gmra.mxu0 %v4622
        %v4691 = vpop.f32.mrf.mxu0
        %v4692 = vadd.f32 0.0, %v4691
        %v4693 = vpop.f32.mrf.mxu0
        %v4694 = vadd.f32 0.0, %v4693
        %4695 = vmatmul.bf16.gmra.mxu0 %v4623
        %v4696 = vpop.f32.mrf.mxu0
        %v4697 = vadd.f32 0.0, %v4696
        %v4698 = vpop.f32.mrf.mxu0
        %v4699 = vadd.f32 0.0, %v4698
        %4700 = vmatmul.bf16.gmra.mxu0 %v4624
        %v4701 = vpop.f32.mrf.mxu0
        %v4702 = vadd.f32 0.0, %v4701
        %v4703 = vpop.f32.mrf.mxu0
        %v4704 = vadd.f32 0.0, %v4703
        %4705 = vdwg.mxu0
        %v4706 = vadd.f32 %v4460, %v4687
        %v4707 = vadd.f32 %v4461, %v4689
        %v4708 = vadd.f32 %v4462, %v4692
        %v4709 = vadd.f32 %v4463, %v4694
        %v4710 = vadd.f32 %v4464, %v4697
        %v4711 = vadd.f32 %v4465, %v4699
        %v4712 = vadd.f32 %v4466, %v4702
        %v4713 = vadd.f32 %v4467, %v4704
        %v4714 = vld [vmem:[%s4333] sm:$0xe]
        %v4715 = vld [vmem:[%s4333 + $0x8] sm:$0xe]
        %v4716 = vld [vmem:[%s4333 + $0x10] sm:$0xe]
        %v4717 = vld [vmem:[%s4333 + $0x18] sm:$0xe]
        %v4718 = vld [vmem:[%s4333 + $0x20] sm:$0xe]
        %v4719 = vld [vmem:[%s4333 + $0x28] sm:$0xe]
        %v4720 = vld [vmem:[%s4333 + $0x30] sm:$0xe]
        %v4721 = vld [vmem:[%s4333 + $0x38] sm:$0xe]
        %v4738 = vrot.slane %v4714, 5
        %v4739 = vrot.slane %v4738, 4
        %v4740 = vrot.slane %v4469, 5
        %v4741 = vsel %vm854, %v4739, %v4740
        %v4742 = vrot.slane %v4715, 5
        %v4743 = vrot.slane %v4742, 4
        %v4744 = vrot.slane %v4471, 5
        %v4745 = vsel %vm854, %v4743, %v4744
        %v4746 = vrot.slane %v4716, 5
        %v4747 = vrot.slane %v4746, 4
        %v4748 = vrot.slane %v4473, 5
        %v4749 = vsel %vm854, %v4747, %v4748
        %v4750 = vrot.slane %v4717, 5
        %v4751 = vrot.slane %v4750, 4
        %v4752 = vrot.slane %v4475, 5
        %v4753 = vsel %vm854, %v4751, %v4752
        %v4754 = vrot.slane %v4718, 5
        %v4755 = vrot.slane %v4754, 4
        %v4756 = vrot.slane %v4477, 5
        %v4757 = vsel %vm854, %v4755, %v4756
        %v4758 = vrot.slane %v4719, 5
        %v4759 = vrot.slane %v4758, 4
        %v4760 = vrot.slane %v4479, 5
        %v4761 = vsel %vm854, %v4759, %v4760
        %v4762 = vrot.slane %v4720, 5
        %v4763 = vrot.slane %v4762, 4
        %v4764 = vrot.slane %v4481, 5
        %v4765 = vsel %vm854, %v4763, %v4764
        %v4766 = vrot.slane %v4721, 5
        %v4767 = vrot.slane %v4766, 4
        %v4768 = vrot.slane %v4483, 5
        %v4769 = vsel %vm854, %v4767, %v4768
        %s4770 = scalar_lea.vmem [#allocation2], 1472
        %v4771 = vld [vmem:[%s4770] sm:$0xf]
        %v4772 = vld [vmem:[%s4770 + $0x4] sm:$0xf]
        %v4773 = vld [vmem:[%s4770 + $0x8] sm:$0xf]
        %v4774 = vld [vmem:[%s4770 + $0xc] sm:$0xf]
        %v4775 = vld [vmem:[%s4770 + $0x10] sm:$0xf]
        %v4776 = vld [vmem:[%s4770 + $0x14] sm:$0xf]
        %v4777 = vld [vmem:[%s4770 + $0x18] sm:$0xf]
        %v4778 = vld [vmem:[%s4770 + $0x1c] sm:$0xf]
        %v4779 = vld [vmem:[%s4770 + $0x20] sm:$0xf]
        %v4780 = vld [vmem:[%s4770 + $0x24] sm:$0xf]
        %v4781 = vld [vmem:[%s4770 + $0x28] sm:$0xf]
        %v4782 = vld [vmem:[%s4770 + $0x2c] sm:$0xf]
        %v4783 = vld [vmem:[%s4770 + $0x30] sm:$0xf]
        %v4784 = vld [vmem:[%s4770 + $0x34] sm:$0xf]
        %v4785 = vld [vmem:[%s4770 + $0x38] sm:$0xf]
        %v4786 = vld [vmem:[%s4770 + $0x3c] sm:$0xf]
        %v4787 = vunpack.c.l.b16 %v4741
        %v4788 = vunpack.c.l.b16 %v4745
        %v4789 = vunpack.c.l.b16 %v4749
        %v4790 = vunpack.c.l.b16 %v4753
        %v4791 = vunpack.c.l.b16 %v4757
        %v4792 = vunpack.c.l.b16 %v4761
        %v4793 = vunpack.c.l.b16 %v4765
        %v4794 = vunpack.c.l.b16 %v4769
        %v4795 = vpack.c.b16 %v4788, %v4787
        %v4796 = vpack.c.b16 %v4790, %v4789
        %v4797 = vpack.c.b16 %v4792, %v4791
        %v4798 = vpack.c.b16 %v4794, %v4793
        %v4819 = vunpack.c.l.b16 %v4771
        %v4820 = vunpack.c.l.b16 %v4772
        %v4821 = vunpack.c.l.b16 %v4773
        %v4822 = vunpack.c.l.b16 %v4774
        %v4823 = vunpack.c.l.b16 %v4775
        %v4824 = vunpack.c.l.b16 %v4776
        %v4825 = vunpack.c.l.b16 %v4777
        %v4826 = vunpack.c.l.b16 %v4778
        %v4827 = vunpack.c.l.b16 %v4779
        %v4828 = vunpack.c.l.b16 %v4780
        %v4829 = vunpack.c.l.b16 %v4781
        %v4830 = vunpack.c.l.b16 %v4782
        %v4831 = vunpack.c.l.b16 %v4783
        %v4832 = vunpack.c.l.b16 %v4784
        %v4833 = vunpack.c.l.b16 %v4785
        %v4834 = vunpack.c.l.b16 %v4786
        %v4835 = vpack.c.b16 %v4820, %v4819
        %v4836 = vpack.c.b16 %v4822, %v4821
        %v4837 = vpack.c.b16 %v4824, %v4823
        %v4838 = vpack.c.b16 %v4826, %v4825
        %v4839 = vpack.c.b16 %v4828, %v4827
        %v4840 = vpack.c.b16 %v4830, %v4829
        %v4841 = vpack.c.b16 %v4832, %v4831
        %v4842 = vpack.c.b16 %v4834, %v4833
        %4851 = vmatpush.bf16.msra.mxu0 %v4842
        %4852 = vmatpush.bf16.msra.mxu0 %v4841
        %4853 = vmatpush.bf16.msra.mxu0 %v4840
        %4854 = vmatpush.bf16.msra.mxu0 %v4839
        %4855 = vmatpush.bf16.msra.mxu0 %v4838
        %4856 = vmatpush.bf16.msra.mxu0 %v4837
        %4857 = vmatpush.bf16.msra.mxu0 %v4836
        %4858 = vmatpush.bf16.msra.mxu0 %v4835
        %4859 = vmatmul.bf16.gmra.mxu0 %v4795
        %v4860 = vpop.f32.mrf.mxu0
        %v4861 = vadd.f32 0.0, %v4860
        %v4862 = vpop.f32.mrf.mxu0
        %v4863 = vadd.f32 0.0, %v4862
        %4864 = vmatmul.bf16.gmra.mxu0 %v4796
        %v4865 = vpop.f32.mrf.mxu0
        %v4866 = vadd.f32 0.0, %v4865
        %v4867 = vpop.f32.mrf.mxu0
        %v4868 = vadd.f32 0.0, %v4867
        %4869 = vmatmul.bf16.gmra.mxu0 %v4797
        %v4870 = vpop.f32.mrf.mxu0
        %v4871 = vadd.f32 0.0, %v4870
        %v4872 = vpop.f32.mrf.mxu0
        %v4873 = vadd.f32 0.0, %v4872
        %4874 = vmatmul.bf16.gmra.mxu0 %v4798
        %v4875 = vpop.f32.mrf.mxu0
        %v4876 = vadd.f32 0.0, %v4875
        %v4877 = vpop.f32.mrf.mxu0
        %v4878 = vadd.f32 0.0, %v4877
        %4879 = vdwg.mxu0
        %v4880 = vadd.f32 %v4706, %v4861
        %v4881 = vadd.f32 %v4707, %v4863
        %v4882 = vadd.f32 %v4708, %v4866
        %v4883 = vadd.f32 %v4709, %v4868
        %v4884 = vadd.f32 %v4710, %v4871
        %v4885 = vadd.f32 %v4711, %v4873
        %v4886 = vadd.f32 %v4712, %v4876
        %v4887 = vadd.f32 %v4713, %v4878
        %s4888 = scalar_lea.vmem %s443, 16
        %v4889 = vld [vmem:[%s4888] sm:$0xf]
        %v4890 = vld [vmem:[%s4888 + $0x8] sm:$0xf]
        %v4891 = vld [vmem:[%s4888 + $0x10] sm:$0xf]
        %v4892 = vld [vmem:[%s4888 + $0x18] sm:$0xf]
        %v4893 = vld [vmem:[%s4888 + $0x20] sm:$0xf]
        %v4894 = vld [vmem:[%s4888 + $0x28] sm:$0xf]
        %v4895 = vld [vmem:[%s4888 + $0x30] sm:$0xf]
        %v4896 = vld [vmem:[%s4888 + $0x38] sm:$0xf]
        %s4897 = scalar_lea.vmem [#allocation2], 1536
        %v4898 = vld [vmem:[%s4897] sm:$0xf]
        %v4899 = vld [vmem:[%s4897 + $0x4] sm:$0xf]
        %v4900 = vld [vmem:[%s4897 + $0x8] sm:$0xf]
        %v4901 = vld [vmem:[%s4897 + $0xc] sm:$0xf]
        %v4902 = vld [vmem:[%s4897 + $0x10] sm:$0xf]
        %v4903 = vld [vmem:[%s4897 + $0x14] sm:$0xf]
        %v4904 = vld [vmem:[%s4897 + $0x18] sm:$0xf]
        %v4905 = vld [vmem:[%s4897 + $0x1c] sm:$0xf]
        %v4906 = vld [vmem:[%s4897 + $0x20] sm:$0xf]
        %v4907 = vld [vmem:[%s4897 + $0x24] sm:$0xf]
        %v4908 = vld [vmem:[%s4897 + $0x28] sm:$0xf]
        %v4909 = vld [vmem:[%s4897 + $0x2c] sm:$0xf]
        %v4910 = vld [vmem:[%s4897 + $0x30] sm:$0xf]
        %v4911 = vld [vmem:[%s4897 + $0x34] sm:$0xf]
        %v4912 = vld [vmem:[%s4897 + $0x38] sm:$0xf]
        %v4913 = vld [vmem:[%s4897 + $0x3c] sm:$0xf]
        %v4922 = vunpack.c.l.b16 %v4889
        %v4923 = vunpack.c.l.b16 %v4890
        %v4924 = vunpack.c.l.b16 %v4891
        %v4925 = vunpack.c.l.b16 %v4892
        %v4926 = vunpack.c.l.b16 %v4893
        %v4927 = vunpack.c.l.b16 %v4894
        %v4928 = vunpack.c.l.b16 %v4895
        %v4929 = vunpack.c.l.b16 %v4896
        %v4930 = vpack.c.b16 %v4923, %v4922
        %v4931 = vpack.c.b16 %v4925, %v4924
        %v4932 = vpack.c.b16 %v4927, %v4926
        %v4933 = vpack.c.b16 %v4929, %v4928
        %v4954 = vunpack.c.l.b16 %v4898
        %v4955 = vunpack.c.l.b16 %v4899
        %v4956 = vunpack.c.l.b16 %v4900
        %v4957 = vunpack.c.l.b16 %v4901
        %v4958 = vunpack.c.l.b16 %v4902
        %v4959 = vunpack.c.l.b16 %v4903
        %v4960 = vunpack.c.l.b16 %v4904
        %v4961 = vunpack.c.l.b16 %v4905
        %v4962 = vunpack.c.l.b16 %v4906
        %v4963 = vunpack.c.l.b16 %v4907
        %v4964 = vunpack.c.l.b16 %v4908
        %v4965 = vunpack.c.l.b16 %v4909
        %v4966 = vunpack.c.l.b16 %v4910
        %v4967 = vunpack.c.l.b16 %v4911
        %v4968 = vunpack.c.l.b16 %v4912
        %v4969 = vunpack.c.l.b16 %v4913
        %v4970 = vpack.c.b16 %v4955, %v4954
        %v4971 = vpack.c.b16 %v4957, %v4956
        %v4972 = vpack.c.b16 %v4959, %v4958
        %v4973 = vpack.c.b16 %v4961, %v4960
        %v4974 = vpack.c.b16 %v4963, %v4962
        %v4975 = vpack.c.b16 %v4965, %v4964
        %v4976 = vpack.c.b16 %v4967, %v4966
        %v4977 = vpack.c.b16 %v4969, %v4968
        %4986 = vmatpush.bf16.msra.mxu0 %v4977
        %4987 = vmatpush.bf16.msra.mxu0 %v4976
        %4988 = vmatpush.bf16.msra.mxu0 %v4975
        %4989 = vmatpush.bf16.msra.mxu0 %v4974
        %4990 = vmatpush.bf16.msra.mxu0 %v4973
        %4991 = vmatpush.bf16.msra.mxu0 %v4972
        %4992 = vmatpush.bf16.msra.mxu0 %v4971
        %4993 = vmatpush.bf16.msra.mxu0 %v4970
        %4994 = vmatmul.bf16.gmra.mxu0 %v4930
        %v4995 = vpop.f32.mrf.mxu0
        %v4996 = vadd.f32 0.0, %v4995
        %v4997 = vpop.f32.mrf.mxu0
        %v4998 = vadd.f32 0.0, %v4997
        %4999 = vmatmul.bf16.gmra.mxu0 %v4931
        %v5000 = vpop.f32.mrf.mxu0
        %v5001 = vadd.f32 0.0, %v5000
        %v5002 = vpop.f32.mrf.mxu0
        %v5003 = vadd.f32 0.0, %v5002
        %5004 = vmatmul.bf16.gmra.mxu0 %v4932
        %v5005 = vpop.f32.mrf.mxu0
        %v5006 = vadd.f32 0.0, %v5005
        %v5007 = vpop.f32.mrf.mxu0
        %v5008 = vadd.f32 0.0, %v5007
        %5009 = vmatmul.bf16.gmra.mxu0 %v4933
        %v5010 = vpop.f32.mrf.mxu0
        %v5011 = vadd.f32 0.0, %v5010
        %v5012 = vpop.f32.mrf.mxu0
        %v5013 = vadd.f32 0.0, %v5012
        %5014 = vdwg.mxu0
        %v5015 = vadd.f32 %v4880, %v4996
        %v5016 = vadd.f32 %v4881, %v4998
        %v5017 = vadd.f32 %v4882, %v5001
        %v5018 = vadd.f32 %v4883, %v5003
        %v5019 = vadd.f32 %v4884, %v5006
        %v5020 = vadd.f32 %v4885, %v5008
        %v5021 = vadd.f32 %v4886, %v5011
        %v5022 = vadd.f32 %v4887, %v5013
        %v5023 = vld [vmem:[%s4888] sm:$0xf]
        %v5024 = vld [vmem:[%s4888 + $0x4] sm:$0x1]
        %v5025 = vld [vmem:[%s4888 + $0x8] sm:$0xf]
        %v5026 = vld [vmem:[%s4888 + $0xc] sm:$0x1]
        %v5027 = vld [vmem:[%s4888 + $0x10] sm:$0xf]
        %v5028 = vld [vmem:[%s4888 + $0x14] sm:$0x1]
        %v5029 = vld [vmem:[%s4888 + $0x18] sm:$0xf]
        %v5030 = vld [vmem:[%s4888 + $0x1c] sm:$0x1]
        %v5031 = vld [vmem:[%s4888 + $0x20] sm:$0xf]
        %v5032 = vld [vmem:[%s4888 + $0x24] sm:$0x1]
        %v5033 = vld [vmem:[%s4888 + $0x28] sm:$0xf]
        %v5034 = vld [vmem:[%s4888 + $0x2c] sm:$0x1]
        %v5035 = vld [vmem:[%s4888 + $0x30] sm:$0xf]
        %v5036 = vld [vmem:[%s4888 + $0x34] sm:$0x1]
        %v5037 = vld [vmem:[%s4888 + $0x38] sm:$0xf]
        %v5038 = vld [vmem:[%s4888 + $0x3c] sm:$0x1]
        %v5040 = vshrl.u32 %v5023, 16
        %v5042 = vrot.slane %v5040, 4
        %v5043 = vshll.u32 %v5023, 16
        %v5045 = vrot.slane %v5043, 5
        %v5046 = vor.u32 %v5042, %v5045
        %v5047 = vrot.slane %v5046, 4
        %v5049 = vshll.u32 %v5024, 16
        %v5051 = vrot.slane %v5049, 5
        %v5052 = vsel %vm504, %v5047, %v5051
        %v5054 = vshrl.u32 %v5025, 16
        %v5056 = vrot.slane %v5054, 4
        %v5057 = vshll.u32 %v5025, 16
        %v5059 = vrot.slane %v5057, 5
        %v5060 = vor.u32 %v5056, %v5059
        %v5061 = vrot.slane %v5060, 4
        %v5063 = vshll.u32 %v5026, 16
        %v5065 = vrot.slane %v5063, 5
        %v5066 = vsel %vm504, %v5061, %v5065
        %v5068 = vshrl.u32 %v5027, 16
        %v5070 = vrot.slane %v5068, 4
        %v5071 = vshll.u32 %v5027, 16
        %v5073 = vrot.slane %v5071, 5
        %v5074 = vor.u32 %v5070, %v5073
        %v5075 = vrot.slane %v5074, 4
        %v5077 = vshll.u32 %v5028, 16
        %v5079 = vrot.slane %v5077, 5
        %v5080 = vsel %vm504, %v5075, %v5079
        %v5082 = vshrl.u32 %v5029, 16
        %v5084 = vrot.slane %v5082, 4
        %v5085 = vshll.u32 %v5029, 16
        %v5087 = vrot.slane %v5085, 5
        %v5088 = vor.u32 %v5084, %v5087
        %v5089 = vrot.slane %v5088, 4
        %v5091 = vshll.u32 %v5030, 16
        %v5093 = vrot.slane %v5091, 5
        %v5094 = vsel %vm504, %v5089, %v5093
        %v5096 = vshrl.u32 %v5031, 16
        %v5098 = vrot.slane %v5096, 4
        %v5099 = vshll.u32 %v5031, 16
        %v5101 = vrot.slane %v5099, 5
        %v5102 = vor.u32 %v5098, %v5101
        %v5103 = vrot.slane %v5102, 4
        %v5105 = vshll.u32 %v5032, 16
        %v5107 = vrot.slane %v5105, 5
        %v5108 = vsel %vm504, %v5103, %v5107
        %v5110 = vshrl.u32 %v5033, 16
        %v5112 = vrot.slane %v5110, 4
        %v5113 = vshll.u32 %v5033, 16
        %v5115 = vrot.slane %v5113, 5
        %v5116 = vor.u32 %v5112, %v5115
        %v5117 = vrot.slane %v5116, 4
        %v5119 = vshll.u32 %v5034, 16
        %v5121 = vrot.slane %v5119, 5
        %v5122 = vsel %vm504, %v5117, %v5121
        %v5124 = vshrl.u32 %v5035, 16
        %v5126 = vrot.slane %v5124, 4
        %v5127 = vshll.u32 %v5035, 16
        %v5129 = vrot.slane %v5127, 5
        %v5130 = vor.u32 %v5126, %v5129
        %v5131 = vrot.slane %v5130, 4
        %v5133 = vshll.u32 %v5036, 16
        %v5135 = vrot.slane %v5133, 5
        %v5136 = vsel %vm504, %v5131, %v5135
        %v5138 = vshrl.u32 %v5037, 16
        %v5140 = vrot.slane %v5138, 4
        %v5141 = vshll.u32 %v5037, 16
        %v5143 = vrot.slane %v5141, 5
        %v5144 = vor.u32 %v5140, %v5143
        %v5145 = vrot.slane %v5144, 4
        %v5147 = vshll.u32 %v5038, 16
        %v5149 = vrot.slane %v5147, 5
        %v5150 = vsel %vm504, %v5145, %v5149
        %s5151 = scalar_lea.vmem [#allocation2], 1600
        %v5152 = vld [vmem:[%s5151] sm:$0xf]
        %v5153 = vld [vmem:[%s5151 + $0x4] sm:$0xf]
        %v5154 = vld [vmem:[%s5151 + $0x8] sm:$0xf]
        %v5155 = vld [vmem:[%s5151 + $0xc] sm:$0xf]
        %v5156 = vld [vmem:[%s5151 + $0x10] sm:$0xf]
        %v5157 = vld [vmem:[%s5151 + $0x14] sm:$0xf]
        %v5158 = vld [vmem:[%s5151 + $0x18] sm:$0xf]
        %v5159 = vld [vmem:[%s5151 + $0x1c] sm:$0xf]
        %v5160 = vld [vmem:[%s5151 + $0x20] sm:$0xf]
        %v5161 = vld [vmem:[%s5151 + $0x24] sm:$0xf]
        %v5162 = vld [vmem:[%s5151 + $0x28] sm:$0xf]
        %v5163 = vld [vmem:[%s5151 + $0x2c] sm:$0xf]
        %v5164 = vld [vmem:[%s5151 + $0x30] sm:$0xf]
        %v5165 = vld [vmem:[%s5151 + $0x34] sm:$0xf]
        %v5166 = vld [vmem:[%s5151 + $0x38] sm:$0xf]
        %v5167 = vld [vmem:[%s5151 + $0x3c] sm:$0xf]
        %v5168 = vunpack.c.l.b16 %v5052
        %v5169 = vunpack.c.l.b16 %v5066
        %v5170 = vunpack.c.l.b16 %v5080
        %v5171 = vunpack.c.l.b16 %v5094
        %v5172 = vunpack.c.l.b16 %v5108
        %v5173 = vunpack.c.l.b16 %v5122
        %v5174 = vunpack.c.l.b16 %v5136
        %v5175 = vunpack.c.l.b16 %v5150
        %v5176 = vpack.c.b16 %v5169, %v5168
        %v5177 = vpack.c.b16 %v5171, %v5170
        %v5178 = vpack.c.b16 %v5173, %v5172
        %v5179 = vpack.c.b16 %v5175, %v5174
        %v5200 = vunpack.c.l.b16 %v5152
        %v5201 = vunpack.c.l.b16 %v5153
        %v5202 = vunpack.c.l.b16 %v5154
        %v5203 = vunpack.c.l.b16 %v5155
        %v5204 = vunpack.c.l.b16 %v5156
        %v5205 = vunpack.c.l.b16 %v5157
        %v5206 = vunpack.c.l.b16 %v5158
        %v5207 = vunpack.c.l.b16 %v5159
        %v5208 = vunpack.c.l.b16 %v5160
        %v5209 = vunpack.c.l.b16 %v5161
        %v5210 = vunpack.c.l.b16 %v5162
        %v5211 = vunpack.c.l.b16 %v5163
        %v5212 = vunpack.c.l.b16 %v5164
        %v5213 = vunpack.c.l.b16 %v5165
        %v5214 = vunpack.c.l.b16 %v5166
        %v5215 = vunpack.c.l.b16 %v5167
        %v5216 = vpack.c.b16 %v5201, %v5200
        %v5217 = vpack.c.b16 %v5203, %v5202
        %v5218 = vpack.c.b16 %v5205, %v5204
        %v5219 = vpack.c.b16 %v5207, %v5206
        %v5220 = vpack.c.b16 %v5209, %v5208
        %v5221 = vpack.c.b16 %v5211, %v5210
        %v5222 = vpack.c.b16 %v5213, %v5212
        %v5223 = vpack.c.b16 %v5215, %v5214
        %5232 = vmatpush.bf16.msra.mxu0 %v5223
        %5233 = vmatpush.bf16.msra.mxu0 %v5222
        %5234 = vmatpush.bf16.msra.mxu0 %v5221
        %5235 = vmatpush.bf16.msra.mxu0 %v5220
        %5236 = vmatpush.bf16.msra.mxu0 %v5219
        %5237 = vmatpush.bf16.msra.mxu0 %v5218
        %5238 = vmatpush.bf16.msra.mxu0 %v5217
        %5239 = vmatpush.bf16.msra.mxu0 %v5216
        %5240 = vmatmul.bf16.gmra.mxu0 %v5176
        %v5241 = vpop.f32.mrf.mxu0
        %v5242 = vadd.f32 0.0, %v5241
        %v5243 = vpop.f32.mrf.mxu0
        %v5244 = vadd.f32 0.0, %v5243
        %5245 = vmatmul.bf16.gmra.mxu0 %v5177
        %v5246 = vpop.f32.mrf.mxu0
        %v5247 = vadd.f32 0.0, %v5246
        %v5248 = vpop.f32.mrf.mxu0
        %v5249 = vadd.f32 0.0, %v5248
        %5250 = vmatmul.bf16.gmra.mxu0 %v5178
        %v5251 = vpop.f32.mrf.mxu0
        %v5252 = vadd.f32 0.0, %v5251
        %v5253 = vpop.f32.mrf.mxu0
        %v5254 = vadd.f32 0.0, %v5253
        %5255 = vmatmul.bf16.gmra.mxu0 %v5179
        %v5256 = vpop.f32.mrf.mxu0
        %v5257 = vadd.f32 0.0, %v5256
        %v5258 = vpop.f32.mrf.mxu0
        %v5259 = vadd.f32 0.0, %v5258
        %5260 = vdwg.mxu0
        %v5261 = vadd.f32 %v5015, %v5242
        %v5262 = vadd.f32 %v5016, %v5244
        %v5263 = vadd.f32 %v5017, %v5247
        %v5264 = vadd.f32 %v5018, %v5249
        %v5265 = vadd.f32 %v5019, %v5252
        %v5266 = vadd.f32 %v5020, %v5254
        %v5267 = vadd.f32 %v5021, %v5257
        %v5268 = vadd.f32 %v5022, %v5259
        %v5269 = vld [vmem:[%s4888] sm:$0xe]
        %v5270 = vld [vmem:[%s4888 + $0x8] sm:$0xe]
        %v5271 = vld [vmem:[%s4888 + $0x10] sm:$0xe]
        %v5272 = vld [vmem:[%s4888 + $0x18] sm:$0xe]
        %v5273 = vld [vmem:[%s4888 + $0x20] sm:$0xe]
        %v5274 = vld [vmem:[%s4888 + $0x28] sm:$0xe]
        %v5275 = vld [vmem:[%s4888 + $0x30] sm:$0xe]
        %v5276 = vld [vmem:[%s4888 + $0x38] sm:$0xe]
        %v5293 = vrot.slane %v5269, 5
        %v5294 = vrot.slane %v5293, 4
        %v5295 = vrot.slane %v5024, 5
        %v5296 = vsel %vm854, %v5294, %v5295
        %v5297 = vrot.slane %v5270, 5
        %v5298 = vrot.slane %v5297, 4
        %v5299 = vrot.slane %v5026, 5
        %v5300 = vsel %vm854, %v5298, %v5299
        %v5301 = vrot.slane %v5271, 5
        %v5302 = vrot.slane %v5301, 4
        %v5303 = vrot.slane %v5028, 5
        %v5304 = vsel %vm854, %v5302, %v5303
        %v5305 = vrot.slane %v5272, 5
        %v5306 = vrot.slane %v5305, 4
        %v5307 = vrot.slane %v5030, 5
        %v5308 = vsel %vm854, %v5306, %v5307
        %v5309 = vrot.slane %v5273, 5
        %v5310 = vrot.slane %v5309, 4
        %v5311 = vrot.slane %v5032, 5
        %v5312 = vsel %vm854, %v5310, %v5311
        %v5313 = vrot.slane %v5274, 5
        %v5314 = vrot.slane %v5313, 4
        %v5315 = vrot.slane %v5034, 5
        %v5316 = vsel %vm854, %v5314, %v5315
        %v5317 = vrot.slane %v5275, 5
        %v5318 = vrot.slane %v5317, 4
        %v5319 = vrot.slane %v5036, 5
        %v5320 = vsel %vm854, %v5318, %v5319
        %v5321 = vrot.slane %v5276, 5
        %v5322 = vrot.slane %v5321, 4
        %v5323 = vrot.slane %v5038, 5
        %v5324 = vsel %vm854, %v5322, %v5323
        %s5325 = scalar_lea.vmem [#allocation2], 1664
        %v5326 = vld [vmem:[%s5325] sm:$0xf]
        %v5327 = vld [vmem:[%s5325 + $0x4] sm:$0xf]
        %v5328 = vld [vmem:[%s5325 + $0x8] sm:$0xf]
        %v5329 = vld [vmem:[%s5325 + $0xc] sm:$0xf]
        %v5330 = vld [vmem:[%s5325 + $0x10] sm:$0xf]
        %v5331 = vld [vmem:[%s5325 + $0x14] sm:$0xf]
        %v5332 = vld [vmem:[%s5325 + $0x18] sm:$0xf]
        %v5333 = vld [vmem:[%s5325 + $0x1c] sm:$0xf]
        %v5334 = vld [vmem:[%s5325 + $0x20] sm:$0xf]
        %v5335 = vld [vmem:[%s5325 + $0x24] sm:$0xf]
        %v5336 = vld [vmem:[%s5325 + $0x28] sm:$0xf]
        %v5337 = vld [vmem:[%s5325 + $0x2c] sm:$0xf]
        %v5338 = vld [vmem:[%s5325 + $0x30] sm:$0xf]
        %v5339 = vld [vmem:[%s5325 + $0x34] sm:$0xf]
        %v5340 = vld [vmem:[%s5325 + $0x38] sm:$0xf]
        %v5341 = vld [vmem:[%s5325 + $0x3c] sm:$0xf]
        %v5342 = vunpack.c.l.b16 %v5296
        %v5343 = vunpack.c.l.b16 %v5300
        %v5344 = vunpack.c.l.b16 %v5304
        %v5345 = vunpack.c.l.b16 %v5308
        %v5346 = vunpack.c.l.b16 %v5312
        %v5347 = vunpack.c.l.b16 %v5316
        %v5348 = vunpack.c.l.b16 %v5320
        %v5349 = vunpack.c.l.b16 %v5324
        %v5350 = vpack.c.b16 %v5343, %v5342
        %v5351 = vpack.c.b16 %v5345, %v5344
        %v5352 = vpack.c.b16 %v5347, %v5346
        %v5353 = vpack.c.b16 %v5349, %v5348
        %v5374 = vunpack.c.l.b16 %v5326
        %v5375 = vunpack.c.l.b16 %v5327
        %v5376 = vunpack.c.l.b16 %v5328
        %v5377 = vunpack.c.l.b16 %v5329
        %v5378 = vunpack.c.l.b16 %v5330
        %v5379 = vunpack.c.l.b16 %v5331
        %v5380 = vunpack.c.l.b16 %v5332
        %v5381 = vunpack.c.l.b16 %v5333
        %v5382 = vunpack.c.l.b16 %v5334
        %v5383 = vunpack.c.l.b16 %v5335
        %v5384 = vunpack.c.l.b16 %v5336
        %v5385 = vunpack.c.l.b16 %v5337
        %v5386 = vunpack.c.l.b16 %v5338
        %v5387 = vunpack.c.l.b16 %v5339
        %v5388 = vunpack.c.l.b16 %v5340
        %v5389 = vunpack.c.l.b16 %v5341
        %v5390 = vpack.c.b16 %v5375, %v5374
        %v5391 = vpack.c.b16 %v5377, %v5376
        %v5392 = vpack.c.b16 %v5379, %v5378
        %v5393 = vpack.c.b16 %v5381, %v5380
        %v5394 = vpack.c.b16 %v5383, %v5382
        %v5395 = vpack.c.b16 %v5385, %v5384
        %v5396 = vpack.c.b16 %v5387, %v5386
        %v5397 = vpack.c.b16 %v5389, %v5388
        %5406 = vmatpush.bf16.msra.mxu0 %v5397
        %5407 = vmatpush.bf16.msra.mxu0 %v5396
        %5408 = vmatpush.bf16.msra.mxu0 %v5395
        %5409 = vmatpush.bf16.msra.mxu0 %v5394
        %5410 = vmatpush.bf16.msra.mxu0 %v5393
        %5411 = vmatpush.bf16.msra.mxu0 %v5392
        %5412 = vmatpush.bf16.msra.mxu0 %v5391
        %5413 = vmatpush.bf16.msra.mxu0 %v5390
        %5414 = vmatmul.bf16.gmra.mxu0 %v5350
        %v5415 = vpop.f32.mrf.mxu0
        %v5416 = vadd.f32 0.0, %v5415
        %v5417 = vpop.f32.mrf.mxu0
        %v5418 = vadd.f32 0.0, %v5417
        %5419 = vmatmul.bf16.gmra.mxu0 %v5351
        %v5420 = vpop.f32.mrf.mxu0
        %v5421 = vadd.f32 0.0, %v5420
        %v5422 = vpop.f32.mrf.mxu0
        %v5423 = vadd.f32 0.0, %v5422
        %5424 = vmatmul.bf16.gmra.mxu0 %v5352
        %v5425 = vpop.f32.mrf.mxu0
        %v5426 = vadd.f32 0.0, %v5425
        %v5427 = vpop.f32.mrf.mxu0
        %v5428 = vadd.f32 0.0, %v5427
        %5429 = vmatmul.bf16.gmra.mxu0 %v5353
        %v5430 = vpop.f32.mrf.mxu0
        %v5431 = vadd.f32 0.0, %v5430
        %v5432 = vpop.f32.mrf.mxu0
        %v5433 = vadd.f32 0.0, %v5432
        %5434 = vdwg.mxu0
        %v5435 = vadd.f32 %v5261, %v5416
        %v5436 = vadd.f32 %v5262, %v5418
        %v5437 = vadd.f32 %v5263, %v5421
        %v5438 = vadd.f32 %v5264, %v5423
        %v5439 = vadd.f32 %v5265, %v5426
        %v5440 = vadd.f32 %v5266, %v5428
        %v5441 = vadd.f32 %v5267, %v5431
        %v5442 = vadd.f32 %v5268, %v5433
        %v5443 = vld [vmem:[#allocation4] sm:$0x1]
        %v5445 = vperm.slane %v5443, 0
        %v5447 = vadd.f32 %v5435, %v5445
        %v5448 = vadd.f32 %v5436, %v5445
        %v5449 = vadd.f32 %v5437, %v5445
        %v5450 = vadd.f32 %v5438, %v5445
        %v5451 = vadd.f32 %v5439, %v5445
        %v5452 = vadd.f32 %v5440, %v5445
        %v5453 = vadd.f32 %v5441, %v5445
        %v5454 = vadd.f32 %v5442, %v5445
        %v5455 = vpack.c.bf16 %v5447, %v5447
        %v5456 = vpack.c.bf16 %v5448, %v5448
        %v5457 = vpack.c.bf16 %v5449, %v5449
        %v5458 = vpack.c.bf16 %v5450, %v5450
        %v5459 = vpack.c.bf16 %v5451, %v5451
        %v5460 = vpack.c.bf16 %v5452, %v5452
        %v5461 = vpack.c.bf16 %v5453, %v5453
        %v5462 = vpack.c.bf16 %v5454, %v5454
        %5463 = vst [vmem:[%s453] sm:$0xf] %v5455
        %5464 = vst [vmem:[%s453 + $0x4] sm:$0xf] %v5456
        %5465 = vst [vmem:[%s453 + $0x8] sm:$0xf] %v5457
        %5466 = vst [vmem:[%s453 + $0xc] sm:$0xf] %v5458
        %5467 = vst [vmem:[%s453 + $0x10] sm:$0xf] %v5459
        %5468 = vst [vmem:[%s453 + $0x14] sm:$0xf] %v5460
        %5469 = vst [vmem:[%s453 + $0x18] sm:$0xf] %v5461
        %5470 = vst [vmem:[%s453 + $0x1c] sm:$0xf] %v5462
        %v5471 = vadd.f32 %v5447, %v5448
        %v5472 = vadd.f32 %v5471, %v5449
        %v5473 = vadd.f32 %v5472, %v5450
        %v5474 = vadd.f32 %v5473, %v5451
        %v5475 = vadd.f32 %v5474, %v5452
        %v5476 = vadd.f32 %v5475, %v5453
        %v5477 = vadd.f32 %v5476, %v5454
        %5478 = vadd.xlane.f32.xlu0 %v5477
        %v5479 = vpop.xlane.xlu0 %5478
        %v5480 = vrot.slane %v5479, 4
        %v5481 = vadd.f32 %v5479, %v5480
        %v5482 = vrot.slane %v5481, 2
        %v5483 = vadd.f32 %v5481, %v5482
        %v5484 = vrot.slane %v5483, 1
        %v5485 = vadd.f32 %v5483, %v5484
        %s5486 = vtos %v5485
        %v5487 = vstv %s5486
        %v5488 = vadd.f32 %v5487, 0.0
        %5489 = vst [vmem:[%s461] sm:$0xff] %v5488
        %v5490 = vmul.f32 %v5447, %v5447
        %v5491 = vmul.f32 %v5448, %v5448
        %v5492 = vmul.f32 %v5449, %v5449
        %v5493 = vmul.f32 %v5450, %v5450
        %v5494 = vmul.f32 %v5451, %v5451
        %v5495 = vmul.f32 %v5452, %v5452
        %v5496 = vmul.f32 %v5453, %v5453
        %v5497 = vmul.f32 %v5454, %v5454
        %v5498 = vadd.f32 %v5490, %v5491
        %v5499 = vadd.f32 %v5498, %v5492
        %v5500 = vadd.f32 %v5499, %v5493
        %v5501 = vadd.f32 %v5500, %v5494
        %v5502 = vadd.f32 %v5501, %v5495
        %v5503 = vadd.f32 %v5502, %v5496
        %v5504 = vadd.f32 %v5503, %v5497
        %5505 = vadd.xlane.f32.xlu0 %v5504
        %v5506 = vpop.xlane.xlu0 %5505
        %v5507 = vrot.slane %v5506, 4
        %v5508 = vadd.f32 %v5506, %v5507
        %v5509 = vrot.slane %v5508, 2
        %v5510 = vadd.f32 %v5508, %v5509
        %v5511 = vrot.slane %v5510, 1
        %v5512 = vadd.f32 %v5510, %v5511
        %s5513 = vtos %v5512
        %v5514 = vstv %s5513
        %v5515 = vadd.f32 %v5514, 0.0
        %5516 = vst [vmem:[%s469] sm:$0xff] %v5515
        %p5517 = scmp.lt.s32.totalorder %s25, 1
        %s5518 = scalar_select %p5517, %s25, 1
        %p5519 = scmp.lt.s32.totalorder %s26, 7
        %s5520 = scalar_select %p5519, %s26, 7
        %s5521 = smul.addr %s5520, 8
        %s5522 = smul.addr %s5518, 64
        %s5523 = sadd.s32 %s5521, %s5522
        %s5524 = smul.addr %s5523, 4
        %s5525 = scalar_lea.vmem %s5, %s5524
        %p5526 = scmp.lt.s32.totalorder %s25, 1
        %s5527 = scalar_select %p5526, %s25, 1
        %p5528 = scmp.lt.s32.totalorder %s26, 7
        %s5529 = scalar_select %p5528, %s26, 7
        %s5530 = smul.addr %s5527, 8
        %s5531 = sadd.s32 %s5529, %s5530
        %s5532 = smul.addr %s5531, 8
        %s5533 = scalar_lea.vmem %s6, %s5532
        %p5534 = scmp.lt.s32.totalorder %s25, 1
        %s5535 = scalar_select %p5534, %s25, 1
        %p5536 = scmp.lt.s32.totalorder %s26, 7
        %s5537 = scalar_select %p5536, %s26, 7
        %s5538 = smul.addr %s5535, 8
        %s5539 = sadd.s32 %s5537, %s5538
        %s5540 = smul.addr %s5539, 8
        %s5541 = scalar_lea.vmem %s7, %s5540
        // Predicated region
        $region49: #{up_block_forward.6} parent=39 // pred_check
          %p5542 = pneg %p183
        $region50: #{up_block_forward.6} parent=39 // pred_check_branch
          %5544 = sbr.rel (%p5542) target = $region52
        $region51: #{up_block_forward.6} parent=39 // pred_region
          _
        $region52: #{up_block_forward.6} parent=39 // pred_fallthru
          _
        // Predicated region
        $region53: #{up_block_forward.6} parent=39 // pred_check
          %p5545 = pneg %p211
        $region54: #{up_block_forward.6} parent=39 // pred_check_branch
          %5547 = sbr.rel (%p5545) target = $region56
        $region55: #{up_block_forward.6} parent=39 // pred_region
          _
        $region56: #{up_block_forward.6} parent=39 // pred_fallthru
          _
        // Predicated region
        $region57: #{up_block_forward.6} parent=39 // pred_check
          %p5548 = pneg %p239
        $region58: #{up_block_forward.6} parent=39 // pred_check_branch
          %5550 = sbr.rel (%p5548) target = $region60
        $region59: #{up_block_forward.6} parent=39 // pred_region
          _
        $region60: #{up_block_forward.6} parent=39 // pred_fallthru
          _
      $region40: #{up_block_forward.6} parent=5 // pred_fallthru
        _
      %p5551 = scmp.le.s32.totalorder 2, %s16
      // Predicated region
      $region61: #{up_block_forward.6} parent=5 // pred_check
        %p5552 = pneg %p5551
      $region62: #{up_block_forward.6} parent=5 // pred_check_branch
        %5554 = sbr.rel (%p5552) target = $region64
      $region63: #{up_block_forward.6} parent=5 // pred_region
        %s5555 = ssub.s32 %s16, 2
        // Predicated region
        $region65: #{up_block_forward.6} parent=63 // pred_check
          %p5556 = pneg %p189
        $region66: #{up_block_forward.6} parent=63 // pred_check_branch
          %5558 = sbr.rel (%p5556) target = $region68
        $region67: #{up_block_forward.6} parent=63 // pred_region
          %p5559 = scmp.lt.s32.totalorder %s27, 1
          %s5560 = scalar_select %p5559, %s27, 1
          %p5561 = scmp.lt.s32.totalorder %s28, 7
          %s5562 = scalar_select %p5561, %s28, 7
          %s5563 = smul.addr %s5562, 8
          %s5564 = smul.addr %s5560, 64
          %s5565 = sadd.s32 %s5563, %s5564
          %s5566 = smul.addr %s5565, 4
          %s5567 = scalar_lea.vmem %s5, %s5566
        $region68: #{up_block_forward.6} parent=63 // pred_fallthru
          _
        // Predicated region
        $region69: #{up_block_forward.6} parent=63 // pred_check
          %p5568 = pneg %p217
        $region70: #{up_block_forward.6} parent=63 // pred_check_branch
          %5570 = sbr.rel (%p5568) target = $region72
        $region71: #{up_block_forward.6} parent=63 // pred_region
          %p5571 = scmp.lt.s32.totalorder %s27, 1
          %s5572 = scalar_select %p5571, %s27, 1
          %p5573 = scmp.lt.s32.totalorder %s28, 7
          %s5574 = scalar_select %p5573, %s28, 7
          %s5575 = smul.addr %s5572, 8
          %s5576 = sadd.s32 %s5574, %s5575
          %s5577 = smul.addr %s5576, 8
          %s5578 = scalar_lea.vmem %s6, %s5577
        $region72: #{up_block_forward.6} parent=63 // pred_fallthru
          _
        // Predicated region
        $region73: #{up_block_forward.6} parent=63 // pred_check
          %p5579 = pneg %p245
        $region74: #{up_block_forward.6} parent=63 // pred_check_branch
          %5581 = sbr.rel (%p5579) target = $region76
        $region75: #{up_block_forward.6} parent=63 // pred_region
          %p5582 = scmp.lt.s32.totalorder %s27, 1
          %s5583 = scalar_select %p5582, %s27, 1
          %p5584 = scmp.lt.s32.totalorder %s28, 7
          %s5585 = scalar_select %p5584, %s28, 7
          %s5586 = smul.addr %s5583, 8
          %s5587 = sadd.s32 %s5585, %s5586
          %s5588 = smul.addr %s5587, 8
          %s5589 = scalar_lea.vmem %s7, %s5588
        $region76: #{up_block_forward.6} parent=63 // pred_fallthru
          _
      $region64: #{up_block_forward.6} parent=5 // pred_fallthru
        _
    $region6: #{up_block_forward.6} parent=1 // loop_footer
      %s20 = sadd.s32 1, %s16
    $region7: #{up_block_forward.6} parent=1 // loop_footer_branch
      %15 = sbr.rel target = $region3
    $region8: #{up_block_forward.6} parent=1 // loop_exit
      _
    %5590 = vsyncpa [#allocation3], 1
    %s5591 = scalar_lea.sflag [#allocation3], 1
    %5592 = vsyncpa %s5591, 1
    %5593 = vsyncpa [#allocation5], 1

</llo_original>
